<compile_context>
chip_gen: v7x
topology: tpu7x:2x2x1
jax: 0.10.0
libtpu: 0.0.40
codegen_flags: <defaults>
</compile_context>

<pallas_src>
import functools

import jax
import jax.numpy as jnp
import numpy as np
from jax.experimental import pallas as pl
from jax.experimental.pallas import tpu as pltpu

EPS = 1e-5
LANES = 128   # channel padding target (TPU lane width)
WL = 8        # left column offset of the real image inside the padded scratch
              # (8-aligned so the interior store stays an aligned vector store)


def _round_up(v, m):
    return (v + m - 1) // m * m


def _pick_vmem_limit():
    """Per-generation VMEM budget: ~3/4 of physical, capped at 96 MiB
    (v5e/v6e: 128 MiB -> 96 MiB; v7x: 64 MiB -> 48 MiB). Safe fallback 32 MiB."""
    try:
        cap = int(pltpu.get_tpu_info().vmem_capacity_bytes)
        return int(min(96 * 1024 * 1024, cap * 3 // 4))
    except Exception:
        return 32 * 1024 * 1024


_VMEM_LIMIT = _pick_vmem_limit()


# ---------------------------------------------------------------------------
# Kernel helpers
# ---------------------------------------------------------------------------
def _fill_halo_and_interior(xpad_ref, interior_bf16, H, W):
    """Zero the halo STRIPS and write the bf16 image interior into xpad.

    Halo strips are re-zeroed every grid step (the interior is overwritten
    anyway, so the old full-scratch zero was a wasted extra vst pass).  Do NOT
    gate this on program_id == 0: with 'parallel' dimension semantics the
    second TensorCore never executes step 0.
    """
    Wp, CP = xpad_ref.shape[1], xpad_ref.shape[2]
    zrow = jnp.zeros((1, Wp, CP), xpad_ref.dtype)
    xpad_ref[0:1, :, :] = zrow                                   # top pad row
    xpad_ref[H + 1:H + 2, :, :] = zrow                           # bottom pad row
    xpad_ref[1:H + 1, 0:WL, :] = jnp.zeros((H, WL, CP), xpad_ref.dtype)
    xpad_ref[1:H + 1, WL + W:Wp, :] = jnp.zeros((H, Wp - WL - W, CP),
                                                xpad_ref.dtype)
    xpad_ref[1:H + 1, WL:WL + W, :] = interior_bf16              # real image


def _conv3x3(xpad_ref, w_ref, H, W):
    """3x3 conv of one image: 9 accumulated (H*W,CP)@(CP,CP) bf16 MXU matmuls
    with an f32 value accumulator.  No im2col scratch is materialized.

    xpad_ref: (H+2, Wp, CP) bf16; image at [1:H+1, WL:WL+W, :], zero halo.
    w_ref:    (9, CP, CP) bf16, tap-major.
    Returns (H*W, CP) f32.
    """
    CP = w_ref.shape[-1]
    acc = None
    for k in range(9):                                  # static 3x3 tap loop
        dy, dx = divmod(k, 3)
        # output pixel (h,w) needs input (h+dy-1, w+dx-1), stored at
        # xpad[h+dy, w+dx-1+WL]
        patch = xpad_ref[dy:dy + H, WL - 1 + dx:WL - 1 + dx + W, :]
        part = jnp.dot(patch.reshape(H * W, CP), w_ref[k],
                       preferred_element_type=jnp.float32)
        acc = part if acc is None else acc + part
    return acc


# ---------------------------------------------------------------------------
# Kernels
# ---------------------------------------------------------------------------
def conv_stats_kernel(x_ref, w_ref, y_ref, sum_ref, sq_ref, xpad_ref, *, H, W):
    """Pass 1: y = conv3x3(x) (raw, pre-BN) + per-image channel sum / sumsq."""
    CP = xpad_ref.shape[2]
    _fill_halo_and_interior(xpad_ref, x_ref[0].reshape(H, W, CP), H, W)
    y = _conv3x3(xpad_ref, w_ref, H, W)                 # (H*W, CP) f32
    y_ref[0] = y.astype(y_ref.dtype)
    sum_ref[0] = jnp.sum(y, axis=0, keepdims=True)
    sq_ref[0] = jnp.sum(y * y, axis=0, keepdims=True)


def bn_relu_conv_stats_kernel(y1_ref, scale_ref, shift_ref, w_ref,
                              y2_ref, sum_ref, sq_ref, xpad_ref, *, H, W):
    """Pass 2: a = relu(bn1(y1)); y2 = conv3x3(a) (raw) + per-image stats."""
    CP = xpad_ref.shape[2]
    a = jnp.maximum(
        y1_ref[0].astype(jnp.float32) * scale_ref[...] + shift_ref[...], 0.0)
    _fill_halo_and_interior(
        xpad_ref, a.astype(xpad_ref.dtype).reshape(H, W, CP), H, W)
    y = _conv3x3(xpad_ref, w_ref, H, W)
    y2_ref[0] = y.astype(y2_ref.dtype)
    sum_ref[0] = jnp.sum(y, axis=0, keepdims=True)
    sq_ref[0] = jnp.sum(y * y, axis=0, keepdims=True)


# ---------------------------------------------------------------------------
# Wrapper
# ---------------------------------------------------------------------------
def _prep_weights(w_oihw, cp):
    """OIHW (Cout,Cin,3,3) -> tap-major (9, CP, CP) bf16, zero-padded channels."""
    cout, cin = w_oihw.shape[0], w_oihw.shape[1]
    w = jnp.transpose(w_oihw, (2, 3, 1, 0)).reshape(9, cin, cout)   # HWIO taps
    w = jnp.pad(w, ((0, 0), (0, cp - cin), (0, cp - cout)))
    return w.astype(jnp.bfloat16)


def _prep_vec(v, cp):
    return jnp.pad(v, (0, cp - v.shape[0])).reshape(1, cp).astype(jnp.float32)


def _bn_scale_shift(ssum, ssq, gamma_p, beta_p, count):
    """Finalize training-mode BatchNorm from per-image partial sums (tiny)."""
    mean = jnp.sum(ssum, axis=0) / count                  # (1, CP)
    var = jnp.sum(ssq, axis=0) / count - mean * mean      # biased variance
    scale = gamma_p * jax.lax.rsqrt(var + EPS)
    shift = beta_p - mean * scale
    return scale, shift


@jax.jit
def basic_block_forward(x_nchw, w1_oihw, g1, b1, w2_oihw, g2, b2):
    """x: (N, C, H, W) f32.  Returns (N, C, H, W) f32."""
    N, C, H, W = x_nchw.shape
    HW = H * W
    CP = C if C % LANES == 0 else _round_up(max(C, LANES), LANES)
    Wp = _round_up(WL + W + 1, 8)      # xpad width: 1 right zero col, 8-aligned
    count = N * HW

    # NCHW -> (N, H*W, CP) bf16 channels-last; pad channels only when needed.
    x_nhwc = jnp.transpose(x_nchw, (0, 2, 3, 1))              # (N, H, W, C) f32
    x_bf = x_nhwc.astype(jnp.bfloat16)
    if CP != C:
        x_bf = jnp.pad(x_bf, ((0, 0), (0, 0), (0, 0), (0, CP - C)))
    x_p = x_bf.reshape(N, HW, CP)

    w1p = _prep_weights(w1_oihw, CP)
    w2p = _prep_weights(w2_oihw, CP)
    g1p, b1p = _prep_vec(g1, CP), _prep_vec(b1, CP)
    g2p, b2p = _prep_vec(g2, CP), _prep_vec(b2, CP)

    cparams = pltpu.CompilerParams(
        dimension_semantics=("parallel",),        # shard images across TCs
        vmem_limit_bytes=_VMEM_LIMIT)
    scratch = [pltpu.VMEM((H + 2, Wp, CP), jnp.bfloat16)]     # bf16 padded img

    img_spec = pl.BlockSpec((1, HW, CP), lambda n: (n, 0, 0))
    w_spec = pl.BlockSpec((9, CP, CP), lambda n: (0, 0, 0))
    vec_spec = pl.BlockSpec((1, CP), lambda n: (0, 0))
    stat_spec = pl.BlockSpec((1, 1, CP), lambda n: (n, 0, 0))

    # ---- pass 1: conv1 (raw) + per-image BN1 partial sums -------------------
    y1, s1, q1 = pl.pallas_call(
        functools.partial(conv_stats_kernel, H=H, W=W),
        grid=(N,),
        in_specs=[img_spec, w_spec],
        out_specs=[img_spec, stat_spec, stat_spec],
        out_shape=[jax.ShapeDtypeStruct((N, HW, CP), jnp.bfloat16),
                   jax.ShapeDtypeStruct((N, 1, CP), jnp.float32),
                   jax.ShapeDtypeStruct((N, 1, CP), jnp.float32)],
        scratch_shapes=scratch,
        compiler_params=cparams,
    )(x_p, w1p)
    scale1, shift1 = _bn_scale_shift(s1, q1, g1p, b1p, count)

    # ---- pass 2: bn1 + relu + conv2 (raw) + per-image BN2 partial sums ------
    y2, s2, q2 = pl.pallas_call(
        functools.partial(bn_relu_conv_stats_kernel, H=H, W=W),
        grid=(N,),
        in_specs=[img_spec, vec_spec, vec_spec, w_spec],
        out_specs=[img_spec, stat_spec, stat_spec],
        out_shape=[jax.ShapeDtypeStruct((N, HW, CP), jnp.bfloat16),
                   jax.ShapeDtypeStruct((N, 1, CP), jnp.float32),
                   jax.ShapeDtypeStruct((N, 1, CP), jnp.float32)],
        scratch_shapes=scratch,
        compiler_params=cparams,
    )(y1, scale1, shift1, w2p)
    scale2, shift2 = _bn_scale_shift(s2, q2, g2p, b2p, count)

    # ---- pass 3 (plain JAX, fused by XLA with slice + transpose): -----------
    #      out = relu(bn2(y2) + residual)
    bn2 = (y2[:, :, :C].astype(jnp.float32) * scale2[:, :C].reshape(1, 1, C)
           + shift2[:, :C].reshape(1, 1, C))
    out_nhwc = jnp.maximum(bn2 + x_nhwc.reshape(N, HW, C), 0.0)
    return jnp.transpose(out_nhwc.reshape(N, H, W, C), (0, 3, 1, 2))


# ---------------------------------------------------------------------------
# Pure-JAX f32 reference (verification only)
# ---------------------------------------------------------------------------
def _ref_forward(x_nchw, w1_hwio, g1, b1, w2_hwio, g2, b2):
    x = jnp.transpose(x_nchw, (0, 2, 3, 1))

    def conv(y, w):
        return jax.lax.conv_general_dilated(
            y, w, window_strides=(1, 1), padding="SAME",
            dimension_numbers=("NHWC", "HWIO", "NHWC"))

    def bn(y, g, b):
        m = jnp.mean(y, axis=(0, 1, 2), keepdims=True)
        v = jnp.mean((y - m) ** 2, axis=(0, 1, 2), keepdims=True)
        return (y - m) * jax.lax.rsqrt(v + EPS) * g.reshape(1, 1, 1, -1) \
            + b.reshape(1, 1, 1, -1)

    out = jax.nn.relu(bn(conv(x, w1_hwio), g1, b1))
    out = bn(conv(out, w2_hwio), g2, b2) + x
    return jnp.transpose(jax.nn.relu(out), (0, 3, 1, 2))


# ---------------------------------------------------------------------------
if __name__ == "__main__":
    N, C, H, W = 2, 4, 16, 16          # inplanes = planes = 4, stride = 1
    key = jax.random.PRNGKey(0)
    kx, kw1, kw2 = jax.random.split(key, 3)

    x = jax.random.normal(kx, (N, C, H, W), jnp.float32)
    w1_oihw = jax.random.normal(kw1, (C, C, 3, 3), jnp.float32) * 0.1
    w2_oihw = jax.random.normal(kw2, (C, C, 3, 3), jnp.float32) * 0.1
    gamma1 = jnp.ones((C,), jnp.float32)
    beta1 = jnp.zeros((C,), jnp.float32)
    gamma2 = jnp.ones((C,), jnp.float32)
    beta2 = jnp.zeros((C,), jnp.float32)

    out = basic_block_forward(x, w1_oihw, gamma1, beta1,
                              w2_oihw, gamma2, beta2)
    out = jax.block_until_ready(out)

    ref = _ref_forward(x,
                       jnp.transpose(w1_oihw, (2, 3, 1, 0)), gamma1, beta1,
                       jnp.transpose(w2_oihw, (2, 3, 1, 0)), gamma2, beta2)
    # bf16 MXU operands / bf16 activations in HBM vs the pure-f32 reference:
    # expected max abs error ~1e-2 on these unit-variance activations.
    np.testing.assert_allclose(np.asarray(out), np.asarray(ref),
                               rtol=5e-2, atol=5e-2)

    print("KERNEL_OK")
</pallas_src>

<mosaic_0001>
module attributes {stable_mosaic.version = 11 : i64} {
  func.func @conv_stats_kernel(%arg0: i32, %arg1: memref<1x256x128xbf16, #tpu.memory_space<vmem>>, %arg2: memref<9x128x128xbf16, #tpu.memory_space<vmem>>, %arg3: memref<1x256x128xbf16, #tpu.memory_space<vmem>>, %arg4: memref<1x1x128xf32, #tpu.memory_space<vmem>>, %arg5: memref<1x1x128xf32, #tpu.memory_space<vmem>>, %arg6: memref<18x32x128xbf16, #tpu.memory_space<vmem>>) attributes {dimension_semantics = [#tpu.dimension_semantics<parallel>], iteration_bounds = array<i64: 2>, scalar_prefetch = 0 : i64, scratch_operands = 1 : i64, tpu.core_type = #tpu.core_type<tc>, window_params = [{transform_indices = @transform_0, window_bounds = array<i64: 1, 256, 128>}, {pipeline_mode = #tpu.pipeline_mode<synchronous>, transform_indices = @transform_1, window_bounds = array<i64: 9, 128, 128>}, {transform_indices = @transform_2, window_bounds = array<i64: 1, 256, 128>}, {transform_indices = @transform_3, window_bounds = array<i64: 1, 1, 128>}, {transform_indices = @transform_4, window_bounds = array<i64: 1, 1, 128>}]} {
    %c0 = arith.constant 0 : index
    %c0_0 = arith.constant 0 : index
    %c0_1 = arith.constant 0 : index
    %0 = vector.load %arg1[%c0, %c0_0, %c0_1] : memref<1x256x128xbf16, #tpu.memory_space<vmem>>, vector<1x256x128xbf16>
    %1 = vector.shape_cast %0 : vector<1x256x128xbf16> to vector<256x128xbf16>
    %2 = vector.shape_cast %1 : vector<256x128xbf16> to vector<16x16x128xbf16>
    %cst = arith.constant 0.000000e+00 : bf16
    %3 = vector.broadcast %cst : bf16 to vector<1x32x128xbf16>
    %c0_2 = arith.constant 0 : index
    %c0_3 = arith.constant 0 : index
    %c0_4 = arith.constant 0 : index
    %4 = vector.load %arg6[%c0_2, %c0_3, %c0_4] : memref<18x32x128xbf16, #tpu.memory_space<vmem>>, vector<1x32x128xbf16>
    tpu.vector_store %arg6[%c0_2, %c0_3, %c0_4], %3 {strides = array<i32>} : memref<18x32x128xbf16, #tpu.memory_space<vmem>>, vector<1x32x128xbf16>,
    %c17 = arith.constant 17 : index
    %c0_5 = arith.constant 0 : index
    %c0_6 = arith.constant 0 : index
    %5 = vector.load %arg6[%c17, %c0_5, %c0_6] : memref<18x32x128xbf16, #tpu.memory_space<vmem>>, vector<1x32x128xbf16>
    tpu.vector_store %arg6[%c17, %c0_5, %c0_6], %3 {strides = array<i32>} : memref<18x32x128xbf16, #tpu.memory_space<vmem>>, vector<1x32x128xbf16>,
    %cst_7 = arith.constant 0.000000e+00 : bf16
    %6 = vector.broadcast %cst_7 : bf16 to vector<16x8x128xbf16>
    %c1 = arith.constant 1 : index
    %c0_8 = arith.constant 0 : index
    %c0_9 = arith.constant 0 : index
    %7 = vector.load %arg6[%c1, %c0_8, %c0_9] : memref<18x32x128xbf16, #tpu.memory_space<vmem>>, vector<16x8x128xbf16>
    tpu.vector_store %arg6[%c1, %c0_8, %c0_9], %6 {strides = array<i32>} : memref<18x32x128xbf16, #tpu.memory_space<vmem>>, vector<16x8x128xbf16>,
    %cst_10 = arith.constant 0.000000e+00 : bf16
    %8 = vector.broadcast %cst_10 : bf16 to vector<16x8x128xbf16>
    %c1_11 = arith.constant 1 : index
    %c24 = arith.constant 24 : index
    %c0_12 = arith.constant 0 : index
    %9 = vector.load %arg6[%c1_11, %c24, %c0_12] : memref<18x32x128xbf16, #tpu.memory_space<vmem>>, vector<16x8x128xbf16>
    tpu.vector_store %arg6[%c1_11, %c24, %c0_12], %8 {strides = array<i32>} : memref<18x32x128xbf16, #tpu.memory_space<vmem>>, vector<16x8x128xbf16>,
    %c1_13 = arith.constant 1 : index
    %c8 = arith.constant 8 : index
    %c0_14 = arith.constant 0 : index
    %10 = vector.load %arg6[%c1_13, %c8, %c0_14] : memref<18x32x128xbf16, #tpu.memory_space<vmem>>, vector<16x16x128xbf16>
    tpu.vector_store %arg6[%c1_13, %c8, %c0_14], %2 {strides = array<i32>} : memref<18x32x128xbf16, #tpu.memory_space<vmem>>, vector<16x16x128xbf16>,
    %c0_15 = arith.constant 0 : index
    %c7 = arith.constant 7 : index
    %c0_16 = arith.constant 0 : index
    %11 = vector.load %arg6[%c0_15, %c7, %c0_16] : memref<18x32x128xbf16, #tpu.memory_space<vmem>>, vector<16x16x128xbf16>
    %12 = vector.shape_cast %11 : vector<16x16x128xbf16> to vector<256x128xbf16>
    %c0_17 = arith.constant 0 : index
    %c0_18 = arith.constant 0 : index
    %c0_19 = arith.constant 0 : index
    %13 = vector.load %arg2[%c0_17, %c0_18, %c0_19] : memref<9x128x128xbf16, #tpu.memory_space<vmem>>, vector<1x128x128xbf16>
    %14 = vector.shape_cast %13 : vector<1x128x128xbf16> to vector<128x128xbf16>
    %cst_20 = arith.constant dense<0.000000e+00> : vector<256x128xf32>
    %15 = tpu.matmul %12, %14, %cst_20 {dimension_numbers = #tpu.dot_dimension_numbers<[1], [0], [0], [1], [0, 0, 1, 1], [], []>} : vector<256x128xbf16>, vector<128x128xbf16>, vector<256x128xf32> -> vector<256x128xf32>
    %c0_21 = arith.constant 0 : index
    %c8_22 = arith.constant 8 : index
    %c0_23 = arith.constant 0 : index
    %16 = vector.load %arg6[%c0_21, %c8_22, %c0_23] : memref<18x32x128xbf16, #tpu.memory_space<vmem>>, vector<16x16x128xbf16>
    %17 = vector.shape_cast %16 : vector<16x16x128xbf16> to vector<256x128xbf16>
    %c1_24 = arith.constant 1 : index
    %c0_25 = arith.constant 0 : index
    %c0_26 = arith.constant 0 : index
    %18 = vector.load %arg2[%c1_24, %c0_25, %c0_26] : memref<9x128x128xbf16, #tpu.memory_space<vmem>>, vector<1x128x128xbf16>
    %19 = vector.shape_cast %18 : vector<1x128x128xbf16> to vector<128x128xbf16>
    %cst_27 = arith.constant dense<0.000000e+00> : vector<256x128xf32>
    %20 = tpu.matmul %17, %19, %cst_27 {dimension_numbers = #tpu.dot_dimension_numbers<[1], [0], [0], [1], [0, 0, 1, 1], [], []>} : vector<256x128xbf16>, vector<128x128xbf16>, vector<256x128xf32> -> vector<256x128xf32>
    %21 = arith.addf %15, %20 : vector<256x128xf32>
    %c0_28 = arith.constant 0 : index
    %c9 = arith.constant 9 : index
    %c0_29 = arith.constant 0 : index
    %22 = vector.load %arg6[%c0_28, %c9, %c0_29] : memref<18x32x128xbf16, #tpu.memory_space<vmem>>, vector<16x16x128xbf16>
    %23 = vector.shape_cast %22 : vector<16x16x128xbf16> to vector<256x128xbf16>
    %c2 = arith.constant 2 : index
    %c0_30 = arith.constant 0 : index
    %c0_31 = arith.constant 0 : index
    %24 = vector.load %arg2[%c2, %c0_30, %c0_31] : memref<9x128x128xbf16, #tpu.memory_space<vmem>>, vector<1x128x128xbf16>
    %25 = vector.shape_cast %24 : vector<1x128x128xbf16> to vector<128x128xbf16>
    %cst_32 = arith.constant dense<0.000000e+00> : vector<256x128xf32>
    %26 = tpu.matmul %23, %25, %cst_32 {dimension_numbers = #tpu.dot_dimension_numbers<[1], [0], [0], [1], [0, 0, 1, 1], [], []>} : vector<256x128xbf16>, vector<128x128xbf16>, vector<256x128xf32> -> vector<256x128xf32>
    %27 = arith.addf %21, %26 : vector<256x128xf32>
    %c1_33 = arith.constant 1 : index
    %c7_34 = arith.constant 7 : index
    %c0_35 = arith.constant 0 : index
    %28 = vector.load %arg6[%c1_33, %c7_34, %c0_35] : memref<18x32x128xbf16, #tpu.memory_space<vmem>>, vector<16x16x128xbf16>
    %29 = vector.shape_cast %28 : vector<16x16x128xbf16> to vector<256x128xbf16>
    %c3 = arith.constant 3 : index
    %c0_36 = arith.constant 0 : index
    %c0_37 = arith.constant 0 : index
    %30 = vector.load %arg2[%c3, %c0_36, %c0_37] : memref<9x128x128xbf16, #tpu.memory_space<vmem>>, vector<1x128x128xbf16>
    %31 = vector.shape_cast %30 : vector<1x128x128xbf16> to vector<128x128xbf16>
    %cst_38 = arith.constant dense<0.000000e+00> : vector<256x128xf32>
    %32 = tpu.matmul %29, %31, %cst_38 {dimension_numbers = #tpu.dot_dimension_numbers<[1], [0], [0], [1], [0, 0, 1, 1], [], []>} : vector<256x128xbf16>, vector<128x128xbf16>, vector<256x128xf32> -> vector<256x128xf32>
    %33 = arith.addf %27, %32 : vector<256x128xf32>
    %c1_39 = arith.constant 1 : index
    %c8_40 = arith.constant 8 : index
    %c0_41 = arith.constant 0 : index
    %34 = vector.load %arg6[%c1_39, %c8_40, %c0_41] : memref<18x32x128xbf16, #tpu.memory_space<vmem>>, vector<16x16x128xbf16>
    %35 = vector.shape_cast %34 : vector<16x16x128xbf16> to vector<256x128xbf16>
    %c4 = arith.constant 4 : index
    %c0_42 = arith.constant 0 : index
    %c0_43 = arith.constant 0 : index
    %36 = vector.load %arg2[%c4, %c0_42, %c0_43] : memref<9x128x128xbf16, #tpu.memory_space<vmem>>, vector<1x128x128xbf16>
    %37 = vector.shape_cast %36 : vector<1x128x128xbf16> to vector<128x128xbf16>
    %cst_44 = arith.constant dense<0.000000e+00> : vector<256x128xf32>
    %38 = tpu.matmul %35, %37, %cst_44 {dimension_numbers = #tpu.dot_dimension_numbers<[1], [0], [0], [1], [0, 0, 1, 1], [], []>} : vector<256x128xbf16>, vector<128x128xbf16>, vector<256x128xf32> -> vector<256x128xf32>
    %39 = arith.addf %33, %38 : vector<256x128xf32>
    %c1_45 = arith.constant 1 : index
    %c9_46 = arith.constant 9 : index
    %c0_47 = arith.constant 0 : index
    %40 = vector.load %arg6[%c1_45, %c9_46, %c0_47] : memref<18x32x128xbf16, #tpu.memory_space<vmem>>, vector<16x16x128xbf16>
    %41 = vector.shape_cast %40 : vector<16x16x128xbf16> to vector<256x128xbf16>
    %c5 = arith.constant 5 : index
    %c0_48 = arith.constant 0 : index
    %c0_49 = arith.constant 0 : index
    %42 = vector.load %arg2[%c5, %c0_48, %c0_49] : memref<9x128x128xbf16, #tpu.memory_space<vmem>>, vector<1x128x128xbf16>
    %43 = vector.shape_cast %42 : vector<1x128x128xbf16> to vector<128x128xbf16>
    %cst_50 = arith.constant dense<0.000000e+00> : vector<256x128xf32>
    %44 = tpu.matmul %41, %43, %cst_50 {dimension_numbers = #tpu.dot_dimension_numbers<[1], [0], [0], [1], [0, 0, 1, 1], [], []>} : vector<256x128xbf16>, vector<128x128xbf16>, vector<256x128xf32> -> vector<256x128xf32>
    %45 = arith.addf %39, %44 : vector<256x128xf32>
    %c2_51 = arith.constant 2 : index
    %c7_52 = arith.constant 7 : index
    %c0_53 = arith.constant 0 : index
    %46 = vector.load %arg6[%c2_51, %c7_52, %c0_53] : memref<18x32x128xbf16, #tpu.memory_space<vmem>>, vector<16x16x128xbf16>
    %47 = vector.shape_cast %46 : vector<16x16x128xbf16> to vector<256x128xbf16>
    %c6 = arith.constant 6 : index
    %c0_54 = arith.constant 0 : index
    %c0_55 = arith.constant 0 : index
    %48 = vector.load %arg2[%c6, %c0_54, %c0_55] : memref<9x128x128xbf16, #tpu.memory_space<vmem>>, vector<1x128x128xbf16>
    %49 = vector.shape_cast %48 : vector<1x128x128xbf16> to vector<128x128xbf16>
    %cst_56 = arith.constant dense<0.000000e+00> : vector<256x128xf32>
    %50 = tpu.matmul %47, %49, %cst_56 {dimension_numbers = #tpu.dot_dimension_numbers<[1], [0], [0], [1], [0, 0, 1, 1], [], []>} : vector<256x128xbf16>, vector<128x128xbf16>, vector<256x128xf32> -> vector<256x128xf32>
    %51 = arith.addf %45, %50 : vector<256x128xf32>
    %c2_57 = arith.constant 2 : index
    %c8_58 = arith.constant 8 : index
    %c0_59 = arith.constant 0 : index
    %52 = vector.load %arg6[%c2_57, %c8_58, %c0_59] : memref<18x32x128xbf16, #tpu.memory_space<vmem>>, vector<16x16x128xbf16>
    %53 = vector.shape_cast %52 : vector<16x16x128xbf16> to vector<256x128xbf16>
    %c7_60 = arith.constant 7 : index
    %c0_61 = arith.constant 0 : index
    %c0_62 = arith.constant 0 : index
    %54 = vector.load %arg2[%c7_60, %c0_61, %c0_62] : memref<9x128x128xbf16, #tpu.memory_space<vmem>>, vector<1x128x128xbf16>
    %55 = vector.shape_cast %54 : vector<1x128x128xbf16> to vector<128x128xbf16>
    %cst_63 = arith.constant dense<0.000000e+00> : vector<256x128xf32>
    %56 = tpu.matmul %53, %55, %cst_63 {dimension_numbers = #tpu.dot_dimension_numbers<[1], [0], [0], [1], [0, 0, 1, 1], [], []>} : vector<256x128xbf16>, vector<128x128xbf16>, vector<256x128xf32> -> vector<256x128xf32>
    %57 = arith.addf %51, %56 : vector<256x128xf32>
    %c2_64 = arith.constant 2 : index
    %c9_65 = arith.constant 9 : index
    %c0_66 = arith.constant 0 : index
    %58 = vector.load %arg6[%c2_64, %c9_65, %c0_66] : memref<18x32x128xbf16, #tpu.memory_space<vmem>>, vector<16x16x128xbf16>
    %59 = vector.shape_cast %58 : vector<16x16x128xbf16> to vector<256x128xbf16>
    %c8_67 = arith.constant 8 : index
    %c0_68 = arith.constant 0 : index
    %c0_69 = arith.constant 0 : index
    %60 = vector.load %arg2[%c8_67, %c0_68, %c0_69] : memref<9x128x128xbf16, #tpu.memory_space<vmem>>, vector<1x128x128xbf16>
    %61 = vector.shape_cast %60 : vector<1x128x128xbf16> to vector<128x128xbf16>
    %cst_70 = arith.constant dense<0.000000e+00> : vector<256x128xf32>
    %62 = tpu.matmul %59, %61, %cst_70 {dimension_numbers = #tpu.dot_dimension_numbers<[1], [0], [0], [1], [0, 0, 1, 1], [], []>} : vector<256x128xbf16>, vector<128x128xbf16>, vector<256x128xf32> -> vector<256x128xf32>
    %63 = arith.addf %57, %62 : vector<256x128xf32>
    %64 = arith.truncf %63 : vector<256x128xf32> to vector<256x128xbf16>
    %c0_71 = arith.constant 0 : index
    %c0_72 = arith.constant 0 : index
    %c0_73 = arith.constant 0 : index
    %65 = vector.load %arg3[%c0_71, %c0_72, %c0_73] : memref<1x256x128xbf16, #tpu.memory_space<vmem>>, vector<1x256x128xbf16>
    %66 = vector.shape_cast %65 : vector<1x256x128xbf16> to vector<256x128xbf16>
    %67 = vector.shape_cast %64 : vector<256x128xbf16> to vector<1x256x128xbf16>
    tpu.vector_store %arg3[%c0_71, %c0_72, %c0_73], %67 {strides = array<i32>} : memref<1x256x128xbf16, #tpu.memory_space<vmem>>, vector<1x256x128xbf16>,
    %cst_74 = arith.constant dense<0.000000e+00> : vector<128xf32>
    %68 = vector.multi_reduction <add>, %63, %cst_74 [0] : vector<256x128xf32> to vector<128xf32>
    %69 = vector.shape_cast %68 : vector<128xf32> to vector<1x128xf32>
    %c0_75 = arith.constant 0 : index
    %c0_76 = arith.constant 0 : index
    %c0_77 = arith.constant 0 : index
    %70 = vector.load %arg4[%c0_75, %c0_76, %c0_77] : memref<1x1x128xf32, #tpu.memory_space<vmem>>, vector<1x1x128xf32>
    %71 = vector.shape_cast %70 : vector<1x1x128xf32> to vector<1x128xf32>
    %72 = vector.shape_cast %69 : vector<1x128xf32> to vector<1x1x128xf32>
    tpu.vector_store %arg4[%c0_75, %c0_76, %c0_77], %72 {strides = array<i32>} : memref<1x1x128xf32, #tpu.memory_space<vmem>>, vector<1x1x128xf32>,
    %73 = arith.mulf %63, %63 : vector<256x128xf32>
    %cst_78 = arith.constant dense<0.000000e+00> : vector<128xf32>
    %74 = vector.multi_reduction <add>, %73, %cst_78 [0] : vector<256x128xf32> to vector<128xf32>
    %75 = vector.shape_cast %74 : vector<128xf32> to vector<1x128xf32>
    %c0_79 = arith.constant 0 : index
    %c0_80 = arith.constant 0 : index
    %c0_81 = arith.constant 0 : index
    %76 = vector.load %arg5[%c0_79, %c0_80, %c0_81] : memref<1x1x128xf32, #tpu.memory_space<vmem>>, vector<1x1x128xf32>
    %77 = vector.shape_cast %76 : vector<1x1x128xf32> to vector<1x128xf32>
    %78 = vector.shape_cast %75 : vector<1x128xf32> to vector<1x1x128xf32>
    tpu.vector_store %arg5[%c0_79, %c0_80, %c0_81], %78 {strides = array<i32>} : memref<1x1x128xf32, #tpu.memory_space<vmem>>, vector<1x1x128xf32>,
    return
  }
  func.func @transform_0(%arg0: i32) -> (i32, i32, i32) {
    %c0_i32 = arith.constant 0 : i32
    %c0_i32_0 = arith.constant 0 : i32
    %c0_i32_1 = arith.constant 0 : i32
    return %arg0, %c0_i32, %c0_i32_0 : i32, i32, i32
  }
  func.func @transform_1(%arg0: i32) -> (i32, i32, i32) {
    %c0_i32 = arith.constant 0 : i32
    %c0_i32_0 = arith.constant 0 : i32
    %c0_i32_1 = arith.constant 0 : i32
    %c0_i32_2 = arith.constant 0 : i32
    return %c0_i32, %c0_i32_0, %c0_i32_1 : i32, i32, i32
  }
  func.func @transform_2(%arg0: i32) -> (i32, i32, i32) {
    %c0_i32 = arith.constant 0 : i32
    %c0_i32_0 = arith.constant 0 : i32
    %c0_i32_1 = arith.constant 0 : i32
    return %arg0, %c0_i32, %c0_i32_0 : i32, i32, i32
  }
  func.func @transform_3(%arg0: i32) -> (i32, i32, i32) {
    %c0_i32 = arith.constant 0 : i32
    %c0_i32_0 = arith.constant 0 : i32
    %c0_i32_1 = arith.constant 0 : i32
    return %arg0, %c0_i32, %c0_i32_0 : i32, i32, i32
  }
  func.func @transform_4(%arg0: i32) -> (i32, i32, i32) {
    %c0_i32 = arith.constant 0 : i32
    %c0_i32_0 = arith.constant 0 : i32
    %c0_i32_1 = arith.constant 0 : i32
    return %arg0, %c0_i32, %c0_i32_0 : i32, i32, i32
  }
}

module attributes {stable_mosaic.version = 11 : i64} {
  func.func @bn_relu_conv_stats_kernel(%arg0: i32, %arg1: memref<1x256x128xbf16, #tpu.memory_space<vmem>>, %arg2: memref<1x128xf32, #tpu.memory_space<vmem>>, %arg3: memref<1x128xf32, #tpu.memory_space<vmem>>, %arg4: memref<9x128x128xbf16, #tpu.memory_space<vmem>>, %arg5: memref<1x256x128xbf16, #tpu.memory_space<vmem>>, %arg6: memref<1x1x128xf32, #tpu.memory_space<vmem>>, %arg7: memref<1x1x128xf32, #tpu.memory_space<vmem>>, %arg8: memref<18x32x128xbf16, #tpu.memory_space<vmem>>) attributes {dimension_semantics = [#tpu.dimension_semantics<parallel>], iteration_bounds = array<i64: 2>, scalar_prefetch = 0 : i64, scratch_operands = 1 : i64, tpu.core_type = #tpu.core_type<tc>, window_params = [{transform_indices = @transform_0, window_bounds = array<i64: 1, 256, 128>}, {pipeline_mode = #tpu.pipeline_mode<synchronous>, transform_indices = @transform_1, window_bounds = array<i64: 1, 128>}, {pipeline_mode = #tpu.pipeline_mode<synchronous>, transform_indices = @transform_2, window_bounds = array<i64: 1, 128>}, {pipeline_mode = #tpu.pipeline_mode<synchronous>, transform_indices = @transform_3, window_bounds = array<i64: 9, 128, 128>}, {transform_indices = @transform_4, window_bounds = array<i64: 1, 256, 128>}, {transform_indices = @transform_5, window_bounds = array<i64: 1, 1, 128>}, {transform_indices = @transform_6, window_bounds = array<i64: 1, 1, 128>}]} {
    %c0 = arith.constant 0 : index
    %c0_0 = arith.constant 0 : index
    %c0_1 = arith.constant 0 : index
    %0 = vector.load %arg1[%c0, %c0_0, %c0_1] : memref<1x256x128xbf16, #tpu.memory_space<vmem>>, vector<1x256x128xbf16>
    %1 = vector.shape_cast %0 : vector<1x256x128xbf16> to vector<256x128xbf16>
    %2 = arith.extf %1 : vector<256x128xbf16> to vector<256x128xf32>
    %c0_2 = arith.constant 0 : index
    %c0_3 = arith.constant 0 : index
    %3 = vector.load %arg2[%c0_2, %c0_3] : memref<1x128xf32, #tpu.memory_space<vmem>>, vector<1x128xf32>
    %4 = vector.broadcast %3 : vector<1x128xf32> to vector<256x128xf32>
    %5 = arith.mulf %2, %4 : vector<256x128xf32>
    %c0_4 = arith.constant 0 : index
    %c0_5 = arith.constant 0 : index
    %6 = vector.load %arg3[%c0_4, %c0_5] : memref<1x128xf32, #tpu.memory_space<vmem>>, vector<1x128xf32>
    %7 = vector.broadcast %6 : vector<1x128xf32> to vector<256x128xf32>
    %8 = arith.addf %5, %7 : vector<256x128xf32>
    %cst = arith.constant 0.000000e+00 : f32
    %9 = vector.broadcast %cst : f32 to vector<256x128xf32>
    %10 = arith.maximumf %8, %9 : vector<256x128xf32>
    %11 = arith.truncf %10 : vector<256x128xf32> to vector<256x128xbf16>
    %12 = vector.shape_cast %11 : vector<256x128xbf16> to vector<16x16x128xbf16>
    %cst_6 = arith.constant 0.000000e+00 : bf16
    %13 = vector.broadcast %cst_6 : bf16 to vector<1x32x128xbf16>
    %c0_7 = arith.constant 0 : index
    %c0_8 = arith.constant 0 : index
    %c0_9 = arith.constant 0 : index
    %14 = vector.load %arg8[%c0_7, %c0_8, %c0_9] : memref<18x32x128xbf16, #tpu.memory_space<vmem>>, vector<1x32x128xbf16>
    tpu.vector_store %arg8[%c0_7, %c0_8, %c0_9], %13 {strides = array<i32>} : memref<18x32x128xbf16, #tpu.memory_space<vmem>>, vector<1x32x128xbf16>,
    %c17 = arith.constant 17 : index
    %c0_10 = arith.constant 0 : index
    %c0_11 = arith.constant 0 : index
    %15 = vector.load %arg8[%c17, %c0_10, %c0_11] : memref<18x32x128xbf16, #tpu.memory_space<vmem>>, vector<1x32x128xbf16>
    tpu.vector_store %arg8[%c17, %c0_10, %c0_11], %13 {strides = array<i32>} : memref<18x32x128xbf16, #tpu.memory_space<vmem>>, vector<1x32x128xbf16>,
    %cst_12 = arith.constant 0.000000e+00 : bf16
    %16 = vector.broadcast %cst_12 : bf16 to vector<16x8x128xbf16>
    %c1 = arith.constant 1 : index
    %c0_13 = arith.constant 0 : index
    %c0_14 = arith.constant 0 : index
    %17 = vector.load %arg8[%c1, %c0_13, %c0_14] : memref<18x32x128xbf16, #tpu.memory_space<vmem>>, vector<16x8x128xbf16>
    tpu.vector_store %arg8[%c1, %c0_13, %c0_14], %16 {strides = array<i32>} : memref<18x32x128xbf16, #tpu.memory_space<vmem>>, vector<16x8x128xbf16>,
    %cst_15 = arith.constant 0.000000e+00 : bf16
    %18 = vector.broadcast %cst_15 : bf16 to vector<16x8x128xbf16>
    %c1_16 = arith.constant 1 : index
    %c24 = arith.constant 24 : index
    %c0_17 = arith.constant 0 : index
    %19 = vector.load %arg8[%c1_16, %c24, %c0_17] : memref<18x32x128xbf16, #tpu.memory_space<vmem>>, vector<16x8x128xbf16>
    tpu.vector_store %arg8[%c1_16, %c24, %c0_17], %18 {strides = array<i32>} : memref<18x32x128xbf16, #tpu.memory_space<vmem>>, vector<16x8x128xbf16>,
    %c1_18 = arith.constant 1 : index
    %c8 = arith.constant 8 : index
    %c0_19 = arith.constant 0 : index
    %20 = vector.load %arg8[%c1_18, %c8, %c0_19] : memref<18x32x128xbf16, #tpu.memory_space<vmem>>, vector<16x16x128xbf16>
    tpu.vector_store %arg8[%c1_18, %c8, %c0_19], %12 {strides = array<i32>} : memref<18x32x128xbf16, #tpu.memory_space<vmem>>, vector<16x16x128xbf16>,
    %c0_20 = arith.constant 0 : index
    %c7 = arith.constant 7 : index
    %c0_21 = arith.constant 0 : index
    %21 = vector.load %arg8[%c0_20, %c7, %c0_21] : memref<18x32x128xbf16, #tpu.memory_space<vmem>>, vector<16x16x128xbf16>
    %22 = vector.shape_cast %21 : vector<16x16x128xbf16> to vector<256x128xbf16>
    %c0_22 = arith.constant 0 : index
    %c0_23 = arith.constant 0 : index
    %c0_24 = arith.constant 0 : index
    %23 = vector.load %arg4[%c0_22, %c0_23, %c0_24] : memref<9x128x128xbf16, #tpu.memory_space<vmem>>, vector<1x128x128xbf16>
    %24 = vector.shape_cast %23 : vector<1x128x128xbf16> to vector<128x128xbf16>
    %cst_25 = arith.constant dense<0.000000e+00> : vector<256x128xf32>
    %25 = tpu.matmul %22, %24, %cst_25 {dimension_numbers = #tpu.dot_dimension_numbers<[1], [0], [0], [1], [0, 0, 1, 1], [], []>} : vector<256x128xbf16>, vector<128x128xbf16>, vector<256x128xf32> -> vector<256x128xf32>
    %c0_26 = arith.constant 0 : index
    %c8_27 = arith.constant 8 : index
    %c0_28 = arith.constant 0 : index
    %26 = vector.load %arg8[%c0_26, %c8_27, %c0_28] : memref<18x32x128xbf16, #tpu.memory_space<vmem>>, vector<16x16x128xbf16>
    %27 = vector.shape_cast %26 : vector<16x16x128xbf16> to vector<256x128xbf16>
    %c1_29 = arith.constant 1 : index
    %c0_30 = arith.constant 0 : index
    %c0_31 = arith.constant 0 : index
    %28 = vector.load %arg4[%c1_29, %c0_30, %c0_31] : memref<9x128x128xbf16, #tpu.memory_space<vmem>>, vector<1x128x128xbf16>
    %29 = vector.shape_cast %28 : vector<1x128x128xbf16> to vector<128x128xbf16>
    %cst_32 = arith.constant dense<0.000000e+00> : vector<256x128xf32>
    %30 = tpu.matmul %27, %29, %cst_32 {dimension_numbers = #tpu.dot_dimension_numbers<[1], [0], [0], [1], [0, 0, 1, 1], [], []>} : vector<256x128xbf16>, vector<128x128xbf16>, vector<256x128xf32> -> vector<256x128xf32>
    %31 = arith.addf %25, %30 : vector<256x128xf32>
    %c0_33 = arith.constant 0 : index
    %c9 = arith.constant 9 : index
    %c0_34 = arith.constant 0 : index
    %32 = vector.load %arg8[%c0_33, %c9, %c0_34] : memref<18x32x128xbf16, #tpu.memory_space<vmem>>, vector<16x16x128xbf16>
    %33 = vector.shape_cast %32 : vector<16x16x128xbf16> to vector<256x128xbf16>
    %c2 = arith.constant 2 : index
    %c0_35 = arith.constant 0 : index
    %c0_36 = arith.constant 0 : index
    %34 = vector.load %arg4[%c2, %c0_35, %c0_36] : memref<9x128x128xbf16, #tpu.memory_space<vmem>>, vector<1x128x128xbf16>
    %35 = vector.shape_cast %34 : vector<1x128x128xbf16> to vector<128x128xbf16>
    %cst_37 = arith.constant dense<0.000000e+00> : vector<256x128xf32>
    %36 = tpu.matmul %33, %35, %cst_37 {dimension_numbers = #tpu.dot_dimension_numbers<[1], [0], [0], [1], [0, 0, 1, 1], [], []>} : vector<256x128xbf16>, vector<128x128xbf16>, vector<256x128xf32> -> vector<256x128xf32>
    %37 = arith.addf %31, %36 : vector<256x128xf32>
    %c1_38 = arith.constant 1 : index
    %c7_39 = arith.constant 7 : index
    %c0_40 = arith.constant 0 : index
    %38 = vector.load %arg8[%c1_38, %c7_39, %c0_40] : memref<18x32x128xbf16, #tpu.memory_space<vmem>>, vector<16x16x128xbf16>
    %39 = vector.shape_cast %38 : vector<16x16x128xbf16> to vector<256x128xbf16>
    %c3 = arith.constant 3 : index
    %c0_41 = arith.constant 0 : index
    %c0_42 = arith.constant 0 : index
    %40 = vector.load %arg4[%c3, %c0_41, %c0_42] : memref<9x128x128xbf16, #tpu.memory_space<vmem>>, vector<1x128x128xbf16>
    %41 = vector.shape_cast %40 : vector<1x128x128xbf16> to vector<128x128xbf16>
    %cst_43 = arith.constant dense<0.000000e+00> : vector<256x128xf32>
    %42 = tpu.matmul %39, %41, %cst_43 {dimension_numbers = #tpu.dot_dimension_numbers<[1], [0], [0], [1], [0, 0, 1, 1], [], []>} : vector<256x128xbf16>, vector<128x128xbf16>, vector<256x128xf32> -> vector<256x128xf32>
    %43 = arith.addf %37, %42 : vector<256x128xf32>
    %c1_44 = arith.constant 1 : index
    %c8_45 = arith.constant 8 : index
    %c0_46 = arith.constant 0 : index
    %44 = vector.load %arg8[%c1_44, %c8_45, %c0_46] : memref<18x32x128xbf16, #tpu.memory_space<vmem>>, vector<16x16x128xbf16>
    %45 = vector.shape_cast %44 : vector<16x16x128xbf16> to vector<256x128xbf16>
    %c4 = arith.constant 4 : index
    %c0_47 = arith.constant 0 : index
    %c0_48 = arith.constant 0 : index
    %46 = vector.load %arg4[%c4, %c0_47, %c0_48] : memref<9x128x128xbf16, #tpu.memory_space<vmem>>, vector<1x128x128xbf16>
    %47 = vector.shape_cast %46 : vector<1x128x128xbf16> to vector<128x128xbf16>
    %cst_49 = arith.constant dense<0.000000e+00> : vector<256x128xf32>
    %48 = tpu.matmul %45, %47, %cst_49 {dimension_numbers = #tpu.dot_dimension_numbers<[1], [0], [0], [1], [0, 0, 1, 1], [], []>} : vector<256x128xbf16>, vector<128x128xbf16>, vector<256x128xf32> -> vector<256x128xf32>
    %49 = arith.addf %43, %48 : vector<256x128xf32>
    %c1_50 = arith.constant 1 : index
    %c9_51 = arith.constant 9 : index
    %c0_52 = arith.constant 0 : index
    %50 = vector.load %arg8[%c1_50, %c9_51, %c0_52] : memref<18x32x128xbf16, #tpu.memory_space<vmem>>, vector<16x16x128xbf16>
    %51 = vector.shape_cast %50 : vector<16x16x128xbf16> to vector<256x128xbf16>
    %c5 = arith.constant 5 : index
    %c0_53 = arith.constant 0 : index
    %c0_54 = arith.constant 0 : index
    %52 = vector.load %arg4[%c5, %c0_53, %c0_54] : memref<9x128x128xbf16, #tpu.memory_space<vmem>>, vector<1x128x128xbf16>
    %53 = vector.shape_cast %52 : vector<1x128x128xbf16> to vector<128x128xbf16>
    %cst_55 = arith.constant dense<0.000000e+00> : vector<256x128xf32>
    %54 = tpu.matmul %51, %53, %cst_55 {dimension_numbers = #tpu.dot_dimension_numbers<[1], [0], [0], [1], [0, 0, 1, 1], [], []>} : vector<256x128xbf16>, vector<128x128xbf16>, vector<256x128xf32> -> vector<256x128xf32>
    %55 = arith.addf %49, %54 : vector<256x128xf32>
    %c2_56 = arith.constant 2 : index
    %c7_57 = arith.constant 7 : index
    %c0_58 = arith.constant 0 : index
    %56 = vector.load %arg8[%c2_56, %c7_57, %c0_58] : memref<18x32x128xbf16, #tpu.memory_space<vmem>>, vector<16x16x128xbf16>
    %57 = vector.shape_cast %56 : vector<16x16x128xbf16> to vector<256x128xbf16>
    %c6 = arith.constant 6 : index
    %c0_59 = arith.constant 0 : index
    %c0_60 = arith.constant 0 : index
    %58 = vector.load %arg4[%c6, %c0_59, %c0_60] : memref<9x128x128xbf16, #tpu.memory_space<vmem>>, vector<1x128x128xbf16>
    %59 = vector.shape_cast %58 : vector<1x128x128xbf16> to vector<128x128xbf16>
    %cst_61 = arith.constant dense<0.000000e+00> : vector<256x128xf32>
    %60 = tpu.matmul %57, %59, %cst_61 {dimension_numbers = #tpu.dot_dimension_numbers<[1], [0], [0], [1], [0, 0, 1, 1], [], []>} : vector<256x128xbf16>, vector<128x128xbf16>, vector<256x128xf32> -> vector<256x128xf32>
    %61 = arith.addf %55, %60 : vector<256x128xf32>
    %c2_62 = arith.constant 2 : index
    %c8_63 = arith.constant 8 : index
    %c0_64 = arith.constant 0 : index
    %62 = vector.load %arg8[%c2_62, %c8_63, %c0_64] : memref<18x32x128xbf16, #tpu.memory_space<vmem>>, vector<16x16x128xbf16>
    %63 = vector.shape_cast %62 : vector<16x16x128xbf16> to vector<256x128xbf16>
    %c7_65 = arith.constant 7 : index
    %c0_66 = arith.constant 0 : index
    %c0_67 = arith.constant 0 : index
    %64 = vector.load %arg4[%c7_65, %c0_66, %c0_67] : memref<9x128x128xbf16, #tpu.memory_space<vmem>>, vector<1x128x128xbf16>
    %65 = vector.shape_cast %64 : vector<1x128x128xbf16> to vector<128x128xbf16>
    %cst_68 = arith.constant dense<0.000000e+00> : vector<256x128xf32>
    %66 = tpu.matmul %63, %65, %cst_68 {dimension_numbers = #tpu.dot_dimension_numbers<[1], [0], [0], [1], [0, 0, 1, 1], [], []>} : vector<256x128xbf16>, vector<128x128xbf16>, vector<256x128xf32> -> vector<256x128xf32>
    %67 = arith.addf %61, %66 : vector<256x128xf32>
    %c2_69 = arith.constant 2 : index
    %c9_70 = arith.constant 9 : index
    %c0_71 = arith.constant 0 : index
    %68 = vector.load %arg8[%c2_69, %c9_70, %c0_71] : memref<18x32x128xbf16, #tpu.memory_space<vmem>>, vector<16x16x128xbf16>
    %69 = vector.shape_cast %68 : vector<16x16x128xbf16> to vector<256x128xbf16>
    %c8_72 = arith.constant 8 : index
    %c0_73 = arith.constant 0 : index
    %c0_74 = arith.constant 0 : index
    %70 = vector.load %arg4[%c8_72, %c0_73, %c0_74] : memref<9x128x128xbf16, #tpu.memory_space<vmem>>, vector<1x128x128xbf16>
    %71 = vector.shape_cast %70 : vector<1x128x128xbf16> to vector<128x128xbf16>
    %cst_75 = arith.constant dense<0.000000e+00> : vector<256x128xf32>
    %72 = tpu.matmul %69, %71, %cst_75 {dimension_numbers = #tpu.dot_dimension_numbers<[1], [0], [0], [1], [0, 0, 1, 1], [], []>} : vector<256x128xbf16>, vector<128x128xbf16>, vector<256x128xf32> -> vector<256x128xf32>
    %73 = arith.addf %67, %72 : vector<256x128xf32>
    %74 = arith.truncf %73 : vector<256x128xf32> to vector<256x128xbf16>
    %c0_76 = arith.constant 0 : index
    %c0_77 = arith.constant 0 : index
    %c0_78 = arith.constant 0 : index
    %75 = vector.load %arg5[%c0_76, %c0_77, %c0_78] : memref<1x256x128xbf16, #tpu.memory_space<vmem>>, vector<1x256x128xbf16>
    %76 = vector.shape_cast %75 : vector<1x256x128xbf16> to vector<256x128xbf16>
    %77 = vector.shape_cast %74 : vector<256x128xbf16> to vector<1x256x128xbf16>
    tpu.vector_store %arg5[%c0_76, %c0_77, %c0_78], %77 {strides = array<i32>} : memref<1x256x128xbf16, #tpu.memory_space<vmem>>, vector<1x256x128xbf16>,
    %cst_79 = arith.constant dense<0.000000e+00> : vector<128xf32>
    %78 = vector.multi_reduction <add>, %73, %cst_79 [0] : vector<256x128xf32> to vector<128xf32>
    %79 = vector.shape_cast %78 : vector<128xf32> to vector<1x128xf32>
    %c0_80 = arith.constant 0 : index
    %c0_81 = arith.constant 0 : index
    %c0_82 = arith.constant 0 : index
    %80 = vector.load %arg6[%c0_80, %c0_81, %c0_82] : memref<1x1x128xf32, #tpu.memory_space<vmem>>, vector<1x1x128xf32>
    %81 = vector.shape_cast %80 : vector<1x1x128xf32> to vector<1x128xf32>
    %82 = vector.shape_cast %79 : vector<1x128xf32> to vector<1x1x128xf32>
    tpu.vector_store %arg6[%c0_80, %c0_81, %c0_82], %82 {strides = array<i32>} : memref<1x1x128xf32, #tpu.memory_space<vmem>>, vector<1x1x128xf32>,
    %83 = arith.mulf %73, %73 : vector<256x128xf32>
    %cst_83 = arith.constant dense<0.000000e+00> : vector<128xf32>
    %84 = vector.multi_reduction <add>, %83, %cst_83 [0] : vector<256x128xf32> to vector<128xf32>
    %85 = vector.shape_cast %84 : vector<128xf32> to vector<1x128xf32>
    %c0_84 = arith.constant 0 : index
    %c0_85 = arith.constant 0 : index
    %c0_86 = arith.constant 0 : index
    %86 = vector.load %arg7[%c0_84, %c0_85, %c0_86] : memref<1x1x128xf32, #tpu.memory_space<vmem>>, vector<1x1x128xf32>
    %87 = vector.shape_cast %86 : vector<1x1x128xf32> to vector<1x128xf32>
    %88 = vector.shape_cast %85 : vector<1x128xf32> to vector<1x1x128xf32>
    tpu.vector_store %arg7[%c0_84, %c0_85, %c0_86], %88 {strides = array<i32>} : memref<1x1x128xf32, #tpu.memory_space<vmem>>, vector<1x1x128xf32>,
    return
  }
  func.func @transform_0(%arg0: i32) -> (i32, i32, i32) {
    %c0_i32 = arith.constant 0 : i32
    %c0_i32_0 = arith.constant 0 : i32
    %c0_i32_1 = arith.constant 0 : i32
    return %arg0, %c0_i32, %c0_i32_0 : i32, i32, i32
  }
  func.func @transform_1(%arg0: i32) -> (i32, i32) {
    %c0_i32 = arith.constant 0 : i32
    %c0_i32_0 = arith.constant 0 : i32
    %c0_i32_1 = arith.constant 0 : i32
    return %c0_i32, %c0_i32_0 : i32, i32
  }
  func.func @transform_2(%arg0: i32) -> (i32, i32) {
    %c0_i32 = arith.constant 0 : i32
    %c0_i32_0 = arith.constant 0 : i32
    %c0_i32_1 = arith.constant 0 : i32
    return %c0_i32, %c0_i32_0 : i32, i32
  }
  func.func @transform_3(%arg0: i32) -> (i32, i32, i32) {
    %c0_i32 = arith.constant 0 : i32
    %c0_i32_0 = arith.constant 0 : i32
    %c0_i32_1 = arith.constant 0 : i32
    %c0_i32_2 = arith.constant 0 : i32
    return %c0_i32, %c0_i32_0, %c0_i32_1 : i32, i32, i32
  }
  func.func @transform_4(%arg0: i32) -> (i32, i32, i32) {
    %c0_i32 = arith.constant 0 : i32
    %c0_i32_0 = arith.constant 0 : i32
    %c0_i32_1 = arith.constant 0 : i32
    return %arg0, %c0_i32, %c0_i32_0 : i32, i32, i32
  }
  func.func @transform_5(%arg0: i32) -> (i32, i32, i32) {
    %c0_i32 = arith.constant 0 : i32
    %c0_i32_0 = arith.constant 0 : i32
    %c0_i32_1 = arith.constant 0 : i32
    return %arg0, %c0_i32, %c0_i32_0 : i32, i32, i32
  }
  func.func @transform_6(%arg0: i32) -> (i32, i32, i32) {
    %c0_i32 = arith.constant 0 : i32
    %c0_i32_0 = arith.constant 0 : i32
    %c0_i32_1 = arith.constant 0 : i32
    return %arg0, %c0_i32, %c0_i32_0 : i32, i32, i32
  }
}

</mosaic_0001>

<llo_original>
// kernel: basic_block_forward.2
$region0: #{basic_block_forward.2}
  #allocation0 [shape = 'u32[]', space=smem, size = 0x4, offset = 0x4, fixed_abs, tag = 'smem constant byte address 0x4 - core index']
  #allocation1 [shape = 'u32[144,128]{1,0:T(1,128)}', space=vmem, size = 0x12000, scoped, tag = 'internal scratch']
  #allocation2 [shape = 'bf16[18,32,128]{2,1,0:T(16,128)(2,1)}', space=vmem, size = 0x24000, scoped, tag = 'scratch operand']
  %s0 = inlined_call_operand.vmem [shape: bf16[2,256,128], index: 0, kind: input, shape index: {}]
  %s1 = inlined_call_operand.vmem [shape: bf16[9,128,128], index: 1, kind: input, shape index: {}]
  %s2 = inlined_call_operand.vmem [shape: bf16[2,256,128], index: 2, kind: output, shape index: {0}]
  %s3 = inlined_call_operand.vmem [shape: f32[2,1,128], index: 3, kind: output, shape index: {1}]
  %s4 = inlined_call_operand.vmem [shape: f32[2,1,128], index: 4, kind: output, shape index: {2}]
  %5 = xla_tuple %s2, %s3, %s4
  %s6 = sld [smem:[#allocation0]]
  $region57: #{basic_block_forward.2} parent=0
    _
  %s8 = ssub.s32 1, %s6
  %s9 = scalar_select 0, %s8, %s6
  loop: start=0, step=1, limit=4
  $region2: #{basic_block_forward.2} parent=0 // loop_pre_header
    _
  $region3: #{basic_block_forward.2} parent=0 // loop_header
    %s11 = sphi 0, %s15
    %p12 = scmp.ge.s32.totalorder %s11, 4
    %s21 = sphi 0, %s23
    %s24 = sphi 0, %s21
    %s25 = sphi 0, %s24
    %s41 = sphi 0, %s25
    %s45 = sphi 0, %s45
    %s47 = sphi 0, %s45
    %s48 = sphi 0, %s47
    %s62 = sphi 0, %s48
    %s68 = sphi 0, %s70
    %s71 = sphi 0, %s68
    %s72 = sphi 0, %s71
    %s88 = sphi 0, %s72
    %s94 = sphi 0, %s96
    %s97 = sphi 0, %s94
    %s98 = sphi 0, %s97
    %s114 = sphi 0, %s98
    %s120 = sphi 0, %s122
    %s123 = sphi 0, %s120
    %s124 = sphi 0, %s123
    %s140 = sphi 0, %s124
  $region4: #{basic_block_forward.2} parent=0 // loop_header_branch
    %14 = sbr.rel (%p12) target = $region8
  $region5: #{basic_block_forward.2} parent=0 // loop_body
    %s16 = ssub.s32 %s11, 1
    %s17 = ssub.s32 %s11, 2
    %s18 = sadd.s32 %s11, 1
    %s19 = ssub.s32 %s11, %s18
    %p20 = scmp.eq.s32.totalorder %s19, 0
    %s22 = sadd.s32 %s21, 1
    %s23 = scalar_select %p20, %s21, %s22
    %p26 = pneg %p20
    %p27 = scmp.eq.s32.totalorder %s11, 1
    %p28 = por %p26, %p27
    %p29 = scmp.ne.s32.totalorder %s21, %s24
    %p30 = scmp.eq.s32.totalorder %s11, 0
    %p31 = por %p29, %p30
    %p32 = scmp.ne.s32.totalorder %s21, %s24
    %p33 = scmp.eq.s32.totalorder %s16, 1
    %p34 = por %p32, %p33
    %p35 = scmp.ne.s32.totalorder %s24, %s25
    %p36 = scmp.eq.s32.totalorder %s16, 0
    %p37 = por %p35, %p36
    %p38 = scmp.ne.s32.totalorder %s24, %s25
    %p39 = scmp.eq.s32.totalorder %s17, 1
    %p40 = por %p38, %p39
    %p42 = scmp.ne.s32.totalorder %s25, %s41
    %p43 = scmp.eq.s32.totalorder %s17, 0
    %p44 = por %p42, %p43
    %s46 = sadd.s32 %s45, 1
    %p49 = scmp.eq.s32.totalorder %s11, 1
    %p50 = scmp.ne.s32.totalorder %s45, %s47
    %p51 = scmp.eq.s32.totalorder %s11, 0
    %p52 = por %p50, %p51
    %p53 = scmp.ne.s32.totalorder %s45, %s47
    %p54 = scmp.eq.s32.totalorder %s16, 1
    %p55 = por %p53, %p54
    %p56 = scmp.ne.s32.totalorder %s47, %s48
    %p57 = scmp.eq.s32.totalorder %s16, 0
    %p58 = por %p56, %p57
    %p59 = scmp.ne.s32.totalorder %s47, %s48
    %p60 = scmp.eq.s32.totalorder %s17, 1
    %p61 = por %p59, %p60
    %p63 = scmp.ne.s32.totalorder %s48, %s62
    %p64 = scmp.eq.s32.totalorder %s17, 0
    %p65 = por %p63, %p64
    %s66 = ssub.s32 %s11, %s18
    %p67 = scmp.eq.s32.totalorder %s66, 0
    %s69 = sadd.s32 %s68, 1
    %s70 = scalar_select %p67, %s68, %s69
    %p73 = pneg %p67
    %p74 = scmp.eq.s32.totalorder %s11, 1
    %p75 = por %p73, %p74
    %p76 = scmp.ne.s32.totalorder %s68, %s71
    %p77 = scmp.eq.s32.totalorder %s11, 0
    %p78 = por %p76, %p77
    %p79 = scmp.ne.s32.totalorder %s68, %s71
    %p80 = scmp.eq.s32.totalorder %s16, 1
    %p81 = por %p79, %p80
    %p82 = scmp.ne.s32.totalorder %s71, %s72
    %p83 = scmp.eq.s32.totalorder %s16, 0
    %p84 = por %p82, %p83
    %p85 = scmp.ne.s32.totalorder %s71, %s72
    %p86 = scmp.eq.s32.totalorder %s17, 1
    %p87 = por %p85, %p86
    %p89 = scmp.ne.s32.totalorder %s72, %s88
    %p90 = scmp.eq.s32.totalorder %s17, 0
    %p91 = por %p89, %p90
    %s92 = ssub.s32 %s11, %s18
    %p93 = scmp.eq.s32.totalorder %s92, 0
    %s95 = sadd.s32 %s94, 1
    %s96 = scalar_select %p93, %s94, %s95
    %p99 = pneg %p93
    %p100 = scmp.eq.s32.totalorder %s11, 1
    %p101 = por %p99, %p100
    %p102 = scmp.ne.s32.totalorder %s94, %s97
    %p103 = scmp.eq.s32.totalorder %s11, 0
    %p104 = por %p102, %p103
    %p105 = scmp.ne.s32.totalorder %s94, %s97
    %p106 = scmp.eq.s32.totalorder %s16, 1
    %p107 = por %p105, %p106
    %p108 = scmp.ne.s32.totalorder %s97, %s98
    %p109 = scmp.eq.s32.totalorder %s16, 0
    %p110 = por %p108, %p109
    %p111 = scmp.ne.s32.totalorder %s97, %s98
    %p112 = scmp.eq.s32.totalorder %s17, 1
    %p113 = por %p111, %p112
    %p115 = scmp.ne.s32.totalorder %s98, %s114
    %p116 = scmp.eq.s32.totalorder %s17, 0
    %p117 = por %p115, %p116
    %s118 = ssub.s32 %s11, %s18
    %p119 = scmp.eq.s32.totalorder %s118, 0
    %s121 = sadd.s32 %s120, 1
    %s122 = scalar_select %p119, %s120, %s121
    %p125 = pneg %p119
    %p126 = scmp.eq.s32.totalorder %s11, 1
    %p127 = por %p125, %p126
    %p128 = scmp.ne.s32.totalorder %s120, %s123
    %p129 = scmp.eq.s32.totalorder %s11, 0
    %p130 = por %p128, %p129
    %p131 = scmp.ne.s32.totalorder %s120, %s123
    %p132 = scmp.eq.s32.totalorder %s16, 1
    %p133 = por %p131, %p132
    %p134 = scmp.ne.s32.totalorder %s123, %s124
    %p135 = scmp.eq.s32.totalorder %s16, 0
    %p136 = por %p134, %p135
    %p137 = scmp.ne.s32.totalorder %s123, %s124
    %p138 = scmp.eq.s32.totalorder %s17, 1
    %p139 = por %p137, %p138
    %p141 = scmp.ne.s32.totalorder %s124, %s140
    %p142 = scmp.eq.s32.totalorder %s17, 0
    %p143 = por %p141, %p142
    %p144 = scmp.le.s32.totalorder 1, %s11
    %p145 = scmp.lt.s32.totalorder %s11, 3
    %p146 = pnand %p144, %p145
    %p147 = pneg %p146
    // Predicated region
    $region9: #{basic_block_forward.2} parent=5 // pred_check
      _
    $region10: #{basic_block_forward.2} parent=5 // pred_check_branch
      %149 = sbr.rel (%p146) target = $region12
    $region11: #{basic_block_forward.2} parent=5 // pred_region
      %s150 = ssub.s32 %s11, 1
      // Predicated region
      $region13: #{basic_block_forward.2} parent=11 // pred_check
        %p151 = pneg %p58
      $region14: #{basic_block_forward.2} parent=11 // pred_check_branch
        %153 = sbr.rel (%p151) target = $region16
      $region15: #{basic_block_forward.2} parent=11 // pred_region
        _
      $region16: #{basic_block_forward.2} parent=11 // pred_fallthru
        _
    $region12: #{basic_block_forward.2} parent=5 // pred_fallthru
      _
    %p154 = scmp.lt.s32.totalorder %s11, 2
    // Predicated region
    $region17: #{basic_block_forward.2} parent=5 // pred_check
      %p155 = pneg %p154
    $region18: #{basic_block_forward.2} parent=5 // pred_check_branch
      %157 = sbr.rel (%p155) target = $region20
    $region19: #{basic_block_forward.2} parent=5 // pred_region
      // Predicated region
      $region21: #{basic_block_forward.2} parent=19 // pred_check
        %p158 = pneg %p31
      $region22: #{basic_block_forward.2} parent=19 // pred_check_branch
        %160 = sbr.rel (%p158) target = $region24
      $region23: #{basic_block_forward.2} parent=19 // pred_region
        %p161 = scmp.lt.s32.totalorder %s11, 1
        %s162 = scalar_select %p161, %s11, 1
        %s163 = smul.addr %s162, 32
        %s164 = smul.addr %s163, 4
        %s165 = scalar_lea.vmem %s0, %s164
      $region24: #{basic_block_forward.2} parent=19 // pred_fallthru
        _
    $region20: #{basic_block_forward.2} parent=5 // pred_fallthru
      _
    %p166 = scmp.le.s32.totalorder 1, %s11
    %p167 = scmp.lt.s32.totalorder %s11, 3
    %p168 = pnand %p166, %p167
    %p169 = pneg %p168
    // Predicated region
    $region25: #{basic_block_forward.2} parent=5 // pred_check
      _
    $region26: #{basic_block_forward.2} parent=5 // pred_check_branch
      %171 = sbr.rel (%p168) target = $region28
    $region27: #{basic_block_forward.2} parent=5 // pred_region
      %s172 = ssub.s32 %s11, 1
      %p173 = scmp.lt.s32.totalorder %s16, 1
      %s174 = scalar_select %p173, %s16, 1
      %s175 = smul.addr %s174, 32
      %s176 = smul.addr %s175, 4
      %s177 = scalar_lea.vmem %s0, %s176
      %p178 = pneg %p37
      %p179 = pneg %p34
      %p180 = pneg %p58
      %p181 = pneg %p55
      %p182 = pneg %p84
      %p183 = pneg %p81
      %p184 = scmp.lt.s32.totalorder %s16, 1
      %s185 = scalar_select %p184, %s16, 1
      %s186 = smul.addr %s185, 32
      %s187 = smul.addr %s186, 4
      %s188 = scalar_lea.vmem %s2, %s187
      %p189 = pneg %p110
      %p190 = pneg %p107
      %p191 = scmp.lt.s32.totalorder %s16, 1
      %s192 = scalar_select %p191, %s16, 1
      %s193 = scalar_lea.vmem %s3, %s192
      %p194 = pneg %p136
      %p195 = pneg %p133
      %p196 = scmp.lt.s32.totalorder %s16, 1
      %s197 = scalar_select %p196, %s16, 1
      %s198 = scalar_lea.vmem %s4, %s197
      %p199 = scmp.lt.s32.totalorder %s16, 1
      %s200 = scalar_select %p199, %s16, 1
      %s201 = smul.addr %s200, 32
      %s202 = smul.addr %s201, 4
      %s203 = scalar_lea.vmem %s0, %s202
      %p204 = scmp.lt.s32.totalorder %s16, 1
      %s205 = scalar_select %p204, %s16, 1
      %s206 = smul.addr %s205, 32
      %s207 = smul.addr %s206, 4
      %s208 = scalar_lea.vmem %s2, %s207
      %p209 = scmp.lt.s32.totalorder %s16, 1
      %s210 = scalar_select %p209, %s16, 1
      %s211 = scalar_lea.vmem %s3, %s210
      %p212 = scmp.lt.s32.totalorder %s16, 1
      %s213 = scalar_select %p212, %s16, 1
      %s214 = scalar_lea.vmem %s4, %s213
      %v216 = vld [vmem:[%s203] sm:$0xf]
      %v217 = vld [vmem:[%s203 + $0x4] sm:$0xf]
      %v218 = vld [vmem:[%s203 + $0x8] sm:$0xf]
      %v219 = vld [vmem:[%s203 + $0xc] sm:$0xf]
      %v220 = vld [vmem:[%s203 + $0x10] sm:$0xf]
      %v221 = vld [vmem:[%s203 + $0x14] sm:$0xf]
      %v222 = vld [vmem:[%s203 + $0x18] sm:$0xf]
      %v223 = vld [vmem:[%s203 + $0x1c] sm:$0xf]
      %v224 = vld [vmem:[%s203 + $0x20] sm:$0xf]
      %v225 = vld [vmem:[%s203 + $0x24] sm:$0xf]
      %v226 = vld [vmem:[%s203 + $0x28] sm:$0xf]
      %v227 = vld [vmem:[%s203 + $0x2c] sm:$0xf]
      %v228 = vld [vmem:[%s203 + $0x30] sm:$0xf]
      %v229 = vld [vmem:[%s203 + $0x34] sm:$0xf]
      %v230 = vld [vmem:[%s203 + $0x38] sm:$0xf]
      %v231 = vld [vmem:[%s203 + $0x3c] sm:$0xf]
      %v232 = vld [vmem:[%s203 + $0x40] sm:$0xf]
      %v233 = vld [vmem:[%s203 + $0x44] sm:$0xf]
      %v234 = vld [vmem:[%s203 + $0x48] sm:$0xf]
      %v235 = vld [vmem:[%s203 + $0x4c] sm:$0xf]
      %v236 = vld [vmem:[%s203 + $0x50] sm:$0xf]
      %v237 = vld [vmem:[%s203 + $0x54] sm:$0xf]
      %v238 = vld [vmem:[%s203 + $0x58] sm:$0xf]
      %v239 = vld [vmem:[%s203 + $0x5c] sm:$0xf]
      %v240 = vld [vmem:[%s203 + $0x60] sm:$0xf]
      %v241 = vld [vmem:[%s203 + $0x64] sm:$0xf]
      %v242 = vld [vmem:[%s203 + $0x68] sm:$0xf]
      %v243 = vld [vmem:[%s203 + $0x6c] sm:$0xf]
      %v244 = vld [vmem:[%s203 + $0x70] sm:$0xf]
      %v245 = vld [vmem:[%s203 + $0x74] sm:$0xf]
      %v246 = vld [vmem:[%s203 + $0x78] sm:$0xf]
      %v247 = vld [vmem:[%s203 + $0x7c] sm:$0xf]
      %248 = vst [vmem:[#allocation2] sm:$0xff] 0
      %249 = vst [vmem:[#allocation2 + $0x8] sm:$0xff] 0
      %s250 = scalar_lea.vmem [#allocation2], 272
      %251 = vst [vmem:[%s250] sm:$0xff] 0
      %252 = vst [vmem:[%s250 + $0x8] sm:$0xff] 0
      %s253 = scalar_lea.vmem [#allocation2], 16
      %254 = vst [vmem:[%s253] sm:$0xf] 0
      %255 = vst [vmem:[%s253 + $0x10] sm:$0xf] 0
      %256 = vst [vmem:[%s253 + $0x20] sm:$0xf] 0
      %257 = vst [vmem:[%s253 + $0x30] sm:$0xf] 0
      %258 = vst [vmem:[%s253 + $0x40] sm:$0xf] 0
      %259 = vst [vmem:[%s253 + $0x50] sm:$0xf] 0
      %260 = vst [vmem:[%s253 + $0x60] sm:$0xf] 0
      %261 = vst [vmem:[%s253 + $0x70] sm:$0xf] 0
      %262 = vst [vmem:[%s253 + $0x80] sm:$0xf] 0
      %263 = vst [vmem:[%s253 + $0x90] sm:$0xf] 0
      %264 = vst [vmem:[%s253 + $0xa0] sm:$0xf] 0
      %265 = vst [vmem:[%s253 + $0xb0] sm:$0xf] 0
      %266 = vst [vmem:[%s253 + $0xc0] sm:$0xf] 0
      %267 = vst [vmem:[%s253 + $0xd0] sm:$0xf] 0
      %268 = vst [vmem:[%s253 + $0xe0] sm:$0xf] 0
      %269 = vst [vmem:[%s253 + $0xf0] sm:$0xf] 0
      %270 = vst [vmem:[%s253 + $0x8] sm:$0xf0] 0
      %271 = vst [vmem:[%s253 + $0x18] sm:$0xf0] 0
      %272 = vst [vmem:[%s253 + $0x28] sm:$0xf0] 0
      %273 = vst [vmem:[%s253 + $0x38] sm:$0xf0] 0
      %274 = vst [vmem:[%s253 + $0x48] sm:$0xf0] 0
      %275 = vst [vmem:[%s253 + $0x58] sm:$0xf0] 0
      %276 = vst [vmem:[%s253 + $0x68] sm:$0xf0] 0
      %277 = vst [vmem:[%s253 + $0x78] sm:$0xf0] 0
      %278 = vst [vmem:[%s253 + $0x88] sm:$0xf0] 0
      %279 = vst [vmem:[%s253 + $0x98] sm:$0xf0] 0
      %280 = vst [vmem:[%s253 + $0xa8] sm:$0xf0] 0
      %281 = vst [vmem:[%s253 + $0xb8] sm:$0xf0] 0
      %282 = vst [vmem:[%s253 + $0xc8] sm:$0xf0] 0
      %283 = vst [vmem:[%s253 + $0xd8] sm:$0xf0] 0
      %284 = vst [vmem:[%s253 + $0xe8] sm:$0xf0] 0
      %285 = vst [vmem:[%s253 + $0xf8] sm:$0xf0] 0
      %v318 = vunpack.c.l.b16 %v216
      %v319 = vunpack.c.l.b16 %v217
      %v320 = vunpack.c.l.b16 %v218
      %v321 = vunpack.c.l.b16 %v219
      %v322 = vunpack.c.l.b16 %v220
      %v323 = vunpack.c.l.b16 %v221
      %v324 = vunpack.c.l.b16 %v222
      %v325 = vunpack.c.l.b16 %v223
      %v326 = vunpack.c.l.b16 %v224
      %v327 = vunpack.c.l.b16 %v225
      %v328 = vunpack.c.l.b16 %v226
      %v329 = vunpack.c.l.b16 %v227
      %v330 = vunpack.c.l.b16 %v228
      %v331 = vunpack.c.l.b16 %v229
      %v332 = vunpack.c.l.b16 %v230
      %v333 = vunpack.c.l.b16 %v231
      %v334 = vunpack.c.l.b16 %v232
      %v335 = vunpack.c.l.b16 %v233
      %v336 = vunpack.c.l.b16 %v234
      %v337 = vunpack.c.l.b16 %v235
      %v338 = vunpack.c.l.b16 %v236
      %v339 = vunpack.c.l.b16 %v237
      %v340 = vunpack.c.l.b16 %v238
      %v341 = vunpack.c.l.b16 %v239
      %v342 = vunpack.c.l.b16 %v240
      %v343 = vunpack.c.l.b16 %v241
      %v344 = vunpack.c.l.b16 %v242
      %v345 = vunpack.c.l.b16 %v243
      %v346 = vunpack.c.l.b16 %v244
      %v347 = vunpack.c.l.b16 %v245
      %v348 = vunpack.c.l.b16 %v246
      %v349 = vunpack.c.l.b16 %v247
      %v350 = vpack.c.b16 %v318, %v318
      %v351 = vpack.c.b16 %v319, %v319
      %v352 = vpack.c.b16 %v320, %v320
      %v353 = vpack.c.b16 %v321, %v321
      %v354 = vpack.c.b16 %v322, %v322
      %v355 = vpack.c.b16 %v323, %v323
      %v356 = vpack.c.b16 %v324, %v324
      %v357 = vpack.c.b16 %v325, %v325
      %v358 = vpack.c.b16 %v326, %v326
      %v359 = vpack.c.b16 %v327, %v327
      %v360 = vpack.c.b16 %v328, %v328
      %v361 = vpack.c.b16 %v329, %v329
      %v362 = vpack.c.b16 %v330, %v330
      %v363 = vpack.c.b16 %v331, %v331
      %v364 = vpack.c.b16 %v332, %v332
      %v365 = vpack.c.b16 %v333, %v333
      %v366 = vpack.c.b16 %v334, %v334
      %v367 = vpack.c.b16 %v335, %v335
      %v368 = vpack.c.b16 %v336, %v336
      %v369 = vpack.c.b16 %v337, %v337
      %v370 = vpack.c.b16 %v338, %v338
      %v371 = vpack.c.b16 %v339, %v339
      %v372 = vpack.c.b16 %v340, %v340
      %v373 = vpack.c.b16 %v341, %v341
      %v374 = vpack.c.b16 %v342, %v342
      %v375 = vpack.c.b16 %v343, %v343
      %v376 = vpack.c.b16 %v344, %v344
      %v377 = vpack.c.b16 %v345, %v345
      %v378 = vpack.c.b16 %v346, %v346
      %v379 = vpack.c.b16 %v347, %v347
      %v380 = vpack.c.b16 %v348, %v348
      %v381 = vpack.c.b16 %v349, %v349
      %414 = vst [vmem:[%s253] sm:$0xf0] %v350
      %415 = vst [vmem:[%s253 + $0x8] sm:$0xf] %v351
      %416 = vst [vmem:[%s253 + $0x10] sm:$0xf0] %v352
      %417 = vst [vmem:[%s253 + $0x18] sm:$0xf] %v353
      %418 = vst [vmem:[%s253 + $0x20] sm:$0xf0] %v354
      %419 = vst [vmem:[%s253 + $0x28] sm:$0xf] %v355
      %420 = vst [vmem:[%s253 + $0x30] sm:$0xf0] %v356
      %421 = vst [vmem:[%s253 + $0x38] sm:$0xf] %v357
      %422 = vst [vmem:[%s253 + $0x40] sm:$0xf0] %v358
      %423 = vst [vmem:[%s253 + $0x48] sm:$0xf] %v359
      %424 = vst [vmem:[%s253 + $0x50] sm:$0xf0] %v360
      %425 = vst [vmem:[%s253 + $0x58] sm:$0xf] %v361
      %426 = vst [vmem:[%s253 + $0x60] sm:$0xf0] %v362
      %427 = vst [vmem:[%s253 + $0x68] sm:$0xf] %v363
      %428 = vst [vmem:[%s253 + $0x70] sm:$0xf0] %v364
      %429 = vst [vmem:[%s253 + $0x78] sm:$0xf] %v365
      %430 = vst [vmem:[%s253 + $0x80] sm:$0xf0] %v366
      %431 = vst [vmem:[%s253 + $0x88] sm:$0xf] %v367
      %432 = vst [vmem:[%s253 + $0x90] sm:$0xf0] %v368
      %433 = vst [vmem:[%s253 + $0x98] sm:$0xf] %v369
      %434 = vst [vmem:[%s253 + $0xa0] sm:$0xf0] %v370
      %435 = vst [vmem:[%s253 + $0xa8] sm:$0xf] %v371
      %436 = vst [vmem:[%s253 + $0xb0] sm:$0xf0] %v372
      %437 = vst [vmem:[%s253 + $0xb8] sm:$0xf] %v373
      %438 = vst [vmem:[%s253 + $0xc0] sm:$0xf0] %v374
      %439 = vst [vmem:[%s253 + $0xc8] sm:$0xf] %v375
      %440 = vst [vmem:[%s253 + $0xd0] sm:$0xf0] %v376
      %441 = vst [vmem:[%s253 + $0xd8] sm:$0xf] %v377
      %442 = vst [vmem:[%s253 + $0xe0] sm:$0xf0] %v378
      %443 = vst [vmem:[%s253 + $0xe8] sm:$0xf] %v379
      %444 = vst [vmem:[%s253 + $0xf0] sm:$0xf0] %v380
      %445 = vst [vmem:[%s253 + $0xf8] sm:$0xf] %v381
      %v446 = vld [vmem:[#allocation2] sm:$0xf8]
      %v447 = vld [vmem:[#allocation2 + $0x8] sm:$0xf]
      %v448 = vld [vmem:[#allocation2 + $0x10] sm:$0xf8]
      %v449 = vld [vmem:[#allocation2 + $0x18] sm:$0xf]
      %v450 = vld [vmem:[#allocation2 + $0x20] sm:$0xf8]
      %v451 = vld [vmem:[#allocation2 + $0x28] sm:$0xf]
      %v452 = vld [vmem:[#allocation2 + $0x30] sm:$0xf8]
      %v453 = vld [vmem:[#allocation2 + $0x38] sm:$0xf]
      %v454 = vld [vmem:[#allocation2 + $0x40] sm:$0xf8]
      %v455 = vld [vmem:[#allocation2 + $0x48] sm:$0xf]
      %v456 = vld [vmem:[#allocation2 + $0x50] sm:$0xf8]
      %v457 = vld [vmem:[#allocation2 + $0x58] sm:$0xf]
      %v458 = vld [vmem:[#allocation2 + $0x60] sm:$0xf8]
      %v459 = vld [vmem:[#allocation2 + $0x68] sm:$0xf]
      %v460 = vld [vmem:[#allocation2 + $0x70] sm:$0xf8]
      %v461 = vld [vmem:[#allocation2 + $0x78] sm:$0xf]
      %v462 = vld [vmem:[#allocation2 + $0x80] sm:$0xf8]
      %v463 = vld [vmem:[#allocation2 + $0x88] sm:$0xf]
      %v464 = vld [vmem:[#allocation2 + $0x90] sm:$0xf8]
      %v465 = vld [vmem:[#allocation2 + $0x98] sm:$0xf]
      %v466 = vld [vmem:[#allocation2 + $0xa0] sm:$0xf8]
      %v467 = vld [vmem:[#allocation2 + $0xa8] sm:$0xf]
      %v468 = vld [vmem:[#allocation2 + $0xb0] sm:$0xf8]
      %v469 = vld [vmem:[#allocation2 + $0xb8] sm:$0xf]
      %v470 = vld [vmem:[#allocation2 + $0xc0] sm:$0xf8]
      %v471 = vld [vmem:[#allocation2 + $0xc8] sm:$0xf]
      %v472 = vld [vmem:[#allocation2 + $0xd0] sm:$0xf8]
      %v473 = vld [vmem:[#allocation2 + $0xd8] sm:$0xf]
      %v474 = vld [vmem:[#allocation2 + $0xe0] sm:$0xf8]
      %v475 = vld [vmem:[#allocation2 + $0xe8] sm:$0xf]
      %v476 = vld [vmem:[#allocation2 + $0xf0] sm:$0xf8]
      %v477 = vld [vmem:[#allocation2 + $0xf8] sm:$0xf]
      %vm478 = vsmask.f32 4352
      %v480 = vshrl.u32 %v446, 16
      %v482 = vrot.slane %v480, 3
      %v483 = vshll.u32 %v446, 16
      %v485 = vrot.slane %v483, 4
      %v486 = vor.u32 %v482, %v485
      %v488 = vshrl.u32 %v447, 16
      %v490 = vrot.slane %v488, 3
      %v491 = vshll.u32 %v447, 16
      %v493 = vrot.slane %v491, 4
      %v494 = vor.u32 %v490, %v493
      %v495 = vsel %vm478, %v486, %v494
      %v497 = vshrl.u32 %v448, 16
      %v499 = vrot.slane %v497, 3
      %v500 = vshll.u32 %v448, 16
      %v502 = vrot.slane %v500, 4
      %v503 = vor.u32 %v499, %v502
      %v505 = vshrl.u32 %v449, 16
      %v507 = vrot.slane %v505, 3
      %v508 = vshll.u32 %v449, 16
      %v510 = vrot.slane %v508, 4
      %v511 = vor.u32 %v507, %v510
      %v512 = vsel %vm478, %v503, %v511
      %v514 = vshrl.u32 %v450, 16
      %v516 = vrot.slane %v514, 3
      %v517 = vshll.u32 %v450, 16
      %v519 = vrot.slane %v517, 4
      %v520 = vor.u32 %v516, %v519
      %v522 = vshrl.u32 %v451, 16
      %v524 = vrot.slane %v522, 3
      %v525 = vshll.u32 %v451, 16
      %v527 = vrot.slane %v525, 4
      %v528 = vor.u32 %v524, %v527
      %v529 = vsel %vm478, %v520, %v528
      %v531 = vshrl.u32 %v452, 16
      %v533 = vrot.slane %v531, 3
      %v534 = vshll.u32 %v452, 16
      %v536 = vrot.slane %v534, 4
      %v537 = vor.u32 %v533, %v536
      %v539 = vshrl.u32 %v453, 16
      %v541 = vrot.slane %v539, 3
      %v542 = vshll.u32 %v453, 16
      %v544 = vrot.slane %v542, 4
      %v545 = vor.u32 %v541, %v544
      %v546 = vsel %vm478, %v537, %v545
      %v548 = vshrl.u32 %v454, 16
      %v550 = vrot.slane %v548, 3
      %v551 = vshll.u32 %v454, 16
      %v553 = vrot.slane %v551, 4
      %v554 = vor.u32 %v550, %v553
      %v556 = vshrl.u32 %v455, 16
      %v558 = vrot.slane %v556, 3
      %v559 = vshll.u32 %v455, 16
      %v561 = vrot.slane %v559, 4
      %v562 = vor.u32 %v558, %v561
      %v563 = vsel %vm478, %v554, %v562
      %v565 = vshrl.u32 %v456, 16
      %v567 = vrot.slane %v565, 3
      %v568 = vshll.u32 %v456, 16
      %v570 = vrot.slane %v568, 4
      %v571 = vor.u32 %v567, %v570
      %v573 = vshrl.u32 %v457, 16
      %v575 = vrot.slane %v573, 3
      %v576 = vshll.u32 %v457, 16
      %v578 = vrot.slane %v576, 4
      %v579 = vor.u32 %v575, %v578
      %v580 = vsel %vm478, %v571, %v579
      %v582 = vshrl.u32 %v458, 16
      %v584 = vrot.slane %v582, 3
      %v585 = vshll.u32 %v458, 16
      %v587 = vrot.slane %v585, 4
      %v588 = vor.u32 %v584, %v587
      %v590 = vshrl.u32 %v459, 16
      %v592 = vrot.slane %v590, 3
      %v593 = vshll.u32 %v459, 16
      %v595 = vrot.slane %v593, 4
      %v596 = vor.u32 %v592, %v595
      %v597 = vsel %vm478, %v588, %v596
      %v599 = vshrl.u32 %v460, 16
      %v601 = vrot.slane %v599, 3
      %v602 = vshll.u32 %v460, 16
      %v604 = vrot.slane %v602, 4
      %v605 = vor.u32 %v601, %v604
      %v607 = vshrl.u32 %v461, 16
      %v609 = vrot.slane %v607, 3
      %v610 = vshll.u32 %v461, 16
      %v612 = vrot.slane %v610, 4
      %v613 = vor.u32 %v609, %v612
      %v614 = vsel %vm478, %v605, %v613
      %v616 = vshrl.u32 %v462, 16
      %v618 = vrot.slane %v616, 3
      %v619 = vshll.u32 %v462, 16
      %v621 = vrot.slane %v619, 4
      %v622 = vor.u32 %v618, %v621
      %v624 = vshrl.u32 %v463, 16
      %v626 = vrot.slane %v624, 3
      %v627 = vshll.u32 %v463, 16
      %v629 = vrot.slane %v627, 4
      %v630 = vor.u32 %v626, %v629
      %v631 = vsel %vm478, %v622, %v630
      %v633 = vshrl.u32 %v464, 16
      %v635 = vrot.slane %v633, 3
      %v636 = vshll.u32 %v464, 16
      %v638 = vrot.slane %v636, 4
      %v639 = vor.u32 %v635, %v638
      %v641 = vshrl.u32 %v465, 16
      %v643 = vrot.slane %v641, 3
      %v644 = vshll.u32 %v465, 16
      %v646 = vrot.slane %v644, 4
      %v647 = vor.u32 %v643, %v646
      %v648 = vsel %vm478, %v639, %v647
      %v650 = vshrl.u32 %v466, 16
      %v652 = vrot.slane %v650, 3
      %v653 = vshll.u32 %v466, 16
      %v655 = vrot.slane %v653, 4
      %v656 = vor.u32 %v652, %v655
      %v658 = vshrl.u32 %v467, 16
      %v660 = vrot.slane %v658, 3
      %v661 = vshll.u32 %v467, 16
      %v663 = vrot.slane %v661, 4
      %v664 = vor.u32 %v660, %v663
      %v665 = vsel %vm478, %v656, %v664
      %v667 = vshrl.u32 %v468, 16
      %v669 = vrot.slane %v667, 3
      %v670 = vshll.u32 %v468, 16
      %v672 = vrot.slane %v670, 4
      %v673 = vor.u32 %v669, %v672
      %v675 = vshrl.u32 %v469, 16
      %v677 = vrot.slane %v675, 3
      %v678 = vshll.u32 %v469, 16
      %v680 = vrot.slane %v678, 4
      %v681 = vor.u32 %v677, %v680
      %v682 = vsel %vm478, %v673, %v681
      %v684 = vshrl.u32 %v470, 16
      %v686 = vrot.slane %v684, 3
      %v687 = vshll.u32 %v470, 16
      %v689 = vrot.slane %v687, 4
      %v690 = vor.u32 %v686, %v689
      %v692 = vshrl.u32 %v471, 16
      %v694 = vrot.slane %v692, 3
      %v695 = vshll.u32 %v471, 16
      %v697 = vrot.slane %v695, 4
      %v698 = vor.u32 %v694, %v697
      %v699 = vsel %vm478, %v690, %v698
      %v701 = vshrl.u32 %v472, 16
      %v703 = vrot.slane %v701, 3
      %v704 = vshll.u32 %v472, 16
      %v706 = vrot.slane %v704, 4
      %v707 = vor.u32 %v703, %v706
      %v709 = vshrl.u32 %v473, 16
      %v711 = vrot.slane %v709, 3
      %v712 = vshll.u32 %v473, 16
      %v714 = vrot.slane %v712, 4
      %v715 = vor.u32 %v711, %v714
      %v716 = vsel %vm478, %v707, %v715
      %v718 = vshrl.u32 %v474, 16
      %v720 = vrot.slane %v718, 3
      %v721 = vshll.u32 %v474, 16
      %v723 = vrot.slane %v721, 4
      %v724 = vor.u32 %v720, %v723
      %v726 = vshrl.u32 %v475, 16
      %v728 = vrot.slane %v726, 3
      %v729 = vshll.u32 %v475, 16
      %v731 = vrot.slane %v729, 4
      %v732 = vor.u32 %v728, %v731
      %v733 = vsel %vm478, %v724, %v732
      %v735 = vshrl.u32 %v476, 16
      %v737 = vrot.slane %v735, 3
      %v738 = vshll.u32 %v476, 16
      %v740 = vrot.slane %v738, 4
      %v741 = vor.u32 %v737, %v740
      %v743 = vshrl.u32 %v477, 16
      %v745 = vrot.slane %v743, 3
      %v746 = vshll.u32 %v477, 16
      %v748 = vrot.slane %v746, 4
      %v749 = vor.u32 %v745, %v748
      %v750 = vsel %vm478, %v741, %v749
      %v767 = vld [vmem:[%s1] sm:$0xf]
      %v768 = vld [vmem:[%s1 + $0x4] sm:$0xf]
      %v769 = vld [vmem:[%s1 + $0x8] sm:$0xf]
      %v770 = vld [vmem:[%s1 + $0xc] sm:$0xf]
      %v771 = vld [vmem:[%s1 + $0x10] sm:$0xf]
      %v772 = vld [vmem:[%s1 + $0x14] sm:$0xf]
      %v773 = vld [vmem:[%s1 + $0x18] sm:$0xf]
      %v774 = vld [vmem:[%s1 + $0x1c] sm:$0xf]
      %v775 = vld [vmem:[%s1 + $0x20] sm:$0xf]
      %v776 = vld [vmem:[%s1 + $0x24] sm:$0xf]
      %v777 = vld [vmem:[%s1 + $0x28] sm:$0xf]
      %v778 = vld [vmem:[%s1 + $0x2c] sm:$0xf]
      %v779 = vld [vmem:[%s1 + $0x30] sm:$0xf]
      %v780 = vld [vmem:[%s1 + $0x34] sm:$0xf]
      %v781 = vld [vmem:[%s1 + $0x38] sm:$0xf]
      %v782 = vld [vmem:[%s1 + $0x3c] sm:$0xf]
      %v783 = vld [vmem:[#allocation2] sm:$0xf0]
      %v784 = vld [vmem:[#allocation2 + $0x10] sm:$0xf0]
      %v785 = vld [vmem:[#allocation2 + $0x20] sm:$0xf0]
      %v786 = vld [vmem:[#allocation2 + $0x30] sm:$0xf0]
      %v787 = vld [vmem:[#allocation2 + $0x40] sm:$0xf0]
      %v788 = vld [vmem:[#allocation2 + $0x50] sm:$0xf0]
      %v789 = vld [vmem:[#allocation2 + $0x60] sm:$0xf0]
      %v790 = vld [vmem:[#allocation2 + $0x70] sm:$0xf0]
      %v791 = vld [vmem:[#allocation2 + $0x80] sm:$0xf0]
      %v792 = vld [vmem:[#allocation2 + $0x90] sm:$0xf0]
      %v793 = vld [vmem:[#allocation2 + $0xa0] sm:$0xf0]
      %v794 = vld [vmem:[#allocation2 + $0xb0] sm:$0xf0]
      %v795 = vld [vmem:[#allocation2 + $0xc0] sm:$0xf0]
      %v796 = vld [vmem:[#allocation2 + $0xd0] sm:$0xf0]
      %v797 = vld [vmem:[#allocation2 + $0xe0] sm:$0xf0]
      %v798 = vld [vmem:[#allocation2 + $0xf0] sm:$0xf0]
      %vm831 = vcmask 1043456
      %v832 = vrot.slane %v783, 4
      %v833 = vrot.slane %v447, 4
      %v834 = vsel %vm831, %v832, %v833
      %v835 = vrot.slane %v784, 4
      %v836 = vrot.slane %v449, 4
      %v837 = vsel %vm831, %v835, %v836
      %v838 = vrot.slane %v785, 4
      %v839 = vrot.slane %v451, 4
      %v840 = vsel %vm831, %v838, %v839
      %v841 = vrot.slane %v786, 4
      %v842 = vrot.slane %v453, 4
      %v843 = vsel %vm831, %v841, %v842
      %v844 = vrot.slane %v787, 4
      %v845 = vrot.slane %v455, 4
      %v846 = vsel %vm831, %v844, %v845
      %v847 = vrot.slane %v788, 4
      %v848 = vrot.slane %v457, 4
      %v849 = vsel %vm831, %v847, %v848
      %v850 = vrot.slane %v789, 4
      %v851 = vrot.slane %v459, 4
      %v852 = vsel %vm831, %v850, %v851
      %v853 = vrot.slane %v790, 4
      %v854 = vrot.slane %v461, 4
      %v855 = vsel %vm831, %v853, %v854
      %v856 = vrot.slane %v791, 4
      %v857 = vrot.slane %v463, 4
      %v858 = vsel %vm831, %v856, %v857
      %v859 = vrot.slane %v792, 4
      %v860 = vrot.slane %v465, 4
      %v861 = vsel %vm831, %v859, %v860
      %v862 = vrot.slane %v793, 4
      %v863 = vrot.slane %v467, 4
      %v864 = vsel %vm831, %v862, %v863
      %v865 = vrot.slane %v794, 4
      %v866 = vrot.slane %v469, 4
      %v867 = vsel %vm831, %v865, %v866
      %v868 = vrot.slane %v795, 4
      %v869 = vrot.slane %v471, 4
      %v870 = vsel %vm831, %v868, %v869
      %v871 = vrot.slane %v796, 4
      %v872 = vrot.slane %v473, 4
      %v873 = vsel %vm831, %v871, %v872
      %v874 = vrot.slane %v797, 4
      %v875 = vrot.slane %v475, 4
      %v876 = vsel %vm831, %v874, %v875
      %v877 = vrot.slane %v798, 4
      %v878 = vrot.slane %v477, 4
      %v879 = vsel %vm831, %v877, %v878
      %s896 = scalar_lea.vmem %s1, 64
      %v897 = vld [vmem:[%s896] sm:$0xf]
      %v898 = vld [vmem:[%s896 + $0x4] sm:$0xf]
      %v899 = vld [vmem:[%s896 + $0x8] sm:$0xf]
      %v900 = vld [vmem:[%s896 + $0xc] sm:$0xf]
      %v901 = vld [vmem:[%s896 + $0x10] sm:$0xf]
      %v902 = vld [vmem:[%s896 + $0x14] sm:$0xf]
      %v903 = vld [vmem:[%s896 + $0x18] sm:$0xf]
      %v904 = vld [vmem:[%s896 + $0x1c] sm:$0xf]
      %v905 = vld [vmem:[%s896 + $0x20] sm:$0xf]
      %v906 = vld [vmem:[%s896 + $0x24] sm:$0xf]
      %v907 = vld [vmem:[%s896 + $0x28] sm:$0xf]
      %v908 = vld [vmem:[%s896 + $0x2c] sm:$0xf]
      %v909 = vld [vmem:[%s896 + $0x30] sm:$0xf]
      %v910 = vld [vmem:[%s896 + $0x34] sm:$0xf]
      %v911 = vld [vmem:[%s896 + $0x38] sm:$0xf]
      %v912 = vld [vmem:[%s896 + $0x3c] sm:$0xf]
      %v929 = vunpack.c.l.b16 %v897
      %v930 = vunpack.c.l.b16 %v898
      %v931 = vunpack.c.l.b16 %v899
      %v932 = vunpack.c.l.b16 %v900
      %v933 = vunpack.c.l.b16 %v901
      %v934 = vunpack.c.l.b16 %v902
      %v935 = vunpack.c.l.b16 %v903
      %v936 = vunpack.c.l.b16 %v904
      %v937 = vunpack.c.l.b16 %v905
      %v938 = vunpack.c.l.b16 %v906
      %v939 = vunpack.c.l.b16 %v907
      %v940 = vunpack.c.l.b16 %v908
      %v941 = vunpack.c.l.b16 %v909
      %v942 = vunpack.c.l.b16 %v910
      %v943 = vunpack.c.l.b16 %v911
      %v944 = vunpack.c.l.b16 %v912
      %v945 = vpack.c.b16 %v930, %v929
      %v946 = vpack.c.b16 %v932, %v931
      %v947 = vpack.c.b16 %v934, %v933
      %v948 = vpack.c.b16 %v936, %v935
      %v949 = vpack.c.b16 %v938, %v937
      %v950 = vpack.c.b16 %v940, %v939
      %v951 = vpack.c.b16 %v942, %v941
      %v952 = vpack.c.b16 %v944, %v943
      %961 = vmatprep.subr.bf16.mxu0 0
      %962 = vmatpush1.bf16.msra.mxu0 %v945
      %963 = vmatprep.subr.bf16.mxu0 0
      %964 = vmatpush1.bf16.msra.mxu0 %v946
      %965 = vmatprep.subr.bf16.mxu0 0
      %966 = vmatpush1.bf16.msra.mxu0 %v947
      %967 = vmatprep.subr.bf16.mxu0 0
      %968 = vmatpush1.bf16.msra.mxu0 %v948
      %969 = vmatprep.subr.bf16.mxu0 0
      %970 = vmatpush1.bf16.msra.mxu0 %v949
      %971 = vmatprep.subr.bf16.mxu0 0
      %972 = vmatpush1.bf16.msra.mxu0 %v950
      %973 = vmatprep.subr.bf16.mxu0 0
      %974 = vmatpush1.bf16.msra.mxu0 %v951
      %975 = vmatprep.subr.bf16.mxu0 0
      %976 = vmatpush1.bf16.msra.mxu0 %v952
      %977 = vmatprep.subr.bf16.mxu0 0
      %978 = vmatpush1.bf16.msra.mxu0 0
      %979 = vmatprep.subr.bf16.mxu0 0
      %980 = vmatpush1.bf16.msra.mxu0 0
      %981 = vmatprep.subr.bf16.mxu0 0
      %982 = vmatpush1.bf16.msra.mxu0 0
      %983 = vmatprep.subr.bf16.mxu0 0
      %984 = vmatpush1.bf16.msra.mxu0 0
      %985 = vmatprep.subr.bf16.mxu0 0
      %986 = vmatpush1.bf16.msra.mxu0 0
      %987 = vmatprep.subr.bf16.mxu0 0
      %988 = vmatpush1.bf16.msra.mxu0 0
      %989 = vmatprep.subr.bf16.mxu0 0
      %990 = vmatpush1.bf16.msra.mxu0 0
      %991 = vmatprep.subr.bf16.mxu0 0
      %992 = vmatpush1.bf16.msra.mxu0 0
      %993 = vmatprep.mubr.bf16.mxu0 0
      %994 = vmatmul.mubr.bf16.gmra.mrb[0].mxu0 %v834
      %v995 = vpop.f32.mrb[0].mxu0
      %v996 = vadd.f32 0.0, %v995
      %v997 = vpop.f32.mrb[0].mxu0
      %v998 = vpop.f32.mrb[0].mxu0
      %v999 = vadd.f32 0.0, %v998
      %v1000 = vpop.f32.mrb[0].mxu0
      %1001 = vmatprep.mubr.bf16.mxu0 0
      %1002 = vmatmul.mubr.bf16.gmra.mrb[0].mxu0 %v837
      %v1003 = vpop.f32.mrb[0].mxu0
      %v1004 = vadd.f32 0.0, %v1003
      %v1005 = vpop.f32.mrb[0].mxu0
      %v1006 = vpop.f32.mrb[0].mxu0
      %v1007 = vadd.f32 0.0, %v1006
      %v1008 = vpop.f32.mrb[0].mxu0
      %1009 = vmatprep.mubr.bf16.mxu0 0
      %1010 = vmatmul.mubr.bf16.gmra.mrb[0].mxu0 %v840
      %v1011 = vpop.f32.mrb[0].mxu0
      %v1012 = vadd.f32 0.0, %v1011
      %v1013 = vpop.f32.mrb[0].mxu0
      %v1014 = vpop.f32.mrb[0].mxu0
      %v1015 = vadd.f32 0.0, %v1014
      %v1016 = vpop.f32.mrb[0].mxu0
      %1017 = vmatprep.mubr.bf16.mxu0 0
      %1018 = vmatmul.mubr.bf16.gmra.mrb[0].mxu0 %v843
      %v1019 = vpop.f32.mrb[0].mxu0
      %v1020 = vadd.f32 0.0, %v1019
      %v1021 = vpop.f32.mrb[0].mxu0
      %v1022 = vpop.f32.mrb[0].mxu0
      %v1023 = vadd.f32 0.0, %v1022
      %v1024 = vpop.f32.mrb[0].mxu0
      %1025 = vmatprep.mubr.bf16.mxu0 0
      %1026 = vmatmul.mubr.bf16.gmra.mrb[0].mxu0 %v846
      %v1027 = vpop.f32.mrb[0].mxu0
      %v1028 = vadd.f32 0.0, %v1027
      %v1029 = vpop.f32.mrb[0].mxu0
      %v1030 = vpop.f32.mrb[0].mxu0
      %v1031 = vadd.f32 0.0, %v1030
      %v1032 = vpop.f32.mrb[0].mxu0
      %1033 = vmatprep.mubr.bf16.mxu0 0
      %1034 = vmatmul.mubr.bf16.gmra.mrb[0].mxu0 %v849
      %v1035 = vpop.f32.mrb[0].mxu0
      %v1036 = vadd.f32 0.0, %v1035
      %v1037 = vpop.f32.mrb[0].mxu0
      %v1038 = vpop.f32.mrb[0].mxu0
      %v1039 = vadd.f32 0.0, %v1038
      %v1040 = vpop.f32.mrb[0].mxu0
      %1041 = vmatprep.mubr.bf16.mxu0 0
      %1042 = vmatmul.mubr.bf16.gmra.mrb[0].mxu0 %v852
      %v1043 = vpop.f32.mrb[0].mxu0
      %v1044 = vadd.f32 0.0, %v1043
      %v1045 = vpop.f32.mrb[0].mxu0
      %v1046 = vpop.f32.mrb[0].mxu0
      %v1047 = vadd.f32 0.0, %v1046
      %v1048 = vpop.f32.mrb[0].mxu0
      %1049 = vmatprep.mubr.bf16.mxu0 0
      %1050 = vmatmul.mubr.bf16.gmra.mrb[0].mxu0 %v855
      %v1051 = vpop.f32.mrb[0].mxu0
      %v1052 = vadd.f32 0.0, %v1051
      %v1053 = vpop.f32.mrb[0].mxu0
      %v1054 = vpop.f32.mrb[0].mxu0
      %v1055 = vadd.f32 0.0, %v1054
      %v1056 = vpop.f32.mrb[0].mxu0
      %1057 = vmatprep.mubr.bf16.mxu0 0
      %1058 = vmatmul.mubr.bf16.gmra.mrb[0].mxu0 %v858
      %v1059 = vpop.f32.mrb[0].mxu0
      %v1060 = vadd.f32 0.0, %v1059
      %v1061 = vpop.f32.mrb[0].mxu0
      %v1062 = vpop.f32.mrb[0].mxu0
      %v1063 = vadd.f32 0.0, %v1062
      %v1064 = vpop.f32.mrb[0].mxu0
      %1065 = vmatprep.mubr.bf16.mxu0 0
      %1066 = vmatmul.mubr.bf16.gmra.mrb[0].mxu0 %v861
      %v1067 = vpop.f32.mrb[0].mxu0
      %v1068 = vadd.f32 0.0, %v1067
      %v1069 = vpop.f32.mrb[0].mxu0
      %v1070 = vpop.f32.mrb[0].mxu0
      %v1071 = vadd.f32 0.0, %v1070
      %v1072 = vpop.f32.mrb[0].mxu0
      %1073 = vmatprep.mubr.bf16.mxu0 0
      %1074 = vmatmul.mubr.bf16.gmra.mrb[0].mxu0 %v864
      %v1075 = vpop.f32.mrb[0].mxu0
      %v1076 = vadd.f32 0.0, %v1075
      %v1077 = vpop.f32.mrb[0].mxu0
      %v1078 = vpop.f32.mrb[0].mxu0
      %v1079 = vadd.f32 0.0, %v1078
      %v1080 = vpop.f32.mrb[0].mxu0
      %1081 = vmatprep.mubr.bf16.mxu0 0
      %1082 = vmatmul.mubr.bf16.gmra.mrb[0].mxu0 %v867
      %v1083 = vpop.f32.mrb[0].mxu0
      %v1084 = vadd.f32 0.0, %v1083
      %v1085 = vpop.f32.mrb[0].mxu0
      %v1086 = vpop.f32.mrb[0].mxu0
      %v1087 = vadd.f32 0.0, %v1086
      %v1088 = vpop.f32.mrb[0].mxu0
      %1089 = vmatprep.mubr.bf16.mxu0 0
      %1090 = vmatmul.mubr.bf16.gmra.mrb[0].mxu0 %v870
      %v1091 = vpop.f32.mrb[0].mxu0
      %v1092 = vadd.f32 0.0, %v1091
      %v1093 = vpop.f32.mrb[0].mxu0
      %v1094 = vpop.f32.mrb[0].mxu0
      %v1095 = vadd.f32 0.0, %v1094
      %v1096 = vpop.f32.mrb[0].mxu0
      %1097 = vmatprep.mubr.bf16.mxu0 0
      %1098 = vmatmul.mubr.bf16.gmra.mrb[0].mxu0 %v873
      %v1099 = vpop.f32.mrb[0].mxu0
      %v1100 = vadd.f32 0.0, %v1099
      %v1101 = vpop.f32.mrb[0].mxu0
      %v1102 = vpop.f32.mrb[0].mxu0
      %v1103 = vadd.f32 0.0, %v1102
      %v1104 = vpop.f32.mrb[0].mxu0
      %1105 = vmatprep.mubr.bf16.mxu0 0
      %1106 = vmatmul.mubr.bf16.gmra.mrb[0].mxu0 %v876
      %v1107 = vpop.f32.mrb[0].mxu0
      %v1108 = vadd.f32 0.0, %v1107
      %v1109 = vpop.f32.mrb[0].mxu0
      %v1110 = vpop.f32.mrb[0].mxu0
      %v1111 = vadd.f32 0.0, %v1110
      %v1112 = vpop.f32.mrb[0].mxu0
      %1113 = vmatprep.mubr.bf16.mxu0 0
      %1114 = vmatmul.mubr.bf16.gmra.mrb[0].mxu0 %v879
      %v1115 = vpop.f32.mrb[0].mxu0
      %v1116 = vadd.f32 0.0, %v1115
      %v1117 = vpop.f32.mrb[0].mxu0
      %v1118 = vpop.f32.mrb[0].mxu0
      %v1119 = vadd.f32 0.0, %v1118
      %v1120 = vpop.f32.mrb[0].mxu0
      %1121 = vdwg.mxu0
      %v1138 = vunpack.c.l.b16 %v767
      %v1139 = vunpack.c.l.b16 %v768
      %v1140 = vunpack.c.l.b16 %v769
      %v1141 = vunpack.c.l.b16 %v770
      %v1142 = vunpack.c.l.b16 %v771
      %v1143 = vunpack.c.l.b16 %v772
      %v1144 = vunpack.c.l.b16 %v773
      %v1145 = vunpack.c.l.b16 %v774
      %v1146 = vunpack.c.l.b16 %v775
      %v1147 = vunpack.c.l.b16 %v776
      %v1148 = vunpack.c.l.b16 %v777
      %v1149 = vunpack.c.l.b16 %v778
      %v1150 = vunpack.c.l.b16 %v779
      %v1151 = vunpack.c.l.b16 %v780
      %v1152 = vunpack.c.l.b16 %v781
      %v1153 = vunpack.c.l.b16 %v782
      %v1154 = vpack.c.b16 %v1139, %v1138
      %v1155 = vpack.c.b16 %v1141, %v1140
      %v1156 = vpack.c.b16 %v1143, %v1142
      %v1157 = vpack.c.b16 %v1145, %v1144
      %v1158 = vpack.c.b16 %v1147, %v1146
      %v1159 = vpack.c.b16 %v1149, %v1148
      %v1160 = vpack.c.b16 %v1151, %v1150
      %v1161 = vpack.c.b16 %v1153, %v1152
      %1170 = vmatprep.subr.bf16.mxu0 0
      %1171 = vmatpush1.bf16.msra.mxu0 %v1154
      %1172 = vmatprep.subr.bf16.mxu0 0
      %1173 = vmatpush1.bf16.msra.mxu0 %v1155
      %1174 = vmatprep.subr.bf16.mxu0 0
      %1175 = vmatpush1.bf16.msra.mxu0 %v1156
      %1176 = vmatprep.subr.bf16.mxu0 0
      %1177 = vmatpush1.bf16.msra.mxu0 %v1157
      %1178 = vmatprep.subr.bf16.mxu0 0
      %1179 = vmatpush1.bf16.msra.mxu0 %v1158
      %1180 = vmatprep.subr.bf16.mxu0 0
      %1181 = vmatpush1.bf16.msra.mxu0 %v1159
      %1182 = vmatprep.subr.bf16.mxu0 0
      %1183 = vmatpush1.bf16.msra.mxu0 %v1160
      %1184 = vmatprep.subr.bf16.mxu0 0
      %1185 = vmatpush1.bf16.msra.mxu0 %v1161
      %1186 = vmatprep.subr.bf16.mxu0 0
      %1187 = vmatpush1.bf16.msra.mxu0 0
      %1188 = vmatprep.subr.bf16.mxu0 0
      %1189 = vmatpush1.bf16.msra.mxu0 0
      %1190 = vmatprep.subr.bf16.mxu0 0
      %1191 = vmatpush1.bf16.msra.mxu0 0
      %1192 = vmatprep.subr.bf16.mxu0 0
      %1193 = vmatpush1.bf16.msra.mxu0 0
      %1194 = vmatprep.subr.bf16.mxu0 0
      %1195 = vmatpush1.bf16.msra.mxu0 0
      %1196 = vmatprep.subr.bf16.mxu0 0
      %1197 = vmatpush1.bf16.msra.mxu0 0
      %1198 = vmatprep.subr.bf16.mxu0 0
      %1199 = vmatpush1.bf16.msra.mxu0 0
      %1200 = vmatprep.subr.bf16.mxu0 0
      %1201 = vmatpush1.bf16.msra.mxu0 0
      %1202 = vmatprep.mubr.bf16.mxu0 0
      %1203 = vmatmul.mubr.bf16.gmra.mrb[0].mxu0 %v495
      %v1204 = vpop.f32.mrb[0].mxu0
      %v1205 = vadd.f32 %v996, %v1204
      %v1206 = vpop.f32.mrb[0].mxu0
      %v1207 = vpop.f32.mrb[0].mxu0
      %v1208 = vadd.f32 %v999, %v1207
      %v1209 = vpop.f32.mrb[0].mxu0
      %1210 = vmatprep.mubr.bf16.mxu0 0
      %1211 = vmatmul.mubr.bf16.gmra.mrb[0].mxu0 %v512
      %v1212 = vpop.f32.mrb[0].mxu0
      %v1213 = vadd.f32 %v1004, %v1212
      %v1214 = vpop.f32.mrb[0].mxu0
      %v1215 = vpop.f32.mrb[0].mxu0
      %v1216 = vadd.f32 %v1007, %v1215
      %v1217 = vpop.f32.mrb[0].mxu0
      %1218 = vmatprep.mubr.bf16.mxu0 0
      %1219 = vmatmul.mubr.bf16.gmra.mrb[0].mxu0 %v529
      %v1220 = vpop.f32.mrb[0].mxu0
      %v1221 = vadd.f32 %v1012, %v1220
      %v1222 = vpop.f32.mrb[0].mxu0
      %v1223 = vpop.f32.mrb[0].mxu0
      %v1224 = vadd.f32 %v1015, %v1223
      %v1225 = vpop.f32.mrb[0].mxu0
      %1226 = vmatprep.mubr.bf16.mxu0 0
      %1227 = vmatmul.mubr.bf16.gmra.mrb[0].mxu0 %v546
      %v1228 = vpop.f32.mrb[0].mxu0
      %v1229 = vadd.f32 %v1020, %v1228
      %v1230 = vpop.f32.mrb[0].mxu0
      %v1231 = vpop.f32.mrb[0].mxu0
      %v1232 = vadd.f32 %v1023, %v1231
      %v1233 = vpop.f32.mrb[0].mxu0
      %1234 = vmatprep.mubr.bf16.mxu0 0
      %1235 = vmatmul.mubr.bf16.gmra.mrb[0].mxu0 %v563
      %v1236 = vpop.f32.mrb[0].mxu0
      %v1237 = vadd.f32 %v1028, %v1236
      %v1238 = vpop.f32.mrb[0].mxu0
      %v1239 = vpop.f32.mrb[0].mxu0
      %v1240 = vadd.f32 %v1031, %v1239
      %v1241 = vpop.f32.mrb[0].mxu0
      %1242 = vmatprep.mubr.bf16.mxu0 0
      %1243 = vmatmul.mubr.bf16.gmra.mrb[0].mxu0 %v580
      %v1244 = vpop.f32.mrb[0].mxu0
      %v1245 = vadd.f32 %v1036, %v1244
      %v1246 = vpop.f32.mrb[0].mxu0
      %v1247 = vpop.f32.mrb[0].mxu0
      %v1248 = vadd.f32 %v1039, %v1247
      %v1249 = vpop.f32.mrb[0].mxu0
      %1250 = vmatprep.mubr.bf16.mxu0 0
      %1251 = vmatmul.mubr.bf16.gmra.mrb[0].mxu0 %v597
      %v1252 = vpop.f32.mrb[0].mxu0
      %v1253 = vadd.f32 %v1044, %v1252
      %v1254 = vpop.f32.mrb[0].mxu0
      %v1255 = vpop.f32.mrb[0].mxu0
      %v1256 = vadd.f32 %v1047, %v1255
      %v1257 = vpop.f32.mrb[0].mxu0
      %1258 = vmatprep.mubr.bf16.mxu0 0
      %1259 = vmatmul.mubr.bf16.gmra.mrb[0].mxu0 %v614
      %v1260 = vpop.f32.mrb[0].mxu0
      %v1261 = vadd.f32 %v1052, %v1260
      %v1262 = vpop.f32.mrb[0].mxu0
      %v1263 = vpop.f32.mrb[0].mxu0
      %v1264 = vadd.f32 %v1055, %v1263
      %v1265 = vpop.f32.mrb[0].mxu0
      %1266 = vmatprep.mubr.bf16.mxu0 0
      %1267 = vmatmul.mubr.bf16.gmra.mrb[0].mxu0 %v631
      %v1268 = vpop.f32.mrb[0].mxu0
      %v1269 = vadd.f32 %v1060, %v1268
      %v1270 = vpop.f32.mrb[0].mxu0
      %v1271 = vpop.f32.mrb[0].mxu0
      %v1272 = vadd.f32 %v1063, %v1271
      %v1273 = vpop.f32.mrb[0].mxu0
      %1274 = vmatprep.mubr.bf16.mxu0 0
      %1275 = vmatmul.mubr.bf16.gmra.mrb[0].mxu0 %v648
      %v1276 = vpop.f32.mrb[0].mxu0
      %v1277 = vadd.f32 %v1068, %v1276
      %v1278 = vpop.f32.mrb[0].mxu0
      %v1279 = vpop.f32.mrb[0].mxu0
      %v1280 = vadd.f32 %v1071, %v1279
      %v1281 = vpop.f32.mrb[0].mxu0
      %1282 = vmatprep.mubr.bf16.mxu0 0
      %1283 = vmatmul.mubr.bf16.gmra.mrb[0].mxu0 %v665
      %v1284 = vpop.f32.mrb[0].mxu0
      %v1285 = vadd.f32 %v1076, %v1284
      %v1286 = vpop.f32.mrb[0].mxu0
      %v1287 = vpop.f32.mrb[0].mxu0
      %v1288 = vadd.f32 %v1079, %v1287
      %v1289 = vpop.f32.mrb[0].mxu0
      %1290 = vmatprep.mubr.bf16.mxu0 0
      %1291 = vmatmul.mubr.bf16.gmra.mrb[0].mxu0 %v682
      %v1292 = vpop.f32.mrb[0].mxu0
      %v1293 = vadd.f32 %v1084, %v1292
      %v1294 = vpop.f32.mrb[0].mxu0
      %v1295 = vpop.f32.mrb[0].mxu0
      %v1296 = vadd.f32 %v1087, %v1295
      %v1297 = vpop.f32.mrb[0].mxu0
      %1298 = vmatprep.mubr.bf16.mxu0 0
      %1299 = vmatmul.mubr.bf16.gmra.mrb[0].mxu0 %v699
      %v1300 = vpop.f32.mrb[0].mxu0
      %v1301 = vadd.f32 %v1092, %v1300
      %v1302 = vpop.f32.mrb[0].mxu0
      %v1303 = vpop.f32.mrb[0].mxu0
      %v1304 = vadd.f32 %v1095, %v1303
      %v1305 = vpop.f32.mrb[0].mxu0
      %1306 = vmatprep.mubr.bf16.mxu0 0
      %1307 = vmatmul.mubr.bf16.gmra.mrb[0].mxu0 %v716
      %v1308 = vpop.f32.mrb[0].mxu0
      %v1309 = vadd.f32 %v1100, %v1308
      %v1310 = vpop.f32.mrb[0].mxu0
      %v1311 = vpop.f32.mrb[0].mxu0
      %v1312 = vadd.f32 %v1103, %v1311
      %v1313 = vpop.f32.mrb[0].mxu0
      %1314 = vmatprep.mubr.bf16.mxu0 0
      %1315 = vmatmul.mubr.bf16.gmra.mrb[0].mxu0 %v733
      %v1316 = vpop.f32.mrb[0].mxu0
      %v1317 = vadd.f32 %v1108, %v1316
      %v1318 = vpop.f32.mrb[0].mxu0
      %v1319 = vpop.f32.mrb[0].mxu0
      %v1320 = vadd.f32 %v1111, %v1319
      %v1321 = vpop.f32.mrb[0].mxu0
      %1322 = vmatprep.mubr.bf16.mxu0 0
      %1323 = vmatmul.mubr.bf16.gmra.mrb[0].mxu0 %v750
      %v1324 = vpop.f32.mrb[0].mxu0
      %v1325 = vadd.f32 %v1116, %v1324
      %v1326 = vpop.f32.mrb[0].mxu0
      %v1327 = vpop.f32.mrb[0].mxu0
      %v1328 = vadd.f32 %v1119, %v1327
      %v1329 = vpop.f32.mrb[0].mxu0
      %1330 = vdwg.mxu0
      %v1331 = vld [vmem:[#allocation2 + $0x8] sm:$0x1f]
      %v1332 = vld [vmem:[#allocation2 + $0x18] sm:$0x1f]
      %v1333 = vld [vmem:[#allocation2 + $0x28] sm:$0x1f]
      %v1334 = vld [vmem:[#allocation2 + $0x38] sm:$0x1f]
      %v1335 = vld [vmem:[#allocation2 + $0x48] sm:$0x1f]
      %v1336 = vld [vmem:[#allocation2 + $0x58] sm:$0x1f]
      %v1337 = vld [vmem:[#allocation2 + $0x68] sm:$0x1f]
      %v1338 = vld [vmem:[#allocation2 + $0x78] sm:$0x1f]
      %v1339 = vld [vmem:[#allocation2 + $0x88] sm:$0x1f]
      %v1340 = vld [vmem:[#allocation2 + $0x98] sm:$0x1f]
      %v1341 = vld [vmem:[#allocation2 + $0xa8] sm:$0x1f]
      %v1342 = vld [vmem:[#allocation2 + $0xb8] sm:$0x1f]
      %v1343 = vld [vmem:[#allocation2 + $0xc8] sm:$0x1f]
      %v1344 = vld [vmem:[#allocation2 + $0xd8] sm:$0x1f]
      %v1345 = vld [vmem:[#allocation2 + $0xe8] sm:$0x1f]
      %v1346 = vld [vmem:[#allocation2 + $0xf8] sm:$0x1f]
      %vm1347 = vsmask.f32 3328
      %v1349 = vshrl.u32 %v783, 16
      %v1351 = vrot.slane %v1349, 4
      %v1352 = vshll.u32 %v783, 16
      %v1354 = vrot.slane %v1352, 5
      %v1355 = vor.u32 %v1351, %v1354
      %v1357 = vshrl.u32 %v1331, 16
      %v1359 = vrot.slane %v1357, 4
      %v1360 = vshll.u32 %v1331, 16
      %v1362 = vrot.slane %v1360, 5
      %v1363 = vor.u32 %v1359, %v1362
      %v1364 = vsel %vm1347, %v1355, %v1363
      %v1366 = vshrl.u32 %v784, 16
      %v1368 = vrot.slane %v1366, 4
      %v1369 = vshll.u32 %v784, 16
      %v1371 = vrot.slane %v1369, 5
      %v1372 = vor.u32 %v1368, %v1371
      %v1374 = vshrl.u32 %v1332, 16
      %v1376 = vrot.slane %v1374, 4
      %v1377 = vshll.u32 %v1332, 16
      %v1379 = vrot.slane %v1377, 5
      %v1380 = vor.u32 %v1376, %v1379
      %v1381 = vsel %vm1347, %v1372, %v1380
      %v1383 = vshrl.u32 %v785, 16
      %v1385 = vrot.slane %v1383, 4
      %v1386 = vshll.u32 %v785, 16
      %v1388 = vrot.slane %v1386, 5
      %v1389 = vor.u32 %v1385, %v1388
      %v1391 = vshrl.u32 %v1333, 16
      %v1393 = vrot.slane %v1391, 4
      %v1394 = vshll.u32 %v1333, 16
      %v1396 = vrot.slane %v1394, 5
      %v1397 = vor.u32 %v1393, %v1396
      %v1398 = vsel %vm1347, %v1389, %v1397
      %v1400 = vshrl.u32 %v786, 16
      %v1402 = vrot.slane %v1400, 4
      %v1403 = vshll.u32 %v786, 16
      %v1405 = vrot.slane %v1403, 5
      %v1406 = vor.u32 %v1402, %v1405
      %v1408 = vshrl.u32 %v1334, 16
      %v1410 = vrot.slane %v1408, 4
      %v1411 = vshll.u32 %v1334, 16
      %v1413 = vrot.slane %v1411, 5
      %v1414 = vor.u32 %v1410, %v1413
      %v1415 = vsel %vm1347, %v1406, %v1414
      %v1417 = vshrl.u32 %v787, 16
      %v1419 = vrot.slane %v1417, 4
      %v1420 = vshll.u32 %v787, 16
      %v1422 = vrot.slane %v1420, 5
      %v1423 = vor.u32 %v1419, %v1422
      %v1425 = vshrl.u32 %v1335, 16
      %v1427 = vrot.slane %v1425, 4
      %v1428 = vshll.u32 %v1335, 16
      %v1430 = vrot.slane %v1428, 5
      %v1431 = vor.u32 %v1427, %v1430
      %v1432 = vsel %vm1347, %v1423, %v1431
      %v1434 = vshrl.u32 %v788, 16
      %v1436 = vrot.slane %v1434, 4
      %v1437 = vshll.u32 %v788, 16
      %v1439 = vrot.slane %v1437, 5
      %v1440 = vor.u32 %v1436, %v1439
      %v1442 = vshrl.u32 %v1336, 16
      %v1444 = vrot.slane %v1442, 4
      %v1445 = vshll.u32 %v1336, 16
      %v1447 = vrot.slane %v1445, 5
      %v1448 = vor.u32 %v1444, %v1447
      %v1449 = vsel %vm1347, %v1440, %v1448
      %v1451 = vshrl.u32 %v789, 16
      %v1453 = vrot.slane %v1451, 4
      %v1454 = vshll.u32 %v789, 16
      %v1456 = vrot.slane %v1454, 5
      %v1457 = vor.u32 %v1453, %v1456
      %v1459 = vshrl.u32 %v1337, 16
      %v1461 = vrot.slane %v1459, 4
      %v1462 = vshll.u32 %v1337, 16
      %v1464 = vrot.slane %v1462, 5
      %v1465 = vor.u32 %v1461, %v1464
      %v1466 = vsel %vm1347, %v1457, %v1465
      %v1468 = vshrl.u32 %v790, 16
      %v1470 = vrot.slane %v1468, 4
      %v1471 = vshll.u32 %v790, 16
      %v1473 = vrot.slane %v1471, 5
      %v1474 = vor.u32 %v1470, %v1473
      %v1476 = vshrl.u32 %v1338, 16
      %v1478 = vrot.slane %v1476, 4
      %v1479 = vshll.u32 %v1338, 16
      %v1481 = vrot.slane %v1479, 5
      %v1482 = vor.u32 %v1478, %v1481
      %v1483 = vsel %vm1347, %v1474, %v1482
      %v1485 = vshrl.u32 %v791, 16
      %v1487 = vrot.slane %v1485, 4
      %v1488 = vshll.u32 %v791, 16
      %v1490 = vrot.slane %v1488, 5
      %v1491 = vor.u32 %v1487, %v1490
      %v1493 = vshrl.u32 %v1339, 16
      %v1495 = vrot.slane %v1493, 4
      %v1496 = vshll.u32 %v1339, 16
      %v1498 = vrot.slane %v1496, 5
      %v1499 = vor.u32 %v1495, %v1498
      %v1500 = vsel %vm1347, %v1491, %v1499
      %v1502 = vshrl.u32 %v792, 16
      %v1504 = vrot.slane %v1502, 4
      %v1505 = vshll.u32 %v792, 16
      %v1507 = vrot.slane %v1505, 5
      %v1508 = vor.u32 %v1504, %v1507
      %v1510 = vshrl.u32 %v1340, 16
      %v1512 = vrot.slane %v1510, 4
      %v1513 = vshll.u32 %v1340, 16
      %v1515 = vrot.slane %v1513, 5
      %v1516 = vor.u32 %v1512, %v1515
      %v1517 = vsel %vm1347, %v1508, %v1516
      %v1519 = vshrl.u32 %v793, 16
      %v1521 = vrot.slane %v1519, 4
      %v1522 = vshll.u32 %v793, 16
      %v1524 = vrot.slane %v1522, 5
      %v1525 = vor.u32 %v1521, %v1524
      %v1527 = vshrl.u32 %v1341, 16
      %v1529 = vrot.slane %v1527, 4
      %v1530 = vshll.u32 %v1341, 16
      %v1532 = vrot.slane %v1530, 5
      %v1533 = vor.u32 %v1529, %v1532
      %v1534 = vsel %vm1347, %v1525, %v1533
      %v1536 = vshrl.u32 %v794, 16
      %v1538 = vrot.slane %v1536, 4
      %v1539 = vshll.u32 %v794, 16
      %v1541 = vrot.slane %v1539, 5
      %v1542 = vor.u32 %v1538, %v1541
      %v1544 = vshrl.u32 %v1342, 16
      %v1546 = vrot.slane %v1544, 4
      %v1547 = vshll.u32 %v1342, 16
      %v1549 = vrot.slane %v1547, 5
      %v1550 = vor.u32 %v1546, %v1549
      %v1551 = vsel %vm1347, %v1542, %v1550
      %v1553 = vshrl.u32 %v795, 16
      %v1555 = vrot.slane %v1553, 4
      %v1556 = vshll.u32 %v795, 16
      %v1558 = vrot.slane %v1556, 5
      %v1559 = vor.u32 %v1555, %v1558
      %v1561 = vshrl.u32 %v1343, 16
      %v1563 = vrot.slane %v1561, 4
      %v1564 = vshll.u32 %v1343, 16
      %v1566 = vrot.slane %v1564, 5
      %v1567 = vor.u32 %v1563, %v1566
      %v1568 = vsel %vm1347, %v1559, %v1567
      %v1570 = vshrl.u32 %v796, 16
      %v1572 = vrot.slane %v1570, 4
      %v1573 = vshll.u32 %v796, 16
      %v1575 = vrot.slane %v1573, 5
      %v1576 = vor.u32 %v1572, %v1575
      %v1578 = vshrl.u32 %v1344, 16
      %v1580 = vrot.slane %v1578, 4
      %v1581 = vshll.u32 %v1344, 16
      %v1583 = vrot.slane %v1581, 5
      %v1584 = vor.u32 %v1580, %v1583
      %v1585 = vsel %vm1347, %v1576, %v1584
      %v1587 = vshrl.u32 %v797, 16
      %v1589 = vrot.slane %v1587, 4
      %v1590 = vshll.u32 %v797, 16
      %v1592 = vrot.slane %v1590, 5
      %v1593 = vor.u32 %v1589, %v1592
      %v1595 = vshrl.u32 %v1345, 16
      %v1597 = vrot.slane %v1595, 4
      %v1598 = vshll.u32 %v1345, 16
      %v1600 = vrot.slane %v1598, 5
      %v1601 = vor.u32 %v1597, %v1600
      %v1602 = vsel %vm1347, %v1593, %v1601
      %v1604 = vshrl.u32 %v798, 16
      %v1606 = vrot.slane %v1604, 4
      %v1607 = vshll.u32 %v798, 16
      %v1609 = vrot.slane %v1607, 5
      %v1610 = vor.u32 %v1606, %v1609
      %v1612 = vshrl.u32 %v1346, 16
      %v1614 = vrot.slane %v1612, 4
      %v1615 = vshll.u32 %v1346, 16
      %v1617 = vrot.slane %v1615, 5
      %v1618 = vor.u32 %v1614, %v1617
      %v1619 = vsel %vm1347, %v1610, %v1618
      %s1636 = scalar_lea.vmem %s1, 128
      %v1637 = vld [vmem:[%s1636] sm:$0xf]
      %v1638 = vld [vmem:[%s1636 + $0x4] sm:$0xf]
      %v1639 = vld [vmem:[%s1636 + $0x8] sm:$0xf]
      %v1640 = vld [vmem:[%s1636 + $0xc] sm:$0xf]
      %v1641 = vld [vmem:[%s1636 + $0x10] sm:$0xf]
      %v1642 = vld [vmem:[%s1636 + $0x14] sm:$0xf]
      %v1643 = vld [vmem:[%s1636 + $0x18] sm:$0xf]
      %v1644 = vld [vmem:[%s1636 + $0x1c] sm:$0xf]
      %v1645 = vld [vmem:[%s1636 + $0x20] sm:$0xf]
      %v1646 = vld [vmem:[%s1636 + $0x24] sm:$0xf]
      %v1647 = vld [vmem:[%s1636 + $0x28] sm:$0xf]
      %v1648 = vld [vmem:[%s1636 + $0x2c] sm:$0xf]
      %v1649 = vld [vmem:[%s1636 + $0x30] sm:$0xf]
      %v1650 = vld [vmem:[%s1636 + $0x34] sm:$0xf]
      %v1651 = vld [vmem:[%s1636 + $0x38] sm:$0xf]
      %v1652 = vld [vmem:[%s1636 + $0x3c] sm:$0xf]
      %v1669 = vunpack.c.l.b16 %v1637
      %v1670 = vunpack.c.l.b16 %v1638
      %v1671 = vunpack.c.l.b16 %v1639
      %v1672 = vunpack.c.l.b16 %v1640
      %v1673 = vunpack.c.l.b16 %v1641
      %v1674 = vunpack.c.l.b16 %v1642
      %v1675 = vunpack.c.l.b16 %v1643
      %v1676 = vunpack.c.l.b16 %v1644
      %v1677 = vunpack.c.l.b16 %v1645
      %v1678 = vunpack.c.l.b16 %v1646
      %v1679 = vunpack.c.l.b16 %v1647
      %v1680 = vunpack.c.l.b16 %v1648
      %v1681 = vunpack.c.l.b16 %v1649
      %v1682 = vunpack.c.l.b16 %v1650
      %v1683 = vunpack.c.l.b16 %v1651
      %v1684 = vunpack.c.l.b16 %v1652
      %v1685 = vpack.c.b16 %v1670, %v1669
      %v1686 = vpack.c.b16 %v1672, %v1671
      %v1687 = vpack.c.b16 %v1674, %v1673
      %v1688 = vpack.c.b16 %v1676, %v1675
      %v1689 = vpack.c.b16 %v1678, %v1677
      %v1690 = vpack.c.b16 %v1680, %v1679
      %v1691 = vpack.c.b16 %v1682, %v1681
      %v1692 = vpack.c.b16 %v1684, %v1683
      %1701 = vmatprep.subr.bf16.mxu0 0
      %1702 = vmatpush1.bf16.msra.mxu0 %v1685
      %1703 = vmatprep.subr.bf16.mxu0 0
      %1704 = vmatpush1.bf16.msra.mxu0 %v1686
      %1705 = vmatprep.subr.bf16.mxu0 0
      %1706 = vmatpush1.bf16.msra.mxu0 %v1687
      %1707 = vmatprep.subr.bf16.mxu0 0
      %1708 = vmatpush1.bf16.msra.mxu0 %v1688
      %1709 = vmatprep.subr.bf16.mxu0 0
      %1710 = vmatpush1.bf16.msra.mxu0 %v1689
      %1711 = vmatprep.subr.bf16.mxu0 0
      %1712 = vmatpush1.bf16.msra.mxu0 %v1690
      %1713 = vmatprep.subr.bf16.mxu0 0
      %1714 = vmatpush1.bf16.msra.mxu0 %v1691
      %1715 = vmatprep.subr.bf16.mxu0 0
      %1716 = vmatpush1.bf16.msra.mxu0 %v1692
      %1717 = vmatprep.subr.bf16.mxu0 0
      %1718 = vmatpush1.bf16.msra.mxu0 0
      %1719 = vmatprep.subr.bf16.mxu0 0
      %1720 = vmatpush1.bf16.msra.mxu0 0
      %1721 = vmatprep.subr.bf16.mxu0 0
      %1722 = vmatpush1.bf16.msra.mxu0 0
      %1723 = vmatprep.subr.bf16.mxu0 0
      %1724 = vmatpush1.bf16.msra.mxu0 0
      %1725 = vmatprep.subr.bf16.mxu0 0
      %1726 = vmatpush1.bf16.msra.mxu0 0
      %1727 = vmatprep.subr.bf16.mxu0 0
      %1728 = vmatpush1.bf16.msra.mxu0 0
      %1729 = vmatprep.subr.bf16.mxu0 0
      %1730 = vmatpush1.bf16.msra.mxu0 0
      %1731 = vmatprep.subr.bf16.mxu0 0
      %1732 = vmatpush1.bf16.msra.mxu0 0
      %1733 = vmatprep.mubr.bf16.mxu0 0
      %1734 = vmatmul.mubr.bf16.gmra.mrb[0].mxu0 %v1364
      %v1735 = vpop.f32.mrb[0].mxu0
      %v1736 = vadd.f32 0.0, %v1735
      %v1737 = vpop.f32.mrb[0].mxu0
      %v1738 = vpop.f32.mrb[0].mxu0
      %v1739 = vadd.f32 0.0, %v1738
      %v1740 = vpop.f32.mrb[0].mxu0
      %1741 = vmatprep.mubr.bf16.mxu0 0
      %1742 = vmatmul.mubr.bf16.gmra.mrb[0].mxu0 %v1381
      %v1743 = vpop.f32.mrb[0].mxu0
      %v1744 = vadd.f32 0.0, %v1743
      %v1745 = vpop.f32.mrb[0].mxu0
      %v1746 = vpop.f32.mrb[0].mxu0
      %v1747 = vadd.f32 0.0, %v1746
      %v1748 = vpop.f32.mrb[0].mxu0
      %1749 = vmatprep.mubr.bf16.mxu0 0
      %1750 = vmatmul.mubr.bf16.gmra.mrb[0].mxu0 %v1398
      %v1751 = vpop.f32.mrb[0].mxu0
      %v1752 = vadd.f32 0.0, %v1751
      %v1753 = vpop.f32.mrb[0].mxu0
      %v1754 = vpop.f32.mrb[0].mxu0
      %v1755 = vadd.f32 0.0, %v1754
      %v1756 = vpop.f32.mrb[0].mxu0
      %1757 = vmatprep.mubr.bf16.mxu0 0
      %1758 = vmatmul.mubr.bf16.gmra.mrb[0].mxu0 %v1415
      %v1759 = vpop.f32.mrb[0].mxu0
      %v1760 = vadd.f32 0.0, %v1759
      %v1761 = vpop.f32.mrb[0].mxu0
      %v1762 = vpop.f32.mrb[0].mxu0
      %v1763 = vadd.f32 0.0, %v1762
      %v1764 = vpop.f32.mrb[0].mxu0
      %1765 = vmatprep.mubr.bf16.mxu0 0
      %1766 = vmatmul.mubr.bf16.gmra.mrb[0].mxu0 %v1432
      %v1767 = vpop.f32.mrb[0].mxu0
      %v1768 = vadd.f32 0.0, %v1767
      %v1769 = vpop.f32.mrb[0].mxu0
      %v1770 = vpop.f32.mrb[0].mxu0
      %v1771 = vadd.f32 0.0, %v1770
      %v1772 = vpop.f32.mrb[0].mxu0
      %1773 = vmatprep.mubr.bf16.mxu0 0
      %1774 = vmatmul.mubr.bf16.gmra.mrb[0].mxu0 %v1449
      %v1775 = vpop.f32.mrb[0].mxu0
      %v1776 = vadd.f32 0.0, %v1775
      %v1777 = vpop.f32.mrb[0].mxu0
      %v1778 = vpop.f32.mrb[0].mxu0
      %v1779 = vadd.f32 0.0, %v1778
      %v1780 = vpop.f32.mrb[0].mxu0
      %1781 = vmatprep.mubr.bf16.mxu0 0
      %1782 = vmatmul.mubr.bf16.gmra.mrb[0].mxu0 %v1466
      %v1783 = vpop.f32.mrb[0].mxu0
      %v1784 = vadd.f32 0.0, %v1783
      %v1785 = vpop.f32.mrb[0].mxu0
      %v1786 = vpop.f32.mrb[0].mxu0
      %v1787 = vadd.f32 0.0, %v1786
      %v1788 = vpop.f32.mrb[0].mxu0
      %1789 = vmatprep.mubr.bf16.mxu0 0
      %1790 = vmatmul.mubr.bf16.gmra.mrb[0].mxu0 %v1483
      %v1791 = vpop.f32.mrb[0].mxu0
      %v1792 = vadd.f32 0.0, %v1791
      %v1793 = vpop.f32.mrb[0].mxu0
      %v1794 = vpop.f32.mrb[0].mxu0
      %v1795 = vadd.f32 0.0, %v1794
      %v1796 = vpop.f32.mrb[0].mxu0
      %1797 = vmatprep.mubr.bf16.mxu0 0
      %1798 = vmatmul.mubr.bf16.gmra.mrb[0].mxu0 %v1500
      %v1799 = vpop.f32.mrb[0].mxu0
      %v1800 = vadd.f32 0.0, %v1799
      %v1801 = vpop.f32.mrb[0].mxu0
      %v1802 = vpop.f32.mrb[0].mxu0
      %v1803 = vadd.f32 0.0, %v1802
      %v1804 = vpop.f32.mrb[0].mxu0
      %1805 = vmatprep.mubr.bf16.mxu0 0
      %1806 = vmatmul.mubr.bf16.gmra.mrb[0].mxu0 %v1517
      %v1807 = vpop.f32.mrb[0].mxu0
      %v1808 = vadd.f32 0.0, %v1807
      %v1809 = vpop.f32.mrb[0].mxu0
      %v1810 = vpop.f32.mrb[0].mxu0
      %v1811 = vadd.f32 0.0, %v1810
      %v1812 = vpop.f32.mrb[0].mxu0
      %1813 = vmatprep.mubr.bf16.mxu0 0
      %1814 = vmatmul.mubr.bf16.gmra.mrb[0].mxu0 %v1534
      %v1815 = vpop.f32.mrb[0].mxu0
      %v1816 = vadd.f32 0.0, %v1815
      %v1817 = vpop.f32.mrb[0].mxu0
      %v1818 = vpop.f32.mrb[0].mxu0
      %v1819 = vadd.f32 0.0, %v1818
      %v1820 = vpop.f32.mrb[0].mxu0
      %1821 = vmatprep.mubr.bf16.mxu0 0
      %1822 = vmatmul.mubr.bf16.gmra.mrb[0].mxu0 %v1551
      %v1823 = vpop.f32.mrb[0].mxu0
      %v1824 = vadd.f32 0.0, %v1823
      %v1825 = vpop.f32.mrb[0].mxu0
      %v1826 = vpop.f32.mrb[0].mxu0
      %v1827 = vadd.f32 0.0, %v1826
      %v1828 = vpop.f32.mrb[0].mxu0
      %1829 = vmatprep.mubr.bf16.mxu0 0
      %1830 = vmatmul.mubr.bf16.gmra.mrb[0].mxu0 %v1568
      %v1831 = vpop.f32.mrb[0].mxu0
      %v1832 = vadd.f32 0.0, %v1831
      %v1833 = vpop.f32.mrb[0].mxu0
      %v1834 = vpop.f32.mrb[0].mxu0
      %v1835 = vadd.f32 0.0, %v1834
      %v1836 = vpop.f32.mrb[0].mxu0
      %1837 = vmatprep.mubr.bf16.mxu0 0
      %1838 = vmatmul.mubr.bf16.gmra.mrb[0].mxu0 %v1585
      %v1839 = vpop.f32.mrb[0].mxu0
      %v1840 = vadd.f32 0.0, %v1839
      %v1841 = vpop.f32.mrb[0].mxu0
      %v1842 = vpop.f32.mrb[0].mxu0
      %v1843 = vadd.f32 0.0, %v1842
      %v1844 = vpop.f32.mrb[0].mxu0
      %1845 = vmatprep.mubr.bf16.mxu0 0
      %1846 = vmatmul.mubr.bf16.gmra.mrb[0].mxu0 %v1602
      %v1847 = vpop.f32.mrb[0].mxu0
      %v1848 = vadd.f32 0.0, %v1847
      %v1849 = vpop.f32.mrb[0].mxu0
      %v1850 = vpop.f32.mrb[0].mxu0
      %v1851 = vadd.f32 0.0, %v1850
      %v1852 = vpop.f32.mrb[0].mxu0
      %1853 = vmatprep.mubr.bf16.mxu0 0
      %1854 = vmatmul.mubr.bf16.gmra.mrb[0].mxu0 %v1619
      %v1855 = vpop.f32.mrb[0].mxu0
      %v1856 = vadd.f32 0.0, %v1855
      %v1857 = vpop.f32.mrb[0].mxu0
      %v1858 = vpop.f32.mrb[0].mxu0
      %v1859 = vadd.f32 0.0, %v1858
      %v1860 = vpop.f32.mrb[0].mxu0
      %1861 = vdwg.mxu0
      %v1862 = vadd.f32 %v1205, %v1736
      %v1863 = vadd.f32 %v1208, %v1739
      %v1864 = vadd.f32 %v1213, %v1744
      %v1865 = vadd.f32 %v1216, %v1747
      %v1866 = vadd.f32 %v1221, %v1752
      %v1867 = vadd.f32 %v1224, %v1755
      %v1868 = vadd.f32 %v1229, %v1760
      %v1869 = vadd.f32 %v1232, %v1763
      %v1870 = vadd.f32 %v1237, %v1768
      %v1871 = vadd.f32 %v1240, %v1771
      %v1872 = vadd.f32 %v1245, %v1776
      %v1873 = vadd.f32 %v1248, %v1779
      %v1874 = vadd.f32 %v1253, %v1784
      %v1875 = vadd.f32 %v1256, %v1787
      %v1876 = vadd.f32 %v1261, %v1792
      %v1877 = vadd.f32 %v1264, %v1795
      %v1878 = vadd.f32 %v1269, %v1800
      %v1879 = vadd.f32 %v1272, %v1803
      %v1880 = vadd.f32 %v1277, %v1808
      %v1881 = vadd.f32 %v1280, %v1811
      %v1882 = vadd.f32 %v1285, %v1816
      %v1883 = vadd.f32 %v1288, %v1819
      %v1884 = vadd.f32 %v1293, %v1824
      %v1885 = vadd.f32 %v1296, %v1827
      %v1886 = vadd.f32 %v1301, %v1832
      %v1887 = vadd.f32 %v1304, %v1835
      %v1888 = vadd.f32 %v1309, %v1840
      %v1889 = vadd.f32 %v1312, %v1843
      %v1890 = vadd.f32 %v1317, %v1848
      %v1891 = vadd.f32 %v1320, %v1851
      %v1892 = vadd.f32 %v1325, %v1856
      %v1893 = vadd.f32 %v1328, %v1859
      %v1894 = vld [vmem:[%s253] sm:$0xf8]
      %v1895 = vld [vmem:[%s253 + $0x8] sm:$0xf]
      %v1896 = vld [vmem:[%s253 + $0x10] sm:$0xf8]
      %v1897 = vld [vmem:[%s253 + $0x18] sm:$0xf]
      %v1898 = vld [vmem:[%s253 + $0x20] sm:$0xf8]
      %v1899 = vld [vmem:[%s253 + $0x28] sm:$0xf]
      %v1900 = vld [vmem:[%s253 + $0x30] sm:$0xf8]
      %v1901 = vld [vmem:[%s253 + $0x38] sm:$0xf]
      %v1902 = vld [vmem:[%s253 + $0x40] sm:$0xf8]
      %v1903 = vld [vmem:[%s253 + $0x48] sm:$0xf]
      %v1904 = vld [vmem:[%s253 + $0x50] sm:$0xf8]
      %v1905 = vld [vmem:[%s253 + $0x58] sm:$0xf]
      %v1906 = vld [vmem:[%s253 + $0x60] sm:$0xf8]
      %v1907 = vld [vmem:[%s253 + $0x68] sm:$0xf]
      %v1908 = vld [vmem:[%s253 + $0x70] sm:$0xf8]
      %v1909 = vld [vmem:[%s253 + $0x78] sm:$0xf]
      %v1910 = vld [vmem:[%s253 + $0x80] sm:$0xf8]
      %v1911 = vld [vmem:[%s253 + $0x88] sm:$0xf]
      %v1912 = vld [vmem:[%s253 + $0x90] sm:$0xf8]
      %v1913 = vld [vmem:[%s253 + $0x98] sm:$0xf]
      %v1914 = vld [vmem:[%s253 + $0xa0] sm:$0xf8]
      %v1915 = vld [vmem:[%s253 + $0xa8] sm:$0xf]
      %v1916 = vld [vmem:[%s253 + $0xb0] sm:$0xf8]
      %v1917 = vld [vmem:[%s253 + $0xb8] sm:$0xf]
      %v1918 = vld [vmem:[%s253 + $0xc0] sm:$0xf8]
      %v1919 = vld [vmem:[%s253 + $0xc8] sm:$0xf]
      %v1920 = vld [vmem:[%s253 + $0xd0] sm:$0xf8]
      %v1921 = vld [vmem:[%s253 + $0xd8] sm:$0xf]
      %v1922 = vld [vmem:[%s253 + $0xe0] sm:$0xf8]
      %v1923 = vld [vmem:[%s253 + $0xe8] sm:$0xf]
      %v1924 = vld [vmem:[%s253 + $0xf0] sm:$0xf8]
      %v1925 = vld [vmem:[%s253 + $0xf8] sm:$0xf]
      %v1927 = vshrl.u32 %v1894, 16
      %v1929 = vrot.slane %v1927, 3
      %v1930 = vshll.u32 %v1894, 16
      %v1932 = vrot.slane %v1930, 4
      %v1933 = vor.u32 %v1929, %v1932
      %v1935 = vshrl.u32 %v1895, 16
      %v1937 = vrot.slane %v1935, 3
      %v1938 = vshll.u32 %v1895, 16
      %v1940 = vrot.slane %v1938, 4
      %v1941 = vor.u32 %v1937, %v1940
      %v1942 = vsel %vm478, %v1933, %v1941
      %v1944 = vshrl.u32 %v1896, 16
      %v1946 = vrot.slane %v1944, 3
      %v1947 = vshll.u32 %v1896, 16
      %v1949 = vrot.slane %v1947, 4
      %v1950 = vor.u32 %v1946, %v1949
      %v1952 = vshrl.u32 %v1897, 16
      %v1954 = vrot.slane %v1952, 3
      %v1955 = vshll.u32 %v1897, 16
      %v1957 = vrot.slane %v1955, 4
      %v1958 = vor.u32 %v1954, %v1957
      %v1959 = vsel %vm478, %v1950, %v1958
      %v1961 = vshrl.u32 %v1898, 16
      %v1963 = vrot.slane %v1961, 3
      %v1964 = vshll.u32 %v1898, 16
      %v1966 = vrot.slane %v1964, 4
      %v1967 = vor.u32 %v1963, %v1966
      %v1969 = vshrl.u32 %v1899, 16
      %v1971 = vrot.slane %v1969, 3
      %v1972 = vshll.u32 %v1899, 16
      %v1974 = vrot.slane %v1972, 4
      %v1975 = vor.u32 %v1971, %v1974
      %v1976 = vsel %vm478, %v1967, %v1975
      %v1978 = vshrl.u32 %v1900, 16
      %v1980 = vrot.slane %v1978, 3
      %v1981 = vshll.u32 %v1900, 16
      %v1983 = vrot.slane %v1981, 4
      %v1984 = vor.u32 %v1980, %v1983
      %v1986 = vshrl.u32 %v1901, 16
      %v1988 = vrot.slane %v1986, 3
      %v1989 = vshll.u32 %v1901, 16
      %v1991 = vrot.slane %v1989, 4
      %v1992 = vor.u32 %v1988, %v1991
      %v1993 = vsel %vm478, %v1984, %v1992
      %v1995 = vshrl.u32 %v1902, 16
      %v1997 = vrot.slane %v1995, 3
      %v1998 = vshll.u32 %v1902, 16
      %v2000 = vrot.slane %v1998, 4
      %v2001 = vor.u32 %v1997, %v2000
      %v2003 = vshrl.u32 %v1903, 16
      %v2005 = vrot.slane %v2003, 3
      %v2006 = vshll.u32 %v1903, 16
      %v2008 = vrot.slane %v2006, 4
      %v2009 = vor.u32 %v2005, %v2008
      %v2010 = vsel %vm478, %v2001, %v2009
      %v2012 = vshrl.u32 %v1904, 16
      %v2014 = vrot.slane %v2012, 3
      %v2015 = vshll.u32 %v1904, 16
      %v2017 = vrot.slane %v2015, 4
      %v2018 = vor.u32 %v2014, %v2017
      %v2020 = vshrl.u32 %v1905, 16
      %v2022 = vrot.slane %v2020, 3
      %v2023 = vshll.u32 %v1905, 16
      %v2025 = vrot.slane %v2023, 4
      %v2026 = vor.u32 %v2022, %v2025
      %v2027 = vsel %vm478, %v2018, %v2026
      %v2029 = vshrl.u32 %v1906, 16
      %v2031 = vrot.slane %v2029, 3
      %v2032 = vshll.u32 %v1906, 16
      %v2034 = vrot.slane %v2032, 4
      %v2035 = vor.u32 %v2031, %v2034
      %v2037 = vshrl.u32 %v1907, 16
      %v2039 = vrot.slane %v2037, 3
      %v2040 = vshll.u32 %v1907, 16
      %v2042 = vrot.slane %v2040, 4
      %v2043 = vor.u32 %v2039, %v2042
      %v2044 = vsel %vm478, %v2035, %v2043
      %v2046 = vshrl.u32 %v1908, 16
      %v2048 = vrot.slane %v2046, 3
      %v2049 = vshll.u32 %v1908, 16
      %v2051 = vrot.slane %v2049, 4
      %v2052 = vor.u32 %v2048, %v2051
      %v2054 = vshrl.u32 %v1909, 16
      %v2056 = vrot.slane %v2054, 3
      %v2057 = vshll.u32 %v1909, 16
      %v2059 = vrot.slane %v2057, 4
      %v2060 = vor.u32 %v2056, %v2059
      %v2061 = vsel %vm478, %v2052, %v2060
      %v2063 = vshrl.u32 %v1910, 16
      %v2065 = vrot.slane %v2063, 3
      %v2066 = vshll.u32 %v1910, 16
      %v2068 = vrot.slane %v2066, 4
      %v2069 = vor.u32 %v2065, %v2068
      %v2071 = vshrl.u32 %v1911, 16
      %v2073 = vrot.slane %v2071, 3
      %v2074 = vshll.u32 %v1911, 16
      %v2076 = vrot.slane %v2074, 4
      %v2077 = vor.u32 %v2073, %v2076
      %v2078 = vsel %vm478, %v2069, %v2077
      %v2080 = vshrl.u32 %v1912, 16
      %v2082 = vrot.slane %v2080, 3
      %v2083 = vshll.u32 %v1912, 16
      %v2085 = vrot.slane %v2083, 4
      %v2086 = vor.u32 %v2082, %v2085
      %v2088 = vshrl.u32 %v1913, 16
      %v2090 = vrot.slane %v2088, 3
      %v2091 = vshll.u32 %v1913, 16
      %v2093 = vrot.slane %v2091, 4
      %v2094 = vor.u32 %v2090, %v2093
      %v2095 = vsel %vm478, %v2086, %v2094
      %v2097 = vshrl.u32 %v1914, 16
      %v2099 = vrot.slane %v2097, 3
      %v2100 = vshll.u32 %v1914, 16
      %v2102 = vrot.slane %v2100, 4
      %v2103 = vor.u32 %v2099, %v2102
      %v2105 = vshrl.u32 %v1915, 16
      %v2107 = vrot.slane %v2105, 3
      %v2108 = vshll.u32 %v1915, 16
      %v2110 = vrot.slane %v2108, 4
      %v2111 = vor.u32 %v2107, %v2110
      %v2112 = vsel %vm478, %v2103, %v2111
      %v2114 = vshrl.u32 %v1916, 16
      %v2116 = vrot.slane %v2114, 3
      %v2117 = vshll.u32 %v1916, 16
      %v2119 = vrot.slane %v2117, 4
      %v2120 = vor.u32 %v2116, %v2119
      %v2122 = vshrl.u32 %v1917, 16
      %v2124 = vrot.slane %v2122, 3
      %v2125 = vshll.u32 %v1917, 16
      %v2127 = vrot.slane %v2125, 4
      %v2128 = vor.u32 %v2124, %v2127
      %v2129 = vsel %vm478, %v2120, %v2128
      %v2131 = vshrl.u32 %v1918, 16
      %v2133 = vrot.slane %v2131, 3
      %v2134 = vshll.u32 %v1918, 16
      %v2136 = vrot.slane %v2134, 4
      %v2137 = vor.u32 %v2133, %v2136
      %v2139 = vshrl.u32 %v1919, 16
      %v2141 = vrot.slane %v2139, 3
      %v2142 = vshll.u32 %v1919, 16
      %v2144 = vrot.slane %v2142, 4
      %v2145 = vor.u32 %v2141, %v2144
      %v2146 = vsel %vm478, %v2137, %v2145
      %v2148 = vshrl.u32 %v1920, 16
      %v2150 = vrot.slane %v2148, 3
      %v2151 = vshll.u32 %v1920, 16
      %v2153 = vrot.slane %v2151, 4
      %v2154 = vor.u32 %v2150, %v2153
      %v2156 = vshrl.u32 %v1921, 16
      %v2158 = vrot.slane %v2156, 3
      %v2159 = vshll.u32 %v1921, 16
      %v2161 = vrot.slane %v2159, 4
      %v2162 = vor.u32 %v2158, %v2161
      %v2163 = vsel %vm478, %v2154, %v2162
      %v2165 = vshrl.u32 %v1922, 16
      %v2167 = vrot.slane %v2165, 3
      %v2168 = vshll.u32 %v1922, 16
      %v2170 = vrot.slane %v2168, 4
      %v2171 = vor.u32 %v2167, %v2170
      %v2173 = vshrl.u32 %v1923, 16
      %v2175 = vrot.slane %v2173, 3
      %v2176 = vshll.u32 %v1923, 16
      %v2178 = vrot.slane %v2176, 4
      %v2179 = vor.u32 %v2175, %v2178
      %v2180 = vsel %vm478, %v2171, %v2179
      %v2182 = vshrl.u32 %v1924, 16
      %v2184 = vrot.slane %v2182, 3
      %v2185 = vshll.u32 %v1924, 16
      %v2187 = vrot.slane %v2185, 4
      %v2188 = vor.u32 %v2184, %v2187
      %v2190 = vshrl.u32 %v1925, 16
      %v2192 = vrot.slane %v2190, 3
      %v2193 = vshll.u32 %v1925, 16
      %v2195 = vrot.slane %v2193, 4
      %v2196 = vor.u32 %v2192, %v2195
      %v2197 = vsel %vm478, %v2188, %v2196
      %s2214 = scalar_lea.vmem %s1, 192
      %v2215 = vld [vmem:[%s2214] sm:$0xf]
      %v2216 = vld [vmem:[%s2214 + $0x4] sm:$0xf]
      %v2217 = vld [vmem:[%s2214 + $0x8] sm:$0xf]
      %v2218 = vld [vmem:[%s2214 + $0xc] sm:$0xf]
      %v2219 = vld [vmem:[%s2214 + $0x10] sm:$0xf]
      %v2220 = vld [vmem:[%s2214 + $0x14] sm:$0xf]
      %v2221 = vld [vmem:[%s2214 + $0x18] sm:$0xf]
      %v2222 = vld [vmem:[%s2214 + $0x1c] sm:$0xf]
      %v2223 = vld [vmem:[%s2214 + $0x20] sm:$0xf]
      %v2224 = vld [vmem:[%s2214 + $0x24] sm:$0xf]
      %v2225 = vld [vmem:[%s2214 + $0x28] sm:$0xf]
      %v2226 = vld [vmem:[%s2214 + $0x2c] sm:$0xf]
      %v2227 = vld [vmem:[%s2214 + $0x30] sm:$0xf]
      %v2228 = vld [vmem:[%s2214 + $0x34] sm:$0xf]
      %v2229 = vld [vmem:[%s2214 + $0x38] sm:$0xf]
      %v2230 = vld [vmem:[%s2214 + $0x3c] sm:$0xf]
      %v2247 = vunpack.c.l.b16 %v2215
      %v2248 = vunpack.c.l.b16 %v2216
      %v2249 = vunpack.c.l.b16 %v2217
      %v2250 = vunpack.c.l.b16 %v2218
      %v2251 = vunpack.c.l.b16 %v2219
      %v2252 = vunpack.c.l.b16 %v2220
      %v2253 = vunpack.c.l.b16 %v2221
      %v2254 = vunpack.c.l.b16 %v2222
      %v2255 = vunpack.c.l.b16 %v2223
      %v2256 = vunpack.c.l.b16 %v2224
      %v2257 = vunpack.c.l.b16 %v2225
      %v2258 = vunpack.c.l.b16 %v2226
      %v2259 = vunpack.c.l.b16 %v2227
      %v2260 = vunpack.c.l.b16 %v2228
      %v2261 = vunpack.c.l.b16 %v2229
      %v2262 = vunpack.c.l.b16 %v2230
      %v2263 = vpack.c.b16 %v2248, %v2247
      %v2264 = vpack.c.b16 %v2250, %v2249
      %v2265 = vpack.c.b16 %v2252, %v2251
      %v2266 = vpack.c.b16 %v2254, %v2253
      %v2267 = vpack.c.b16 %v2256, %v2255
      %v2268 = vpack.c.b16 %v2258, %v2257
      %v2269 = vpack.c.b16 %v2260, %v2259
      %v2270 = vpack.c.b16 %v2262, %v2261
      %2279 = vmatprep.subr.bf16.mxu0 0
      %2280 = vmatpush1.bf16.msra.mxu0 %v2263
      %2281 = vmatprep.subr.bf16.mxu0 0
      %2282 = vmatpush1.bf16.msra.mxu0 %v2264
      %2283 = vmatprep.subr.bf16.mxu0 0
      %2284 = vmatpush1.bf16.msra.mxu0 %v2265
      %2285 = vmatprep.subr.bf16.mxu0 0
      %2286 = vmatpush1.bf16.msra.mxu0 %v2266
      %2287 = vmatprep.subr.bf16.mxu0 0
      %2288 = vmatpush1.bf16.msra.mxu0 %v2267
      %2289 = vmatprep.subr.bf16.mxu0 0
      %2290 = vmatpush1.bf16.msra.mxu0 %v2268
      %2291 = vmatprep.subr.bf16.mxu0 0
      %2292 = vmatpush1.bf16.msra.mxu0 %v2269
      %2293 = vmatprep.subr.bf16.mxu0 0
      %2294 = vmatpush1.bf16.msra.mxu0 %v2270
      %2295 = vmatprep.subr.bf16.mxu0 0
      %2296 = vmatpush1.bf16.msra.mxu0 0
      %2297 = vmatprep.subr.bf16.mxu0 0
      %2298 = vmatpush1.bf16.msra.mxu0 0
      %2299 = vmatprep.subr.bf16.mxu0 0
      %2300 = vmatpush1.bf16.msra.mxu0 0
      %2301 = vmatprep.subr.bf16.mxu0 0
      %2302 = vmatpush1.bf16.msra.mxu0 0
      %2303 = vmatprep.subr.bf16.mxu0 0
      %2304 = vmatpush1.bf16.msra.mxu0 0
      %2305 = vmatprep.subr.bf16.mxu0 0
      %2306 = vmatpush1.bf16.msra.mxu0 0
      %2307 = vmatprep.subr.bf16.mxu0 0
      %2308 = vmatpush1.bf16.msra.mxu0 0
      %2309 = vmatprep.subr.bf16.mxu0 0
      %2310 = vmatpush1.bf16.msra.mxu0 0
      %2311 = vmatprep.mubr.bf16.mxu0 0
      %2312 = vmatmul.mubr.bf16.gmra.mrb[0].mxu0 %v1942
      %v2313 = vpop.f32.mrb[0].mxu0
      %v2314 = vadd.f32 0.0, %v2313
      %v2315 = vpop.f32.mrb[0].mxu0
      %v2316 = vpop.f32.mrb[0].mxu0
      %v2317 = vadd.f32 0.0, %v2316
      %v2318 = vpop.f32.mrb[0].mxu0
      %2319 = vmatprep.mubr.bf16.mxu0 0
      %2320 = vmatmul.mubr.bf16.gmra.mrb[0].mxu0 %v1959
      %v2321 = vpop.f32.mrb[0].mxu0
      %v2322 = vadd.f32 0.0, %v2321
      %v2323 = vpop.f32.mrb[0].mxu0
      %v2324 = vpop.f32.mrb[0].mxu0
      %v2325 = vadd.f32 0.0, %v2324
      %v2326 = vpop.f32.mrb[0].mxu0
      %2327 = vmatprep.mubr.bf16.mxu0 0
      %2328 = vmatmul.mubr.bf16.gmra.mrb[0].mxu0 %v1976
      %v2329 = vpop.f32.mrb[0].mxu0
      %v2330 = vadd.f32 0.0, %v2329
      %v2331 = vpop.f32.mrb[0].mxu0
      %v2332 = vpop.f32.mrb[0].mxu0
      %v2333 = vadd.f32 0.0, %v2332
      %v2334 = vpop.f32.mrb[0].mxu0
      %2335 = vmatprep.mubr.bf16.mxu0 0
      %2336 = vmatmul.mubr.bf16.gmra.mrb[0].mxu0 %v1993
      %v2337 = vpop.f32.mrb[0].mxu0
      %v2338 = vadd.f32 0.0, %v2337
      %v2339 = vpop.f32.mrb[0].mxu0
      %v2340 = vpop.f32.mrb[0].mxu0
      %v2341 = vadd.f32 0.0, %v2340
      %v2342 = vpop.f32.mrb[0].mxu0
      %2343 = vmatprep.mubr.bf16.mxu0 0
      %2344 = vmatmul.mubr.bf16.gmra.mrb[0].mxu0 %v2010
      %v2345 = vpop.f32.mrb[0].mxu0
      %v2346 = vadd.f32 0.0, %v2345
      %v2347 = vpop.f32.mrb[0].mxu0
      %v2348 = vpop.f32.mrb[0].mxu0
      %v2349 = vadd.f32 0.0, %v2348
      %v2350 = vpop.f32.mrb[0].mxu0
      %2351 = vmatprep.mubr.bf16.mxu0 0
      %2352 = vmatmul.mubr.bf16.gmra.mrb[0].mxu0 %v2027
      %v2353 = vpop.f32.mrb[0].mxu0
      %v2354 = vadd.f32 0.0, %v2353
      %v2355 = vpop.f32.mrb[0].mxu0
      %v2356 = vpop.f32.mrb[0].mxu0
      %v2357 = vadd.f32 0.0, %v2356
      %v2358 = vpop.f32.mrb[0].mxu0
      %2359 = vmatprep.mubr.bf16.mxu0 0
      %2360 = vmatmul.mubr.bf16.gmra.mrb[0].mxu0 %v2044
      %v2361 = vpop.f32.mrb[0].mxu0
      %v2362 = vadd.f32 0.0, %v2361
      %v2363 = vpop.f32.mrb[0].mxu0
      %v2364 = vpop.f32.mrb[0].mxu0
      %v2365 = vadd.f32 0.0, %v2364
      %v2366 = vpop.f32.mrb[0].mxu0
      %2367 = vmatprep.mubr.bf16.mxu0 0
      %2368 = vmatmul.mubr.bf16.gmra.mrb[0].mxu0 %v2061
      %v2369 = vpop.f32.mrb[0].mxu0
      %v2370 = vadd.f32 0.0, %v2369
      %v2371 = vpop.f32.mrb[0].mxu0
      %v2372 = vpop.f32.mrb[0].mxu0
      %v2373 = vadd.f32 0.0, %v2372
      %v2374 = vpop.f32.mrb[0].mxu0
      %2375 = vmatprep.mubr.bf16.mxu0 0
      %2376 = vmatmul.mubr.bf16.gmra.mrb[0].mxu0 %v2078
      %v2377 = vpop.f32.mrb[0].mxu0
      %v2378 = vadd.f32 0.0, %v2377
      %v2379 = vpop.f32.mrb[0].mxu0
      %v2380 = vpop.f32.mrb[0].mxu0
      %v2381 = vadd.f32 0.0, %v2380
      %v2382 = vpop.f32.mrb[0].mxu0
      %2383 = vmatprep.mubr.bf16.mxu0 0
      %2384 = vmatmul.mubr.bf16.gmra.mrb[0].mxu0 %v2095
      %v2385 = vpop.f32.mrb[0].mxu0
      %v2386 = vadd.f32 0.0, %v2385
      %v2387 = vpop.f32.mrb[0].mxu0
      %v2388 = vpop.f32.mrb[0].mxu0
      %v2389 = vadd.f32 0.0, %v2388
      %v2390 = vpop.f32.mrb[0].mxu0
      %2391 = vmatprep.mubr.bf16.mxu0 0
      %2392 = vmatmul.mubr.bf16.gmra.mrb[0].mxu0 %v2112
      %v2393 = vpop.f32.mrb[0].mxu0
      %v2394 = vadd.f32 0.0, %v2393
      %v2395 = vpop.f32.mrb[0].mxu0
      %v2396 = vpop.f32.mrb[0].mxu0
      %v2397 = vadd.f32 0.0, %v2396
      %v2398 = vpop.f32.mrb[0].mxu0
      %2399 = vmatprep.mubr.bf16.mxu0 0
      %2400 = vmatmul.mubr.bf16.gmra.mrb[0].mxu0 %v2129
      %v2401 = vpop.f32.mrb[0].mxu0
      %v2402 = vadd.f32 0.0, %v2401
      %v2403 = vpop.f32.mrb[0].mxu0
      %v2404 = vpop.f32.mrb[0].mxu0
      %v2405 = vadd.f32 0.0, %v2404
      %v2406 = vpop.f32.mrb[0].mxu0
      %2407 = vmatprep.mubr.bf16.mxu0 0
      %2408 = vmatmul.mubr.bf16.gmra.mrb[0].mxu0 %v2146
      %v2409 = vpop.f32.mrb[0].mxu0
      %v2410 = vadd.f32 0.0, %v2409
      %v2411 = vpop.f32.mrb[0].mxu0
      %v2412 = vpop.f32.mrb[0].mxu0
      %v2413 = vadd.f32 0.0, %v2412
      %v2414 = vpop.f32.mrb[0].mxu0
      %2415 = vmatprep.mubr.bf16.mxu0 0
      %2416 = vmatmul.mubr.bf16.gmra.mrb[0].mxu0 %v2163
      %v2417 = vpop.f32.mrb[0].mxu0
      %v2418 = vadd.f32 0.0, %v2417
      %v2419 = vpop.f32.mrb[0].mxu0
      %v2420 = vpop.f32.mrb[0].mxu0
      %v2421 = vadd.f32 0.0, %v2420
      %v2422 = vpop.f32.mrb[0].mxu0
      %2423 = vmatprep.mubr.bf16.mxu0 0
      %2424 = vmatmul.mubr.bf16.gmra.mrb[0].mxu0 %v2180
      %v2425 = vpop.f32.mrb[0].mxu0
      %v2426 = vadd.f32 0.0, %v2425
      %v2427 = vpop.f32.mrb[0].mxu0
      %v2428 = vpop.f32.mrb[0].mxu0
      %v2429 = vadd.f32 0.0, %v2428
      %v2430 = vpop.f32.mrb[0].mxu0
      %2431 = vmatprep.mubr.bf16.mxu0 0
      %2432 = vmatmul.mubr.bf16.gmra.mrb[0].mxu0 %v2197
      %v2433 = vpop.f32.mrb[0].mxu0
      %v2434 = vadd.f32 0.0, %v2433
      %v2435 = vpop.f32.mrb[0].mxu0
      %v2436 = vpop.f32.mrb[0].mxu0
      %v2437 = vadd.f32 0.0, %v2436
      %v2438 = vpop.f32.mrb[0].mxu0
      %2439 = vdwg.mxu0
      %v2440 = vadd.f32 %v1862, %v2314
      %v2441 = vadd.f32 %v1863, %v2317
      %v2442 = vadd.f32 %v1864, %v2322
      %v2443 = vadd.f32 %v1865, %v2325
      %v2444 = vadd.f32 %v1866, %v2330
      %v2445 = vadd.f32 %v1867, %v2333
      %v2446 = vadd.f32 %v1868, %v2338
      %v2447 = vadd.f32 %v1869, %v2341
      %v2448 = vadd.f32 %v1870, %v2346
      %v2449 = vadd.f32 %v1871, %v2349
      %v2450 = vadd.f32 %v1872, %v2354
      %v2451 = vadd.f32 %v1873, %v2357
      %v2452 = vadd.f32 %v1874, %v2362
      %v2453 = vadd.f32 %v1875, %v2365
      %v2454 = vadd.f32 %v1876, %v2370
      %v2455 = vadd.f32 %v1877, %v2373
      %v2456 = vadd.f32 %v1878, %v2378
      %v2457 = vadd.f32 %v1879, %v2381
      %v2458 = vadd.f32 %v1880, %v2386
      %v2459 = vadd.f32 %v1881, %v2389
      %v2460 = vadd.f32 %v1882, %v2394
      %v2461 = vadd.f32 %v1883, %v2397
      %v2462 = vadd.f32 %v1884, %v2402
      %v2463 = vadd.f32 %v1885, %v2405
      %v2464 = vadd.f32 %v1886, %v2410
      %v2465 = vadd.f32 %v1887, %v2413
      %v2466 = vadd.f32 %v1888, %v2418
      %v2467 = vadd.f32 %v1889, %v2421
      %v2468 = vadd.f32 %v1890, %v2426
      %v2469 = vadd.f32 %v1891, %v2429
      %v2470 = vadd.f32 %v1892, %v2434
      %v2471 = vadd.f32 %v1893, %v2437
      %v2472 = vld [vmem:[%s253] sm:$0xf0]
      %v2473 = vld [vmem:[%s253 + $0x10] sm:$0xf0]
      %v2474 = vld [vmem:[%s253 + $0x20] sm:$0xf0]
      %v2475 = vld [vmem:[%s253 + $0x30] sm:$0xf0]
      %v2476 = vld [vmem:[%s253 + $0x40] sm:$0xf0]
      %v2477 = vld [vmem:[%s253 + $0x50] sm:$0xf0]
      %v2478 = vld [vmem:[%s253 + $0x60] sm:$0xf0]
      %v2479 = vld [vmem:[%s253 + $0x70] sm:$0xf0]
      %v2480 = vld [vmem:[%s253 + $0x80] sm:$0xf0]
      %v2481 = vld [vmem:[%s253 + $0x90] sm:$0xf0]
      %v2482 = vld [vmem:[%s253 + $0xa0] sm:$0xf0]
      %v2483 = vld [vmem:[%s253 + $0xb0] sm:$0xf0]
      %v2484 = vld [vmem:[%s253 + $0xc0] sm:$0xf0]
      %v2485 = vld [vmem:[%s253 + $0xd0] sm:$0xf0]
      %v2486 = vld [vmem:[%s253 + $0xe0] sm:$0xf0]
      %v2487 = vld [vmem:[%s253 + $0xf0] sm:$0xf0]
      %v2520 = vrot.slane %v2472, 4
      %v2521 = vrot.slane %v1895, 4
      %v2522 = vsel %vm831, %v2520, %v2521
      %v2523 = vrot.slane %v2473, 4
      %v2524 = vrot.slane %v1897, 4
      %v2525 = vsel %vm831, %v2523, %v2524
      %v2526 = vrot.slane %v2474, 4
      %v2527 = vrot.slane %v1899, 4
      %v2528 = vsel %vm831, %v2526, %v2527
      %v2529 = vrot.slane %v2475, 4
      %v2530 = vrot.slane %v1901, 4
      %v2531 = vsel %vm831, %v2529, %v2530
      %v2532 = vrot.slane %v2476, 4
      %v2533 = vrot.slane %v1903, 4
      %v2534 = vsel %vm831, %v2532, %v2533
      %v2535 = vrot.slane %v2477, 4
      %v2536 = vrot.slane %v1905, 4
      %v2537 = vsel %vm831, %v2535, %v2536
      %v2538 = vrot.slane %v2478, 4
      %v2539 = vrot.slane %v1907, 4
      %v2540 = vsel %vm831, %v2538, %v2539
      %v2541 = vrot.slane %v2479, 4
      %v2542 = vrot.slane %v1909, 4
      %v2543 = vsel %vm831, %v2541, %v2542
      %v2544 = vrot.slane %v2480, 4
      %v2545 = vrot.slane %v1911, 4
      %v2546 = vsel %vm831, %v2544, %v2545
      %v2547 = vrot.slane %v2481, 4
      %v2548 = vrot.slane %v1913, 4
      %v2549 = vsel %vm831, %v2547, %v2548
      %v2550 = vrot.slane %v2482, 4
      %v2551 = vrot.slane %v1915, 4
      %v2552 = vsel %vm831, %v2550, %v2551
      %v2553 = vrot.slane %v2483, 4
      %v2554 = vrot.slane %v1917, 4
      %v2555 = vsel %vm831, %v2553, %v2554
      %v2556 = vrot.slane %v2484, 4
      %v2557 = vrot.slane %v1919, 4
      %v2558 = vsel %vm831, %v2556, %v2557
      %v2559 = vrot.slane %v2485, 4
      %v2560 = vrot.slane %v1921, 4
      %v2561 = vsel %vm831, %v2559, %v2560
      %v2562 = vrot.slane %v2486, 4
      %v2563 = vrot.slane %v1923, 4
      %v2564 = vsel %vm831, %v2562, %v2563
      %v2565 = vrot.slane %v2487, 4
      %v2566 = vrot.slane %v1925, 4
      %v2567 = vsel %vm831, %v2565, %v2566
      %s2584 = scalar_lea.vmem %s1, 256
      %v2585 = vld [vmem:[%s2584] sm:$0xf]
      %v2586 = vld [vmem:[%s2584 + $0x4] sm:$0xf]
      %v2587 = vld [vmem:[%s2584 + $0x8] sm:$0xf]
      %v2588 = vld [vmem:[%s2584 + $0xc] sm:$0xf]
      %v2589 = vld [vmem:[%s2584 + $0x10] sm:$0xf]
      %v2590 = vld [vmem:[%s2584 + $0x14] sm:$0xf]
      %v2591 = vld [vmem:[%s2584 + $0x18] sm:$0xf]
      %v2592 = vld [vmem:[%s2584 + $0x1c] sm:$0xf]
      %v2593 = vld [vmem:[%s2584 + $0x20] sm:$0xf]
      %v2594 = vld [vmem:[%s2584 + $0x24] sm:$0xf]
      %v2595 = vld [vmem:[%s2584 + $0x28] sm:$0xf]
      %v2596 = vld [vmem:[%s2584 + $0x2c] sm:$0xf]
      %v2597 = vld [vmem:[%s2584 + $0x30] sm:$0xf]
      %v2598 = vld [vmem:[%s2584 + $0x34] sm:$0xf]
      %v2599 = vld [vmem:[%s2584 + $0x38] sm:$0xf]
      %v2600 = vld [vmem:[%s2584 + $0x3c] sm:$0xf]
      %v2617 = vunpack.c.l.b16 %v2585
      %v2618 = vunpack.c.l.b16 %v2586
      %v2619 = vunpack.c.l.b16 %v2587
      %v2620 = vunpack.c.l.b16 %v2588
      %v2621 = vunpack.c.l.b16 %v2589
      %v2622 = vunpack.c.l.b16 %v2590
      %v2623 = vunpack.c.l.b16 %v2591
      %v2624 = vunpack.c.l.b16 %v2592
      %v2625 = vunpack.c.l.b16 %v2593
      %v2626 = vunpack.c.l.b16 %v2594
      %v2627 = vunpack.c.l.b16 %v2595
      %v2628 = vunpack.c.l.b16 %v2596
      %v2629 = vunpack.c.l.b16 %v2597
      %v2630 = vunpack.c.l.b16 %v2598
      %v2631 = vunpack.c.l.b16 %v2599
      %v2632 = vunpack.c.l.b16 %v2600
      %v2633 = vpack.c.b16 %v2618, %v2617
      %v2634 = vpack.c.b16 %v2620, %v2619
      %v2635 = vpack.c.b16 %v2622, %v2621
      %v2636 = vpack.c.b16 %v2624, %v2623
      %v2637 = vpack.c.b16 %v2626, %v2625
      %v2638 = vpack.c.b16 %v2628, %v2627
      %v2639 = vpack.c.b16 %v2630, %v2629
      %v2640 = vpack.c.b16 %v2632, %v2631
      %2649 = vmatprep.subr.bf16.mxu0 0
      %2650 = vmatpush1.bf16.msra.mxu0 %v2633
      %2651 = vmatprep.subr.bf16.mxu0 0
      %2652 = vmatpush1.bf16.msra.mxu0 %v2634
      %2653 = vmatprep.subr.bf16.mxu0 0
      %2654 = vmatpush1.bf16.msra.mxu0 %v2635
      %2655 = vmatprep.subr.bf16.mxu0 0
      %2656 = vmatpush1.bf16.msra.mxu0 %v2636
      %2657 = vmatprep.subr.bf16.mxu0 0
      %2658 = vmatpush1.bf16.msra.mxu0 %v2637
      %2659 = vmatprep.subr.bf16.mxu0 0
      %2660 = vmatpush1.bf16.msra.mxu0 %v2638
      %2661 = vmatprep.subr.bf16.mxu0 0
      %2662 = vmatpush1.bf16.msra.mxu0 %v2639
      %2663 = vmatprep.subr.bf16.mxu0 0
      %2664 = vmatpush1.bf16.msra.mxu0 %v2640
      %2665 = vmatprep.subr.bf16.mxu0 0
      %2666 = vmatpush1.bf16.msra.mxu0 0
      %2667 = vmatprep.subr.bf16.mxu0 0
      %2668 = vmatpush1.bf16.msra.mxu0 0
      %2669 = vmatprep.subr.bf16.mxu0 0
      %2670 = vmatpush1.bf16.msra.mxu0 0
      %2671 = vmatprep.subr.bf16.mxu0 0
      %2672 = vmatpush1.bf16.msra.mxu0 0
      %2673 = vmatprep.subr.bf16.mxu0 0
      %2674 = vmatpush1.bf16.msra.mxu0 0
      %2675 = vmatprep.subr.bf16.mxu0 0
      %2676 = vmatpush1.bf16.msra.mxu0 0
      %2677 = vmatprep.subr.bf16.mxu0 0
      %2678 = vmatpush1.bf16.msra.mxu0 0
      %2679 = vmatprep.subr.bf16.mxu0 0
      %2680 = vmatpush1.bf16.msra.mxu0 0
      %2681 = vmatprep.mubr.bf16.mxu0 0
      %2682 = vmatmul.mubr.bf16.gmra.mrb[0].mxu0 %v2522
      %v2683 = vpop.f32.mrb[0].mxu0
      %v2684 = vadd.f32 0.0, %v2683
      %v2685 = vpop.f32.mrb[0].mxu0
      %v2686 = vpop.f32.mrb[0].mxu0
      %v2687 = vadd.f32 0.0, %v2686
      %v2688 = vpop.f32.mrb[0].mxu0
      %2689 = vmatprep.mubr.bf16.mxu0 0
      %2690 = vmatmul.mubr.bf16.gmra.mrb[0].mxu0 %v2525
      %v2691 = vpop.f32.mrb[0].mxu0
      %v2692 = vadd.f32 0.0, %v2691
      %v2693 = vpop.f32.mrb[0].mxu0
      %v2694 = vpop.f32.mrb[0].mxu0
      %v2695 = vadd.f32 0.0, %v2694
      %v2696 = vpop.f32.mrb[0].mxu0
      %2697 = vmatprep.mubr.bf16.mxu0 0
      %2698 = vmatmul.mubr.bf16.gmra.mrb[0].mxu0 %v2528
      %v2699 = vpop.f32.mrb[0].mxu0
      %v2700 = vadd.f32 0.0, %v2699
      %v2701 = vpop.f32.mrb[0].mxu0
      %v2702 = vpop.f32.mrb[0].mxu0
      %v2703 = vadd.f32 0.0, %v2702
      %v2704 = vpop.f32.mrb[0].mxu0
      %2705 = vmatprep.mubr.bf16.mxu0 0
      %2706 = vmatmul.mubr.bf16.gmra.mrb[0].mxu0 %v2531
      %v2707 = vpop.f32.mrb[0].mxu0
      %v2708 = vadd.f32 0.0, %v2707
      %v2709 = vpop.f32.mrb[0].mxu0
      %v2710 = vpop.f32.mrb[0].mxu0
      %v2711 = vadd.f32 0.0, %v2710
      %v2712 = vpop.f32.mrb[0].mxu0
      %2713 = vmatprep.mubr.bf16.mxu0 0
      %2714 = vmatmul.mubr.bf16.gmra.mrb[0].mxu0 %v2534
      %v2715 = vpop.f32.mrb[0].mxu0
      %v2716 = vadd.f32 0.0, %v2715
      %v2717 = vpop.f32.mrb[0].mxu0
      %v2718 = vpop.f32.mrb[0].mxu0
      %v2719 = vadd.f32 0.0, %v2718
      %v2720 = vpop.f32.mrb[0].mxu0
      %2721 = vmatprep.mubr.bf16.mxu0 0
      %2722 = vmatmul.mubr.bf16.gmra.mrb[0].mxu0 %v2537
      %v2723 = vpop.f32.mrb[0].mxu0
      %v2724 = vadd.f32 0.0, %v2723
      %v2725 = vpop.f32.mrb[0].mxu0
      %v2726 = vpop.f32.mrb[0].mxu0
      %v2727 = vadd.f32 0.0, %v2726
      %v2728 = vpop.f32.mrb[0].mxu0
      %2729 = vmatprep.mubr.bf16.mxu0 0
      %2730 = vmatmul.mubr.bf16.gmra.mrb[0].mxu0 %v2540
      %v2731 = vpop.f32.mrb[0].mxu0
      %v2732 = vadd.f32 0.0, %v2731
      %v2733 = vpop.f32.mrb[0].mxu0
      %v2734 = vpop.f32.mrb[0].mxu0
      %v2735 = vadd.f32 0.0, %v2734
      %v2736 = vpop.f32.mrb[0].mxu0
      %2737 = vmatprep.mubr.bf16.mxu0 0
      %2738 = vmatmul.mubr.bf16.gmra.mrb[0].mxu0 %v2543
      %v2739 = vpop.f32.mrb[0].mxu0
      %v2740 = vadd.f32 0.0, %v2739
      %v2741 = vpop.f32.mrb[0].mxu0
      %v2742 = vpop.f32.mrb[0].mxu0
      %v2743 = vadd.f32 0.0, %v2742
      %v2744 = vpop.f32.mrb[0].mxu0
      %2745 = vmatprep.mubr.bf16.mxu0 0
      %2746 = vmatmul.mubr.bf16.gmra.mrb[0].mxu0 %v2546
      %v2747 = vpop.f32.mrb[0].mxu0
      %v2748 = vadd.f32 0.0, %v2747
      %v2749 = vpop.f32.mrb[0].mxu0
      %v2750 = vpop.f32.mrb[0].mxu0
      %v2751 = vadd.f32 0.0, %v2750
      %v2752 = vpop.f32.mrb[0].mxu0
      %2753 = vmatprep.mubr.bf16.mxu0 0
      %2754 = vmatmul.mubr.bf16.gmra.mrb[0].mxu0 %v2549
      %v2755 = vpop.f32.mrb[0].mxu0
      %v2756 = vadd.f32 0.0, %v2755
      %v2757 = vpop.f32.mrb[0].mxu0
      %v2758 = vpop.f32.mrb[0].mxu0
      %v2759 = vadd.f32 0.0, %v2758
      %v2760 = vpop.f32.mrb[0].mxu0
      %2761 = vmatprep.mubr.bf16.mxu0 0
      %2762 = vmatmul.mubr.bf16.gmra.mrb[0].mxu0 %v2552
      %v2763 = vpop.f32.mrb[0].mxu0
      %v2764 = vadd.f32 0.0, %v2763
      %v2765 = vpop.f32.mrb[0].mxu0
      %v2766 = vpop.f32.mrb[0].mxu0
      %v2767 = vadd.f32 0.0, %v2766
      %v2768 = vpop.f32.mrb[0].mxu0
      %2769 = vmatprep.mubr.bf16.mxu0 0
      %2770 = vmatmul.mubr.bf16.gmra.mrb[0].mxu0 %v2555
      %v2771 = vpop.f32.mrb[0].mxu0
      %v2772 = vadd.f32 0.0, %v2771
      %v2773 = vpop.f32.mrb[0].mxu0
      %v2774 = vpop.f32.mrb[0].mxu0
      %v2775 = vadd.f32 0.0, %v2774
      %v2776 = vpop.f32.mrb[0].mxu0
      %2777 = vmatprep.mubr.bf16.mxu0 0
      %2778 = vmatmul.mubr.bf16.gmra.mrb[0].mxu0 %v2558
      %v2779 = vpop.f32.mrb[0].mxu0
      %v2780 = vadd.f32 0.0, %v2779
      %v2781 = vpop.f32.mrb[0].mxu0
      %v2782 = vpop.f32.mrb[0].mxu0
      %v2783 = vadd.f32 0.0, %v2782
      %v2784 = vpop.f32.mrb[0].mxu0
      %2785 = vmatprep.mubr.bf16.mxu0 0
      %2786 = vmatmul.mubr.bf16.gmra.mrb[0].mxu0 %v2561
      %v2787 = vpop.f32.mrb[0].mxu0
      %v2788 = vadd.f32 0.0, %v2787
      %v2789 = vpop.f32.mrb[0].mxu0
      %v2790 = vpop.f32.mrb[0].mxu0
      %v2791 = vadd.f32 0.0, %v2790
      %v2792 = vpop.f32.mrb[0].mxu0
      %2793 = vmatprep.mubr.bf16.mxu0 0
      %2794 = vmatmul.mubr.bf16.gmra.mrb[0].mxu0 %v2564
      %v2795 = vpop.f32.mrb[0].mxu0
      %v2796 = vadd.f32 0.0, %v2795
      %v2797 = vpop.f32.mrb[0].mxu0
      %v2798 = vpop.f32.mrb[0].mxu0
      %v2799 = vadd.f32 0.0, %v2798
      %v2800 = vpop.f32.mrb[0].mxu0
      %2801 = vmatprep.mubr.bf16.mxu0 0
      %2802 = vmatmul.mubr.bf16.gmra.mrb[0].mxu0 %v2567
      %v2803 = vpop.f32.mrb[0].mxu0
      %v2804 = vadd.f32 0.0, %v2803
      %v2805 = vpop.f32.mrb[0].mxu0
      %v2806 = vpop.f32.mrb[0].mxu0
      %v2807 = vadd.f32 0.0, %v2806
      %v2808 = vpop.f32.mrb[0].mxu0
      %2809 = vdwg.mxu0
      %v2810 = vadd.f32 %v2440, %v2684
      %v2811 = vadd.f32 %v2441, %v2687
      %v2812 = vadd.f32 %v2442, %v2692
      %v2813 = vadd.f32 %v2443, %v2695
      %v2814 = vadd.f32 %v2444, %v2700
      %v2815 = vadd.f32 %v2445, %v2703
      %v2816 = vadd.f32 %v2446, %v2708
      %v2817 = vadd.f32 %v2447, %v2711
      %v2818 = vadd.f32 %v2448, %v2716
      %v2819 = vadd.f32 %v2449, %v2719
      %v2820 = vadd.f32 %v2450, %v2724
      %v2821 = vadd.f32 %v2451, %v2727
      %v2822 = vadd.f32 %v2452, %v2732
      %v2823 = vadd.f32 %v2453, %v2735
      %v2824 = vadd.f32 %v2454, %v2740
      %v2825 = vadd.f32 %v2455, %v2743
      %v2826 = vadd.f32 %v2456, %v2748
      %v2827 = vadd.f32 %v2457, %v2751
      %v2828 = vadd.f32 %v2458, %v2756
      %v2829 = vadd.f32 %v2459, %v2759
      %v2830 = vadd.f32 %v2460, %v2764
      %v2831 = vadd.f32 %v2461, %v2767
      %v2832 = vadd.f32 %v2462, %v2772
      %v2833 = vadd.f32 %v2463, %v2775
      %v2834 = vadd.f32 %v2464, %v2780
      %v2835 = vadd.f32 %v2465, %v2783
      %v2836 = vadd.f32 %v2466, %v2788
      %v2837 = vadd.f32 %v2467, %v2791
      %v2838 = vadd.f32 %v2468, %v2796
      %v2839 = vadd.f32 %v2469, %v2799
      %v2840 = vadd.f32 %v2470, %v2804
      %v2841 = vadd.f32 %v2471, %v2807
      %v2842 = vld [vmem:[%s253 + $0x8] sm:$0x1f]
      %v2843 = vld [vmem:[%s253 + $0x18] sm:$0x1f]
      %v2844 = vld [vmem:[%s253 + $0x28] sm:$0x1f]
      %v2845 = vld [vmem:[%s253 + $0x38] sm:$0x1f]
      %v2846 = vld [vmem:[%s253 + $0x48] sm:$0x1f]
      %v2847 = vld [vmem:[%s253 + $0x58] sm:$0x1f]
      %v2848 = vld [vmem:[%s253 + $0x68] sm:$0x1f]
      %v2849 = vld [vmem:[%s253 + $0x78] sm:$0x1f]
      %v2850 = vld [vmem:[%s253 + $0x88] sm:$0x1f]
      %v2851 = vld [vmem:[%s253 + $0x98] sm:$0x1f]
      %v2852 = vld [vmem:[%s253 + $0xa8] sm:$0x1f]
      %v2853 = vld [vmem:[%s253 + $0xb8] sm:$0x1f]
      %v2854 = vld [vmem:[%s253 + $0xc8] sm:$0x1f]
      %v2855 = vld [vmem:[%s253 + $0xd8] sm:$0x1f]
      %v2856 = vld [vmem:[%s253 + $0xe8] sm:$0x1f]
      %v2857 = vld [vmem:[%s253 + $0xf8] sm:$0x1f]
      %v2859 = vshrl.u32 %v2472, 16
      %v2861 = vrot.slane %v2859, 4
      %v2862 = vshll.u32 %v2472, 16
      %v2864 = vrot.slane %v2862, 5
      %v2865 = vor.u32 %v2861, %v2864
      %v2867 = vshrl.u32 %v2842, 16
      %v2869 = vrot.slane %v2867, 4
      %v2870 = vshll.u32 %v2842, 16
      %v2872 = vrot.slane %v2870, 5
      %v2873 = vor.u32 %v2869, %v2872
      %v2874 = vsel %vm1347, %v2865, %v2873
      %v2876 = vshrl.u32 %v2473, 16
      %v2878 = vrot.slane %v2876, 4
      %v2879 = vshll.u32 %v2473, 16
      %v2881 = vrot.slane %v2879, 5
      %v2882 = vor.u32 %v2878, %v2881
      %v2884 = vshrl.u32 %v2843, 16
      %v2886 = vrot.slane %v2884, 4
      %v2887 = vshll.u32 %v2843, 16
      %v2889 = vrot.slane %v2887, 5
      %v2890 = vor.u32 %v2886, %v2889
      %v2891 = vsel %vm1347, %v2882, %v2890
      %v2893 = vshrl.u32 %v2474, 16
      %v2895 = vrot.slane %v2893, 4
      %v2896 = vshll.u32 %v2474, 16
      %v2898 = vrot.slane %v2896, 5
      %v2899 = vor.u32 %v2895, %v2898
      %v2901 = vshrl.u32 %v2844, 16
      %v2903 = vrot.slane %v2901, 4
      %v2904 = vshll.u32 %v2844, 16
      %v2906 = vrot.slane %v2904, 5
      %v2907 = vor.u32 %v2903, %v2906
      %v2908 = vsel %vm1347, %v2899, %v2907
      %v2910 = vshrl.u32 %v2475, 16
      %v2912 = vrot.slane %v2910, 4
      %v2913 = vshll.u32 %v2475, 16
      %v2915 = vrot.slane %v2913, 5
      %v2916 = vor.u32 %v2912, %v2915
      %v2918 = vshrl.u32 %v2845, 16
      %v2920 = vrot.slane %v2918, 4
      %v2921 = vshll.u32 %v2845, 16
      %v2923 = vrot.slane %v2921, 5
      %v2924 = vor.u32 %v2920, %v2923
      %v2925 = vsel %vm1347, %v2916, %v2924
      %v2927 = vshrl.u32 %v2476, 16
      %v2929 = vrot.slane %v2927, 4
      %v2930 = vshll.u32 %v2476, 16
      %v2932 = vrot.slane %v2930, 5
      %v2933 = vor.u32 %v2929, %v2932
      %v2935 = vshrl.u32 %v2846, 16
      %v2937 = vrot.slane %v2935, 4
      %v2938 = vshll.u32 %v2846, 16
      %v2940 = vrot.slane %v2938, 5
      %v2941 = vor.u32 %v2937, %v2940
      %v2942 = vsel %vm1347, %v2933, %v2941
      %v2944 = vshrl.u32 %v2477, 16
      %v2946 = vrot.slane %v2944, 4
      %v2947 = vshll.u32 %v2477, 16
      %v2949 = vrot.slane %v2947, 5
      %v2950 = vor.u32 %v2946, %v2949
      %v2952 = vshrl.u32 %v2847, 16
      %v2954 = vrot.slane %v2952, 4
      %v2955 = vshll.u32 %v2847, 16
      %v2957 = vrot.slane %v2955, 5
      %v2958 = vor.u32 %v2954, %v2957
      %v2959 = vsel %vm1347, %v2950, %v2958
      %v2961 = vshrl.u32 %v2478, 16
      %v2963 = vrot.slane %v2961, 4
      %v2964 = vshll.u32 %v2478, 16
      %v2966 = vrot.slane %v2964, 5
      %v2967 = vor.u32 %v2963, %v2966
      %v2969 = vshrl.u32 %v2848, 16
      %v2971 = vrot.slane %v2969, 4
      %v2972 = vshll.u32 %v2848, 16
      %v2974 = vrot.slane %v2972, 5
      %v2975 = vor.u32 %v2971, %v2974
      %v2976 = vsel %vm1347, %v2967, %v2975
      %v2978 = vshrl.u32 %v2479, 16
      %v2980 = vrot.slane %v2978, 4
      %v2981 = vshll.u32 %v2479, 16
      %v2983 = vrot.slane %v2981, 5
      %v2984 = vor.u32 %v2980, %v2983
      %v2986 = vshrl.u32 %v2849, 16
      %v2988 = vrot.slane %v2986, 4
      %v2989 = vshll.u32 %v2849, 16
      %v2991 = vrot.slane %v2989, 5
      %v2992 = vor.u32 %v2988, %v2991
      %v2993 = vsel %vm1347, %v2984, %v2992
      %v2995 = vshrl.u32 %v2480, 16
      %v2997 = vrot.slane %v2995, 4
      %v2998 = vshll.u32 %v2480, 16
      %v3000 = vrot.slane %v2998, 5
      %v3001 = vor.u32 %v2997, %v3000
      %v3003 = vshrl.u32 %v2850, 16
      %v3005 = vrot.slane %v3003, 4
      %v3006 = vshll.u32 %v2850, 16
      %v3008 = vrot.slane %v3006, 5
      %v3009 = vor.u32 %v3005, %v3008
      %v3010 = vsel %vm1347, %v3001, %v3009
      %v3012 = vshrl.u32 %v2481, 16
      %v3014 = vrot.slane %v3012, 4
      %v3015 = vshll.u32 %v2481, 16
      %v3017 = vrot.slane %v3015, 5
      %v3018 = vor.u32 %v3014, %v3017
      %v3020 = vshrl.u32 %v2851, 16
      %v3022 = vrot.slane %v3020, 4
      %v3023 = vshll.u32 %v2851, 16
      %v3025 = vrot.slane %v3023, 5
      %v3026 = vor.u32 %v3022, %v3025
      %v3027 = vsel %vm1347, %v3018, %v3026
      %v3029 = vshrl.u32 %v2482, 16
      %v3031 = vrot.slane %v3029, 4
      %v3032 = vshll.u32 %v2482, 16
      %v3034 = vrot.slane %v3032, 5
      %v3035 = vor.u32 %v3031, %v3034
      %v3037 = vshrl.u32 %v2852, 16
      %v3039 = vrot.slane %v3037, 4
      %v3040 = vshll.u32 %v2852, 16
      %v3042 = vrot.slane %v3040, 5
      %v3043 = vor.u32 %v3039, %v3042
      %v3044 = vsel %vm1347, %v3035, %v3043
      %v3046 = vshrl.u32 %v2483, 16
      %v3048 = vrot.slane %v3046, 4
      %v3049 = vshll.u32 %v2483, 16
      %v3051 = vrot.slane %v3049, 5
      %v3052 = vor.u32 %v3048, %v3051
      %v3054 = vshrl.u32 %v2853, 16
      %v3056 = vrot.slane %v3054, 4
      %v3057 = vshll.u32 %v2853, 16
      %v3059 = vrot.slane %v3057, 5
      %v3060 = vor.u32 %v3056, %v3059
      %v3061 = vsel %vm1347, %v3052, %v3060
      %v3063 = vshrl.u32 %v2484, 16
      %v3065 = vrot.slane %v3063, 4
      %v3066 = vshll.u32 %v2484, 16
      %v3068 = vrot.slane %v3066, 5
      %v3069 = vor.u32 %v3065, %v3068
      %v3071 = vshrl.u32 %v2854, 16
      %v3073 = vrot.slane %v3071, 4
      %v3074 = vshll.u32 %v2854, 16
      %v3076 = vrot.slane %v3074, 5
      %v3077 = vor.u32 %v3073, %v3076
      %v3078 = vsel %vm1347, %v3069, %v3077
      %v3080 = vshrl.u32 %v2485, 16
      %v3082 = vrot.slane %v3080, 4
      %v3083 = vshll.u32 %v2485, 16
      %v3085 = vrot.slane %v3083, 5
      %v3086 = vor.u32 %v3082, %v3085
      %v3088 = vshrl.u32 %v2855, 16
      %v3090 = vrot.slane %v3088, 4
      %v3091 = vshll.u32 %v2855, 16
      %v3093 = vrot.slane %v3091, 5
      %v3094 = vor.u32 %v3090, %v3093
      %v3095 = vsel %vm1347, %v3086, %v3094
      %v3097 = vshrl.u32 %v2486, 16
      %v3099 = vrot.slane %v3097, 4
      %v3100 = vshll.u32 %v2486, 16
      %v3102 = vrot.slane %v3100, 5
      %v3103 = vor.u32 %v3099, %v3102
      %v3105 = vshrl.u32 %v2856, 16
      %v3107 = vrot.slane %v3105, 4
      %v3108 = vshll.u32 %v2856, 16
      %v3110 = vrot.slane %v3108, 5
      %v3111 = vor.u32 %v3107, %v3110
      %v3112 = vsel %vm1347, %v3103, %v3111
      %v3114 = vshrl.u32 %v2487, 16
      %v3116 = vrot.slane %v3114, 4
      %v3117 = vshll.u32 %v2487, 16
      %v3119 = vrot.slane %v3117, 5
      %v3120 = vor.u32 %v3116, %v3119
      %v3122 = vshrl.u32 %v2857, 16
      %v3124 = vrot.slane %v3122, 4
      %v3125 = vshll.u32 %v2857, 16
      %v3127 = vrot.slane %v3125, 5
      %v3128 = vor.u32 %v3124, %v3127
      %v3129 = vsel %vm1347, %v3120, %v3128
      %s3146 = scalar_lea.vmem %s1, 320
      %v3147 = vld [vmem:[%s3146] sm:$0xf]
      %v3148 = vld [vmem:[%s3146 + $0x4] sm:$0xf]
      %v3149 = vld [vmem:[%s3146 + $0x8] sm:$0xf]
      %v3150 = vld [vmem:[%s3146 + $0xc] sm:$0xf]
      %v3151 = vld [vmem:[%s3146 + $0x10] sm:$0xf]
      %v3152 = vld [vmem:[%s3146 + $0x14] sm:$0xf]
      %v3153 = vld [vmem:[%s3146 + $0x18] sm:$0xf]
      %v3154 = vld [vmem:[%s3146 + $0x1c] sm:$0xf]
      %v3155 = vld [vmem:[%s3146 + $0x20] sm:$0xf]
      %v3156 = vld [vmem:[%s3146 + $0x24] sm:$0xf]
      %v3157 = vld [vmem:[%s3146 + $0x28] sm:$0xf]
      %v3158 = vld [vmem:[%s3146 + $0x2c] sm:$0xf]
      %v3159 = vld [vmem:[%s3146 + $0x30] sm:$0xf]
      %v3160 = vld [vmem:[%s3146 + $0x34] sm:$0xf]
      %v3161 = vld [vmem:[%s3146 + $0x38] sm:$0xf]
      %v3162 = vld [vmem:[%s3146 + $0x3c] sm:$0xf]
      %v3179 = vunpack.c.l.b16 %v3147
      %v3180 = vunpack.c.l.b16 %v3148
      %v3181 = vunpack.c.l.b16 %v3149
      %v3182 = vunpack.c.l.b16 %v3150
      %v3183 = vunpack.c.l.b16 %v3151
      %v3184 = vunpack.c.l.b16 %v3152
      %v3185 = vunpack.c.l.b16 %v3153
      %v3186 = vunpack.c.l.b16 %v3154
      %v3187 = vunpack.c.l.b16 %v3155
      %v3188 = vunpack.c.l.b16 %v3156
      %v3189 = vunpack.c.l.b16 %v3157
      %v3190 = vunpack.c.l.b16 %v3158
      %v3191 = vunpack.c.l.b16 %v3159
      %v3192 = vunpack.c.l.b16 %v3160
      %v3193 = vunpack.c.l.b16 %v3161
      %v3194 = vunpack.c.l.b16 %v3162
      %v3195 = vpack.c.b16 %v3180, %v3179
      %v3196 = vpack.c.b16 %v3182, %v3181
      %v3197 = vpack.c.b16 %v3184, %v3183
      %v3198 = vpack.c.b16 %v3186, %v3185
      %v3199 = vpack.c.b16 %v3188, %v3187
      %v3200 = vpack.c.b16 %v3190, %v3189
      %v3201 = vpack.c.b16 %v3192, %v3191
      %v3202 = vpack.c.b16 %v3194, %v3193
      %3211 = vmatprep.subr.bf16.mxu0 0
      %3212 = vmatpush1.bf16.msra.mxu0 %v3195
      %3213 = vmatprep.subr.bf16.mxu0 0
      %3214 = vmatpush1.bf16.msra.mxu0 %v3196
      %3215 = vmatprep.subr.bf16.mxu0 0
      %3216 = vmatpush1.bf16.msra.mxu0 %v3197
      %3217 = vmatprep.subr.bf16.mxu0 0
      %3218 = vmatpush1.bf16.msra.mxu0 %v3198
      %3219 = vmatprep.subr.bf16.mxu0 0
      %3220 = vmatpush1.bf16.msra.mxu0 %v3199
      %3221 = vmatprep.subr.bf16.mxu0 0
      %3222 = vmatpush1.bf16.msra.mxu0 %v3200
      %3223 = vmatprep.subr.bf16.mxu0 0
      %3224 = vmatpush1.bf16.msra.mxu0 %v3201
      %3225 = vmatprep.subr.bf16.mxu0 0
      %3226 = vmatpush1.bf16.msra.mxu0 %v3202
      %3227 = vmatprep.subr.bf16.mxu0 0
      %3228 = vmatpush1.bf16.msra.mxu0 0
      %3229 = vmatprep.subr.bf16.mxu0 0
      %3230 = vmatpush1.bf16.msra.mxu0 0
      %3231 = vmatprep.subr.bf16.mxu0 0
      %3232 = vmatpush1.bf16.msra.mxu0 0
      %3233 = vmatprep.subr.bf16.mxu0 0
      %3234 = vmatpush1.bf16.msra.mxu0 0
      %3235 = vmatprep.subr.bf16.mxu0 0
      %3236 = vmatpush1.bf16.msra.mxu0 0
      %3237 = vmatprep.subr.bf16.mxu0 0
      %3238 = vmatpush1.bf16.msra.mxu0 0
      %3239 = vmatprep.subr.bf16.mxu0 0
      %3240 = vmatpush1.bf16.msra.mxu0 0
      %3241 = vmatprep.subr.bf16.mxu0 0
      %3242 = vmatpush1.bf16.msra.mxu0 0
      %3243 = vmatprep.mubr.bf16.mxu0 0
      %3244 = vmatmul.mubr.bf16.gmra.mrb[0].mxu0 %v2874
      %v3245 = vpop.f32.mrb[0].mxu0
      %v3246 = vadd.f32 0.0, %v3245
      %v3247 = vpop.f32.mrb[0].mxu0
      %v3248 = vpop.f32.mrb[0].mxu0
      %v3249 = vadd.f32 0.0, %v3248
      %v3250 = vpop.f32.mrb[0].mxu0
      %3251 = vmatprep.mubr.bf16.mxu0 0
      %3252 = vmatmul.mubr.bf16.gmra.mrb[0].mxu0 %v2891
      %v3253 = vpop.f32.mrb[0].mxu0
      %v3254 = vadd.f32 0.0, %v3253
      %v3255 = vpop.f32.mrb[0].mxu0
      %v3256 = vpop.f32.mrb[0].mxu0
      %v3257 = vadd.f32 0.0, %v3256
      %v3258 = vpop.f32.mrb[0].mxu0
      %3259 = vmatprep.mubr.bf16.mxu0 0
      %3260 = vmatmul.mubr.bf16.gmra.mrb[0].mxu0 %v2908
      %v3261 = vpop.f32.mrb[0].mxu0
      %v3262 = vadd.f32 0.0, %v3261
      %v3263 = vpop.f32.mrb[0].mxu0
      %v3264 = vpop.f32.mrb[0].mxu0
      %v3265 = vadd.f32 0.0, %v3264
      %v3266 = vpop.f32.mrb[0].mxu0
      %3267 = vmatprep.mubr.bf16.mxu0 0
      %3268 = vmatmul.mubr.bf16.gmra.mrb[0].mxu0 %v2925
      %v3269 = vpop.f32.mrb[0].mxu0
      %v3270 = vadd.f32 0.0, %v3269
      %v3271 = vpop.f32.mrb[0].mxu0
      %v3272 = vpop.f32.mrb[0].mxu0
      %v3273 = vadd.f32 0.0, %v3272
      %v3274 = vpop.f32.mrb[0].mxu0
      %3275 = vmatprep.mubr.bf16.mxu0 0
      %3276 = vmatmul.mubr.bf16.gmra.mrb[0].mxu0 %v2942
      %v3277 = vpop.f32.mrb[0].mxu0
      %v3278 = vadd.f32 0.0, %v3277
      %v3279 = vpop.f32.mrb[0].mxu0
      %v3280 = vpop.f32.mrb[0].mxu0
      %v3281 = vadd.f32 0.0, %v3280
      %v3282 = vpop.f32.mrb[0].mxu0
      %3283 = vmatprep.mubr.bf16.mxu0 0
      %3284 = vmatmul.mubr.bf16.gmra.mrb[0].mxu0 %v2959
      %v3285 = vpop.f32.mrb[0].mxu0
      %v3286 = vadd.f32 0.0, %v3285
      %v3287 = vpop.f32.mrb[0].mxu0
      %v3288 = vpop.f32.mrb[0].mxu0
      %v3289 = vadd.f32 0.0, %v3288
      %v3290 = vpop.f32.mrb[0].mxu0
      %3291 = vmatprep.mubr.bf16.mxu0 0
      %3292 = vmatmul.mubr.bf16.gmra.mrb[0].mxu0 %v2976
      %v3293 = vpop.f32.mrb[0].mxu0
      %v3294 = vadd.f32 0.0, %v3293
      %v3295 = vpop.f32.mrb[0].mxu0
      %v3296 = vpop.f32.mrb[0].mxu0
      %v3297 = vadd.f32 0.0, %v3296
      %v3298 = vpop.f32.mrb[0].mxu0
      %3299 = vmatprep.mubr.bf16.mxu0 0
      %3300 = vmatmul.mubr.bf16.gmra.mrb[0].mxu0 %v2993
      %v3301 = vpop.f32.mrb[0].mxu0
      %v3302 = vadd.f32 0.0, %v3301
      %v3303 = vpop.f32.mrb[0].mxu0
      %v3304 = vpop.f32.mrb[0].mxu0
      %v3305 = vadd.f32 0.0, %v3304
      %v3306 = vpop.f32.mrb[0].mxu0
      %3307 = vmatprep.mubr.bf16.mxu0 0
      %3308 = vmatmul.mubr.bf16.gmra.mrb[0].mxu0 %v3010
      %v3309 = vpop.f32.mrb[0].mxu0
      %v3310 = vadd.f32 0.0, %v3309
      %v3311 = vpop.f32.mrb[0].mxu0
      %v3312 = vpop.f32.mrb[0].mxu0
      %v3313 = vadd.f32 0.0, %v3312
      %v3314 = vpop.f32.mrb[0].mxu0
      %3315 = vmatprep.mubr.bf16.mxu0 0
      %3316 = vmatmul.mubr.bf16.gmra.mrb[0].mxu0 %v3027
      %v3317 = vpop.f32.mrb[0].mxu0
      %v3318 = vadd.f32 0.0, %v3317
      %v3319 = vpop.f32.mrb[0].mxu0
      %v3320 = vpop.f32.mrb[0].mxu0
      %v3321 = vadd.f32 0.0, %v3320
      %v3322 = vpop.f32.mrb[0].mxu0
      %3323 = vmatprep.mubr.bf16.mxu0 0
      %3324 = vmatmul.mubr.bf16.gmra.mrb[0].mxu0 %v3044
      %v3325 = vpop.f32.mrb[0].mxu0
      %v3326 = vadd.f32 0.0, %v3325
      %v3327 = vpop.f32.mrb[0].mxu0
      %v3328 = vpop.f32.mrb[0].mxu0
      %v3329 = vadd.f32 0.0, %v3328
      %v3330 = vpop.f32.mrb[0].mxu0
      %3331 = vmatprep.mubr.bf16.mxu0 0
      %3332 = vmatmul.mubr.bf16.gmra.mrb[0].mxu0 %v3061
      %v3333 = vpop.f32.mrb[0].mxu0
      %v3334 = vadd.f32 0.0, %v3333
      %v3335 = vpop.f32.mrb[0].mxu0
      %v3336 = vpop.f32.mrb[0].mxu0
      %v3337 = vadd.f32 0.0, %v3336
      %v3338 = vpop.f32.mrb[0].mxu0
      %3339 = vmatprep.mubr.bf16.mxu0 0
      %3340 = vmatmul.mubr.bf16.gmra.mrb[0].mxu0 %v3078
      %v3341 = vpop.f32.mrb[0].mxu0
      %v3342 = vadd.f32 0.0, %v3341
      %v3343 = vpop.f32.mrb[0].mxu0
      %v3344 = vpop.f32.mrb[0].mxu0
      %v3345 = vadd.f32 0.0, %v3344
      %v3346 = vpop.f32.mrb[0].mxu0
      %3347 = vmatprep.mubr.bf16.mxu0 0
      %3348 = vmatmul.mubr.bf16.gmra.mrb[0].mxu0 %v3095
      %v3349 = vpop.f32.mrb[0].mxu0
      %v3350 = vadd.f32 0.0, %v3349
      %v3351 = vpop.f32.mrb[0].mxu0
      %v3352 = vpop.f32.mrb[0].mxu0
      %v3353 = vadd.f32 0.0, %v3352
      %v3354 = vpop.f32.mrb[0].mxu0
      %3355 = vmatprep.mubr.bf16.mxu0 0
      %3356 = vmatmul.mubr.bf16.gmra.mrb[0].mxu0 %v3112
      %v3357 = vpop.f32.mrb[0].mxu0
      %v3358 = vadd.f32 0.0, %v3357
      %v3359 = vpop.f32.mrb[0].mxu0
      %v3360 = vpop.f32.mrb[0].mxu0
      %v3361 = vadd.f32 0.0, %v3360
      %v3362 = vpop.f32.mrb[0].mxu0
      %3363 = vmatprep.mubr.bf16.mxu0 0
      %3364 = vmatmul.mubr.bf16.gmra.mrb[0].mxu0 %v3129
      %v3365 = vpop.f32.mrb[0].mxu0
      %v3366 = vadd.f32 0.0, %v3365
      %v3367 = vpop.f32.mrb[0].mxu0
      %v3368 = vpop.f32.mrb[0].mxu0
      %v3369 = vadd.f32 0.0, %v3368
      %v3370 = vpop.f32.mrb[0].mxu0
      %3371 = vdwg.mxu0
      %v3372 = vadd.f32 %v2810, %v3246
      %v3373 = vadd.f32 %v2811, %v3249
      %v3374 = vadd.f32 %v2812, %v3254
      %v3375 = vadd.f32 %v2813, %v3257
      %v3376 = vadd.f32 %v2814, %v3262
      %v3377 = vadd.f32 %v2815, %v3265
      %v3378 = vadd.f32 %v2816, %v3270
      %v3379 = vadd.f32 %v2817, %v3273
      %v3380 = vadd.f32 %v2818, %v3278
      %v3381 = vadd.f32 %v2819, %v3281
      %v3382 = vadd.f32 %v2820, %v3286
      %v3383 = vadd.f32 %v2821, %v3289
      %v3384 = vadd.f32 %v2822, %v3294
      %v3385 = vadd.f32 %v2823, %v3297
      %v3386 = vadd.f32 %v2824, %v3302
      %v3387 = vadd.f32 %v2825, %v3305
      %v3388 = vadd.f32 %v2826, %v3310
      %v3389 = vadd.f32 %v2827, %v3313
      %v3390 = vadd.f32 %v2828, %v3318
      %v3391 = vadd.f32 %v2829, %v3321
      %v3392 = vadd.f32 %v2830, %v3326
      %v3393 = vadd.f32 %v2831, %v3329
      %v3394 = vadd.f32 %v2832, %v3334
      %v3395 = vadd.f32 %v2833, %v3337
      %v3396 = vadd.f32 %v2834, %v3342
      %v3397 = vadd.f32 %v2835, %v3345
      %v3398 = vadd.f32 %v2836, %v3350
      %v3399 = vadd.f32 %v2837, %v3353
      %v3400 = vadd.f32 %v2838, %v3358
      %v3401 = vadd.f32 %v2839, %v3361
      %v3402 = vadd.f32 %v2840, %v3366
      %v3403 = vadd.f32 %v2841, %v3369
      %s3404 = scalar_lea.vmem [#allocation2], 32
      %v3405 = vld [vmem:[%s3404] sm:$0xf8]
      %v3406 = vld [vmem:[%s3404 + $0x8] sm:$0xf]
      %v3407 = vld [vmem:[%s3404 + $0x10] sm:$0xf8]
      %v3408 = vld [vmem:[%s3404 + $0x18] sm:$0xf]
      %v3409 = vld [vmem:[%s3404 + $0x20] sm:$0xf8]
      %v3410 = vld [vmem:[%s3404 + $0x28] sm:$0xf]
      %v3411 = vld [vmem:[%s3404 + $0x30] sm:$0xf8]
      %v3412 = vld [vmem:[%s3404 + $0x38] sm:$0xf]
      %v3413 = vld [vmem:[%s3404 + $0x40] sm:$0xf8]
      %v3414 = vld [vmem:[%s3404 + $0x48] sm:$0xf]
      %v3415 = vld [vmem:[%s3404 + $0x50] sm:$0xf8]
      %v3416 = vld [vmem:[%s3404 + $0x58] sm:$0xf]
      %v3417 = vld [vmem:[%s3404 + $0x60] sm:$0xf8]
      %v3418 = vld [vmem:[%s3404 + $0x68] sm:$0xf]
      %v3419 = vld [vmem:[%s3404 + $0x70] sm:$0xf8]
      %v3420 = vld [vmem:[%s3404 + $0x78] sm:$0xf]
      %v3421 = vld [vmem:[%s3404 + $0x80] sm:$0xf8]
      %v3422 = vld [vmem:[%s3404 + $0x88] sm:$0xf]
      %v3423 = vld [vmem:[%s3404 + $0x90] sm:$0xf8]
      %v3424 = vld [vmem:[%s3404 + $0x98] sm:$0xf]
      %v3425 = vld [vmem:[%s3404 + $0xa0] sm:$0xf8]
      %v3426 = vld [vmem:[%s3404 + $0xa8] sm:$0xf]
      %v3427 = vld [vmem:[%s3404 + $0xb0] sm:$0xf8]
      %v3428 = vld [vmem:[%s3404 + $0xb8] sm:$0xf]
      %v3429 = vld [vmem:[%s3404 + $0xc0] sm:$0xf8]
      %v3430 = vld [vmem:[%s3404 + $0xc8] sm:$0xf]
      %v3431 = vld [vmem:[%s3404 + $0xd0] sm:$0xf8]
      %v3432 = vld [vmem:[%s3404 + $0xd8] sm:$0xf]
      %v3433 = vld [vmem:[%s3404 + $0xe0] sm:$0xf8]
      %v3434 = vld [vmem:[%s3404 + $0xe8] sm:$0xf]
      %v3435 = vld [vmem:[%s3404 + $0xf0] sm:$0xf8]
      %v3436 = vld [vmem:[%s3404 + $0xf8] sm:$0xf]
      %v3438 = vshrl.u32 %v3405, 16
      %v3440 = vrot.slane %v3438, 3
      %v3441 = vshll.u32 %v3405, 16
      %v3443 = vrot.slane %v3441, 4
      %v3444 = vor.u32 %v3440, %v3443
      %v3446 = vshrl.u32 %v3406, 16
      %v3448 = vrot.slane %v3446, 3
      %v3449 = vshll.u32 %v3406, 16
      %v3451 = vrot.slane %v3449, 4
      %v3452 = vor.u32 %v3448, %v3451
      %v3453 = vsel %vm478, %v3444, %v3452
      %v3455 = vshrl.u32 %v3407, 16
      %v3457 = vrot.slane %v3455, 3
      %v3458 = vshll.u32 %v3407, 16
      %v3460 = vrot.slane %v3458, 4
      %v3461 = vor.u32 %v3457, %v3460
      %v3463 = vshrl.u32 %v3408, 16
      %v3465 = vrot.slane %v3463, 3
      %v3466 = vshll.u32 %v3408, 16
      %v3468 = vrot.slane %v3466, 4
      %v3469 = vor.u32 %v3465, %v3468
      %v3470 = vsel %vm478, %v3461, %v3469
      %v3472 = vshrl.u32 %v3409, 16
      %v3474 = vrot.slane %v3472, 3
      %v3475 = vshll.u32 %v3409, 16
      %v3477 = vrot.slane %v3475, 4
      %v3478 = vor.u32 %v3474, %v3477
      %v3480 = vshrl.u32 %v3410, 16
      %v3482 = vrot.slane %v3480, 3
      %v3483 = vshll.u32 %v3410, 16
      %v3485 = vrot.slane %v3483, 4
      %v3486 = vor.u32 %v3482, %v3485
      %v3487 = vsel %vm478, %v3478, %v3486
      %v3489 = vshrl.u32 %v3411, 16
      %v3491 = vrot.slane %v3489, 3
      %v3492 = vshll.u32 %v3411, 16
      %v3494 = vrot.slane %v3492, 4
      %v3495 = vor.u32 %v3491, %v3494
      %v3497 = vshrl.u32 %v3412, 16
      %v3499 = vrot.slane %v3497, 3
      %v3500 = vshll.u32 %v3412, 16
      %v3502 = vrot.slane %v3500, 4
      %v3503 = vor.u32 %v3499, %v3502
      %v3504 = vsel %vm478, %v3495, %v3503
      %v3506 = vshrl.u32 %v3413, 16
      %v3508 = vrot.slane %v3506, 3
      %v3509 = vshll.u32 %v3413, 16
      %v3511 = vrot.slane %v3509, 4
      %v3512 = vor.u32 %v3508, %v3511
      %v3514 = vshrl.u32 %v3414, 16
      %v3516 = vrot.slane %v3514, 3
      %v3517 = vshll.u32 %v3414, 16
      %v3519 = vrot.slane %v3517, 4
      %v3520 = vor.u32 %v3516, %v3519
      %v3521 = vsel %vm478, %v3512, %v3520
      %v3523 = vshrl.u32 %v3415, 16
      %v3525 = vrot.slane %v3523, 3
      %v3526 = vshll.u32 %v3415, 16
      %v3528 = vrot.slane %v3526, 4
      %v3529 = vor.u32 %v3525, %v3528
      %v3531 = vshrl.u32 %v3416, 16
      %v3533 = vrot.slane %v3531, 3
      %v3534 = vshll.u32 %v3416, 16
      %v3536 = vrot.slane %v3534, 4
      %v3537 = vor.u32 %v3533, %v3536
      %v3538 = vsel %vm478, %v3529, %v3537
      %v3540 = vshrl.u32 %v3417, 16
      %v3542 = vrot.slane %v3540, 3
      %v3543 = vshll.u32 %v3417, 16
      %v3545 = vrot.slane %v3543, 4
      %v3546 = vor.u32 %v3542, %v3545
      %v3548 = vshrl.u32 %v3418, 16
      %v3550 = vrot.slane %v3548, 3
      %v3551 = vshll.u32 %v3418, 16
      %v3553 = vrot.slane %v3551, 4
      %v3554 = vor.u32 %v3550, %v3553
      %v3555 = vsel %vm478, %v3546, %v3554
      %v3557 = vshrl.u32 %v3419, 16
      %v3559 = vrot.slane %v3557, 3
      %v3560 = vshll.u32 %v3419, 16
      %v3562 = vrot.slane %v3560, 4
      %v3563 = vor.u32 %v3559, %v3562
      %v3565 = vshrl.u32 %v3420, 16
      %v3567 = vrot.slane %v3565, 3
      %v3568 = vshll.u32 %v3420, 16
      %v3570 = vrot.slane %v3568, 4
      %v3571 = vor.u32 %v3567, %v3570
      %v3572 = vsel %vm478, %v3563, %v3571
      %v3574 = vshrl.u32 %v3421, 16
      %v3576 = vrot.slane %v3574, 3
      %v3577 = vshll.u32 %v3421, 16
      %v3579 = vrot.slane %v3577, 4
      %v3580 = vor.u32 %v3576, %v3579
      %v3582 = vshrl.u32 %v3422, 16
      %v3584 = vrot.slane %v3582, 3
      %v3585 = vshll.u32 %v3422, 16
      %v3587 = vrot.slane %v3585, 4
      %v3588 = vor.u32 %v3584, %v3587
      %v3589 = vsel %vm478, %v3580, %v3588
      %v3591 = vshrl.u32 %v3423, 16
      %v3593 = vrot.slane %v3591, 3
      %v3594 = vshll.u32 %v3423, 16
      %v3596 = vrot.slane %v3594, 4
      %v3597 = vor.u32 %v3593, %v3596
      %v3599 = vshrl.u32 %v3424, 16
      %v3601 = vrot.slane %v3599, 3
      %v3602 = vshll.u32 %v3424, 16
      %v3604 = vrot.slane %v3602, 4
      %v3605 = vor.u32 %v3601, %v3604
      %v3606 = vsel %vm478, %v3597, %v3605
      %v3608 = vshrl.u32 %v3425, 16
      %v3610 = vrot.slane %v3608, 3
      %v3611 = vshll.u32 %v3425, 16
      %v3613 = vrot.slane %v3611, 4
      %v3614 = vor.u32 %v3610, %v3613
      %v3616 = vshrl.u32 %v3426, 16
      %v3618 = vrot.slane %v3616, 3
      %v3619 = vshll.u32 %v3426, 16
      %v3621 = vrot.slane %v3619, 4
      %v3622 = vor.u32 %v3618, %v3621
      %v3623 = vsel %vm478, %v3614, %v3622
      %v3625 = vshrl.u32 %v3427, 16
      %v3627 = vrot.slane %v3625, 3
      %v3628 = vshll.u32 %v3427, 16
      %v3630 = vrot.slane %v3628, 4
      %v3631 = vor.u32 %v3627, %v3630
      %v3633 = vshrl.u32 %v3428, 16
      %v3635 = vrot.slane %v3633, 3
      %v3636 = vshll.u32 %v3428, 16
      %v3638 = vrot.slane %v3636, 4
      %v3639 = vor.u32 %v3635, %v3638
      %v3640 = vsel %vm478, %v3631, %v3639
      %v3642 = vshrl.u32 %v3429, 16
      %v3644 = vrot.slane %v3642, 3
      %v3645 = vshll.u32 %v3429, 16
      %v3647 = vrot.slane %v3645, 4
      %v3648 = vor.u32 %v3644, %v3647
      %v3650 = vshrl.u32 %v3430, 16
      %v3652 = vrot.slane %v3650, 3
      %v3653 = vshll.u32 %v3430, 16
      %v3655 = vrot.slane %v3653, 4
      %v3656 = vor.u32 %v3652, %v3655
      %v3657 = vsel %vm478, %v3648, %v3656
      %v3659 = vshrl.u32 %v3431, 16
      %v3661 = vrot.slane %v3659, 3
      %v3662 = vshll.u32 %v3431, 16
      %v3664 = vrot.slane %v3662, 4
      %v3665 = vor.u32 %v3661, %v3664
      %v3667 = vshrl.u32 %v3432, 16
      %v3669 = vrot.slane %v3667, 3
      %v3670 = vshll.u32 %v3432, 16
      %v3672 = vrot.slane %v3670, 4
      %v3673 = vor.u32 %v3669, %v3672
      %v3674 = vsel %vm478, %v3665, %v3673
      %v3676 = vshrl.u32 %v3433, 16
      %v3678 = vrot.slane %v3676, 3
      %v3679 = vshll.u32 %v3433, 16
      %v3681 = vrot.slane %v3679, 4
      %v3682 = vor.u32 %v3678, %v3681
      %v3684 = vshrl.u32 %v3434, 16
      %v3686 = vrot.slane %v3684, 3
      %v3687 = vshll.u32 %v3434, 16
      %v3689 = vrot.slane %v3687, 4
      %v3690 = vor.u32 %v3686, %v3689
      %v3691 = vsel %vm478, %v3682, %v3690
      %v3693 = vshrl.u32 %v3435, 16
      %v3695 = vrot.slane %v3693, 3
      %v3696 = vshll.u32 %v3435, 16
      %v3698 = vrot.slane %v3696, 4
      %v3699 = vor.u32 %v3695, %v3698
      %v3701 = vshrl.u32 %v3436, 16
      %v3703 = vrot.slane %v3701, 3
      %v3704 = vshll.u32 %v3436, 16
      %v3706 = vrot.slane %v3704, 4
      %v3707 = vor.u32 %v3703, %v3706
      %v3708 = vsel %vm478, %v3699, %v3707
      %s3725 = scalar_lea.vmem %s1, 384
      %v3726 = vld [vmem:[%s3725] sm:$0xf]
      %v3727 = vld [vmem:[%s3725 + $0x4] sm:$0xf]
      %v3728 = vld [vmem:[%s3725 + $0x8] sm:$0xf]
      %v3729 = vld [vmem:[%s3725 + $0xc] sm:$0xf]
      %v3730 = vld [vmem:[%s3725 + $0x10] sm:$0xf]
      %v3731 = vld [vmem:[%s3725 + $0x14] sm:$0xf]
      %v3732 = vld [vmem:[%s3725 + $0x18] sm:$0xf]
      %v3733 = vld [vmem:[%s3725 + $0x1c] sm:$0xf]
      %v3734 = vld [vmem:[%s3725 + $0x20] sm:$0xf]
      %v3735 = vld [vmem:[%s3725 + $0x24] sm:$0xf]
      %v3736 = vld [vmem:[%s3725 + $0x28] sm:$0xf]
      %v3737 = vld [vmem:[%s3725 + $0x2c] sm:$0xf]
      %v3738 = vld [vmem:[%s3725 + $0x30] sm:$0xf]
      %v3739 = vld [vmem:[%s3725 + $0x34] sm:$0xf]
      %v3740 = vld [vmem:[%s3725 + $0x38] sm:$0xf]
      %v3741 = vld [vmem:[%s3725 + $0x3c] sm:$0xf]
      %v3758 = vunpack.c.l.b16 %v3726
      %v3759 = vunpack.c.l.b16 %v3727
      %v3760 = vunpack.c.l.b16 %v3728
      %v3761 = vunpack.c.l.b16 %v3729
      %v3762 = vunpack.c.l.b16 %v3730
      %v3763 = vunpack.c.l.b16 %v3731
      %v3764 = vunpack.c.l.b16 %v3732
      %v3765 = vunpack.c.l.b16 %v3733
      %v3766 = vunpack.c.l.b16 %v3734
      %v3767 = vunpack.c.l.b16 %v3735
      %v3768 = vunpack.c.l.b16 %v3736
      %v3769 = vunpack.c.l.b16 %v3737
      %v3770 = vunpack.c.l.b16 %v3738
      %v3771 = vunpack.c.l.b16 %v3739
      %v3772 = vunpack.c.l.b16 %v3740
      %v3773 = vunpack.c.l.b16 %v3741
      %v3774 = vpack.c.b16 %v3759, %v3758
      %v3775 = vpack.c.b16 %v3761, %v3760
      %v3776 = vpack.c.b16 %v3763, %v3762
      %v3777 = vpack.c.b16 %v3765, %v3764
      %v3778 = vpack.c.b16 %v3767, %v3766
      %v3779 = vpack.c.b16 %v3769, %v3768
      %v3780 = vpack.c.b16 %v3771, %v3770
      %v3781 = vpack.c.b16 %v3773, %v3772
      %3790 = vmatprep.subr.bf16.mxu0 0
      %3791 = vmatpush1.bf16.msra.mxu0 %v3774
      %3792 = vmatprep.subr.bf16.mxu0 0
      %3793 = vmatpush1.bf16.msra.mxu0 %v3775
      %3794 = vmatprep.subr.bf16.mxu0 0
      %3795 = vmatpush1.bf16.msra.mxu0 %v3776
      %3796 = vmatprep.subr.bf16.mxu0 0
      %3797 = vmatpush1.bf16.msra.mxu0 %v3777
      %3798 = vmatprep.subr.bf16.mxu0 0
      %3799 = vmatpush1.bf16.msra.mxu0 %v3778
      %3800 = vmatprep.subr.bf16.mxu0 0
      %3801 = vmatpush1.bf16.msra.mxu0 %v3779
      %3802 = vmatprep.subr.bf16.mxu0 0
      %3803 = vmatpush1.bf16.msra.mxu0 %v3780
      %3804 = vmatprep.subr.bf16.mxu0 0
      %3805 = vmatpush1.bf16.msra.mxu0 %v3781
      %3806 = vmatprep.subr.bf16.mxu0 0
      %3807 = vmatpush1.bf16.msra.mxu0 0
      %3808 = vmatprep.subr.bf16.mxu0 0
      %3809 = vmatpush1.bf16.msra.mxu0 0
      %3810 = vmatprep.subr.bf16.mxu0 0
      %3811 = vmatpush1.bf16.msra.mxu0 0
      %3812 = vmatprep.subr.bf16.mxu0 0
      %3813 = vmatpush1.bf16.msra.mxu0 0
      %3814 = vmatprep.subr.bf16.mxu0 0
      %3815 = vmatpush1.bf16.msra.mxu0 0
      %3816 = vmatprep.subr.bf16.mxu0 0
      %3817 = vmatpush1.bf16.msra.mxu0 0
      %3818 = vmatprep.subr.bf16.mxu0 0
      %3819 = vmatpush1.bf16.msra.mxu0 0
      %3820 = vmatprep.subr.bf16.mxu0 0
      %3821 = vmatpush1.bf16.msra.mxu0 0
      %3822 = vmatprep.mubr.bf16.mxu0 0
      %3823 = vmatmul.mubr.bf16.gmra.mrb[0].mxu0 %v3453
      %v3824 = vpop.f32.mrb[0].mxu0
      %v3825 = vadd.f32 0.0, %v3824
      %v3826 = vpop.f32.mrb[0].mxu0
      %v3827 = vpop.f32.mrb[0].mxu0
      %v3828 = vadd.f32 0.0, %v3827
      %v3829 = vpop.f32.mrb[0].mxu0
      %3830 = vmatprep.mubr.bf16.mxu0 0
      %3831 = vmatmul.mubr.bf16.gmra.mrb[0].mxu0 %v3470
      %v3832 = vpop.f32.mrb[0].mxu0
      %v3833 = vadd.f32 0.0, %v3832
      %v3834 = vpop.f32.mrb[0].mxu0
      %v3835 = vpop.f32.mrb[0].mxu0
      %v3836 = vadd.f32 0.0, %v3835
      %v3837 = vpop.f32.mrb[0].mxu0
      %3838 = vmatprep.mubr.bf16.mxu0 0
      %3839 = vmatmul.mubr.bf16.gmra.mrb[0].mxu0 %v3487
      %v3840 = vpop.f32.mrb[0].mxu0
      %v3841 = vadd.f32 0.0, %v3840
      %v3842 = vpop.f32.mrb[0].mxu0
      %v3843 = vpop.f32.mrb[0].mxu0
      %v3844 = vadd.f32 0.0, %v3843
      %v3845 = vpop.f32.mrb[0].mxu0
      %3846 = vmatprep.mubr.bf16.mxu0 0
      %3847 = vmatmul.mubr.bf16.gmra.mrb[0].mxu0 %v3504
      %v3848 = vpop.f32.mrb[0].mxu0
      %v3849 = vadd.f32 0.0, %v3848
      %v3850 = vpop.f32.mrb[0].mxu0
      %v3851 = vpop.f32.mrb[0].mxu0
      %v3852 = vadd.f32 0.0, %v3851
      %v3853 = vpop.f32.mrb[0].mxu0
      %3854 = vmatprep.mubr.bf16.mxu0 0
      %3855 = vmatmul.mubr.bf16.gmra.mrb[0].mxu0 %v3521
      %v3856 = vpop.f32.mrb[0].mxu0
      %v3857 = vadd.f32 0.0, %v3856
      %v3858 = vpop.f32.mrb[0].mxu0
      %v3859 = vpop.f32.mrb[0].mxu0
      %v3860 = vadd.f32 0.0, %v3859
      %v3861 = vpop.f32.mrb[0].mxu0
      %3862 = vmatprep.mubr.bf16.mxu0 0
      %3863 = vmatmul.mubr.bf16.gmra.mrb[0].mxu0 %v3538
      %v3864 = vpop.f32.mrb[0].mxu0
      %v3865 = vadd.f32 0.0, %v3864
      %v3866 = vpop.f32.mrb[0].mxu0
      %v3867 = vpop.f32.mrb[0].mxu0
      %v3868 = vadd.f32 0.0, %v3867
      %v3869 = vpop.f32.mrb[0].mxu0
      %3870 = vmatprep.mubr.bf16.mxu0 0
      %3871 = vmatmul.mubr.bf16.gmra.mrb[0].mxu0 %v3555
      %v3872 = vpop.f32.mrb[0].mxu0
      %v3873 = vadd.f32 0.0, %v3872
      %v3874 = vpop.f32.mrb[0].mxu0
      %v3875 = vpop.f32.mrb[0].mxu0
      %v3876 = vadd.f32 0.0, %v3875
      %v3877 = vpop.f32.mrb[0].mxu0
      %3878 = vmatprep.mubr.bf16.mxu0 0
      %3879 = vmatmul.mubr.bf16.gmra.mrb[0].mxu0 %v3572
      %v3880 = vpop.f32.mrb[0].mxu0
      %v3881 = vadd.f32 0.0, %v3880
      %v3882 = vpop.f32.mrb[0].mxu0
      %v3883 = vpop.f32.mrb[0].mxu0
      %v3884 = vadd.f32 0.0, %v3883
      %v3885 = vpop.f32.mrb[0].mxu0
      %3886 = vmatprep.mubr.bf16.mxu0 0
      %3887 = vmatmul.mubr.bf16.gmra.mrb[0].mxu0 %v3589
      %v3888 = vpop.f32.mrb[0].mxu0
      %v3889 = vadd.f32 0.0, %v3888
      %v3890 = vpop.f32.mrb[0].mxu0
      %v3891 = vpop.f32.mrb[0].mxu0
      %v3892 = vadd.f32 0.0, %v3891
      %v3893 = vpop.f32.mrb[0].mxu0
      %3894 = vmatprep.mubr.bf16.mxu0 0
      %3895 = vmatmul.mubr.bf16.gmra.mrb[0].mxu0 %v3606
      %v3896 = vpop.f32.mrb[0].mxu0
      %v3897 = vadd.f32 0.0, %v3896
      %v3898 = vpop.f32.mrb[0].mxu0
      %v3899 = vpop.f32.mrb[0].mxu0
      %v3900 = vadd.f32 0.0, %v3899
      %v3901 = vpop.f32.mrb[0].mxu0
      %3902 = vmatprep.mubr.bf16.mxu0 0
      %3903 = vmatmul.mubr.bf16.gmra.mrb[0].mxu0 %v3623
      %v3904 = vpop.f32.mrb[0].mxu0
      %v3905 = vadd.f32 0.0, %v3904
      %v3906 = vpop.f32.mrb[0].mxu0
      %v3907 = vpop.f32.mrb[0].mxu0
      %v3908 = vadd.f32 0.0, %v3907
      %v3909 = vpop.f32.mrb[0].mxu0
      %3910 = vmatprep.mubr.bf16.mxu0 0
      %3911 = vmatmul.mubr.bf16.gmra.mrb[0].mxu0 %v3640
      %v3912 = vpop.f32.mrb[0].mxu0
      %v3913 = vadd.f32 0.0, %v3912
      %v3914 = vpop.f32.mrb[0].mxu0
      %v3915 = vpop.f32.mrb[0].mxu0
      %v3916 = vadd.f32 0.0, %v3915
      %v3917 = vpop.f32.mrb[0].mxu0
      %3918 = vmatprep.mubr.bf16.mxu0 0
      %3919 = vmatmul.mubr.bf16.gmra.mrb[0].mxu0 %v3657
      %v3920 = vpop.f32.mrb[0].mxu0
      %v3921 = vadd.f32 0.0, %v3920
      %v3922 = vpop.f32.mrb[0].mxu0
      %v3923 = vpop.f32.mrb[0].mxu0
      %v3924 = vadd.f32 0.0, %v3923
      %v3925 = vpop.f32.mrb[0].mxu0
      %3926 = vmatprep.mubr.bf16.mxu0 0
      %3927 = vmatmul.mubr.bf16.gmra.mrb[0].mxu0 %v3674
      %v3928 = vpop.f32.mrb[0].mxu0
      %v3929 = vadd.f32 0.0, %v3928
      %v3930 = vpop.f32.mrb[0].mxu0
      %v3931 = vpop.f32.mrb[0].mxu0
      %v3932 = vadd.f32 0.0, %v3931
      %v3933 = vpop.f32.mrb[0].mxu0
      %3934 = vmatprep.mubr.bf16.mxu0 0
      %3935 = vmatmul.mubr.bf16.gmra.mrb[0].mxu0 %v3691
      %v3936 = vpop.f32.mrb[0].mxu0
      %v3937 = vadd.f32 0.0, %v3936
      %v3938 = vpop.f32.mrb[0].mxu0
      %v3939 = vpop.f32.mrb[0].mxu0
      %v3940 = vadd.f32 0.0, %v3939
      %v3941 = vpop.f32.mrb[0].mxu0
      %3942 = vmatprep.mubr.bf16.mxu0 0
      %3943 = vmatmul.mubr.bf16.gmra.mrb[0].mxu0 %v3708
      %v3944 = vpop.f32.mrb[0].mxu0
      %v3945 = vadd.f32 0.0, %v3944
      %v3946 = vpop.f32.mrb[0].mxu0
      %v3947 = vpop.f32.mrb[0].mxu0
      %v3948 = vadd.f32 0.0, %v3947
      %v3949 = vpop.f32.mrb[0].mxu0
      %3950 = vdwg.mxu0
      %v3951 = vadd.f32 %v3372, %v3825
      %v3952 = vadd.f32 %v3373, %v3828
      %v3953 = vadd.f32 %v3374, %v3833
      %v3954 = vadd.f32 %v3375, %v3836
      %v3955 = vadd.f32 %v3376, %v3841
      %v3956 = vadd.f32 %v3377, %v3844
      %v3957 = vadd.f32 %v3378, %v3849
      %v3958 = vadd.f32 %v3379, %v3852
      %v3959 = vadd.f32 %v3380, %v3857
      %v3960 = vadd.f32 %v3381, %v3860
      %v3961 = vadd.f32 %v3382, %v3865
      %v3962 = vadd.f32 %v3383, %v3868
      %v3963 = vadd.f32 %v3384, %v3873
      %v3964 = vadd.f32 %v3385, %v3876
      %v3965 = vadd.f32 %v3386, %v3881
      %v3966 = vadd.f32 %v3387, %v3884
      %v3967 = vadd.f32 %v3388, %v3889
      %v3968 = vadd.f32 %v3389, %v3892
      %v3969 = vadd.f32 %v3390, %v3897
      %v3970 = vadd.f32 %v3391, %v3900
      %v3971 = vadd.f32 %v3392, %v3905
      %v3972 = vadd.f32 %v3393, %v3908
      %v3973 = vadd.f32 %v3394, %v3913
      %v3974 = vadd.f32 %v3395, %v3916
      %v3975 = vadd.f32 %v3396, %v3921
      %v3976 = vadd.f32 %v3397, %v3924
      %v3977 = vadd.f32 %v3398, %v3929
      %v3978 = vadd.f32 %v3399, %v3932
      %v3979 = vadd.f32 %v3400, %v3937
      %v3980 = vadd.f32 %v3401, %v3940
      %v3981 = vadd.f32 %v3402, %v3945
      %v3982 = vadd.f32 %v3403, %v3948
      %v3983 = vld [vmem:[%s3404] sm:$0xf0]
      %v3984 = vld [vmem:[%s3404 + $0x10] sm:$0xf0]
      %v3985 = vld [vmem:[%s3404 + $0x20] sm:$0xf0]
      %v3986 = vld [vmem:[%s3404 + $0x30] sm:$0xf0]
      %v3987 = vld [vmem:[%s3404 + $0x40] sm:$0xf0]
      %v3988 = vld [vmem:[%s3404 + $0x50] sm:$0xf0]
      %v3989 = vld [vmem:[%s3404 + $0x60] sm:$0xf0]
      %v3990 = vld [vmem:[%s3404 + $0x70] sm:$0xf0]
      %v3991 = vld [vmem:[%s3404 + $0x80] sm:$0xf0]
      %v3992 = vld [vmem:[%s3404 + $0x90] sm:$0xf0]
      %v3993 = vld [vmem:[%s3404 + $0xa0] sm:$0xf0]
      %v3994 = vld [vmem:[%s3404 + $0xb0] sm:$0xf0]
      %v3995 = vld [vmem:[%s3404 + $0xc0] sm:$0xf0]
      %v3996 = vld [vmem:[%s3404 + $0xd0] sm:$0xf0]
      %v3997 = vld [vmem:[%s3404 + $0xe0] sm:$0xf0]
      %v3998 = vld [vmem:[%s3404 + $0xf0] sm:$0xf0]
      %v4031 = vrot.slane %v3983, 4
      %v4032 = vrot.slane %v3406, 4
      %v4033 = vsel %vm831, %v4031, %v4032
      %v4034 = vrot.slane %v3984, 4
      %v4035 = vrot.slane %v3408, 4
      %v4036 = vsel %vm831, %v4034, %v4035
      %v4037 = vrot.slane %v3985, 4
      %v4038 = vrot.slane %v3410, 4
      %v4039 = vsel %vm831, %v4037, %v4038
      %v4040 = vrot.slane %v3986, 4
      %v4041 = vrot.slane %v3412, 4
      %v4042 = vsel %vm831, %v4040, %v4041
      %v4043 = vrot.slane %v3987, 4
      %v4044 = vrot.slane %v3414, 4
      %v4045 = vsel %vm831, %v4043, %v4044
      %v4046 = vrot.slane %v3988, 4
      %v4047 = vrot.slane %v3416, 4
      %v4048 = vsel %vm831, %v4046, %v4047
      %v4049 = vrot.slane %v3989, 4
      %v4050 = vrot.slane %v3418, 4
      %v4051 = vsel %vm831, %v4049, %v4050
      %v4052 = vrot.slane %v3990, 4
      %v4053 = vrot.slane %v3420, 4
      %v4054 = vsel %vm831, %v4052, %v4053
      %v4055 = vrot.slane %v3991, 4
      %v4056 = vrot.slane %v3422, 4
      %v4057 = vsel %vm831, %v4055, %v4056
      %v4058 = vrot.slane %v3992, 4
      %v4059 = vrot.slane %v3424, 4
      %v4060 = vsel %vm831, %v4058, %v4059
      %v4061 = vrot.slane %v3993, 4
      %v4062 = vrot.slane %v3426, 4
      %v4063 = vsel %vm831, %v4061, %v4062
      %v4064 = vrot.slane %v3994, 4
      %v4065 = vrot.slane %v3428, 4
      %v4066 = vsel %vm831, %v4064, %v4065
      %v4067 = vrot.slane %v3995, 4
      %v4068 = vrot.slane %v3430, 4
      %v4069 = vsel %vm831, %v4067, %v4068
      %v4070 = vrot.slane %v3996, 4
      %v4071 = vrot.slane %v3432, 4
      %v4072 = vsel %vm831, %v4070, %v4071
      %v4073 = vrot.slane %v3997, 4
      %v4074 = vrot.slane %v3434, 4
      %v4075 = vsel %vm831, %v4073, %v4074
      %v4076 = vrot.slane %v3998, 4
      %v4077 = vrot.slane %v3436, 4
      %v4078 = vsel %vm831, %v4076, %v4077
      %s4095 = scalar_lea.vmem %s1, 448
      %v4096 = vld [vmem:[%s4095] sm:$0xf]
      %v4097 = vld [vmem:[%s4095 + $0x4] sm:$0xf]
      %v4098 = vld [vmem:[%s4095 + $0x8] sm:$0xf]
      %v4099 = vld [vmem:[%s4095 + $0xc] sm:$0xf]
      %v4100 = vld [vmem:[%s4095 + $0x10] sm:$0xf]
      %v4101 = vld [vmem:[%s4095 + $0x14] sm:$0xf]
      %v4102 = vld [vmem:[%s4095 + $0x18] sm:$0xf]
      %v4103 = vld [vmem:[%s4095 + $0x1c] sm:$0xf]
      %v4104 = vld [vmem:[%s4095 + $0x20] sm:$0xf]
      %v4105 = vld [vmem:[%s4095 + $0x24] sm:$0xf]
      %v4106 = vld [vmem:[%s4095 + $0x28] sm:$0xf]
      %v4107 = vld [vmem:[%s4095 + $0x2c] sm:$0xf]
      %v4108 = vld [vmem:[%s4095 + $0x30] sm:$0xf]
      %v4109 = vld [vmem:[%s4095 + $0x34] sm:$0xf]
      %v4110 = vld [vmem:[%s4095 + $0x38] sm:$0xf]
      %v4111 = vld [vmem:[%s4095 + $0x3c] sm:$0xf]
      %v4128 = vunpack.c.l.b16 %v4096
      %v4129 = vunpack.c.l.b16 %v4097
      %v4130 = vunpack.c.l.b16 %v4098
      %v4131 = vunpack.c.l.b16 %v4099
      %v4132 = vunpack.c.l.b16 %v4100
      %v4133 = vunpack.c.l.b16 %v4101
      %v4134 = vunpack.c.l.b16 %v4102
      %v4135 = vunpack.c.l.b16 %v4103
      %v4136 = vunpack.c.l.b16 %v4104
      %v4137 = vunpack.c.l.b16 %v4105
      %v4138 = vunpack.c.l.b16 %v4106
      %v4139 = vunpack.c.l.b16 %v4107
      %v4140 = vunpack.c.l.b16 %v4108
      %v4141 = vunpack.c.l.b16 %v4109
      %v4142 = vunpack.c.l.b16 %v4110
      %v4143 = vunpack.c.l.b16 %v4111
      %v4144 = vpack.c.b16 %v4129, %v4128
      %v4145 = vpack.c.b16 %v4131, %v4130
      %v4146 = vpack.c.b16 %v4133, %v4132
      %v4147 = vpack.c.b16 %v4135, %v4134
      %v4148 = vpack.c.b16 %v4137, %v4136
      %v4149 = vpack.c.b16 %v4139, %v4138
      %v4150 = vpack.c.b16 %v4141, %v4140
      %v4151 = vpack.c.b16 %v4143, %v4142
      %4160 = vmatprep.subr.bf16.mxu0 0
      %4161 = vmatpush1.bf16.msra.mxu0 %v4144
      %4162 = vmatprep.subr.bf16.mxu0 0
      %4163 = vmatpush1.bf16.msra.mxu0 %v4145
      %4164 = vmatprep.subr.bf16.mxu0 0
      %4165 = vmatpush1.bf16.msra.mxu0 %v4146
      %4166 = vmatprep.subr.bf16.mxu0 0
      %4167 = vmatpush1.bf16.msra.mxu0 %v4147
      %4168 = vmatprep.subr.bf16.mxu0 0
      %4169 = vmatpush1.bf16.msra.mxu0 %v4148
      %4170 = vmatprep.subr.bf16.mxu0 0
      %4171 = vmatpush1.bf16.msra.mxu0 %v4149
      %4172 = vmatprep.subr.bf16.mxu0 0
      %4173 = vmatpush1.bf16.msra.mxu0 %v4150
      %4174 = vmatprep.subr.bf16.mxu0 0
      %4175 = vmatpush1.bf16.msra.mxu0 %v4151
      %4176 = vmatprep.subr.bf16.mxu0 0
      %4177 = vmatpush1.bf16.msra.mxu0 0
      %4178 = vmatprep.subr.bf16.mxu0 0
      %4179 = vmatpush1.bf16.msra.mxu0 0
      %4180 = vmatprep.subr.bf16.mxu0 0
      %4181 = vmatpush1.bf16.msra.mxu0 0
      %4182 = vmatprep.subr.bf16.mxu0 0
      %4183 = vmatpush1.bf16.msra.mxu0 0
      %4184 = vmatprep.subr.bf16.mxu0 0
      %4185 = vmatpush1.bf16.msra.mxu0 0
      %4186 = vmatprep.subr.bf16.mxu0 0
      %4187 = vmatpush1.bf16.msra.mxu0 0
      %4188 = vmatprep.subr.bf16.mxu0 0
      %4189 = vmatpush1.bf16.msra.mxu0 0
      %4190 = vmatprep.subr.bf16.mxu0 0
      %4191 = vmatpush1.bf16.msra.mxu0 0
      %4192 = vmatprep.mubr.bf16.mxu0 0
      %4193 = vmatmul.mubr.bf16.gmra.mrb[0].mxu0 %v4033
      %v4194 = vpop.f32.mrb[0].mxu0
      %v4195 = vadd.f32 0.0, %v4194
      %v4196 = vpop.f32.mrb[0].mxu0
      %v4197 = vpop.f32.mrb[0].mxu0
      %v4198 = vadd.f32 0.0, %v4197
      %v4199 = vpop.f32.mrb[0].mxu0
      %4200 = vmatprep.mubr.bf16.mxu0 0
      %4201 = vmatmul.mubr.bf16.gmra.mrb[0].mxu0 %v4036
      %v4202 = vpop.f32.mrb[0].mxu0
      %v4203 = vadd.f32 0.0, %v4202
      %v4204 = vpop.f32.mrb[0].mxu0
      %v4205 = vpop.f32.mrb[0].mxu0
      %v4206 = vadd.f32 0.0, %v4205
      %v4207 = vpop.f32.mrb[0].mxu0
      %4208 = vmatprep.mubr.bf16.mxu0 0
      %4209 = vmatmul.mubr.bf16.gmra.mrb[0].mxu0 %v4039
      %v4210 = vpop.f32.mrb[0].mxu0
      %v4211 = vadd.f32 0.0, %v4210
      %v4212 = vpop.f32.mrb[0].mxu0
      %v4213 = vpop.f32.mrb[0].mxu0
      %v4214 = vadd.f32 0.0, %v4213
      %v4215 = vpop.f32.mrb[0].mxu0
      %4216 = vmatprep.mubr.bf16.mxu0 0
      %4217 = vmatmul.mubr.bf16.gmra.mrb[0].mxu0 %v4042
      %v4218 = vpop.f32.mrb[0].mxu0
      %v4219 = vadd.f32 0.0, %v4218
      %v4220 = vpop.f32.mrb[0].mxu0
      %v4221 = vpop.f32.mrb[0].mxu0
      %v4222 = vadd.f32 0.0, %v4221
      %v4223 = vpop.f32.mrb[0].mxu0
      %4224 = vmatprep.mubr.bf16.mxu0 0
      %4225 = vmatmul.mubr.bf16.gmra.mrb[0].mxu0 %v4045
      %v4226 = vpop.f32.mrb[0].mxu0
      %v4227 = vadd.f32 0.0, %v4226
      %v4228 = vpop.f32.mrb[0].mxu0
      %v4229 = vpop.f32.mrb[0].mxu0
      %v4230 = vadd.f32 0.0, %v4229
      %v4231 = vpop.f32.mrb[0].mxu0
      %4232 = vmatprep.mubr.bf16.mxu0 0
      %4233 = vmatmul.mubr.bf16.gmra.mrb[0].mxu0 %v4048
      %v4234 = vpop.f32.mrb[0].mxu0
      %v4235 = vadd.f32 0.0, %v4234
      %v4236 = vpop.f32.mrb[0].mxu0
      %v4237 = vpop.f32.mrb[0].mxu0
      %v4238 = vadd.f32 0.0, %v4237
      %v4239 = vpop.f32.mrb[0].mxu0
      %4240 = vmatprep.mubr.bf16.mxu0 0
      %4241 = vmatmul.mubr.bf16.gmra.mrb[0].mxu0 %v4051
      %v4242 = vpop.f32.mrb[0].mxu0
      %v4243 = vadd.f32 0.0, %v4242
      %v4244 = vpop.f32.mrb[0].mxu0
      %v4245 = vpop.f32.mrb[0].mxu0
      %v4246 = vadd.f32 0.0, %v4245
      %v4247 = vpop.f32.mrb[0].mxu0
      %4248 = vmatprep.mubr.bf16.mxu0 0
      %4249 = vmatmul.mubr.bf16.gmra.mrb[0].mxu0 %v4054
      %v4250 = vpop.f32.mrb[0].mxu0
      %v4251 = vadd.f32 0.0, %v4250
      %v4252 = vpop.f32.mrb[0].mxu0
      %v4253 = vpop.f32.mrb[0].mxu0
      %v4254 = vadd.f32 0.0, %v4253
      %v4255 = vpop.f32.mrb[0].mxu0
      %4256 = vmatprep.mubr.bf16.mxu0 0
      %4257 = vmatmul.mubr.bf16.gmra.mrb[0].mxu0 %v4057
      %v4258 = vpop.f32.mrb[0].mxu0
      %v4259 = vadd.f32 0.0, %v4258
      %v4260 = vpop.f32.mrb[0].mxu0
      %v4261 = vpop.f32.mrb[0].mxu0
      %v4262 = vadd.f32 0.0, %v4261
      %v4263 = vpop.f32.mrb[0].mxu0
      %4264 = vmatprep.mubr.bf16.mxu0 0
      %4265 = vmatmul.mubr.bf16.gmra.mrb[0].mxu0 %v4060
      %v4266 = vpop.f32.mrb[0].mxu0
      %v4267 = vadd.f32 0.0, %v4266
      %v4268 = vpop.f32.mrb[0].mxu0
      %v4269 = vpop.f32.mrb[0].mxu0
      %v4270 = vadd.f32 0.0, %v4269
      %v4271 = vpop.f32.mrb[0].mxu0
      %4272 = vmatprep.mubr.bf16.mxu0 0
      %4273 = vmatmul.mubr.bf16.gmra.mrb[0].mxu0 %v4063
      %v4274 = vpop.f32.mrb[0].mxu0
      %v4275 = vadd.f32 0.0, %v4274
      %v4276 = vpop.f32.mrb[0].mxu0
      %v4277 = vpop.f32.mrb[0].mxu0
      %v4278 = vadd.f32 0.0, %v4277
      %v4279 = vpop.f32.mrb[0].mxu0
      %4280 = vmatprep.mubr.bf16.mxu0 0
      %4281 = vmatmul.mubr.bf16.gmra.mrb[0].mxu0 %v4066
      %v4282 = vpop.f32.mrb[0].mxu0
      %v4283 = vadd.f32 0.0, %v4282
      %v4284 = vpop.f32.mrb[0].mxu0
      %v4285 = vpop.f32.mrb[0].mxu0
      %v4286 = vadd.f32 0.0, %v4285
      %v4287 = vpop.f32.mrb[0].mxu0
      %4288 = vmatprep.mubr.bf16.mxu0 0
      %4289 = vmatmul.mubr.bf16.gmra.mrb[0].mxu0 %v4069
      %v4290 = vpop.f32.mrb[0].mxu0
      %v4291 = vadd.f32 0.0, %v4290
      %v4292 = vpop.f32.mrb[0].mxu0
      %v4293 = vpop.f32.mrb[0].mxu0
      %v4294 = vadd.f32 0.0, %v4293
      %v4295 = vpop.f32.mrb[0].mxu0
      %4296 = vmatprep.mubr.bf16.mxu0 0
      %4297 = vmatmul.mubr.bf16.gmra.mrb[0].mxu0 %v4072
      %v4298 = vpop.f32.mrb[0].mxu0
      %v4299 = vadd.f32 0.0, %v4298
      %v4300 = vpop.f32.mrb[0].mxu0
      %v4301 = vpop.f32.mrb[0].mxu0
      %v4302 = vadd.f32 0.0, %v4301
      %v4303 = vpop.f32.mrb[0].mxu0
      %4304 = vmatprep.mubr.bf16.mxu0 0
      %4305 = vmatmul.mubr.bf16.gmra.mrb[0].mxu0 %v4075
      %v4306 = vpop.f32.mrb[0].mxu0
      %v4307 = vadd.f32 0.0, %v4306
      %v4308 = vpop.f32.mrb[0].mxu0
      %v4309 = vpop.f32.mrb[0].mxu0
      %v4310 = vadd.f32 0.0, %v4309
      %v4311 = vpop.f32.mrb[0].mxu0
      %4312 = vmatprep.mubr.bf16.mxu0 0
      %4313 = vmatmul.mubr.bf16.gmra.mrb[0].mxu0 %v4078
      %v4314 = vpop.f32.mrb[0].mxu0
      %v4315 = vadd.f32 0.0, %v4314
      %v4316 = vpop.f32.mrb[0].mxu0
      %v4317 = vpop.f32.mrb[0].mxu0
      %v4318 = vadd.f32 0.0, %v4317
      %v4319 = vpop.f32.mrb[0].mxu0
      %4320 = vdwg.mxu0
      %v4321 = vadd.f32 %v3951, %v4195
      %v4322 = vadd.f32 %v3952, %v4198
      %v4323 = vadd.f32 %v3953, %v4203
      %v4324 = vadd.f32 %v3954, %v4206
      %v4325 = vadd.f32 %v3955, %v4211
      %v4326 = vadd.f32 %v3956, %v4214
      %v4327 = vadd.f32 %v3957, %v4219
      %v4328 = vadd.f32 %v3958, %v4222
      %v4329 = vadd.f32 %v3959, %v4227
      %v4330 = vadd.f32 %v3960, %v4230
      %v4331 = vadd.f32 %v3961, %v4235
      %v4332 = vadd.f32 %v3962, %v4238
      %v4333 = vadd.f32 %v3963, %v4243
      %v4334 = vadd.f32 %v3964, %v4246
      %v4335 = vadd.f32 %v3965, %v4251
      %v4336 = vadd.f32 %v3966, %v4254
      %v4337 = vadd.f32 %v3967, %v4259
      %v4338 = vadd.f32 %v3968, %v4262
      %v4339 = vadd.f32 %v3969, %v4267
      %v4340 = vadd.f32 %v3970, %v4270
      %v4341 = vadd.f32 %v3971, %v4275
      %v4342 = vadd.f32 %v3972, %v4278
      %v4343 = vadd.f32 %v3973, %v4283
      %v4344 = vadd.f32 %v3974, %v4286
      %v4345 = vadd.f32 %v3975, %v4291
      %v4346 = vadd.f32 %v3976, %v4294
      %v4347 = vadd.f32 %v3977, %v4299
      %v4348 = vadd.f32 %v3978, %v4302
      %v4349 = vadd.f32 %v3979, %v4307
      %v4350 = vadd.f32 %v3980, %v4310
      %v4351 = vadd.f32 %v3981, %v4315
      %v4352 = vadd.f32 %v3982, %v4318
      %v4353 = vld [vmem:[%s3404 + $0x8] sm:$0x1f]
      %v4354 = vld [vmem:[%s3404 + $0x18] sm:$0x1f]
      %v4355 = vld [vmem:[%s3404 + $0x28] sm:$0x1f]
      %v4356 = vld [vmem:[%s3404 + $0x38] sm:$0x1f]
      %v4357 = vld [vmem:[%s3404 + $0x48] sm:$0x1f]
      %v4358 = vld [vmem:[%s3404 + $0x58] sm:$0x1f]
      %v4359 = vld [vmem:[%s3404 + $0x68] sm:$0x1f]
      %v4360 = vld [vmem:[%s3404 + $0x78] sm:$0x1f]
      %v4361 = vld [vmem:[%s3404 + $0x88] sm:$0x1f]
      %v4362 = vld [vmem:[%s3404 + $0x98] sm:$0x1f]
      %v4363 = vld [vmem:[%s3404 + $0xa8] sm:$0x1f]
      %v4364 = vld [vmem:[%s3404 + $0xb8] sm:$0x1f]
      %v4365 = vld [vmem:[%s3404 + $0xc8] sm:$0x1f]
      %v4366 = vld [vmem:[%s3404 + $0xd8] sm:$0x1f]
      %v4367 = vld [vmem:[%s3404 + $0xe8] sm:$0x1f]
      %v4368 = vld [vmem:[%s3404 + $0xf8] sm:$0x1f]
      %v4370 = vshrl.u32 %v3983, 16
      %v4372 = vrot.slane %v4370, 4
      %v4373 = vshll.u32 %v3983, 16
      %v4375 = vrot.slane %v4373, 5
      %v4376 = vor.u32 %v4372, %v4375
      %v4378 = vshrl.u32 %v4353, 16
      %v4380 = vrot.slane %v4378, 4
      %v4381 = vshll.u32 %v4353, 16
      %v4383 = vrot.slane %v4381, 5
      %v4384 = vor.u32 %v4380, %v4383
      %v4385 = vsel %vm1347, %v4376, %v4384
      %v4387 = vshrl.u32 %v3984, 16
      %v4389 = vrot.slane %v4387, 4
      %v4390 = vshll.u32 %v3984, 16
      %v4392 = vrot.slane %v4390, 5
      %v4393 = vor.u32 %v4389, %v4392
      %v4395 = vshrl.u32 %v4354, 16
      %v4397 = vrot.slane %v4395, 4
      %v4398 = vshll.u32 %v4354, 16
      %v4400 = vrot.slane %v4398, 5
      %v4401 = vor.u32 %v4397, %v4400
      %v4402 = vsel %vm1347, %v4393, %v4401
      %v4404 = vshrl.u32 %v3985, 16
      %v4406 = vrot.slane %v4404, 4
      %v4407 = vshll.u32 %v3985, 16
      %v4409 = vrot.slane %v4407, 5
      %v4410 = vor.u32 %v4406, %v4409
      %v4412 = vshrl.u32 %v4355, 16
      %v4414 = vrot.slane %v4412, 4
      %v4415 = vshll.u32 %v4355, 16
      %v4417 = vrot.slane %v4415, 5
      %v4418 = vor.u32 %v4414, %v4417
      %v4419 = vsel %vm1347, %v4410, %v4418
      %v4421 = vshrl.u32 %v3986, 16
      %v4423 = vrot.slane %v4421, 4
      %v4424 = vshll.u32 %v3986, 16
      %v4426 = vrot.slane %v4424, 5
      %v4427 = vor.u32 %v4423, %v4426
      %v4429 = vshrl.u32 %v4356, 16
      %v4431 = vrot.slane %v4429, 4
      %v4432 = vshll.u32 %v4356, 16
      %v4434 = vrot.slane %v4432, 5
      %v4435 = vor.u32 %v4431, %v4434
      %v4436 = vsel %vm1347, %v4427, %v4435
      %v4438 = vshrl.u32 %v3987, 16
      %v4440 = vrot.slane %v4438, 4
      %v4441 = vshll.u32 %v3987, 16
      %v4443 = vrot.slane %v4441, 5
      %v4444 = vor.u32 %v4440, %v4443
      %v4446 = vshrl.u32 %v4357, 16
      %v4448 = vrot.slane %v4446, 4
      %v4449 = vshll.u32 %v4357, 16
      %v4451 = vrot.slane %v4449, 5
      %v4452 = vor.u32 %v4448, %v4451
      %v4453 = vsel %vm1347, %v4444, %v4452
      %v4455 = vshrl.u32 %v3988, 16
      %v4457 = vrot.slane %v4455, 4
      %v4458 = vshll.u32 %v3988, 16
      %v4460 = vrot.slane %v4458, 5
      %v4461 = vor.u32 %v4457, %v4460
      %v4463 = vshrl.u32 %v4358, 16
      %v4465 = vrot.slane %v4463, 4
      %v4466 = vshll.u32 %v4358, 16
      %v4468 = vrot.slane %v4466, 5
      %v4469 = vor.u32 %v4465, %v4468
      %v4470 = vsel %vm1347, %v4461, %v4469
      %v4472 = vshrl.u32 %v3989, 16
      %v4474 = vrot.slane %v4472, 4
      %v4475 = vshll.u32 %v3989, 16
      %v4477 = vrot.slane %v4475, 5
      %v4478 = vor.u32 %v4474, %v4477
      %v4480 = vshrl.u32 %v4359, 16
      %v4482 = vrot.slane %v4480, 4
      %v4483 = vshll.u32 %v4359, 16
      %v4485 = vrot.slane %v4483, 5
      %v4486 = vor.u32 %v4482, %v4485
      %v4487 = vsel %vm1347, %v4478, %v4486
      %v4489 = vshrl.u32 %v3990, 16
      %v4491 = vrot.slane %v4489, 4
      %v4492 = vshll.u32 %v3990, 16
      %v4494 = vrot.slane %v4492, 5
      %v4495 = vor.u32 %v4491, %v4494
      %v4497 = vshrl.u32 %v4360, 16
      %v4499 = vrot.slane %v4497, 4
      %v4500 = vshll.u32 %v4360, 16
      %v4502 = vrot.slane %v4500, 5
      %v4503 = vor.u32 %v4499, %v4502
      %v4504 = vsel %vm1347, %v4495, %v4503
      %v4506 = vshrl.u32 %v3991, 16
      %v4508 = vrot.slane %v4506, 4
      %v4509 = vshll.u32 %v3991, 16
      %v4511 = vrot.slane %v4509, 5
      %v4512 = vor.u32 %v4508, %v4511
      %v4514 = vshrl.u32 %v4361, 16
      %v4516 = vrot.slane %v4514, 4
      %v4517 = vshll.u32 %v4361, 16
      %v4519 = vrot.slane %v4517, 5
      %v4520 = vor.u32 %v4516, %v4519
      %v4521 = vsel %vm1347, %v4512, %v4520
      %v4523 = vshrl.u32 %v3992, 16
      %v4525 = vrot.slane %v4523, 4
      %v4526 = vshll.u32 %v3992, 16
      %v4528 = vrot.slane %v4526, 5
      %v4529 = vor.u32 %v4525, %v4528
      %v4531 = vshrl.u32 %v4362, 16
      %v4533 = vrot.slane %v4531, 4
      %v4534 = vshll.u32 %v4362, 16
      %v4536 = vrot.slane %v4534, 5
      %v4537 = vor.u32 %v4533, %v4536
      %v4538 = vsel %vm1347, %v4529, %v4537
      %v4540 = vshrl.u32 %v3993, 16
      %v4542 = vrot.slane %v4540, 4
      %v4543 = vshll.u32 %v3993, 16
      %v4545 = vrot.slane %v4543, 5
      %v4546 = vor.u32 %v4542, %v4545
      %v4548 = vshrl.u32 %v4363, 16
      %v4550 = vrot.slane %v4548, 4
      %v4551 = vshll.u32 %v4363, 16
      %v4553 = vrot.slane %v4551, 5
      %v4554 = vor.u32 %v4550, %v4553
      %v4555 = vsel %vm1347, %v4546, %v4554
      %v4557 = vshrl.u32 %v3994, 16
      %v4559 = vrot.slane %v4557, 4
      %v4560 = vshll.u32 %v3994, 16
      %v4562 = vrot.slane %v4560, 5
      %v4563 = vor.u32 %v4559, %v4562
      %v4565 = vshrl.u32 %v4364, 16
      %v4567 = vrot.slane %v4565, 4
      %v4568 = vshll.u32 %v4364, 16
      %v4570 = vrot.slane %v4568, 5
      %v4571 = vor.u32 %v4567, %v4570
      %v4572 = vsel %vm1347, %v4563, %v4571
      %v4574 = vshrl.u32 %v3995, 16
      %v4576 = vrot.slane %v4574, 4
      %v4577 = vshll.u32 %v3995, 16
      %v4579 = vrot.slane %v4577, 5
      %v4580 = vor.u32 %v4576, %v4579
      %v4582 = vshrl.u32 %v4365, 16
      %v4584 = vrot.slane %v4582, 4
      %v4585 = vshll.u32 %v4365, 16
      %v4587 = vrot.slane %v4585, 5
      %v4588 = vor.u32 %v4584, %v4587
      %v4589 = vsel %vm1347, %v4580, %v4588
      %v4591 = vshrl.u32 %v3996, 16
      %v4593 = vrot.slane %v4591, 4
      %v4594 = vshll.u32 %v3996, 16
      %v4596 = vrot.slane %v4594, 5
      %v4597 = vor.u32 %v4593, %v4596
      %v4599 = vshrl.u32 %v4366, 16
      %v4601 = vrot.slane %v4599, 4
      %v4602 = vshll.u32 %v4366, 16
      %v4604 = vrot.slane %v4602, 5
      %v4605 = vor.u32 %v4601, %v4604
      %v4606 = vsel %vm1347, %v4597, %v4605
      %v4608 = vshrl.u32 %v3997, 16
      %v4610 = vrot.slane %v4608, 4
      %v4611 = vshll.u32 %v3997, 16
      %v4613 = vrot.slane %v4611, 5
      %v4614 = vor.u32 %v4610, %v4613
      %v4616 = vshrl.u32 %v4367, 16
      %v4618 = vrot.slane %v4616, 4
      %v4619 = vshll.u32 %v4367, 16
      %v4621 = vrot.slane %v4619, 5
      %v4622 = vor.u32 %v4618, %v4621
      %v4623 = vsel %vm1347, %v4614, %v4622
      %v4625 = vshrl.u32 %v3998, 16
      %v4627 = vrot.slane %v4625, 4
      %v4628 = vshll.u32 %v3998, 16
      %v4630 = vrot.slane %v4628, 5
      %v4631 = vor.u32 %v4627, %v4630
      %v4633 = vshrl.u32 %v4368, 16
      %v4635 = vrot.slane %v4633, 4
      %v4636 = vshll.u32 %v4368, 16
      %v4638 = vrot.slane %v4636, 5
      %v4639 = vor.u32 %v4635, %v4638
      %v4640 = vsel %vm1347, %v4631, %v4639
      %s4657 = scalar_lea.vmem %s1, 512
      %v4658 = vld [vmem:[%s4657] sm:$0xf]
      %v4659 = vld [vmem:[%s4657 + $0x4] sm:$0xf]
      %v4660 = vld [vmem:[%s4657 + $0x8] sm:$0xf]
      %v4661 = vld [vmem:[%s4657 + $0xc] sm:$0xf]
      %v4662 = vld [vmem:[%s4657 + $0x10] sm:$0xf]
      %v4663 = vld [vmem:[%s4657 + $0x14] sm:$0xf]
      %v4664 = vld [vmem:[%s4657 + $0x18] sm:$0xf]
      %v4665 = vld [vmem:[%s4657 + $0x1c] sm:$0xf]
      %v4666 = vld [vmem:[%s4657 + $0x20] sm:$0xf]
      %v4667 = vld [vmem:[%s4657 + $0x24] sm:$0xf]
      %v4668 = vld [vmem:[%s4657 + $0x28] sm:$0xf]
      %v4669 = vld [vmem:[%s4657 + $0x2c] sm:$0xf]
      %v4670 = vld [vmem:[%s4657 + $0x30] sm:$0xf]
      %v4671 = vld [vmem:[%s4657 + $0x34] sm:$0xf]
      %v4672 = vld [vmem:[%s4657 + $0x38] sm:$0xf]
      %v4673 = vld [vmem:[%s4657 + $0x3c] sm:$0xf]
      %v4690 = vunpack.c.l.b16 %v4658
      %v4691 = vunpack.c.l.b16 %v4659
      %v4692 = vunpack.c.l.b16 %v4660
      %v4693 = vunpack.c.l.b16 %v4661
      %v4694 = vunpack.c.l.b16 %v4662
      %v4695 = vunpack.c.l.b16 %v4663
      %v4696 = vunpack.c.l.b16 %v4664
      %v4697 = vunpack.c.l.b16 %v4665
      %v4698 = vunpack.c.l.b16 %v4666
      %v4699 = vunpack.c.l.b16 %v4667
      %v4700 = vunpack.c.l.b16 %v4668
      %v4701 = vunpack.c.l.b16 %v4669
      %v4702 = vunpack.c.l.b16 %v4670
      %v4703 = vunpack.c.l.b16 %v4671
      %v4704 = vunpack.c.l.b16 %v4672
      %v4705 = vunpack.c.l.b16 %v4673
      %v4706 = vpack.c.b16 %v4691, %v4690
      %v4707 = vpack.c.b16 %v4693, %v4692
      %v4708 = vpack.c.b16 %v4695, %v4694
      %v4709 = vpack.c.b16 %v4697, %v4696
      %v4710 = vpack.c.b16 %v4699, %v4698
      %v4711 = vpack.c.b16 %v4701, %v4700
      %v4712 = vpack.c.b16 %v4703, %v4702
      %v4713 = vpack.c.b16 %v4705, %v4704
      %4722 = vmatprep.subr.bf16.mxu0 0
      %4723 = vmatpush1.bf16.msra.mxu0 %v4706
      %4724 = vmatprep.subr.bf16.mxu0 0
      %4725 = vmatpush1.bf16.msra.mxu0 %v4707
      %4726 = vmatprep.subr.bf16.mxu0 0
      %4727 = vmatpush1.bf16.msra.mxu0 %v4708
      %4728 = vmatprep.subr.bf16.mxu0 0
      %4729 = vmatpush1.bf16.msra.mxu0 %v4709
      %4730 = vmatprep.subr.bf16.mxu0 0
      %4731 = vmatpush1.bf16.msra.mxu0 %v4710
      %4732 = vmatprep.subr.bf16.mxu0 0
      %4733 = vmatpush1.bf16.msra.mxu0 %v4711
      %4734 = vmatprep.subr.bf16.mxu0 0
      %4735 = vmatpush1.bf16.msra.mxu0 %v4712
      %4736 = vmatprep.subr.bf16.mxu0 0
      %4737 = vmatpush1.bf16.msra.mxu0 %v4713
      %4738 = vmatprep.subr.bf16.mxu0 0
      %4739 = vmatpush1.bf16.msra.mxu0 0
      %4740 = vmatprep.subr.bf16.mxu0 0
      %4741 = vmatpush1.bf16.msra.mxu0 0
      %4742 = vmatprep.subr.bf16.mxu0 0
      %4743 = vmatpush1.bf16.msra.mxu0 0
      %4744 = vmatprep.subr.bf16.mxu0 0
      %4745 = vmatpush1.bf16.msra.mxu0 0
      %4746 = vmatprep.subr.bf16.mxu0 0
      %4747 = vmatpush1.bf16.msra.mxu0 0
      %4748 = vmatprep.subr.bf16.mxu0 0
      %4749 = vmatpush1.bf16.msra.mxu0 0
      %4750 = vmatprep.subr.bf16.mxu0 0
      %4751 = vmatpush1.bf16.msra.mxu0 0
      %4752 = vmatprep.subr.bf16.mxu0 0
      %4753 = vmatpush1.bf16.msra.mxu0 0
      %4754 = vmatprep.mubr.bf16.mxu0 0
      %4755 = vmatmul.mubr.bf16.gmra.mrb[0].mxu0 %v4385
      %v4756 = vpop.f32.mrb[0].mxu0
      %v4757 = vadd.f32 0.0, %v4756
      %v4758 = vpop.f32.mrb[0].mxu0
      %v4759 = vpop.f32.mrb[0].mxu0
      %v4760 = vadd.f32 0.0, %v4759
      %v4761 = vpop.f32.mrb[0].mxu0
      %4762 = vmatprep.mubr.bf16.mxu0 0
      %4763 = vmatmul.mubr.bf16.gmra.mrb[0].mxu0 %v4402
      %v4764 = vpop.f32.mrb[0].mxu0
      %v4765 = vadd.f32 0.0, %v4764
      %v4766 = vpop.f32.mrb[0].mxu0
      %v4767 = vpop.f32.mrb[0].mxu0
      %v4768 = vadd.f32 0.0, %v4767
      %v4769 = vpop.f32.mrb[0].mxu0
      %4770 = vmatprep.mubr.bf16.mxu0 0
      %4771 = vmatmul.mubr.bf16.gmra.mrb[0].mxu0 %v4419
      %v4772 = vpop.f32.mrb[0].mxu0
      %v4773 = vadd.f32 0.0, %v4772
      %v4774 = vpop.f32.mrb[0].mxu0
      %v4775 = vpop.f32.mrb[0].mxu0
      %v4776 = vadd.f32 0.0, %v4775
      %v4777 = vpop.f32.mrb[0].mxu0
      %4778 = vmatprep.mubr.bf16.mxu0 0
      %4779 = vmatmul.mubr.bf16.gmra.mrb[0].mxu0 %v4436
      %v4780 = vpop.f32.mrb[0].mxu0
      %v4781 = vadd.f32 0.0, %v4780
      %v4782 = vpop.f32.mrb[0].mxu0
      %v4783 = vpop.f32.mrb[0].mxu0
      %v4784 = vadd.f32 0.0, %v4783
      %v4785 = vpop.f32.mrb[0].mxu0
      %4786 = vmatprep.mubr.bf16.mxu0 0
      %4787 = vmatmul.mubr.bf16.gmra.mrb[0].mxu0 %v4453
      %v4788 = vpop.f32.mrb[0].mxu0
      %v4789 = vadd.f32 0.0, %v4788
      %v4790 = vpop.f32.mrb[0].mxu0
      %v4791 = vpop.f32.mrb[0].mxu0
      %v4792 = vadd.f32 0.0, %v4791
      %v4793 = vpop.f32.mrb[0].mxu0
      %4794 = vmatprep.mubr.bf16.mxu0 0
      %4795 = vmatmul.mubr.bf16.gmra.mrb[0].mxu0 %v4470
      %v4796 = vpop.f32.mrb[0].mxu0
      %v4797 = vadd.f32 0.0, %v4796
      %v4798 = vpop.f32.mrb[0].mxu0
      %v4799 = vpop.f32.mrb[0].mxu0
      %v4800 = vadd.f32 0.0, %v4799
      %v4801 = vpop.f32.mrb[0].mxu0
      %4802 = vmatprep.mubr.bf16.mxu0 0
      %4803 = vmatmul.mubr.bf16.gmra.mrb[0].mxu0 %v4487
      %v4804 = vpop.f32.mrb[0].mxu0
      %v4805 = vadd.f32 0.0, %v4804
      %v4806 = vpop.f32.mrb[0].mxu0
      %v4807 = vpop.f32.mrb[0].mxu0
      %v4808 = vadd.f32 0.0, %v4807
      %v4809 = vpop.f32.mrb[0].mxu0
      %4810 = vmatprep.mubr.bf16.mxu0 0
      %4811 = vmatmul.mubr.bf16.gmra.mrb[0].mxu0 %v4504
      %v4812 = vpop.f32.mrb[0].mxu0
      %v4813 = vadd.f32 0.0, %v4812
      %v4814 = vpop.f32.mrb[0].mxu0
      %v4815 = vpop.f32.mrb[0].mxu0
      %v4816 = vadd.f32 0.0, %v4815
      %v4817 = vpop.f32.mrb[0].mxu0
      %4818 = vmatprep.mubr.bf16.mxu0 0
      %4819 = vmatmul.mubr.bf16.gmra.mrb[0].mxu0 %v4521
      %v4820 = vpop.f32.mrb[0].mxu0
      %v4821 = vadd.f32 0.0, %v4820
      %v4822 = vpop.f32.mrb[0].mxu0
      %v4823 = vpop.f32.mrb[0].mxu0
      %v4824 = vadd.f32 0.0, %v4823
      %v4825 = vpop.f32.mrb[0].mxu0
      %4826 = vmatprep.mubr.bf16.mxu0 0
      %4827 = vmatmul.mubr.bf16.gmra.mrb[0].mxu0 %v4538
      %v4828 = vpop.f32.mrb[0].mxu0
      %v4829 = vadd.f32 0.0, %v4828
      %v4830 = vpop.f32.mrb[0].mxu0
      %v4831 = vpop.f32.mrb[0].mxu0
      %v4832 = vadd.f32 0.0, %v4831
      %v4833 = vpop.f32.mrb[0].mxu0
      %4834 = vmatprep.mubr.bf16.mxu0 0
      %4835 = vmatmul.mubr.bf16.gmra.mrb[0].mxu0 %v4555
      %v4836 = vpop.f32.mrb[0].mxu0
      %v4837 = vadd.f32 0.0, %v4836
      %v4838 = vpop.f32.mrb[0].mxu0
      %v4839 = vpop.f32.mrb[0].mxu0
      %v4840 = vadd.f32 0.0, %v4839
      %v4841 = vpop.f32.mrb[0].mxu0
      %4842 = vmatprep.mubr.bf16.mxu0 0
      %4843 = vmatmul.mubr.bf16.gmra.mrb[0].mxu0 %v4572
      %v4844 = vpop.f32.mrb[0].mxu0
      %v4845 = vadd.f32 0.0, %v4844
      %v4846 = vpop.f32.mrb[0].mxu0
      %v4847 = vpop.f32.mrb[0].mxu0
      %v4848 = vadd.f32 0.0, %v4847
      %v4849 = vpop.f32.mrb[0].mxu0
      %4850 = vmatprep.mubr.bf16.mxu0 0
      %4851 = vmatmul.mubr.bf16.gmra.mrb[0].mxu0 %v4589
      %v4852 = vpop.f32.mrb[0].mxu0
      %v4853 = vadd.f32 0.0, %v4852
      %v4854 = vpop.f32.mrb[0].mxu0
      %v4855 = vpop.f32.mrb[0].mxu0
      %v4856 = vadd.f32 0.0, %v4855
      %v4857 = vpop.f32.mrb[0].mxu0
      %4858 = vmatprep.mubr.bf16.mxu0 0
      %4859 = vmatmul.mubr.bf16.gmra.mrb[0].mxu0 %v4606
      %v4860 = vpop.f32.mrb[0].mxu0
      %v4861 = vadd.f32 0.0, %v4860
      %v4862 = vpop.f32.mrb[0].mxu0
      %v4863 = vpop.f32.mrb[0].mxu0
      %v4864 = vadd.f32 0.0, %v4863
      %v4865 = vpop.f32.mrb[0].mxu0
      %4866 = vmatprep.mubr.bf16.mxu0 0
      %4867 = vmatmul.mubr.bf16.gmra.mrb[0].mxu0 %v4623
      %v4868 = vpop.f32.mrb[0].mxu0
      %v4869 = vadd.f32 0.0, %v4868
      %v4870 = vpop.f32.mrb[0].mxu0
      %v4871 = vpop.f32.mrb[0].mxu0
      %v4872 = vadd.f32 0.0, %v4871
      %v4873 = vpop.f32.mrb[0].mxu0
      %4874 = vmatprep.mubr.bf16.mxu0 0
      %4875 = vmatmul.mubr.bf16.gmra.mrb[0].mxu0 %v4640
      %v4876 = vpop.f32.mrb[0].mxu0
      %v4877 = vadd.f32 0.0, %v4876
      %v4878 = vpop.f32.mrb[0].mxu0
      %v4879 = vpop.f32.mrb[0].mxu0
      %v4880 = vadd.f32 0.0, %v4879
      %v4881 = vpop.f32.mrb[0].mxu0
      %4882 = vdwg.mxu0
      %v4883 = vadd.f32 %v4321, %v4757
      %v4884 = vadd.f32 %v4322, %v4760
      %v4885 = vadd.f32 %v4323, %v4765
      %v4886 = vadd.f32 %v4324, %v4768
      %v4887 = vadd.f32 %v4325, %v4773
      %v4888 = vadd.f32 %v4326, %v4776
      %v4889 = vadd.f32 %v4327, %v4781
      %v4890 = vadd.f32 %v4328, %v4784
      %v4891 = vadd.f32 %v4329, %v4789
      %v4892 = vadd.f32 %v4330, %v4792
      %v4893 = vadd.f32 %v4331, %v4797
      %v4894 = vadd.f32 %v4332, %v4800
      %v4895 = vadd.f32 %v4333, %v4805
      %v4896 = vadd.f32 %v4334, %v4808
      %v4897 = vadd.f32 %v4335, %v4813
      %v4898 = vadd.f32 %v4336, %v4816
      %v4899 = vadd.f32 %v4337, %v4821
      %v4900 = vadd.f32 %v4338, %v4824
      %v4901 = vadd.f32 %v4339, %v4829
      %v4902 = vadd.f32 %v4340, %v4832
      %v4903 = vadd.f32 %v4341, %v4837
      %v4904 = vadd.f32 %v4342, %v4840
      %v4905 = vadd.f32 %v4343, %v4845
      %v4906 = vadd.f32 %v4344, %v4848
      %v4907 = vadd.f32 %v4345, %v4853
      %v4908 = vadd.f32 %v4346, %v4856
      %v4909 = vadd.f32 %v4347, %v4861
      %v4910 = vadd.f32 %v4348, %v4864
      %v4911 = vadd.f32 %v4349, %v4869
      %v4912 = vadd.f32 %v4350, %v4872
      %v4913 = vadd.f32 %v4351, %v4877
      %v4914 = vadd.f32 %v4352, %v4880
      %v4915 = vpack.c.bf16 %v4884, %v4883
      %v4916 = vpack.c.bf16 %v4886, %v4885
      %v4917 = vpack.c.bf16 %v4888, %v4887
      %v4918 = vpack.c.bf16 %v4890, %v4889
      %v4919 = vpack.c.bf16 %v4892, %v4891
      %v4920 = vpack.c.bf16 %v4894, %v4893
      %v4921 = vpack.c.bf16 %v4896, %v4895
      %v4922 = vpack.c.bf16 %v4898, %v4897
      %v4923 = vpack.c.bf16 %v4900, %v4899
      %v4924 = vpack.c.bf16 %v4902, %v4901
      %v4925 = vpack.c.bf16 %v4904, %v4903
      %v4926 = vpack.c.bf16 %v4906, %v4905
      %v4927 = vpack.c.bf16 %v4908, %v4907
      %v4928 = vpack.c.bf16 %v4910, %v4909
      %v4929 = vpack.c.bf16 %v4912, %v4911
      %v4930 = vpack.c.bf16 %v4914, %v4913
      %v4947 = vunpack.c.l.b16 %v4915
      %v4948 = vunpack.c.h.b16 %v4915
      %v4949 = vunpack.c.l.b16 %v4916
      %v4950 = vunpack.c.h.b16 %v4916
      %v4951 = vunpack.c.l.b16 %v4917
      %v4952 = vunpack.c.h.b16 %v4917
      %v4953 = vunpack.c.l.b16 %v4918
      %v4954 = vunpack.c.h.b16 %v4918
      %v4955 = vunpack.c.l.b16 %v4919
      %v4956 = vunpack.c.h.b16 %v4919
      %v4957 = vunpack.c.l.b16 %v4920
      %v4958 = vunpack.c.h.b16 %v4920
      %v4959 = vunpack.c.l.b16 %v4921
      %v4960 = vunpack.c.h.b16 %v4921
      %v4961 = vunpack.c.l.b16 %v4922
      %v4962 = vunpack.c.h.b16 %v4922
      %v4963 = vunpack.c.l.b16 %v4923
      %v4964 = vunpack.c.h.b16 %v4923
      %v4965 = vunpack.c.l.b16 %v4924
      %v4966 = vunpack.c.h.b16 %v4924
      %v4967 = vunpack.c.l.b16 %v4925
      %v4968 = vunpack.c.h.b16 %v4925
      %v4969 = vunpack.c.l.b16 %v4926
      %v4970 = vunpack.c.h.b16 %v4926
      %v4971 = vunpack.c.l.b16 %v4927
      %v4972 = vunpack.c.h.b16 %v4927
      %v4973 = vunpack.c.l.b16 %v4928
      %v4974 = vunpack.c.h.b16 %v4928
      %v4975 = vunpack.c.l.b16 %v4929
      %v4976 = vunpack.c.h.b16 %v4929
      %v4977 = vunpack.c.l.b16 %v4930
      %v4978 = vunpack.c.h.b16 %v4930
      %v4979 = vpack.c.b16 %v4947, %v4947
      %v4980 = vpack.c.b16 %v4948, %v4948
      %v4981 = vpack.c.b16 %v4949, %v4949
      %v4982 = vpack.c.b16 %v4950, %v4950
      %v4983 = vpack.c.b16 %v4951, %v4951
      %v4984 = vpack.c.b16 %v4952, %v4952
      %v4985 = vpack.c.b16 %v4953, %v4953
      %v4986 = vpack.c.b16 %v4954, %v4954
      %v4987 = vpack.c.b16 %v4955, %v4955
      %v4988 = vpack.c.b16 %v4956, %v4956
      %v4989 = vpack.c.b16 %v4957, %v4957
      %v4990 = vpack.c.b16 %v4958, %v4958
      %v4991 = vpack.c.b16 %v4959, %v4959
      %v4992 = vpack.c.b16 %v4960, %v4960
      %v4993 = vpack.c.b16 %v4961, %v4961
      %v4994 = vpack.c.b16 %v4962, %v4962
      %v4995 = vpack.c.b16 %v4963, %v4963
      %v4996 = vpack.c.b16 %v4964, %v4964
      %v4997 = vpack.c.b16 %v4965, %v4965
      %v4998 = vpack.c.b16 %v4966, %v4966
      %v4999 = vpack.c.b16 %v4967, %v4967
      %v5000 = vpack.c.b16 %v4968, %v4968
      %v5001 = vpack.c.b16 %v4969, %v4969
      %v5002 = vpack.c.b16 %v4970, %v4970
      %v5003 = vpack.c.b16 %v4971, %v4971
      %v5004 = vpack.c.b16 %v4972, %v4972
      %v5005 = vpack.c.b16 %v4973, %v4973
      %v5006 = vpack.c.b16 %v4974, %v4974
      %v5007 = vpack.c.b16 %v4975, %v4975
      %v5008 = vpack.c.b16 %v4976, %v4976
      %v5009 = vpack.c.b16 %v4977, %v4977
      %v5010 = vpack.c.b16 %v4978, %v4978
      %5043 = vst [vmem:[%s208] sm:$0xf] %v4979
      %5044 = vst [vmem:[%s208 + $0x4] sm:$0xf] %v4980
      %5045 = vst [vmem:[%s208 + $0x8] sm:$0xf] %v4981
      %5046 = vst [vmem:[%s208 + $0xc] sm:$0xf] %v4982
      %5047 = vst [vmem:[%s208 + $0x10] sm:$0xf] %v4983
      %5048 = vst [vmem:[%s208 + $0x14] sm:$0xf] %v4984
      %5049 = vst [vmem:[%s208 + $0x18] sm:$0xf] %v4985
      %5050 = vst [vmem:[%s208 + $0x1c] sm:$0xf] %v4986
      %5051 = vst [vmem:[%s208 + $0x20] sm:$0xf] %v4987
      %5052 = vst [vmem:[%s208 + $0x24] sm:$0xf] %v4988
      %5053 = vst [vmem:[%s208 + $0x28] sm:$0xf] %v4989
      %5054 = vst [vmem:[%s208 + $0x2c] sm:$0xf] %v4990
      %5055 = vst [vmem:[%s208 + $0x30] sm:$0xf] %v4991
      %5056 = vst [vmem:[%s208 + $0x34] sm:$0xf] %v4992
      %5057 = vst [vmem:[%s208 + $0x38] sm:$0xf] %v4993
      %5058 = vst [vmem:[%s208 + $0x3c] sm:$0xf] %v4994
      %5059 = vst [vmem:[%s208 + $0x40] sm:$0xf] %v4995
      %5060 = vst [vmem:[%s208 + $0x44] sm:$0xf] %v4996
      %5061 = vst [vmem:[%s208 + $0x48] sm:$0xf] %v4997
      %5062 = vst [vmem:[%s208 + $0x4c] sm:$0xf] %v4998
      %5063 = vst [vmem:[%s208 + $0x50] sm:$0xf] %v4999
      %5064 = vst [vmem:[%s208 + $0x54] sm:$0xf] %v5000
      %5065 = vst [vmem:[%s208 + $0x58] sm:$0xf] %v5001
      %5066 = vst [vmem:[%s208 + $0x5c] sm:$0xf] %v5002
      %5067 = vst [vmem:[%s208 + $0x60] sm:$0xf] %v5003
      %5068 = vst [vmem:[%s208 + $0x64] sm:$0xf] %v5004
      %5069 = vst [vmem:[%s208 + $0x68] sm:$0xf] %v5005
      %5070 = vst [vmem:[%s208 + $0x6c] sm:$0xf] %v5006
      %5071 = vst [vmem:[%s208 + $0x70] sm:$0xf] %v5007
      %5072 = vst [vmem:[%s208 + $0x74] sm:$0xf] %v5008
      %5073 = vst [vmem:[%s208 + $0x78] sm:$0xf] %v5009
      %5074 = vst [vmem:[%s208 + $0x7c] sm:$0xf] %v5010
      %v5075 = vadd.f32 %v4883, %v4884
      %v5076 = vadd.f32 %v5075, %v4885
      %v5077 = vadd.f32 %v5076, %v4886
      %v5078 = vadd.f32 %v5077, %v4887
      %v5079 = vadd.f32 %v5078, %v4888
      %v5080 = vadd.f32 %v5079, %v4889
      %v5081 = vadd.f32 %v5080, %v4890
      %v5082 = vadd.f32 %v5081, %v4891
      %v5083 = vadd.f32 %v5082, %v4892
      %v5084 = vadd.f32 %v5083, %v4893
      %v5085 = vadd.f32 %v5084, %v4894
      %v5086 = vadd.f32 %v5085, %v4895
      %v5087 = vadd.f32 %v5086, %v4896
      %v5088 = vadd.f32 %v5087, %v4897
      %v5089 = vadd.f32 %v5088, %v4898
      %v5090 = vadd.f32 %v5089, %v4899
      %v5091 = vadd.f32 %v5090, %v4900
      %v5092 = vadd.f32 %v5091, %v4901
      %v5093 = vadd.f32 %v5092, %v4902
      %v5094 = vadd.f32 %v5093, %v4903
      %v5095 = vadd.f32 %v5094, %v4904
      %v5096 = vadd.f32 %v5095, %v4905
      %v5097 = vadd.f32 %v5096, %v4906
      %v5098 = vadd.f32 %v5097, %v4907
      %v5099 = vadd.f32 %v5098, %v4908
      %v5100 = vadd.f32 %v5099, %v4909
      %v5101 = vadd.f32 %v5100, %v4910
      %v5102 = vadd.f32 %v5101, %v4911
      %v5103 = vadd.f32 %v5102, %v4912
      %v5104 = vadd.f32 %v5103, %v4913
      %v5105 = vadd.f32 %v5104, %v4914
      %v5106 = vrot.slane %v5105, 4
      %v5107 = vadd.f32 %v5105, %v5106
      %v5108 = vrot.slane %v5107, 2
      %v5109 = vadd.f32 %v5107, %v5108
      %v5110 = vrot.slane %v5109, 1
      %v5111 = vadd.f32 %v5109, %v5110
      %5112 = vst [vmem:[%s211] sm:$0x1] %v5111
      %v5113 = vmul.f32 %v4883, %v4883
      %v5114 = vmul.f32 %v4884, %v4884
      %v5115 = vmul.f32 %v4885, %v4885
      %v5116 = vmul.f32 %v4886, %v4886
      %v5117 = vmul.f32 %v4887, %v4887
      %v5118 = vmul.f32 %v4888, %v4888
      %v5119 = vmul.f32 %v4889, %v4889
      %v5120 = vmul.f32 %v4890, %v4890
      %v5121 = vmul.f32 %v4891, %v4891
      %v5122 = vmul.f32 %v4892, %v4892
      %v5123 = vmul.f32 %v4893, %v4893
      %v5124 = vmul.f32 %v4894, %v4894
      %v5125 = vmul.f32 %v4895, %v4895
      %v5126 = vmul.f32 %v4896, %v4896
      %v5127 = vmul.f32 %v4897, %v4897
      %v5128 = vmul.f32 %v4898, %v4898
      %v5129 = vmul.f32 %v4899, %v4899
      %v5130 = vmul.f32 %v4900, %v4900
      %v5131 = vmul.f32 %v4901, %v4901
      %v5132 = vmul.f32 %v4902, %v4902
      %v5133 = vmul.f32 %v4903, %v4903
      %v5134 = vmul.f32 %v4904, %v4904
      %v5135 = vmul.f32 %v4905, %v4905
      %v5136 = vmul.f32 %v4906, %v4906
      %v5137 = vmul.f32 %v4907, %v4907
      %v5138 = vmul.f32 %v4908, %v4908
      %v5139 = vmul.f32 %v4909, %v4909
      %v5140 = vmul.f32 %v4910, %v4910
      %v5141 = vmul.f32 %v4911, %v4911
      %v5142 = vmul.f32 %v4912, %v4912
      %v5143 = vmul.f32 %v4913, %v4913
      %v5144 = vmul.f32 %v4914, %v4914
      %v5145 = vadd.f32 %v5113, %v5114
      %v5146 = vadd.f32 %v5145, %v5115
      %v5147 = vadd.f32 %v5146, %v5116
      %v5148 = vadd.f32 %v5147, %v5117
      %v5149 = vadd.f32 %v5148, %v5118
      %v5150 = vadd.f32 %v5149, %v5119
      %v5151 = vadd.f32 %v5150, %v5120
      %v5152 = vadd.f32 %v5151, %v5121
      %v5153 = vadd.f32 %v5152, %v5122
      %v5154 = vadd.f32 %v5153, %v5123
      %v5155 = vadd.f32 %v5154, %v5124
      %v5156 = vadd.f32 %v5155, %v5125
      %v5157 = vadd.f32 %v5156, %v5126
      %v5158 = vadd.f32 %v5157, %v5127
      %v5159 = vadd.f32 %v5158, %v5128
      %v5160 = vadd.f32 %v5159, %v5129
      %v5161 = vadd.f32 %v5160, %v5130
      %v5162 = vadd.f32 %v5161, %v5131
      %v5163 = vadd.f32 %v5162, %v5132
      %v5164 = vadd.f32 %v5163, %v5133
      %v5165 = vadd.f32 %v5164, %v5134
      %v5166 = vadd.f32 %v5165, %v5135
      %v5167 = vadd.f32 %v5166, %v5136
      %v5168 = vadd.f32 %v5167, %v5137
      %v5169 = vadd.f32 %v5168, %v5138
      %v5170 = vadd.f32 %v5169, %v5139
      %v5171 = vadd.f32 %v5170, %v5140
      %v5172 = vadd.f32 %v5171, %v5141
      %v5173 = vadd.f32 %v5172, %v5142
      %v5174 = vadd.f32 %v5173, %v5143
      %v5175 = vadd.f32 %v5174, %v5144
      %v5176 = vrot.slane %v5175, 4
      %v5177 = vadd.f32 %v5175, %v5176
      %v5178 = vrot.slane %v5177, 2
      %v5179 = vadd.f32 %v5177, %v5178
      %v5180 = vrot.slane %v5179, 1
      %v5181 = vadd.f32 %v5179, %v5180
      %5182 = vst [vmem:[%s214] sm:$0x1] %v5181
      %p5183 = scmp.lt.s32.totalorder %s16, 1
      %s5184 = scalar_select %p5183, %s16, 1
      %s5185 = smul.addr %s5184, 32
      %s5186 = smul.addr %s5185, 4
      %s5187 = scalar_lea.vmem %s2, %s5186
      %p5188 = scmp.lt.s32.totalorder %s16, 1
      %s5189 = scalar_select %p5188, %s16, 1
      %s5190 = scalar_lea.vmem %s3, %s5189
      %p5191 = scmp.lt.s32.totalorder %s16, 1
      %s5192 = scalar_select %p5191, %s16, 1
      %s5193 = scalar_lea.vmem %s4, %s5192
      // Predicated region
      $region29: #{basic_block_forward.2} parent=27 // pred_check
        %p5194 = pneg %p81
      $region30: #{basic_block_forward.2} parent=27 // pred_check_branch
        %5196 = sbr.rel (%p5194) target = $region32
      $region31: #{basic_block_forward.2} parent=27 // pred_region
        _
      $region32: #{basic_block_forward.2} parent=27 // pred_fallthru
        _
      // Predicated region
      $region33: #{basic_block_forward.2} parent=27 // pred_check
        %p5197 = pneg %p107
      $region34: #{basic_block_forward.2} parent=27 // pred_check_branch
        %5199 = sbr.rel (%p5197) target = $region36
      $region35: #{basic_block_forward.2} parent=27 // pred_region
        _
      $region36: #{basic_block_forward.2} parent=27 // pred_fallthru
        _
      // Predicated region
      $region37: #{basic_block_forward.2} parent=27 // pred_check
        %p5200 = pneg %p133
      $region38: #{basic_block_forward.2} parent=27 // pred_check_branch
        %5202 = sbr.rel (%p5200) target = $region40
      $region39: #{basic_block_forward.2} parent=27 // pred_region
        _
      $region40: #{basic_block_forward.2} parent=27 // pred_fallthru
        _
    $region28: #{basic_block_forward.2} parent=5 // pred_fallthru
      _
    %p5203 = scmp.le.s32.totalorder 2, %s11
    // Predicated region
    $region41: #{basic_block_forward.2} parent=5 // pred_check
      %p5204 = pneg %p5203
    $region42: #{basic_block_forward.2} parent=5 // pred_check_branch
      %5206 = sbr.rel (%p5204) target = $region44
    $region43: #{basic_block_forward.2} parent=5 // pred_region
      %s5207 = ssub.s32 %s11, 2
      // Predicated region
      $region45: #{basic_block_forward.2} parent=43 // pred_check
        %p5208 = pneg %p87
      $region46: #{basic_block_forward.2} parent=43 // pred_check_branch
        %5210 = sbr.rel (%p5208) target = $region48
      $region47: #{basic_block_forward.2} parent=43 // pred_region
        %p5211 = scmp.lt.s32.totalorder %s17, 1
        %s5212 = scalar_select %p5211, %s17, 1
        %s5213 = smul.addr %s5212, 32
        %s5214 = smul.addr %s5213, 4
        %s5215 = scalar_lea.vmem %s2, %s5214
      $region48: #{basic_block_forward.2} parent=43 // pred_fallthru
        _
      // Predicated region
      $region49: #{basic_block_forward.2} parent=43 // pred_check
        %p5216 = pneg %p113
      $region50: #{basic_block_forward.2} parent=43 // pred_check_branch
        %5218 = sbr.rel (%p5216) target = $region52
      $region51: #{basic_block_forward.2} parent=43 // pred_region
        %p5219 = scmp.lt.s32.totalorder %s17, 1
        %s5220 = scalar_select %p5219, %s17, 1
        %s5221 = scalar_lea.vmem %s3, %s5220
      $region52: #{basic_block_forward.2} parent=43 // pred_fallthru
        _
      // Predicated region
      $region53: #{basic_block_forward.2} parent=43 // pred_check
        %p5222 = pneg %p139
      $region54: #{basic_block_forward.2} parent=43 // pred_check_branch
        %5224 = sbr.rel (%p5222) target = $region56
      $region55: #{basic_block_forward.2} parent=43 // pred_region
        %p5225 = scmp.lt.s32.totalorder %s17, 1
        %s5226 = scalar_select %p5225, %s17, 1
        %s5227 = scalar_lea.vmem %s4, %s5226
      $region56: #{basic_block_forward.2} parent=43 // pred_fallthru
        _
    $region44: #{basic_block_forward.2} parent=5 // pred_fallthru
      _
  $region6: #{basic_block_forward.2} parent=0 // loop_footer
    %s15 = sadd.s32 1, %s11
  $region7: #{basic_block_forward.2} parent=0 // loop_footer_branch
    %10 = sbr.rel target = $region3
  $region8: #{basic_block_forward.2} parent=0 // loop_exit
    _

// kernel: basic_block_forward.3
$region0: #{basic_block_forward.3}
  #allocation0 [shape = 'u32[]', space=smem, size = 0x4, offset = 0x4, fixed_abs, tag = 'smem constant byte address 0x4 - core index']
  #allocation1 [shape = 'u32[144,128]{1,0:T(1,128)}', space=vmem, size = 0x12000, scoped, tag = 'internal scratch']
  #allocation2 [shape = 'bf16[18,32,128]{2,1,0:T(16,128)(2,1)}', space=vmem, size = 0x24000, scoped, tag = 'scratch operand']
  %s0 = inlined_call_operand.vmem [shape: bf16[2,256,128], index: 0, kind: input, shape index: {}]
  %s1 = inlined_call_operand.vmem [shape: f32[1,128], index: 1, kind: input, shape index: {}]
  %s2 = inlined_call_operand.vmem [shape: f32[1,128], index: 2, kind: input, shape index: {}]
  %s3 = inlined_call_operand.vmem [shape: bf16[9,128,128], index: 3, kind: input, shape index: {}]
  %s4 = inlined_call_operand.vmem [shape: bf16[2,256,128], index: 4, kind: output, shape index: {0}]
  %s5 = inlined_call_operand.vmem [shape: f32[2,1,128], index: 5, kind: output, shape index: {1}]
  %s6 = inlined_call_operand.vmem [shape: f32[2,1,128], index: 6, kind: output, shape index: {2}]
  %7 = xla_tuple %s4, %s5, %s6
  %s8 = sld [smem:[#allocation0]]
  $region65: #{basic_block_forward.3} parent=0
    _
  %s10 = ssub.s32 1, %s8
  %s11 = scalar_select 0, %s10, %s8
  loop: start=0, step=1, limit=4
  $region2: #{basic_block_forward.3} parent=0 // loop_pre_header
    _
  $region3: #{basic_block_forward.3} parent=0 // loop_header
    %s13 = sphi 0, %s17
    %p14 = scmp.ge.s32.totalorder %s13, 4
    %s23 = sphi 0, %s25
    %s26 = sphi 0, %s23
    %s27 = sphi 0, %s26
    %s43 = sphi 0, %s27
    %s47 = sphi 0, %s47
    %s49 = sphi 0, %s47
    %s50 = sphi 0, %s49
    %s64 = sphi 0, %s50
    %s68 = sphi 0, %s68
    %s70 = sphi 0, %s68
    %s71 = sphi 0, %s70
    %s85 = sphi 0, %s71
    %s89 = sphi 0, %s89
    %s91 = sphi 0, %s89
    %s92 = sphi 0, %s91
    %s106 = sphi 0, %s92
    %s112 = sphi 0, %s114
    %s115 = sphi 0, %s112
    %s116 = sphi 0, %s115
    %s132 = sphi 0, %s116
    %s138 = sphi 0, %s140
    %s141 = sphi 0, %s138
    %s142 = sphi 0, %s141
    %s158 = sphi 0, %s142
    %s164 = sphi 0, %s166
    %s167 = sphi 0, %s164
    %s168 = sphi 0, %s167
    %s184 = sphi 0, %s168
  $region4: #{basic_block_forward.3} parent=0 // loop_header_branch
    %16 = sbr.rel (%p14) target = $region8
  $region5: #{basic_block_forward.3} parent=0 // loop_body
    %s18 = ssub.s32 %s13, 1
    %s19 = ssub.s32 %s13, 2
    %s20 = sadd.s32 %s13, 1
    %s21 = ssub.s32 %s13, %s20
    %p22 = scmp.eq.s32.totalorder %s21, 0
    %s24 = sadd.s32 %s23, 1
    %s25 = scalar_select %p22, %s23, %s24
    %p28 = pneg %p22
    %p29 = scmp.eq.s32.totalorder %s13, 1
    %p30 = por %p28, %p29
    %p31 = scmp.ne.s32.totalorder %s23, %s26
    %p32 = scmp.eq.s32.totalorder %s13, 0
    %p33 = por %p31, %p32
    %p34 = scmp.ne.s32.totalorder %s23, %s26
    %p35 = scmp.eq.s32.totalorder %s18, 1
    %p36 = por %p34, %p35
    %p37 = scmp.ne.s32.totalorder %s26, %s27
    %p38 = scmp.eq.s32.totalorder %s18, 0
    %p39 = por %p37, %p38
    %p40 = scmp.ne.s32.totalorder %s26, %s27
    %p41 = scmp.eq.s32.totalorder %s19, 1
    %p42 = por %p40, %p41
    %p44 = scmp.ne.s32.totalorder %s27, %s43
    %p45 = scmp.eq.s32.totalorder %s19, 0
    %p46 = por %p44, %p45
    %s48 = sadd.s32 %s47, 1
    %p51 = scmp.eq.s32.totalorder %s13, 1
    %p52 = scmp.ne.s32.totalorder %s47, %s49
    %p53 = scmp.eq.s32.totalorder %s13, 0
    %p54 = por %p52, %p53
    %p55 = scmp.ne.s32.totalorder %s47, %s49
    %p56 = scmp.eq.s32.totalorder %s18, 1
    %p57 = por %p55, %p56
    %p58 = scmp.ne.s32.totalorder %s49, %s50
    %p59 = scmp.eq.s32.totalorder %s18, 0
    %p60 = por %p58, %p59
    %p61 = scmp.ne.s32.totalorder %s49, %s50
    %p62 = scmp.eq.s32.totalorder %s19, 1
    %p63 = por %p61, %p62
    %p65 = scmp.ne.s32.totalorder %s50, %s64
    %p66 = scmp.eq.s32.totalorder %s19, 0
    %p67 = por %p65, %p66
    %s69 = sadd.s32 %s68, 1
    %p72 = scmp.eq.s32.totalorder %s13, 1
    %p73 = scmp.ne.s32.totalorder %s68, %s70
    %p74 = scmp.eq.s32.totalorder %s13, 0
    %p75 = por %p73, %p74
    %p76 = scmp.ne.s32.totalorder %s68, %s70
    %p77 = scmp.eq.s32.totalorder %s18, 1
    %p78 = por %p76, %p77
    %p79 = scmp.ne.s32.totalorder %s70, %s71
    %p80 = scmp.eq.s32.totalorder %s18, 0
    %p81 = por %p79, %p80
    %p82 = scmp.ne.s32.totalorder %s70, %s71
    %p83 = scmp.eq.s32.totalorder %s19, 1
    %p84 = por %p82, %p83
    %p86 = scmp.ne.s32.totalorder %s71, %s85
    %p87 = scmp.eq.s32.totalorder %s19, 0
    %p88 = por %p86, %p87
    %s90 = sadd.s32 %s89, 1
    %p93 = scmp.eq.s32.totalorder %s13, 1
    %p94 = scmp.ne.s32.totalorder %s89, %s91
    %p95 = scmp.eq.s32.totalorder %s13, 0
    %p96 = por %p94, %p95
    %p97 = scmp.ne.s32.totalorder %s89, %s91
    %p98 = scmp.eq.s32.totalorder %s18, 1
    %p99 = por %p97, %p98
    %p100 = scmp.ne.s32.totalorder %s91, %s92
    %p101 = scmp.eq.s32.totalorder %s18, 0
    %p102 = por %p100, %p101
    %p103 = scmp.ne.s32.totalorder %s91, %s92
    %p104 = scmp.eq.s32.totalorder %s19, 1
    %p105 = por %p103, %p104
    %p107 = scmp.ne.s32.totalorder %s92, %s106
    %p108 = scmp.eq.s32.totalorder %s19, 0
    %p109 = por %p107, %p108
    %s110 = ssub.s32 %s13, %s20
    %p111 = scmp.eq.s32.totalorder %s110, 0
    %s113 = sadd.s32 %s112, 1
    %s114 = scalar_select %p111, %s112, %s113
    %p117 = pneg %p111
    %p118 = scmp.eq.s32.totalorder %s13, 1
    %p119 = por %p117, %p118
    %p120 = scmp.ne.s32.totalorder %s112, %s115
    %p121 = scmp.eq.s32.totalorder %s13, 0
    %p122 = por %p120, %p121
    %p123 = scmp.ne.s32.totalorder %s112, %s115
    %p124 = scmp.eq.s32.totalorder %s18, 1
    %p125 = por %p123, %p124
    %p126 = scmp.ne.s32.totalorder %s115, %s116
    %p127 = scmp.eq.s32.totalorder %s18, 0
    %p128 = por %p126, %p127
    %p129 = scmp.ne.s32.totalorder %s115, %s116
    %p130 = scmp.eq.s32.totalorder %s19, 1
    %p131 = por %p129, %p130
    %p133 = scmp.ne.s32.totalorder %s116, %s132
    %p134 = scmp.eq.s32.totalorder %s19, 0
    %p135 = por %p133, %p134
    %s136 = ssub.s32 %s13, %s20
    %p137 = scmp.eq.s32.totalorder %s136, 0
    %s139 = sadd.s32 %s138, 1
    %s140 = scalar_select %p137, %s138, %s139
    %p143 = pneg %p137
    %p144 = scmp.eq.s32.totalorder %s13, 1
    %p145 = por %p143, %p144
    %p146 = scmp.ne.s32.totalorder %s138, %s141
    %p147 = scmp.eq.s32.totalorder %s13, 0
    %p148 = por %p146, %p147
    %p149 = scmp.ne.s32.totalorder %s138, %s141
    %p150 = scmp.eq.s32.totalorder %s18, 1
    %p151 = por %p149, %p150
    %p152 = scmp.ne.s32.totalorder %s141, %s142
    %p153 = scmp.eq.s32.totalorder %s18, 0
    %p154 = por %p152, %p153
    %p155 = scmp.ne.s32.totalorder %s141, %s142
    %p156 = scmp.eq.s32.totalorder %s19, 1
    %p157 = por %p155, %p156
    %p159 = scmp.ne.s32.totalorder %s142, %s158
    %p160 = scmp.eq.s32.totalorder %s19, 0
    %p161 = por %p159, %p160
    %s162 = ssub.s32 %s13, %s20
    %p163 = scmp.eq.s32.totalorder %s162, 0
    %s165 = sadd.s32 %s164, 1
    %s166 = scalar_select %p163, %s164, %s165
    %p169 = pneg %p163
    %p170 = scmp.eq.s32.totalorder %s13, 1
    %p171 = por %p169, %p170
    %p172 = scmp.ne.s32.totalorder %s164, %s167
    %p173 = scmp.eq.s32.totalorder %s13, 0
    %p174 = por %p172, %p173
    %p175 = scmp.ne.s32.totalorder %s164, %s167
    %p176 = scmp.eq.s32.totalorder %s18, 1
    %p177 = por %p175, %p176
    %p178 = scmp.ne.s32.totalorder %s167, %s168
    %p179 = scmp.eq.s32.totalorder %s18, 0
    %p180 = por %p178, %p179
    %p181 = scmp.ne.s32.totalorder %s167, %s168
    %p182 = scmp.eq.s32.totalorder %s19, 1
    %p183 = por %p181, %p182
    %p185 = scmp.ne.s32.totalorder %s168, %s184
    %p186 = scmp.eq.s32.totalorder %s19, 0
    %p187 = por %p185, %p186
    %p188 = scmp.le.s32.totalorder 1, %s13
    %p189 = scmp.lt.s32.totalorder %s13, 3
    %p190 = pnand %p188, %p189
    %p191 = pneg %p190
    // Predicated region
    $region9: #{basic_block_forward.3} parent=5 // pred_check
      _
    $region10: #{basic_block_forward.3} parent=5 // pred_check_branch
      %193 = sbr.rel (%p190) target = $region12
    $region11: #{basic_block_forward.3} parent=5 // pred_region
      %s194 = ssub.s32 %s13, 1
      // Predicated region
      $region13: #{basic_block_forward.3} parent=11 // pred_check
        %p195 = pneg %p60
      $region14: #{basic_block_forward.3} parent=11 // pred_check_branch
        %197 = sbr.rel (%p195) target = $region16
      $region15: #{basic_block_forward.3} parent=11 // pred_region
        _
      $region16: #{basic_block_forward.3} parent=11 // pred_fallthru
        _
      // Predicated region
      $region17: #{basic_block_forward.3} parent=11 // pred_check
        %p198 = pneg %p81
      $region18: #{basic_block_forward.3} parent=11 // pred_check_branch
        %200 = sbr.rel (%p198) target = $region20
      $region19: #{basic_block_forward.3} parent=11 // pred_region
        _
      $region20: #{basic_block_forward.3} parent=11 // pred_fallthru
        _
      // Predicated region
      $region21: #{basic_block_forward.3} parent=11 // pred_check
        %p201 = pneg %p102
      $region22: #{basic_block_forward.3} parent=11 // pred_check_branch
        %203 = sbr.rel (%p201) target = $region24
      $region23: #{basic_block_forward.3} parent=11 // pred_region
        _
      $region24: #{basic_block_forward.3} parent=11 // pred_fallthru
        _
    $region12: #{basic_block_forward.3} parent=5 // pred_fallthru
      _
    %p204 = scmp.lt.s32.totalorder %s13, 2
    // Predicated region
    $region25: #{basic_block_forward.3} parent=5 // pred_check
      %p205 = pneg %p204
    $region26: #{basic_block_forward.3} parent=5 // pred_check_branch
      %207 = sbr.rel (%p205) target = $region28
    $region27: #{basic_block_forward.3} parent=5 // pred_region
      // Predicated region
      $region29: #{basic_block_forward.3} parent=27 // pred_check
        %p208 = pneg %p33
      $region30: #{basic_block_forward.3} parent=27 // pred_check_branch
        %210 = sbr.rel (%p208) target = $region32
      $region31: #{basic_block_forward.3} parent=27 // pred_region
        %p211 = scmp.lt.s32.totalorder %s13, 1
        %s212 = scalar_select %p211, %s13, 1
        %s213 = smul.addr %s212, 32
        %s214 = smul.addr %s213, 4
        %s215 = scalar_lea.vmem %s0, %s214
      $region32: #{basic_block_forward.3} parent=27 // pred_fallthru
        _
    $region28: #{basic_block_forward.3} parent=5 // pred_fallthru
      _
    %p216 = scmp.le.s32.totalorder 1, %s13
    %p217 = scmp.lt.s32.totalorder %s13, 3
    %p218 = pnand %p216, %p217
    %p219 = pneg %p218
    // Predicated region
    $region33: #{basic_block_forward.3} parent=5 // pred_check
      _
    $region34: #{basic_block_forward.3} parent=5 // pred_check_branch
      %221 = sbr.rel (%p218) target = $region36
    $region35: #{basic_block_forward.3} parent=5 // pred_region
      %s222 = ssub.s32 %s13, 1
      %p223 = scmp.lt.s32.totalorder %s18, 1
      %s224 = scalar_select %p223, %s18, 1
      %s225 = smul.addr %s224, 32
      %s226 = smul.addr %s225, 4
      %s227 = scalar_lea.vmem %s0, %s226
      %p228 = pneg %p39
      %p229 = pneg %p36
      %p230 = pneg %p60
      %p231 = pneg %p57
      %p232 = pneg %p81
      %p233 = pneg %p78
      %p234 = pneg %p102
      %p235 = pneg %p99
      %p236 = pneg %p128
      %p237 = pneg %p125
      %p238 = scmp.lt.s32.totalorder %s18, 1
      %s239 = scalar_select %p238, %s18, 1
      %s240 = smul.addr %s239, 32
      %s241 = smul.addr %s240, 4
      %s242 = scalar_lea.vmem %s4, %s241
      %p243 = pneg %p154
      %p244 = pneg %p151
      %p245 = scmp.lt.s32.totalorder %s18, 1
      %s246 = scalar_select %p245, %s18, 1
      %s247 = scalar_lea.vmem %s5, %s246
      %p248 = pneg %p180
      %p249 = pneg %p177
      %p250 = scmp.lt.s32.totalorder %s18, 1
      %s251 = scalar_select %p250, %s18, 1
      %s252 = scalar_lea.vmem %s6, %s251
      %p253 = scmp.lt.s32.totalorder %s18, 1
      %s254 = scalar_select %p253, %s18, 1
      %s255 = smul.addr %s254, 32
      %s256 = smul.addr %s255, 4
      %s257 = scalar_lea.vmem %s0, %s256
      %p258 = scmp.lt.s32.totalorder %s18, 1
      %s259 = scalar_select %p258, %s18, 1
      %s260 = smul.addr %s259, 32
      %s261 = smul.addr %s260, 4
      %s262 = scalar_lea.vmem %s4, %s261
      %p263 = scmp.lt.s32.totalorder %s18, 1
      %s264 = scalar_select %p263, %s18, 1
      %s265 = scalar_lea.vmem %s5, %s264
      %p266 = scmp.lt.s32.totalorder %s18, 1
      %s267 = scalar_select %p266, %s18, 1
      %s268 = scalar_lea.vmem %s6, %s267
      %v270 = vld [vmem:[%s257] sm:$0xf]
      %v271 = vld [vmem:[%s257 + $0x4] sm:$0xf]
      %v272 = vld [vmem:[%s257 + $0x8] sm:$0xf]
      %v273 = vld [vmem:[%s257 + $0xc] sm:$0xf]
      %v274 = vld [vmem:[%s257 + $0x10] sm:$0xf]
      %v275 = vld [vmem:[%s257 + $0x14] sm:$0xf]
      %v276 = vld [vmem:[%s257 + $0x18] sm:$0xf]
      %v277 = vld [vmem:[%s257 + $0x1c] sm:$0xf]
      %v278 = vld [vmem:[%s257 + $0x20] sm:$0xf]
      %v279 = vld [vmem:[%s257 + $0x24] sm:$0xf]
      %v280 = vld [vmem:[%s257 + $0x28] sm:$0xf]
      %v281 = vld [vmem:[%s257 + $0x2c] sm:$0xf]
      %v282 = vld [vmem:[%s257 + $0x30] sm:$0xf]
      %v283 = vld [vmem:[%s257 + $0x34] sm:$0xf]
      %v284 = vld [vmem:[%s257 + $0x38] sm:$0xf]
      %v285 = vld [vmem:[%s257 + $0x3c] sm:$0xf]
      %v286 = vld [vmem:[%s257 + $0x40] sm:$0xf]
      %v287 = vld [vmem:[%s257 + $0x44] sm:$0xf]
      %v288 = vld [vmem:[%s257 + $0x48] sm:$0xf]
      %v289 = vld [vmem:[%s257 + $0x4c] sm:$0xf]
      %v290 = vld [vmem:[%s257 + $0x50] sm:$0xf]
      %v291 = vld [vmem:[%s257 + $0x54] sm:$0xf]
      %v292 = vld [vmem:[%s257 + $0x58] sm:$0xf]
      %v293 = vld [vmem:[%s257 + $0x5c] sm:$0xf]
      %v294 = vld [vmem:[%s257 + $0x60] sm:$0xf]
      %v295 = vld [vmem:[%s257 + $0x64] sm:$0xf]
      %v296 = vld [vmem:[%s257 + $0x68] sm:$0xf]
      %v297 = vld [vmem:[%s257 + $0x6c] sm:$0xf]
      %v298 = vld [vmem:[%s257 + $0x70] sm:$0xf]
      %v299 = vld [vmem:[%s257 + $0x74] sm:$0xf]
      %v300 = vld [vmem:[%s257 + $0x78] sm:$0xf]
      %v301 = vld [vmem:[%s257 + $0x7c] sm:$0xf]
      %v302 = vunpack.c.l.bf16 %v270
      %v303 = vunpack.c.l.bf16 %v271
      %v304 = vunpack.c.l.bf16 %v272
      %v305 = vunpack.c.l.bf16 %v273
      %v306 = vunpack.c.l.bf16 %v274
      %v307 = vunpack.c.l.bf16 %v275
      %v308 = vunpack.c.l.bf16 %v276
      %v309 = vunpack.c.l.bf16 %v277
      %v310 = vunpack.c.l.bf16 %v278
      %v311 = vunpack.c.l.bf16 %v279
      %v312 = vunpack.c.l.bf16 %v280
      %v313 = vunpack.c.l.bf16 %v281
      %v314 = vunpack.c.l.bf16 %v282
      %v315 = vunpack.c.l.bf16 %v283
      %v316 = vunpack.c.l.bf16 %v284
      %v317 = vunpack.c.l.bf16 %v285
      %v318 = vunpack.c.l.bf16 %v286
      %v319 = vunpack.c.l.bf16 %v287
      %v320 = vunpack.c.l.bf16 %v288
      %v321 = vunpack.c.l.bf16 %v289
      %v322 = vunpack.c.l.bf16 %v290
      %v323 = vunpack.c.l.bf16 %v291
      %v324 = vunpack.c.l.bf16 %v292
      %v325 = vunpack.c.l.bf16 %v293
      %v326 = vunpack.c.l.bf16 %v294
      %v327 = vunpack.c.l.bf16 %v295
      %v328 = vunpack.c.l.bf16 %v296
      %v329 = vunpack.c.l.bf16 %v297
      %v330 = vunpack.c.l.bf16 %v298
      %v331 = vunpack.c.l.bf16 %v299
      %v332 = vunpack.c.l.bf16 %v300
      %v333 = vunpack.c.l.bf16 %v301
      %v334 = vld [vmem:[%s1] sm:$0x1]
      %v336 = vlaneseq
      %v337 = vshrl.u32 %v336, 7
      %v338 = vsub.s32 0, %v337
      %v339 = vrot.slane %v334, %v338
      %v341 = vmul.f32 %v302, %v339
      %v342 = vmul.f32 %v303, %v339
      %v343 = vmul.f32 %v304, %v339
      %v344 = vmul.f32 %v305, %v339
      %v345 = vmul.f32 %v306, %v339
      %v346 = vmul.f32 %v307, %v339
      %v347 = vmul.f32 %v308, %v339
      %v348 = vmul.f32 %v309, %v339
      %v349 = vmul.f32 %v310, %v339
      %v350 = vmul.f32 %v311, %v339
      %v351 = vmul.f32 %v312, %v339
      %v352 = vmul.f32 %v313, %v339
      %v353 = vmul.f32 %v314, %v339
      %v354 = vmul.f32 %v315, %v339
      %v355 = vmul.f32 %v316, %v339
      %v356 = vmul.f32 %v317, %v339
      %v357 = vmul.f32 %v318, %v339
      %v358 = vmul.f32 %v319, %v339
      %v359 = vmul.f32 %v320, %v339
      %v360 = vmul.f32 %v321, %v339
      %v361 = vmul.f32 %v322, %v339
      %v362 = vmul.f32 %v323, %v339
      %v363 = vmul.f32 %v324, %v339
      %v364 = vmul.f32 %v325, %v339
      %v365 = vmul.f32 %v326, %v339
      %v366 = vmul.f32 %v327, %v339
      %v367 = vmul.f32 %v328, %v339
      %v368 = vmul.f32 %v329, %v339
      %v369 = vmul.f32 %v330, %v339
      %v370 = vmul.f32 %v331, %v339
      %v371 = vmul.f32 %v332, %v339
      %v372 = vmul.f32 %v333, %v339
      %v373 = vld [vmem:[%s2] sm:$0x1]
      %v375 = vlaneseq
      %v376 = vshrl.u32 %v375, 7
      %v377 = vsub.s32 0, %v376
      %v378 = vrot.slane %v373, %v377
      %v380 = vadd.f32 %v341, %v378
      %v381 = vadd.f32 %v342, %v378
      %v382 = vadd.f32 %v343, %v378
      %v383 = vadd.f32 %v344, %v378
      %v384 = vadd.f32 %v345, %v378
      %v385 = vadd.f32 %v346, %v378
      %v386 = vadd.f32 %v347, %v378
      %v387 = vadd.f32 %v348, %v378
      %v388 = vadd.f32 %v349, %v378
      %v389 = vadd.f32 %v350, %v378
      %v390 = vadd.f32 %v351, %v378
      %v391 = vadd.f32 %v352, %v378
      %v392 = vadd.f32 %v353, %v378
      %v393 = vadd.f32 %v354, %v378
      %v394 = vadd.f32 %v355, %v378
      %v395 = vadd.f32 %v356, %v378
      %v396 = vadd.f32 %v357, %v378
      %v397 = vadd.f32 %v358, %v378
      %v398 = vadd.f32 %v359, %v378
      %v399 = vadd.f32 %v360, %v378
      %v400 = vadd.f32 %v361, %v378
      %v401 = vadd.f32 %v362, %v378
      %v402 = vadd.f32 %v363, %v378
      %v403 = vadd.f32 %v364, %v378
      %v404 = vadd.f32 %v365, %v378
      %v405 = vadd.f32 %v366, %v378
      %v406 = vadd.f32 %v367, %v378
      %v407 = vadd.f32 %v368, %v378
      %v408 = vadd.f32 %v369, %v378
      %v409 = vadd.f32 %v370, %v378
      %v410 = vadd.f32 %v371, %v378
      %v411 = vadd.f32 %v372, %v378
      %v412 = vmax.f32 %v380, 0.0
      %v413 = vmax.f32 %v381, 0.0
      %v414 = vmax.f32 %v382, 0.0
      %v415 = vmax.f32 %v383, 0.0
      %v416 = vmax.f32 %v384, 0.0
      %v417 = vmax.f32 %v385, 0.0
      %v418 = vmax.f32 %v386, 0.0
      %v419 = vmax.f32 %v387, 0.0
      %v420 = vmax.f32 %v388, 0.0
      %v421 = vmax.f32 %v389, 0.0
      %v422 = vmax.f32 %v390, 0.0
      %v423 = vmax.f32 %v391, 0.0
      %v424 = vmax.f32 %v392, 0.0
      %v425 = vmax.f32 %v393, 0.0
      %v426 = vmax.f32 %v394, 0.0
      %v427 = vmax.f32 %v395, 0.0
      %v428 = vmax.f32 %v396, 0.0
      %v429 = vmax.f32 %v397, 0.0
      %v430 = vmax.f32 %v398, 0.0
      %v431 = vmax.f32 %v399, 0.0
      %v432 = vmax.f32 %v400, 0.0
      %v433 = vmax.f32 %v401, 0.0
      %v434 = vmax.f32 %v402, 0.0
      %v435 = vmax.f32 %v403, 0.0
      %v436 = vmax.f32 %v404, 0.0
      %v437 = vmax.f32 %v405, 0.0
      %v438 = vmax.f32 %v406, 0.0
      %v439 = vmax.f32 %v407, 0.0
      %v440 = vmax.f32 %v408, 0.0
      %v441 = vmax.f32 %v409, 0.0
      %v442 = vmax.f32 %v410, 0.0
      %v443 = vmax.f32 %v411, 0.0
      %v444 = vpack.c.bf16 %v413, %v412
      %v445 = vpack.c.bf16 %v415, %v414
      %v446 = vpack.c.bf16 %v417, %v416
      %v447 = vpack.c.bf16 %v419, %v418
      %v448 = vpack.c.bf16 %v421, %v420
      %v449 = vpack.c.bf16 %v423, %v422
      %v450 = vpack.c.bf16 %v425, %v424
      %v451 = vpack.c.bf16 %v427, %v426
      %v452 = vpack.c.bf16 %v429, %v428
      %v453 = vpack.c.bf16 %v431, %v430
      %v454 = vpack.c.bf16 %v433, %v432
      %v455 = vpack.c.bf16 %v435, %v434
      %v456 = vpack.c.bf16 %v437, %v436
      %v457 = vpack.c.bf16 %v439, %v438
      %v458 = vpack.c.bf16 %v441, %v440
      %v459 = vpack.c.bf16 %v443, %v442
      %460 = vst [vmem:[#allocation2] sm:$0xff] 0
      %461 = vst [vmem:[#allocation2 + $0x8] sm:$0xff] 0
      %s462 = scalar_lea.vmem [#allocation2], 272
      %463 = vst [vmem:[%s462] sm:$0xff] 0
      %464 = vst [vmem:[%s462 + $0x8] sm:$0xff] 0
      %s465 = scalar_lea.vmem [#allocation2], 16
      %466 = vst [vmem:[%s465] sm:$0xf] 0
      %467 = vst [vmem:[%s465 + $0x10] sm:$0xf] 0
      %468 = vst [vmem:[%s465 + $0x20] sm:$0xf] 0
      %469 = vst [vmem:[%s465 + $0x30] sm:$0xf] 0
      %470 = vst [vmem:[%s465 + $0x40] sm:$0xf] 0
      %471 = vst [vmem:[%s465 + $0x50] sm:$0xf] 0
      %472 = vst [vmem:[%s465 + $0x60] sm:$0xf] 0
      %473 = vst [vmem:[%s465 + $0x70] sm:$0xf] 0
      %474 = vst [vmem:[%s465 + $0x80] sm:$0xf] 0
      %475 = vst [vmem:[%s465 + $0x90] sm:$0xf] 0
      %476 = vst [vmem:[%s465 + $0xa0] sm:$0xf] 0
      %477 = vst [vmem:[%s465 + $0xb0] sm:$0xf] 0
      %478 = vst [vmem:[%s465 + $0xc0] sm:$0xf] 0
      %479 = vst [vmem:[%s465 + $0xd0] sm:$0xf] 0
      %480 = vst [vmem:[%s465 + $0xe0] sm:$0xf] 0
      %481 = vst [vmem:[%s465 + $0xf0] sm:$0xf] 0
      %482 = vst [vmem:[%s465 + $0x8] sm:$0xf0] 0
      %483 = vst [vmem:[%s465 + $0x18] sm:$0xf0] 0
      %484 = vst [vmem:[%s465 + $0x28] sm:$0xf0] 0
      %485 = vst [vmem:[%s465 + $0x38] sm:$0xf0] 0
      %486 = vst [vmem:[%s465 + $0x48] sm:$0xf0] 0
      %487 = vst [vmem:[%s465 + $0x58] sm:$0xf0] 0
      %488 = vst [vmem:[%s465 + $0x68] sm:$0xf0] 0
      %489 = vst [vmem:[%s465 + $0x78] sm:$0xf0] 0
      %490 = vst [vmem:[%s465 + $0x88] sm:$0xf0] 0
      %491 = vst [vmem:[%s465 + $0x98] sm:$0xf0] 0
      %492 = vst [vmem:[%s465 + $0xa8] sm:$0xf0] 0
      %493 = vst [vmem:[%s465 + $0xb8] sm:$0xf0] 0
      %494 = vst [vmem:[%s465 + $0xc8] sm:$0xf0] 0
      %495 = vst [vmem:[%s465 + $0xd8] sm:$0xf0] 0
      %496 = vst [vmem:[%s465 + $0xe8] sm:$0xf0] 0
      %497 = vst [vmem:[%s465 + $0xf8] sm:$0xf0] 0
      %v514 = vrot.slane %v444, 4
      %v515 = vrot.slane %v445, 4
      %v516 = vrot.slane %v446, 4
      %v517 = vrot.slane %v447, 4
      %v518 = vrot.slane %v448, 4
      %v519 = vrot.slane %v449, 4
      %v520 = vrot.slane %v450, 4
      %v521 = vrot.slane %v451, 4
      %v522 = vrot.slane %v452, 4
      %v523 = vrot.slane %v453, 4
      %v524 = vrot.slane %v454, 4
      %v525 = vrot.slane %v455, 4
      %v526 = vrot.slane %v456, 4
      %v527 = vrot.slane %v457, 4
      %v528 = vrot.slane %v458, 4
      %v529 = vrot.slane %v459, 4
      %546 = vst [vmem:[%s465] sm:$0xf0] %v514
      %547 = vst [vmem:[%s465 + $0x8] sm:$0xf] %v514
      %548 = vst [vmem:[%s465 + $0x10] sm:$0xf0] %v515
      %549 = vst [vmem:[%s465 + $0x18] sm:$0xf] %v515
      %550 = vst [vmem:[%s465 + $0x20] sm:$0xf0] %v516
      %551 = vst [vmem:[%s465 + $0x28] sm:$0xf] %v516
      %552 = vst [vmem:[%s465 + $0x30] sm:$0xf0] %v517
      %553 = vst [vmem:[%s465 + $0x38] sm:$0xf] %v517
      %554 = vst [vmem:[%s465 + $0x40] sm:$0xf0] %v518
      %555 = vst [vmem:[%s465 + $0x48] sm:$0xf] %v518
      %556 = vst [vmem:[%s465 + $0x50] sm:$0xf0] %v519
      %557 = vst [vmem:[%s465 + $0x58] sm:$0xf] %v519
      %558 = vst [vmem:[%s465 + $0x60] sm:$0xf0] %v520
      %559 = vst [vmem:[%s465 + $0x68] sm:$0xf] %v520
      %560 = vst [vmem:[%s465 + $0x70] sm:$0xf0] %v521
      %561 = vst [vmem:[%s465 + $0x78] sm:$0xf] %v521
      %562 = vst [vmem:[%s465 + $0x80] sm:$0xf0] %v522
      %563 = vst [vmem:[%s465 + $0x88] sm:$0xf] %v522
      %564 = vst [vmem:[%s465 + $0x90] sm:$0xf0] %v523
      %565 = vst [vmem:[%s465 + $0x98] sm:$0xf] %v523
      %566 = vst [vmem:[%s465 + $0xa0] sm:$0xf0] %v524
      %567 = vst [vmem:[%s465 + $0xa8] sm:$0xf] %v524
      %568 = vst [vmem:[%s465 + $0xb0] sm:$0xf0] %v525
      %569 = vst [vmem:[%s465 + $0xb8] sm:$0xf] %v525
      %570 = vst [vmem:[%s465 + $0xc0] sm:$0xf0] %v526
      %571 = vst [vmem:[%s465 + $0xc8] sm:$0xf] %v526
      %572 = vst [vmem:[%s465 + $0xd0] sm:$0xf0] %v527
      %573 = vst [vmem:[%s465 + $0xd8] sm:$0xf] %v527
      %574 = vst [vmem:[%s465 + $0xe0] sm:$0xf0] %v528
      %575 = vst [vmem:[%s465 + $0xe8] sm:$0xf] %v528
      %576 = vst [vmem:[%s465 + $0xf0] sm:$0xf0] %v529
      %577 = vst [vmem:[%s465 + $0xf8] sm:$0xf] %v529
      %v578 = vld [vmem:[#allocation2] sm:$0xf8]
      %v579 = vld [vmem:[#allocation2 + $0x8] sm:$0xf]
      %v580 = vld [vmem:[#allocation2 + $0x10] sm:$0xf8]
      %v581 = vld [vmem:[#allocation2 + $0x18] sm:$0xf]
      %v582 = vld [vmem:[#allocation2 + $0x20] sm:$0xf8]
      %v583 = vld [vmem:[#allocation2 + $0x28] sm:$0xf]
      %v584 = vld [vmem:[#allocation2 + $0x30] sm:$0xf8]
      %v585 = vld [vmem:[#allocation2 + $0x38] sm:$0xf]
      %v586 = vld [vmem:[#allocation2 + $0x40] sm:$0xf8]
      %v587 = vld [vmem:[#allocation2 + $0x48] sm:$0xf]
      %v588 = vld [vmem:[#allocation2 + $0x50] sm:$0xf8]
      %v589 = vld [vmem:[#allocation2 + $0x58] sm:$0xf]
      %v590 = vld [vmem:[#allocation2 + $0x60] sm:$0xf8]
      %v591 = vld [vmem:[#allocation2 + $0x68] sm:$0xf]
      %v592 = vld [vmem:[#allocation2 + $0x70] sm:$0xf8]
      %v593 = vld [vmem:[#allocation2 + $0x78] sm:$0xf]
      %v594 = vld [vmem:[#allocation2 + $0x80] sm:$0xf8]
      %v595 = vld [vmem:[#allocation2 + $0x88] sm:$0xf]
      %v596 = vld [vmem:[#allocation2 + $0x90] sm:$0xf8]
      %v597 = vld [vmem:[#allocation2 + $0x98] sm:$0xf]
      %v598 = vld [vmem:[#allocation2 + $0xa0] sm:$0xf8]
      %v599 = vld [vmem:[#allocation2 + $0xa8] sm:$0xf]
      %v600 = vld [vmem:[#allocation2 + $0xb0] sm:$0xf8]
      %v601 = vld [vmem:[#allocation2 + $0xb8] sm:$0xf]
      %v602 = vld [vmem:[#allocation2 + $0xc0] sm:$0xf8]
      %v603 = vld [vmem:[#allocation2 + $0xc8] sm:$0xf]
      %v604 = vld [vmem:[#allocation2 + $0xd0] sm:$0xf8]
      %v605 = vld [vmem:[#allocation2 + $0xd8] sm:$0xf]
      %v606 = vld [vmem:[#allocation2 + $0xe0] sm:$0xf8]
      %v607 = vld [vmem:[#allocation2 + $0xe8] sm:$0xf]
      %v608 = vld [vmem:[#allocation2 + $0xf0] sm:$0xf8]
      %v609 = vld [vmem:[#allocation2 + $0xf8] sm:$0xf]
      %vm610 = vsmask.f32 4352
      %v612 = vshrl.u32 %v578, 16
      %v614 = vrot.slane %v612, 3
      %v615 = vshll.u32 %v578, 16
      %v617 = vrot.slane %v615, 4
      %v618 = vor.u32 %v614, %v617
      %v620 = vshrl.u32 %v579, 16
      %v622 = vrot.slane %v620, 3
      %v623 = vshll.u32 %v579, 16
      %v625 = vrot.slane %v623, 4
      %v626 = vor.u32 %v622, %v625
      %v627 = vsel %vm610, %v618, %v626
      %v629 = vshrl.u32 %v580, 16
      %v631 = vrot.slane %v629, 3
      %v632 = vshll.u32 %v580, 16
      %v634 = vrot.slane %v632, 4
      %v635 = vor.u32 %v631, %v634
      %v637 = vshrl.u32 %v581, 16
      %v639 = vrot.slane %v637, 3
      %v640 = vshll.u32 %v581, 16
      %v642 = vrot.slane %v640, 4
      %v643 = vor.u32 %v639, %v642
      %v644 = vsel %vm610, %v635, %v643
      %v646 = vshrl.u32 %v582, 16
      %v648 = vrot.slane %v646, 3
      %v649 = vshll.u32 %v582, 16
      %v651 = vrot.slane %v649, 4
      %v652 = vor.u32 %v648, %v651
      %v654 = vshrl.u32 %v583, 16
      %v656 = vrot.slane %v654, 3
      %v657 = vshll.u32 %v583, 16
      %v659 = vrot.slane %v657, 4
      %v660 = vor.u32 %v656, %v659
      %v661 = vsel %vm610, %v652, %v660
      %v663 = vshrl.u32 %v584, 16
      %v665 = vrot.slane %v663, 3
      %v666 = vshll.u32 %v584, 16
      %v668 = vrot.slane %v666, 4
      %v669 = vor.u32 %v665, %v668
      %v671 = vshrl.u32 %v585, 16
      %v673 = vrot.slane %v671, 3
      %v674 = vshll.u32 %v585, 16
      %v676 = vrot.slane %v674, 4
      %v677 = vor.u32 %v673, %v676
      %v678 = vsel %vm610, %v669, %v677
      %v680 = vshrl.u32 %v586, 16
      %v682 = vrot.slane %v680, 3
      %v683 = vshll.u32 %v586, 16
      %v685 = vrot.slane %v683, 4
      %v686 = vor.u32 %v682, %v685
      %v688 = vshrl.u32 %v587, 16
      %v690 = vrot.slane %v688, 3
      %v691 = vshll.u32 %v587, 16
      %v693 = vrot.slane %v691, 4
      %v694 = vor.u32 %v690, %v693
      %v695 = vsel %vm610, %v686, %v694
      %v697 = vshrl.u32 %v588, 16
      %v699 = vrot.slane %v697, 3
      %v700 = vshll.u32 %v588, 16
      %v702 = vrot.slane %v700, 4
      %v703 = vor.u32 %v699, %v702
      %v705 = vshrl.u32 %v589, 16
      %v707 = vrot.slane %v705, 3
      %v708 = vshll.u32 %v589, 16
      %v710 = vrot.slane %v708, 4
      %v711 = vor.u32 %v707, %v710
      %v712 = vsel %vm610, %v703, %v711
      %v714 = vshrl.u32 %v590, 16
      %v716 = vrot.slane %v714, 3
      %v717 = vshll.u32 %v590, 16
      %v719 = vrot.slane %v717, 4
      %v720 = vor.u32 %v716, %v719
      %v722 = vshrl.u32 %v591, 16
      %v724 = vrot.slane %v722, 3
      %v725 = vshll.u32 %v591, 16
      %v727 = vrot.slane %v725, 4
      %v728 = vor.u32 %v724, %v727
      %v729 = vsel %vm610, %v720, %v728
      %v731 = vshrl.u32 %v592, 16
      %v733 = vrot.slane %v731, 3
      %v734 = vshll.u32 %v592, 16
      %v736 = vrot.slane %v734, 4
      %v737 = vor.u32 %v733, %v736
      %v739 = vshrl.u32 %v593, 16
      %v741 = vrot.slane %v739, 3
      %v742 = vshll.u32 %v593, 16
      %v744 = vrot.slane %v742, 4
      %v745 = vor.u32 %v741, %v744
      %v746 = vsel %vm610, %v737, %v745
      %v748 = vshrl.u32 %v594, 16
      %v750 = vrot.slane %v748, 3
      %v751 = vshll.u32 %v594, 16
      %v753 = vrot.slane %v751, 4
      %v754 = vor.u32 %v750, %v753
      %v756 = vshrl.u32 %v595, 16
      %v758 = vrot.slane %v756, 3
      %v759 = vshll.u32 %v595, 16
      %v761 = vrot.slane %v759, 4
      %v762 = vor.u32 %v758, %v761
      %v763 = vsel %vm610, %v754, %v762
      %v765 = vshrl.u32 %v596, 16
      %v767 = vrot.slane %v765, 3
      %v768 = vshll.u32 %v596, 16
      %v770 = vrot.slane %v768, 4
      %v771 = vor.u32 %v767, %v770
      %v773 = vshrl.u32 %v597, 16
      %v775 = vrot.slane %v773, 3
      %v776 = vshll.u32 %v597, 16
      %v778 = vrot.slane %v776, 4
      %v779 = vor.u32 %v775, %v778
      %v780 = vsel %vm610, %v771, %v779
      %v782 = vshrl.u32 %v598, 16
      %v784 = vrot.slane %v782, 3
      %v785 = vshll.u32 %v598, 16
      %v787 = vrot.slane %v785, 4
      %v788 = vor.u32 %v784, %v787
      %v790 = vshrl.u32 %v599, 16
      %v792 = vrot.slane %v790, 3
      %v793 = vshll.u32 %v599, 16
      %v795 = vrot.slane %v793, 4
      %v796 = vor.u32 %v792, %v795
      %v797 = vsel %vm610, %v788, %v796
      %v799 = vshrl.u32 %v600, 16
      %v801 = vrot.slane %v799, 3
      %v802 = vshll.u32 %v600, 16
      %v804 = vrot.slane %v802, 4
      %v805 = vor.u32 %v801, %v804
      %v807 = vshrl.u32 %v601, 16
      %v809 = vrot.slane %v807, 3
      %v810 = vshll.u32 %v601, 16
      %v812 = vrot.slane %v810, 4
      %v813 = vor.u32 %v809, %v812
      %v814 = vsel %vm610, %v805, %v813
      %v816 = vshrl.u32 %v602, 16
      %v818 = vrot.slane %v816, 3
      %v819 = vshll.u32 %v602, 16
      %v821 = vrot.slane %v819, 4
      %v822 = vor.u32 %v818, %v821
      %v824 = vshrl.u32 %v603, 16
      %v826 = vrot.slane %v824, 3
      %v827 = vshll.u32 %v603, 16
      %v829 = vrot.slane %v827, 4
      %v830 = vor.u32 %v826, %v829
      %v831 = vsel %vm610, %v822, %v830
      %v833 = vshrl.u32 %v604, 16
      %v835 = vrot.slane %v833, 3
      %v836 = vshll.u32 %v604, 16
      %v838 = vrot.slane %v836, 4
      %v839 = vor.u32 %v835, %v838
      %v841 = vshrl.u32 %v605, 16
      %v843 = vrot.slane %v841, 3
      %v844 = vshll.u32 %v605, 16
      %v846 = vrot.slane %v844, 4
      %v847 = vor.u32 %v843, %v846
      %v848 = vsel %vm610, %v839, %v847
      %v850 = vshrl.u32 %v606, 16
      %v852 = vrot.slane %v850, 3
      %v853 = vshll.u32 %v606, 16
      %v855 = vrot.slane %v853, 4
      %v856 = vor.u32 %v852, %v855
      %v858 = vshrl.u32 %v607, 16
      %v860 = vrot.slane %v858, 3
      %v861 = vshll.u32 %v607, 16
      %v863 = vrot.slane %v861, 4
      %v864 = vor.u32 %v860, %v863
      %v865 = vsel %vm610, %v856, %v864
      %v867 = vshrl.u32 %v608, 16
      %v869 = vrot.slane %v867, 3
      %v870 = vshll.u32 %v608, 16
      %v872 = vrot.slane %v870, 4
      %v873 = vor.u32 %v869, %v872
      %v875 = vshrl.u32 %v609, 16
      %v877 = vrot.slane %v875, 3
      %v878 = vshll.u32 %v609, 16
      %v880 = vrot.slane %v878, 4
      %v881 = vor.u32 %v877, %v880
      %v882 = vsel %vm610, %v873, %v881
      %v899 = vld [vmem:[%s3] sm:$0xf]
      %v900 = vld [vmem:[%s3 + $0x4] sm:$0xf]
      %v901 = vld [vmem:[%s3 + $0x8] sm:$0xf]
      %v902 = vld [vmem:[%s3 + $0xc] sm:$0xf]
      %v903 = vld [vmem:[%s3 + $0x10] sm:$0xf]
      %v904 = vld [vmem:[%s3 + $0x14] sm:$0xf]
      %v905 = vld [vmem:[%s3 + $0x18] sm:$0xf]
      %v906 = vld [vmem:[%s3 + $0x1c] sm:$0xf]
      %v907 = vld [vmem:[%s3 + $0x20] sm:$0xf]
      %v908 = vld [vmem:[%s3 + $0x24] sm:$0xf]
      %v909 = vld [vmem:[%s3 + $0x28] sm:$0xf]
      %v910 = vld [vmem:[%s3 + $0x2c] sm:$0xf]
      %v911 = vld [vmem:[%s3 + $0x30] sm:$0xf]
      %v912 = vld [vmem:[%s3 + $0x34] sm:$0xf]
      %v913 = vld [vmem:[%s3 + $0x38] sm:$0xf]
      %v914 = vld [vmem:[%s3 + $0x3c] sm:$0xf]
      %v915 = vld [vmem:[#allocation2] sm:$0xf0]
      %v916 = vld [vmem:[#allocation2 + $0x10] sm:$0xf0]
      %v917 = vld [vmem:[#allocation2 + $0x20] sm:$0xf0]
      %v918 = vld [vmem:[#allocation2 + $0x30] sm:$0xf0]
      %v919 = vld [vmem:[#allocation2 + $0x40] sm:$0xf0]
      %v920 = vld [vmem:[#allocation2 + $0x50] sm:$0xf0]
      %v921 = vld [vmem:[#allocation2 + $0x60] sm:$0xf0]
      %v922 = vld [vmem:[#allocation2 + $0x70] sm:$0xf0]
      %v923 = vld [vmem:[#allocation2 + $0x80] sm:$0xf0]
      %v924 = vld [vmem:[#allocation2 + $0x90] sm:$0xf0]
      %v925 = vld [vmem:[#allocation2 + $0xa0] sm:$0xf0]
      %v926 = vld [vmem:[#allocation2 + $0xb0] sm:$0xf0]
      %v927 = vld [vmem:[#allocation2 + $0xc0] sm:$0xf0]
      %v928 = vld [vmem:[#allocation2 + $0xd0] sm:$0xf0]
      %v929 = vld [vmem:[#allocation2 + $0xe0] sm:$0xf0]
      %v930 = vld [vmem:[#allocation2 + $0xf0] sm:$0xf0]
      %vm963 = vcmask 1043456
      %v964 = vrot.slane %v915, 4
      %v965 = vrot.slane %v579, 4
      %v966 = vsel %vm963, %v964, %v965
      %v967 = vrot.slane %v916, 4
      %v968 = vrot.slane %v581, 4
      %v969 = vsel %vm963, %v967, %v968
      %v970 = vrot.slane %v917, 4
      %v971 = vrot.slane %v583, 4
      %v972 = vsel %vm963, %v970, %v971
      %v973 = vrot.slane %v918, 4
      %v974 = vrot.slane %v585, 4
      %v975 = vsel %vm963, %v973, %v974
      %v976 = vrot.slane %v919, 4
      %v977 = vrot.slane %v587, 4
      %v978 = vsel %vm963, %v976, %v977
      %v979 = vrot.slane %v920, 4
      %v980 = vrot.slane %v589, 4
      %v981 = vsel %vm963, %v979, %v980
      %v982 = vrot.slane %v921, 4
      %v983 = vrot.slane %v591, 4
      %v984 = vsel %vm963, %v982, %v983
      %v985 = vrot.slane %v922, 4
      %v986 = vrot.slane %v593, 4
      %v987 = vsel %vm963, %v985, %v986
      %v988 = vrot.slane %v923, 4
      %v989 = vrot.slane %v595, 4
      %v990 = vsel %vm963, %v988, %v989
      %v991 = vrot.slane %v924, 4
      %v992 = vrot.slane %v597, 4
      %v993 = vsel %vm963, %v991, %v992
      %v994 = vrot.slane %v925, 4
      %v995 = vrot.slane %v599, 4
      %v996 = vsel %vm963, %v994, %v995
      %v997 = vrot.slane %v926, 4
      %v998 = vrot.slane %v601, 4
      %v999 = vsel %vm963, %v997, %v998
      %v1000 = vrot.slane %v927, 4
      %v1001 = vrot.slane %v603, 4
      %v1002 = vsel %vm963, %v1000, %v1001
      %v1003 = vrot.slane %v928, 4
      %v1004 = vrot.slane %v605, 4
      %v1005 = vsel %vm963, %v1003, %v1004
      %v1006 = vrot.slane %v929, 4
      %v1007 = vrot.slane %v607, 4
      %v1008 = vsel %vm963, %v1006, %v1007
      %v1009 = vrot.slane %v930, 4
      %v1010 = vrot.slane %v609, 4
      %v1011 = vsel %vm963, %v1009, %v1010
      %s1028 = scalar_lea.vmem %s3, 64
      %v1029 = vld [vmem:[%s1028] sm:$0xf]
      %v1030 = vld [vmem:[%s1028 + $0x4] sm:$0xf]
      %v1031 = vld [vmem:[%s1028 + $0x8] sm:$0xf]
      %v1032 = vld [vmem:[%s1028 + $0xc] sm:$0xf]
      %v1033 = vld [vmem:[%s1028 + $0x10] sm:$0xf]
      %v1034 = vld [vmem:[%s1028 + $0x14] sm:$0xf]
      %v1035 = vld [vmem:[%s1028 + $0x18] sm:$0xf]
      %v1036 = vld [vmem:[%s1028 + $0x1c] sm:$0xf]
      %v1037 = vld [vmem:[%s1028 + $0x20] sm:$0xf]
      %v1038 = vld [vmem:[%s1028 + $0x24] sm:$0xf]
      %v1039 = vld [vmem:[%s1028 + $0x28] sm:$0xf]
      %v1040 = vld [vmem:[%s1028 + $0x2c] sm:$0xf]
      %v1041 = vld [vmem:[%s1028 + $0x30] sm:$0xf]
      %v1042 = vld [vmem:[%s1028 + $0x34] sm:$0xf]
      %v1043 = vld [vmem:[%s1028 + $0x38] sm:$0xf]
      %v1044 = vld [vmem:[%s1028 + $0x3c] sm:$0xf]
      %v1061 = vunpack.c.l.b16 %v1029
      %v1062 = vunpack.c.l.b16 %v1030
      %v1063 = vunpack.c.l.b16 %v1031
      %v1064 = vunpack.c.l.b16 %v1032
      %v1065 = vunpack.c.l.b16 %v1033
      %v1066 = vunpack.c.l.b16 %v1034
      %v1067 = vunpack.c.l.b16 %v1035
      %v1068 = vunpack.c.l.b16 %v1036
      %v1069 = vunpack.c.l.b16 %v1037
      %v1070 = vunpack.c.l.b16 %v1038
      %v1071 = vunpack.c.l.b16 %v1039
      %v1072 = vunpack.c.l.b16 %v1040
      %v1073 = vunpack.c.l.b16 %v1041
      %v1074 = vunpack.c.l.b16 %v1042
      %v1075 = vunpack.c.l.b16 %v1043
      %v1076 = vunpack.c.l.b16 %v1044
      %v1077 = vpack.c.b16 %v1062, %v1061
      %v1078 = vpack.c.b16 %v1064, %v1063
      %v1079 = vpack.c.b16 %v1066, %v1065
      %v1080 = vpack.c.b16 %v1068, %v1067
      %v1081 = vpack.c.b16 %v1070, %v1069
      %v1082 = vpack.c.b16 %v1072, %v1071
      %v1083 = vpack.c.b16 %v1074, %v1073
      %v1084 = vpack.c.b16 %v1076, %v1075
      %1093 = vmatprep.subr.bf16.mxu0 0
      %1094 = vmatpush1.bf16.msra.mxu0 %v1077
      %1095 = vmatprep.subr.bf16.mxu0 0
      %1096 = vmatpush1.bf16.msra.mxu0 %v1078
      %1097 = vmatprep.subr.bf16.mxu0 0
      %1098 = vmatpush1.bf16.msra.mxu0 %v1079
      %1099 = vmatprep.subr.bf16.mxu0 0
      %1100 = vmatpush1.bf16.msra.mxu0 %v1080
      %1101 = vmatprep.subr.bf16.mxu0 0
      %1102 = vmatpush1.bf16.msra.mxu0 %v1081
      %1103 = vmatprep.subr.bf16.mxu0 0
      %1104 = vmatpush1.bf16.msra.mxu0 %v1082
      %1105 = vmatprep.subr.bf16.mxu0 0
      %1106 = vmatpush1.bf16.msra.mxu0 %v1083
      %1107 = vmatprep.subr.bf16.mxu0 0
      %1108 = vmatpush1.bf16.msra.mxu0 %v1084
      %1109 = vmatprep.subr.bf16.mxu0 0
      %1110 = vmatpush1.bf16.msra.mxu0 0
      %1111 = vmatprep.subr.bf16.mxu0 0
      %1112 = vmatpush1.bf16.msra.mxu0 0
      %1113 = vmatprep.subr.bf16.mxu0 0
      %1114 = vmatpush1.bf16.msra.mxu0 0
      %1115 = vmatprep.subr.bf16.mxu0 0
      %1116 = vmatpush1.bf16.msra.mxu0 0
      %1117 = vmatprep.subr.bf16.mxu0 0
      %1118 = vmatpush1.bf16.msra.mxu0 0
      %1119 = vmatprep.subr.bf16.mxu0 0
      %1120 = vmatpush1.bf16.msra.mxu0 0
      %1121 = vmatprep.subr.bf16.mxu0 0
      %1122 = vmatpush1.bf16.msra.mxu0 0
      %1123 = vmatprep.subr.bf16.mxu0 0
      %1124 = vmatpush1.bf16.msra.mxu0 0
      %1125 = vmatprep.mubr.bf16.mxu0 0
      %1126 = vmatmul.mubr.bf16.gmra.mrb[0].mxu0 %v966
      %v1127 = vpop.f32.mrb[0].mxu0
      %v1128 = vadd.f32 0.0, %v1127
      %v1129 = vpop.f32.mrb[0].mxu0
      %v1130 = vpop.f32.mrb[0].mxu0
      %v1131 = vadd.f32 0.0, %v1130
      %v1132 = vpop.f32.mrb[0].mxu0
      %1133 = vmatprep.mubr.bf16.mxu0 0
      %1134 = vmatmul.mubr.bf16.gmra.mrb[0].mxu0 %v969
      %v1135 = vpop.f32.mrb[0].mxu0
      %v1136 = vadd.f32 0.0, %v1135
      %v1137 = vpop.f32.mrb[0].mxu0
      %v1138 = vpop.f32.mrb[0].mxu0
      %v1139 = vadd.f32 0.0, %v1138
      %v1140 = vpop.f32.mrb[0].mxu0
      %1141 = vmatprep.mubr.bf16.mxu0 0
      %1142 = vmatmul.mubr.bf16.gmra.mrb[0].mxu0 %v972
      %v1143 = vpop.f32.mrb[0].mxu0
      %v1144 = vadd.f32 0.0, %v1143
      %v1145 = vpop.f32.mrb[0].mxu0
      %v1146 = vpop.f32.mrb[0].mxu0
      %v1147 = vadd.f32 0.0, %v1146
      %v1148 = vpop.f32.mrb[0].mxu0
      %1149 = vmatprep.mubr.bf16.mxu0 0
      %1150 = vmatmul.mubr.bf16.gmra.mrb[0].mxu0 %v975
      %v1151 = vpop.f32.mrb[0].mxu0
      %v1152 = vadd.f32 0.0, %v1151
      %v1153 = vpop.f32.mrb[0].mxu0
      %v1154 = vpop.f32.mrb[0].mxu0
      %v1155 = vadd.f32 0.0, %v1154
      %v1156 = vpop.f32.mrb[0].mxu0
      %1157 = vmatprep.mubr.bf16.mxu0 0
      %1158 = vmatmul.mubr.bf16.gmra.mrb[0].mxu0 %v978
      %v1159 = vpop.f32.mrb[0].mxu0
      %v1160 = vadd.f32 0.0, %v1159
      %v1161 = vpop.f32.mrb[0].mxu0
      %v1162 = vpop.f32.mrb[0].mxu0
      %v1163 = vadd.f32 0.0, %v1162
      %v1164 = vpop.f32.mrb[0].mxu0
      %1165 = vmatprep.mubr.bf16.mxu0 0
      %1166 = vmatmul.mubr.bf16.gmra.mrb[0].mxu0 %v981
      %v1167 = vpop.f32.mrb[0].mxu0
      %v1168 = vadd.f32 0.0, %v1167
      %v1169 = vpop.f32.mrb[0].mxu0
      %v1170 = vpop.f32.mrb[0].mxu0
      %v1171 = vadd.f32 0.0, %v1170
      %v1172 = vpop.f32.mrb[0].mxu0
      %1173 = vmatprep.mubr.bf16.mxu0 0
      %1174 = vmatmul.mubr.bf16.gmra.mrb[0].mxu0 %v984
      %v1175 = vpop.f32.mrb[0].mxu0
      %v1176 = vadd.f32 0.0, %v1175
      %v1177 = vpop.f32.mrb[0].mxu0
      %v1178 = vpop.f32.mrb[0].mxu0
      %v1179 = vadd.f32 0.0, %v1178
      %v1180 = vpop.f32.mrb[0].mxu0
      %1181 = vmatprep.mubr.bf16.mxu0 0
      %1182 = vmatmul.mubr.bf16.gmra.mrb[0].mxu0 %v987
      %v1183 = vpop.f32.mrb[0].mxu0
      %v1184 = vadd.f32 0.0, %v1183
      %v1185 = vpop.f32.mrb[0].mxu0
      %v1186 = vpop.f32.mrb[0].mxu0
      %v1187 = vadd.f32 0.0, %v1186
      %v1188 = vpop.f32.mrb[0].mxu0
      %1189 = vmatprep.mubr.bf16.mxu0 0
      %1190 = vmatmul.mubr.bf16.gmra.mrb[0].mxu0 %v990
      %v1191 = vpop.f32.mrb[0].mxu0
      %v1192 = vadd.f32 0.0, %v1191
      %v1193 = vpop.f32.mrb[0].mxu0
      %v1194 = vpop.f32.mrb[0].mxu0
      %v1195 = vadd.f32 0.0, %v1194
      %v1196 = vpop.f32.mrb[0].mxu0
      %1197 = vmatprep.mubr.bf16.mxu0 0
      %1198 = vmatmul.mubr.bf16.gmra.mrb[0].mxu0 %v993
      %v1199 = vpop.f32.mrb[0].mxu0
      %v1200 = vadd.f32 0.0, %v1199
      %v1201 = vpop.f32.mrb[0].mxu0
      %v1202 = vpop.f32.mrb[0].mxu0
      %v1203 = vadd.f32 0.0, %v1202
      %v1204 = vpop.f32.mrb[0].mxu0
      %1205 = vmatprep.mubr.bf16.mxu0 0
      %1206 = vmatmul.mubr.bf16.gmra.mrb[0].mxu0 %v996
      %v1207 = vpop.f32.mrb[0].mxu0
      %v1208 = vadd.f32 0.0, %v1207
      %v1209 = vpop.f32.mrb[0].mxu0
      %v1210 = vpop.f32.mrb[0].mxu0
      %v1211 = vadd.f32 0.0, %v1210
      %v1212 = vpop.f32.mrb[0].mxu0
      %1213 = vmatprep.mubr.bf16.mxu0 0
      %1214 = vmatmul.mubr.bf16.gmra.mrb[0].mxu0 %v999
      %v1215 = vpop.f32.mrb[0].mxu0
      %v1216 = vadd.f32 0.0, %v1215
      %v1217 = vpop.f32.mrb[0].mxu0
      %v1218 = vpop.f32.mrb[0].mxu0
      %v1219 = vadd.f32 0.0, %v1218
      %v1220 = vpop.f32.mrb[0].mxu0
      %1221 = vmatprep.mubr.bf16.mxu0 0
      %1222 = vmatmul.mubr.bf16.gmra.mrb[0].mxu0 %v1002
      %v1223 = vpop.f32.mrb[0].mxu0
      %v1224 = vadd.f32 0.0, %v1223
      %v1225 = vpop.f32.mrb[0].mxu0
      %v1226 = vpop.f32.mrb[0].mxu0
      %v1227 = vadd.f32 0.0, %v1226
      %v1228 = vpop.f32.mrb[0].mxu0
      %1229 = vmatprep.mubr.bf16.mxu0 0
      %1230 = vmatmul.mubr.bf16.gmra.mrb[0].mxu0 %v1005
      %v1231 = vpop.f32.mrb[0].mxu0
      %v1232 = vadd.f32 0.0, %v1231
      %v1233 = vpop.f32.mrb[0].mxu0
      %v1234 = vpop.f32.mrb[0].mxu0
      %v1235 = vadd.f32 0.0, %v1234
      %v1236 = vpop.f32.mrb[0].mxu0
      %1237 = vmatprep.mubr.bf16.mxu0 0
      %1238 = vmatmul.mubr.bf16.gmra.mrb[0].mxu0 %v1008
      %v1239 = vpop.f32.mrb[0].mxu0
      %v1240 = vadd.f32 0.0, %v1239
      %v1241 = vpop.f32.mrb[0].mxu0
      %v1242 = vpop.f32.mrb[0].mxu0
      %v1243 = vadd.f32 0.0, %v1242
      %v1244 = vpop.f32.mrb[0].mxu0
      %1245 = vmatprep.mubr.bf16.mxu0 0
      %1246 = vmatmul.mubr.bf16.gmra.mrb[0].mxu0 %v1011
      %v1247 = vpop.f32.mrb[0].mxu0
      %v1248 = vadd.f32 0.0, %v1247
      %v1249 = vpop.f32.mrb[0].mxu0
      %v1250 = vpop.f32.mrb[0].mxu0
      %v1251 = vadd.f32 0.0, %v1250
      %v1252 = vpop.f32.mrb[0].mxu0
      %1253 = vdwg.mxu0
      %v1270 = vunpack.c.l.b16 %v899
      %v1271 = vunpack.c.l.b16 %v900
      %v1272 = vunpack.c.l.b16 %v901
      %v1273 = vunpack.c.l.b16 %v902
      %v1274 = vunpack.c.l.b16 %v903
      %v1275 = vunpack.c.l.b16 %v904
      %v1276 = vunpack.c.l.b16 %v905
      %v1277 = vunpack.c.l.b16 %v906
      %v1278 = vunpack.c.l.b16 %v907
      %v1279 = vunpack.c.l.b16 %v908
      %v1280 = vunpack.c.l.b16 %v909
      %v1281 = vunpack.c.l.b16 %v910
      %v1282 = vunpack.c.l.b16 %v911
      %v1283 = vunpack.c.l.b16 %v912
      %v1284 = vunpack.c.l.b16 %v913
      %v1285 = vunpack.c.l.b16 %v914
      %v1286 = vpack.c.b16 %v1271, %v1270
      %v1287 = vpack.c.b16 %v1273, %v1272
      %v1288 = vpack.c.b16 %v1275, %v1274
      %v1289 = vpack.c.b16 %v1277, %v1276
      %v1290 = vpack.c.b16 %v1279, %v1278
      %v1291 = vpack.c.b16 %v1281, %v1280
      %v1292 = vpack.c.b16 %v1283, %v1282
      %v1293 = vpack.c.b16 %v1285, %v1284
      %1302 = vmatprep.subr.bf16.mxu0 0
      %1303 = vmatpush1.bf16.msra.mxu0 %v1286
      %1304 = vmatprep.subr.bf16.mxu0 0
      %1305 = vmatpush1.bf16.msra.mxu0 %v1287
      %1306 = vmatprep.subr.bf16.mxu0 0
      %1307 = vmatpush1.bf16.msra.mxu0 %v1288
      %1308 = vmatprep.subr.bf16.mxu0 0
      %1309 = vmatpush1.bf16.msra.mxu0 %v1289
      %1310 = vmatprep.subr.bf16.mxu0 0
      %1311 = vmatpush1.bf16.msra.mxu0 %v1290
      %1312 = vmatprep.subr.bf16.mxu0 0
      %1313 = vmatpush1.bf16.msra.mxu0 %v1291
      %1314 = vmatprep.subr.bf16.mxu0 0
      %1315 = vmatpush1.bf16.msra.mxu0 %v1292
      %1316 = vmatprep.subr.bf16.mxu0 0
      %1317 = vmatpush1.bf16.msra.mxu0 %v1293
      %1318 = vmatprep.subr.bf16.mxu0 0
      %1319 = vmatpush1.bf16.msra.mxu0 0
      %1320 = vmatprep.subr.bf16.mxu0 0
      %1321 = vmatpush1.bf16.msra.mxu0 0
      %1322 = vmatprep.subr.bf16.mxu0 0
      %1323 = vmatpush1.bf16.msra.mxu0 0
      %1324 = vmatprep.subr.bf16.mxu0 0
      %1325 = vmatpush1.bf16.msra.mxu0 0
      %1326 = vmatprep.subr.bf16.mxu0 0
      %1327 = vmatpush1.bf16.msra.mxu0 0
      %1328 = vmatprep.subr.bf16.mxu0 0
      %1329 = vmatpush1.bf16.msra.mxu0 0
      %1330 = vmatprep.subr.bf16.mxu0 0
      %1331 = vmatpush1.bf16.msra.mxu0 0
      %1332 = vmatprep.subr.bf16.mxu0 0
      %1333 = vmatpush1.bf16.msra.mxu0 0
      %1334 = vmatprep.mubr.bf16.mxu0 0
      %1335 = vmatmul.mubr.bf16.gmra.mrb[0].mxu0 %v627
      %v1336 = vpop.f32.mrb[0].mxu0
      %v1337 = vadd.f32 %v1128, %v1336
      %v1338 = vpop.f32.mrb[0].mxu0
      %v1339 = vpop.f32.mrb[0].mxu0
      %v1340 = vadd.f32 %v1131, %v1339
      %v1341 = vpop.f32.mrb[0].mxu0
      %1342 = vmatprep.mubr.bf16.mxu0 0
      %1343 = vmatmul.mubr.bf16.gmra.mrb[0].mxu0 %v644
      %v1344 = vpop.f32.mrb[0].mxu0
      %v1345 = vadd.f32 %v1136, %v1344
      %v1346 = vpop.f32.mrb[0].mxu0
      %v1347 = vpop.f32.mrb[0].mxu0
      %v1348 = vadd.f32 %v1139, %v1347
      %v1349 = vpop.f32.mrb[0].mxu0
      %1350 = vmatprep.mubr.bf16.mxu0 0
      %1351 = vmatmul.mubr.bf16.gmra.mrb[0].mxu0 %v661
      %v1352 = vpop.f32.mrb[0].mxu0
      %v1353 = vadd.f32 %v1144, %v1352
      %v1354 = vpop.f32.mrb[0].mxu0
      %v1355 = vpop.f32.mrb[0].mxu0
      %v1356 = vadd.f32 %v1147, %v1355
      %v1357 = vpop.f32.mrb[0].mxu0
      %1358 = vmatprep.mubr.bf16.mxu0 0
      %1359 = vmatmul.mubr.bf16.gmra.mrb[0].mxu0 %v678
      %v1360 = vpop.f32.mrb[0].mxu0
      %v1361 = vadd.f32 %v1152, %v1360
      %v1362 = vpop.f32.mrb[0].mxu0
      %v1363 = vpop.f32.mrb[0].mxu0
      %v1364 = vadd.f32 %v1155, %v1363
      %v1365 = vpop.f32.mrb[0].mxu0
      %1366 = vmatprep.mubr.bf16.mxu0 0
      %1367 = vmatmul.mubr.bf16.gmra.mrb[0].mxu0 %v695
      %v1368 = vpop.f32.mrb[0].mxu0
      %v1369 = vadd.f32 %v1160, %v1368
      %v1370 = vpop.f32.mrb[0].mxu0
      %v1371 = vpop.f32.mrb[0].mxu0
      %v1372 = vadd.f32 %v1163, %v1371
      %v1373 = vpop.f32.mrb[0].mxu0
      %1374 = vmatprep.mubr.bf16.mxu0 0
      %1375 = vmatmul.mubr.bf16.gmra.mrb[0].mxu0 %v712
      %v1376 = vpop.f32.mrb[0].mxu0
      %v1377 = vadd.f32 %v1168, %v1376
      %v1378 = vpop.f32.mrb[0].mxu0
      %v1379 = vpop.f32.mrb[0].mxu0
      %v1380 = vadd.f32 %v1171, %v1379
      %v1381 = vpop.f32.mrb[0].mxu0
      %1382 = vmatprep.mubr.bf16.mxu0 0
      %1383 = vmatmul.mubr.bf16.gmra.mrb[0].mxu0 %v729
      %v1384 = vpop.f32.mrb[0].mxu0
      %v1385 = vadd.f32 %v1176, %v1384
      %v1386 = vpop.f32.mrb[0].mxu0
      %v1387 = vpop.f32.mrb[0].mxu0
      %v1388 = vadd.f32 %v1179, %v1387
      %v1389 = vpop.f32.mrb[0].mxu0
      %1390 = vmatprep.mubr.bf16.mxu0 0
      %1391 = vmatmul.mubr.bf16.gmra.mrb[0].mxu0 %v746
      %v1392 = vpop.f32.mrb[0].mxu0
      %v1393 = vadd.f32 %v1184, %v1392
      %v1394 = vpop.f32.mrb[0].mxu0
      %v1395 = vpop.f32.mrb[0].mxu0
      %v1396 = vadd.f32 %v1187, %v1395
      %v1397 = vpop.f32.mrb[0].mxu0
      %1398 = vmatprep.mubr.bf16.mxu0 0
      %1399 = vmatmul.mubr.bf16.gmra.mrb[0].mxu0 %v763
      %v1400 = vpop.f32.mrb[0].mxu0
      %v1401 = vadd.f32 %v1192, %v1400
      %v1402 = vpop.f32.mrb[0].mxu0
      %v1403 = vpop.f32.mrb[0].mxu0
      %v1404 = vadd.f32 %v1195, %v1403
      %v1405 = vpop.f32.mrb[0].mxu0
      %1406 = vmatprep.mubr.bf16.mxu0 0
      %1407 = vmatmul.mubr.bf16.gmra.mrb[0].mxu0 %v780
      %v1408 = vpop.f32.mrb[0].mxu0
      %v1409 = vadd.f32 %v1200, %v1408
      %v1410 = vpop.f32.mrb[0].mxu0
      %v1411 = vpop.f32.mrb[0].mxu0
      %v1412 = vadd.f32 %v1203, %v1411
      %v1413 = vpop.f32.mrb[0].mxu0
      %1414 = vmatprep.mubr.bf16.mxu0 0
      %1415 = vmatmul.mubr.bf16.gmra.mrb[0].mxu0 %v797
      %v1416 = vpop.f32.mrb[0].mxu0
      %v1417 = vadd.f32 %v1208, %v1416
      %v1418 = vpop.f32.mrb[0].mxu0
      %v1419 = vpop.f32.mrb[0].mxu0
      %v1420 = vadd.f32 %v1211, %v1419
      %v1421 = vpop.f32.mrb[0].mxu0
      %1422 = vmatprep.mubr.bf16.mxu0 0
      %1423 = vmatmul.mubr.bf16.gmra.mrb[0].mxu0 %v814
      %v1424 = vpop.f32.mrb[0].mxu0
      %v1425 = vadd.f32 %v1216, %v1424
      %v1426 = vpop.f32.mrb[0].mxu0
      %v1427 = vpop.f32.mrb[0].mxu0
      %v1428 = vadd.f32 %v1219, %v1427
      %v1429 = vpop.f32.mrb[0].mxu0
      %1430 = vmatprep.mubr.bf16.mxu0 0
      %1431 = vmatmul.mubr.bf16.gmra.mrb[0].mxu0 %v831
      %v1432 = vpop.f32.mrb[0].mxu0
      %v1433 = vadd.f32 %v1224, %v1432
      %v1434 = vpop.f32.mrb[0].mxu0
      %v1435 = vpop.f32.mrb[0].mxu0
      %v1436 = vadd.f32 %v1227, %v1435
      %v1437 = vpop.f32.mrb[0].mxu0
      %1438 = vmatprep.mubr.bf16.mxu0 0
      %1439 = vmatmul.mubr.bf16.gmra.mrb[0].mxu0 %v848
      %v1440 = vpop.f32.mrb[0].mxu0
      %v1441 = vadd.f32 %v1232, %v1440
      %v1442 = vpop.f32.mrb[0].mxu0
      %v1443 = vpop.f32.mrb[0].mxu0
      %v1444 = vadd.f32 %v1235, %v1443
      %v1445 = vpop.f32.mrb[0].mxu0
      %1446 = vmatprep.mubr.bf16.mxu0 0
      %1447 = vmatmul.mubr.bf16.gmra.mrb[0].mxu0 %v865
      %v1448 = vpop.f32.mrb[0].mxu0
      %v1449 = vadd.f32 %v1240, %v1448
      %v1450 = vpop.f32.mrb[0].mxu0
      %v1451 = vpop.f32.mrb[0].mxu0
      %v1452 = vadd.f32 %v1243, %v1451
      %v1453 = vpop.f32.mrb[0].mxu0
      %1454 = vmatprep.mubr.bf16.mxu0 0
      %1455 = vmatmul.mubr.bf16.gmra.mrb[0].mxu0 %v882
      %v1456 = vpop.f32.mrb[0].mxu0
      %v1457 = vadd.f32 %v1248, %v1456
      %v1458 = vpop.f32.mrb[0].mxu0
      %v1459 = vpop.f32.mrb[0].mxu0
      %v1460 = vadd.f32 %v1251, %v1459
      %v1461 = vpop.f32.mrb[0].mxu0
      %1462 = vdwg.mxu0
      %v1463 = vld [vmem:[#allocation2 + $0x8] sm:$0x1f]
      %v1464 = vld [vmem:[#allocation2 + $0x18] sm:$0x1f]
      %v1465 = vld [vmem:[#allocation2 + $0x28] sm:$0x1f]
      %v1466 = vld [vmem:[#allocation2 + $0x38] sm:$0x1f]
      %v1467 = vld [vmem:[#allocation2 + $0x48] sm:$0x1f]
      %v1468 = vld [vmem:[#allocation2 + $0x58] sm:$0x1f]
      %v1469 = vld [vmem:[#allocation2 + $0x68] sm:$0x1f]
      %v1470 = vld [vmem:[#allocation2 + $0x78] sm:$0x1f]
      %v1471 = vld [vmem:[#allocation2 + $0x88] sm:$0x1f]
      %v1472 = vld [vmem:[#allocation2 + $0x98] sm:$0x1f]
      %v1473 = vld [vmem:[#allocation2 + $0xa8] sm:$0x1f]
      %v1474 = vld [vmem:[#allocation2 + $0xb8] sm:$0x1f]
      %v1475 = vld [vmem:[#allocation2 + $0xc8] sm:$0x1f]
      %v1476 = vld [vmem:[#allocation2 + $0xd8] sm:$0x1f]
      %v1477 = vld [vmem:[#allocation2 + $0xe8] sm:$0x1f]
      %v1478 = vld [vmem:[#allocation2 + $0xf8] sm:$0x1f]
      %vm1479 = vsmask.f32 3328
      %v1481 = vshrl.u32 %v915, 16
      %v1483 = vrot.slane %v1481, 4
      %v1484 = vshll.u32 %v915, 16
      %v1486 = vrot.slane %v1484, 5
      %v1487 = vor.u32 %v1483, %v1486
      %v1489 = vshrl.u32 %v1463, 16
      %v1491 = vrot.slane %v1489, 4
      %v1492 = vshll.u32 %v1463, 16
      %v1494 = vrot.slane %v1492, 5
      %v1495 = vor.u32 %v1491, %v1494
      %v1496 = vsel %vm1479, %v1487, %v1495
      %v1498 = vshrl.u32 %v916, 16
      %v1500 = vrot.slane %v1498, 4
      %v1501 = vshll.u32 %v916, 16
      %v1503 = vrot.slane %v1501, 5
      %v1504 = vor.u32 %v1500, %v1503
      %v1506 = vshrl.u32 %v1464, 16
      %v1508 = vrot.slane %v1506, 4
      %v1509 = vshll.u32 %v1464, 16
      %v1511 = vrot.slane %v1509, 5
      %v1512 = vor.u32 %v1508, %v1511
      %v1513 = vsel %vm1479, %v1504, %v1512
      %v1515 = vshrl.u32 %v917, 16
      %v1517 = vrot.slane %v1515, 4
      %v1518 = vshll.u32 %v917, 16
      %v1520 = vrot.slane %v1518, 5
      %v1521 = vor.u32 %v1517, %v1520
      %v1523 = vshrl.u32 %v1465, 16
      %v1525 = vrot.slane %v1523, 4
      %v1526 = vshll.u32 %v1465, 16
      %v1528 = vrot.slane %v1526, 5
      %v1529 = vor.u32 %v1525, %v1528
      %v1530 = vsel %vm1479, %v1521, %v1529
      %v1532 = vshrl.u32 %v918, 16
      %v1534 = vrot.slane %v1532, 4
      %v1535 = vshll.u32 %v918, 16
      %v1537 = vrot.slane %v1535, 5
      %v1538 = vor.u32 %v1534, %v1537
      %v1540 = vshrl.u32 %v1466, 16
      %v1542 = vrot.slane %v1540, 4
      %v1543 = vshll.u32 %v1466, 16
      %v1545 = vrot.slane %v1543, 5
      %v1546 = vor.u32 %v1542, %v1545
      %v1547 = vsel %vm1479, %v1538, %v1546
      %v1549 = vshrl.u32 %v919, 16
      %v1551 = vrot.slane %v1549, 4
      %v1552 = vshll.u32 %v919, 16
      %v1554 = vrot.slane %v1552, 5
      %v1555 = vor.u32 %v1551, %v1554
      %v1557 = vshrl.u32 %v1467, 16
      %v1559 = vrot.slane %v1557, 4
      %v1560 = vshll.u32 %v1467, 16
      %v1562 = vrot.slane %v1560, 5
      %v1563 = vor.u32 %v1559, %v1562
      %v1564 = vsel %vm1479, %v1555, %v1563
      %v1566 = vshrl.u32 %v920, 16
      %v1568 = vrot.slane %v1566, 4
      %v1569 = vshll.u32 %v920, 16
      %v1571 = vrot.slane %v1569, 5
      %v1572 = vor.u32 %v1568, %v1571
      %v1574 = vshrl.u32 %v1468, 16
      %v1576 = vrot.slane %v1574, 4
      %v1577 = vshll.u32 %v1468, 16
      %v1579 = vrot.slane %v1577, 5
      %v1580 = vor.u32 %v1576, %v1579
      %v1581 = vsel %vm1479, %v1572, %v1580
      %v1583 = vshrl.u32 %v921, 16
      %v1585 = vrot.slane %v1583, 4
      %v1586 = vshll.u32 %v921, 16
      %v1588 = vrot.slane %v1586, 5
      %v1589 = vor.u32 %v1585, %v1588
      %v1591 = vshrl.u32 %v1469, 16
      %v1593 = vrot.slane %v1591, 4
      %v1594 = vshll.u32 %v1469, 16
      %v1596 = vrot.slane %v1594, 5
      %v1597 = vor.u32 %v1593, %v1596
      %v1598 = vsel %vm1479, %v1589, %v1597
      %v1600 = vshrl.u32 %v922, 16
      %v1602 = vrot.slane %v1600, 4
      %v1603 = vshll.u32 %v922, 16
      %v1605 = vrot.slane %v1603, 5
      %v1606 = vor.u32 %v1602, %v1605
      %v1608 = vshrl.u32 %v1470, 16
      %v1610 = vrot.slane %v1608, 4
      %v1611 = vshll.u32 %v1470, 16
      %v1613 = vrot.slane %v1611, 5
      %v1614 = vor.u32 %v1610, %v1613
      %v1615 = vsel %vm1479, %v1606, %v1614
      %v1617 = vshrl.u32 %v923, 16
      %v1619 = vrot.slane %v1617, 4
      %v1620 = vshll.u32 %v923, 16
      %v1622 = vrot.slane %v1620, 5
      %v1623 = vor.u32 %v1619, %v1622
      %v1625 = vshrl.u32 %v1471, 16
      %v1627 = vrot.slane %v1625, 4
      %v1628 = vshll.u32 %v1471, 16
      %v1630 = vrot.slane %v1628, 5
      %v1631 = vor.u32 %v1627, %v1630
      %v1632 = vsel %vm1479, %v1623, %v1631
      %v1634 = vshrl.u32 %v924, 16
      %v1636 = vrot.slane %v1634, 4
      %v1637 = vshll.u32 %v924, 16
      %v1639 = vrot.slane %v1637, 5
      %v1640 = vor.u32 %v1636, %v1639
      %v1642 = vshrl.u32 %v1472, 16
      %v1644 = vrot.slane %v1642, 4
      %v1645 = vshll.u32 %v1472, 16
      %v1647 = vrot.slane %v1645, 5
      %v1648 = vor.u32 %v1644, %v1647
      %v1649 = vsel %vm1479, %v1640, %v1648
      %v1651 = vshrl.u32 %v925, 16
      %v1653 = vrot.slane %v1651, 4
      %v1654 = vshll.u32 %v925, 16
      %v1656 = vrot.slane %v1654, 5
      %v1657 = vor.u32 %v1653, %v1656
      %v1659 = vshrl.u32 %v1473, 16
      %v1661 = vrot.slane %v1659, 4
      %v1662 = vshll.u32 %v1473, 16
      %v1664 = vrot.slane %v1662, 5
      %v1665 = vor.u32 %v1661, %v1664
      %v1666 = vsel %vm1479, %v1657, %v1665
      %v1668 = vshrl.u32 %v926, 16
      %v1670 = vrot.slane %v1668, 4
      %v1671 = vshll.u32 %v926, 16
      %v1673 = vrot.slane %v1671, 5
      %v1674 = vor.u32 %v1670, %v1673
      %v1676 = vshrl.u32 %v1474, 16
      %v1678 = vrot.slane %v1676, 4
      %v1679 = vshll.u32 %v1474, 16
      %v1681 = vrot.slane %v1679, 5
      %v1682 = vor.u32 %v1678, %v1681
      %v1683 = vsel %vm1479, %v1674, %v1682
      %v1685 = vshrl.u32 %v927, 16
      %v1687 = vrot.slane %v1685, 4
      %v1688 = vshll.u32 %v927, 16
      %v1690 = vrot.slane %v1688, 5
      %v1691 = vor.u32 %v1687, %v1690
      %v1693 = vshrl.u32 %v1475, 16
      %v1695 = vrot.slane %v1693, 4
      %v1696 = vshll.u32 %v1475, 16
      %v1698 = vrot.slane %v1696, 5
      %v1699 = vor.u32 %v1695, %v1698
      %v1700 = vsel %vm1479, %v1691, %v1699
      %v1702 = vshrl.u32 %v928, 16
      %v1704 = vrot.slane %v1702, 4
      %v1705 = vshll.u32 %v928, 16
      %v1707 = vrot.slane %v1705, 5
      %v1708 = vor.u32 %v1704, %v1707
      %v1710 = vshrl.u32 %v1476, 16
      %v1712 = vrot.slane %v1710, 4
      %v1713 = vshll.u32 %v1476, 16
      %v1715 = vrot.slane %v1713, 5
      %v1716 = vor.u32 %v1712, %v1715
      %v1717 = vsel %vm1479, %v1708, %v1716
      %v1719 = vshrl.u32 %v929, 16
      %v1721 = vrot.slane %v1719, 4
      %v1722 = vshll.u32 %v929, 16
      %v1724 = vrot.slane %v1722, 5
      %v1725 = vor.u32 %v1721, %v1724
      %v1727 = vshrl.u32 %v1477, 16
      %v1729 = vrot.slane %v1727, 4
      %v1730 = vshll.u32 %v1477, 16
      %v1732 = vrot.slane %v1730, 5
      %v1733 = vor.u32 %v1729, %v1732
      %v1734 = vsel %vm1479, %v1725, %v1733
      %v1736 = vshrl.u32 %v930, 16
      %v1738 = vrot.slane %v1736, 4
      %v1739 = vshll.u32 %v930, 16
      %v1741 = vrot.slane %v1739, 5
      %v1742 = vor.u32 %v1738, %v1741
      %v1744 = vshrl.u32 %v1478, 16
      %v1746 = vrot.slane %v1744, 4
      %v1747 = vshll.u32 %v1478, 16
      %v1749 = vrot.slane %v1747, 5
      %v1750 = vor.u32 %v1746, %v1749
      %v1751 = vsel %vm1479, %v1742, %v1750
      %s1768 = scalar_lea.vmem %s3, 128
      %v1769 = vld [vmem:[%s1768] sm:$0xf]
      %v1770 = vld [vmem:[%s1768 + $0x4] sm:$0xf]
      %v1771 = vld [vmem:[%s1768 + $0x8] sm:$0xf]
      %v1772 = vld [vmem:[%s1768 + $0xc] sm:$0xf]
      %v1773 = vld [vmem:[%s1768 + $0x10] sm:$0xf]
      %v1774 = vld [vmem:[%s1768 + $0x14] sm:$0xf]
      %v1775 = vld [vmem:[%s1768 + $0x18] sm:$0xf]
      %v1776 = vld [vmem:[%s1768 + $0x1c] sm:$0xf]
      %v1777 = vld [vmem:[%s1768 + $0x20] sm:$0xf]
      %v1778 = vld [vmem:[%s1768 + $0x24] sm:$0xf]
      %v1779 = vld [vmem:[%s1768 + $0x28] sm:$0xf]
      %v1780 = vld [vmem:[%s1768 + $0x2c] sm:$0xf]
      %v1781 = vld [vmem:[%s1768 + $0x30] sm:$0xf]
      %v1782 = vld [vmem:[%s1768 + $0x34] sm:$0xf]
      %v1783 = vld [vmem:[%s1768 + $0x38] sm:$0xf]
      %v1784 = vld [vmem:[%s1768 + $0x3c] sm:$0xf]
      %v1801 = vunpack.c.l.b16 %v1769
      %v1802 = vunpack.c.l.b16 %v1770
      %v1803 = vunpack.c.l.b16 %v1771
      %v1804 = vunpack.c.l.b16 %v1772
      %v1805 = vunpack.c.l.b16 %v1773
      %v1806 = vunpack.c.l.b16 %v1774
      %v1807 = vunpack.c.l.b16 %v1775
      %v1808 = vunpack.c.l.b16 %v1776
      %v1809 = vunpack.c.l.b16 %v1777
      %v1810 = vunpack.c.l.b16 %v1778
      %v1811 = vunpack.c.l.b16 %v1779
      %v1812 = vunpack.c.l.b16 %v1780
      %v1813 = vunpack.c.l.b16 %v1781
      %v1814 = vunpack.c.l.b16 %v1782
      %v1815 = vunpack.c.l.b16 %v1783
      %v1816 = vunpack.c.l.b16 %v1784
      %v1817 = vpack.c.b16 %v1802, %v1801
      %v1818 = vpack.c.b16 %v1804, %v1803
      %v1819 = vpack.c.b16 %v1806, %v1805
      %v1820 = vpack.c.b16 %v1808, %v1807
      %v1821 = vpack.c.b16 %v1810, %v1809
      %v1822 = vpack.c.b16 %v1812, %v1811
      %v1823 = vpack.c.b16 %v1814, %v1813
      %v1824 = vpack.c.b16 %v1816, %v1815
      %1833 = vmatprep.subr.bf16.mxu0 0
      %1834 = vmatpush1.bf16.msra.mxu0 %v1817
      %1835 = vmatprep.subr.bf16.mxu0 0
      %1836 = vmatpush1.bf16.msra.mxu0 %v1818
      %1837 = vmatprep.subr.bf16.mxu0 0
      %1838 = vmatpush1.bf16.msra.mxu0 %v1819
      %1839 = vmatprep.subr.bf16.mxu0 0
      %1840 = vmatpush1.bf16.msra.mxu0 %v1820
      %1841 = vmatprep.subr.bf16.mxu0 0
      %1842 = vmatpush1.bf16.msra.mxu0 %v1821
      %1843 = vmatprep.subr.bf16.mxu0 0
      %1844 = vmatpush1.bf16.msra.mxu0 %v1822
      %1845 = vmatprep.subr.bf16.mxu0 0
      %1846 = vmatpush1.bf16.msra.mxu0 %v1823
      %1847 = vmatprep.subr.bf16.mxu0 0
      %1848 = vmatpush1.bf16.msra.mxu0 %v1824
      %1849 = vmatprep.subr.bf16.mxu0 0
      %1850 = vmatpush1.bf16.msra.mxu0 0
      %1851 = vmatprep.subr.bf16.mxu0 0
      %1852 = vmatpush1.bf16.msra.mxu0 0
      %1853 = vmatprep.subr.bf16.mxu0 0
      %1854 = vmatpush1.bf16.msra.mxu0 0
      %1855 = vmatprep.subr.bf16.mxu0 0
      %1856 = vmatpush1.bf16.msra.mxu0 0
      %1857 = vmatprep.subr.bf16.mxu0 0
      %1858 = vmatpush1.bf16.msra.mxu0 0
      %1859 = vmatprep.subr.bf16.mxu0 0
      %1860 = vmatpush1.bf16.msra.mxu0 0
      %1861 = vmatprep.subr.bf16.mxu0 0
      %1862 = vmatpush1.bf16.msra.mxu0 0
      %1863 = vmatprep.subr.bf16.mxu0 0
      %1864 = vmatpush1.bf16.msra.mxu0 0
      %1865 = vmatprep.mubr.bf16.mxu0 0
      %1866 = vmatmul.mubr.bf16.gmra.mrb[0].mxu0 %v1496
      %v1867 = vpop.f32.mrb[0].mxu0
      %v1868 = vadd.f32 0.0, %v1867
      %v1869 = vpop.f32.mrb[0].mxu0
      %v1870 = vpop.f32.mrb[0].mxu0
      %v1871 = vadd.f32 0.0, %v1870
      %v1872 = vpop.f32.mrb[0].mxu0
      %1873 = vmatprep.mubr.bf16.mxu0 0
      %1874 = vmatmul.mubr.bf16.gmra.mrb[0].mxu0 %v1513
      %v1875 = vpop.f32.mrb[0].mxu0
      %v1876 = vadd.f32 0.0, %v1875
      %v1877 = vpop.f32.mrb[0].mxu0
      %v1878 = vpop.f32.mrb[0].mxu0
      %v1879 = vadd.f32 0.0, %v1878
      %v1880 = vpop.f32.mrb[0].mxu0
      %1881 = vmatprep.mubr.bf16.mxu0 0
      %1882 = vmatmul.mubr.bf16.gmra.mrb[0].mxu0 %v1530
      %v1883 = vpop.f32.mrb[0].mxu0
      %v1884 = vadd.f32 0.0, %v1883
      %v1885 = vpop.f32.mrb[0].mxu0
      %v1886 = vpop.f32.mrb[0].mxu0
      %v1887 = vadd.f32 0.0, %v1886
      %v1888 = vpop.f32.mrb[0].mxu0
      %1889 = vmatprep.mubr.bf16.mxu0 0
      %1890 = vmatmul.mubr.bf16.gmra.mrb[0].mxu0 %v1547
      %v1891 = vpop.f32.mrb[0].mxu0
      %v1892 = vadd.f32 0.0, %v1891
      %v1893 = vpop.f32.mrb[0].mxu0
      %v1894 = vpop.f32.mrb[0].mxu0
      %v1895 = vadd.f32 0.0, %v1894
      %v1896 = vpop.f32.mrb[0].mxu0
      %1897 = vmatprep.mubr.bf16.mxu0 0
      %1898 = vmatmul.mubr.bf16.gmra.mrb[0].mxu0 %v1564
      %v1899 = vpop.f32.mrb[0].mxu0
      %v1900 = vadd.f32 0.0, %v1899
      %v1901 = vpop.f32.mrb[0].mxu0
      %v1902 = vpop.f32.mrb[0].mxu0
      %v1903 = vadd.f32 0.0, %v1902
      %v1904 = vpop.f32.mrb[0].mxu0
      %1905 = vmatprep.mubr.bf16.mxu0 0
      %1906 = vmatmul.mubr.bf16.gmra.mrb[0].mxu0 %v1581
      %v1907 = vpop.f32.mrb[0].mxu0
      %v1908 = vadd.f32 0.0, %v1907
      %v1909 = vpop.f32.mrb[0].mxu0
      %v1910 = vpop.f32.mrb[0].mxu0
      %v1911 = vadd.f32 0.0, %v1910
      %v1912 = vpop.f32.mrb[0].mxu0
      %1913 = vmatprep.mubr.bf16.mxu0 0
      %1914 = vmatmul.mubr.bf16.gmra.mrb[0].mxu0 %v1598
      %v1915 = vpop.f32.mrb[0].mxu0
      %v1916 = vadd.f32 0.0, %v1915
      %v1917 = vpop.f32.mrb[0].mxu0
      %v1918 = vpop.f32.mrb[0].mxu0
      %v1919 = vadd.f32 0.0, %v1918
      %v1920 = vpop.f32.mrb[0].mxu0
      %1921 = vmatprep.mubr.bf16.mxu0 0
      %1922 = vmatmul.mubr.bf16.gmra.mrb[0].mxu0 %v1615
      %v1923 = vpop.f32.mrb[0].mxu0
      %v1924 = vadd.f32 0.0, %v1923
      %v1925 = vpop.f32.mrb[0].mxu0
      %v1926 = vpop.f32.mrb[0].mxu0
      %v1927 = vadd.f32 0.0, %v1926
      %v1928 = vpop.f32.mrb[0].mxu0
      %1929 = vmatprep.mubr.bf16.mxu0 0
      %1930 = vmatmul.mubr.bf16.gmra.mrb[0].mxu0 %v1632
      %v1931 = vpop.f32.mrb[0].mxu0
      %v1932 = vadd.f32 0.0, %v1931
      %v1933 = vpop.f32.mrb[0].mxu0
      %v1934 = vpop.f32.mrb[0].mxu0
      %v1935 = vadd.f32 0.0, %v1934
      %v1936 = vpop.f32.mrb[0].mxu0
      %1937 = vmatprep.mubr.bf16.mxu0 0
      %1938 = vmatmul.mubr.bf16.gmra.mrb[0].mxu0 %v1649
      %v1939 = vpop.f32.mrb[0].mxu0
      %v1940 = vadd.f32 0.0, %v1939
      %v1941 = vpop.f32.mrb[0].mxu0
      %v1942 = vpop.f32.mrb[0].mxu0
      %v1943 = vadd.f32 0.0, %v1942
      %v1944 = vpop.f32.mrb[0].mxu0
      %1945 = vmatprep.mubr.bf16.mxu0 0
      %1946 = vmatmul.mubr.bf16.gmra.mrb[0].mxu0 %v1666
      %v1947 = vpop.f32.mrb[0].mxu0
      %v1948 = vadd.f32 0.0, %v1947
      %v1949 = vpop.f32.mrb[0].mxu0
      %v1950 = vpop.f32.mrb[0].mxu0
      %v1951 = vadd.f32 0.0, %v1950
      %v1952 = vpop.f32.mrb[0].mxu0
      %1953 = vmatprep.mubr.bf16.mxu0 0
      %1954 = vmatmul.mubr.bf16.gmra.mrb[0].mxu0 %v1683
      %v1955 = vpop.f32.mrb[0].mxu0
      %v1956 = vadd.f32 0.0, %v1955
      %v1957 = vpop.f32.mrb[0].mxu0
      %v1958 = vpop.f32.mrb[0].mxu0
      %v1959 = vadd.f32 0.0, %v1958
      %v1960 = vpop.f32.mrb[0].mxu0
      %1961 = vmatprep.mubr.bf16.mxu0 0
      %1962 = vmatmul.mubr.bf16.gmra.mrb[0].mxu0 %v1700
      %v1963 = vpop.f32.mrb[0].mxu0
      %v1964 = vadd.f32 0.0, %v1963
      %v1965 = vpop.f32.mrb[0].mxu0
      %v1966 = vpop.f32.mrb[0].mxu0
      %v1967 = vadd.f32 0.0, %v1966
      %v1968 = vpop.f32.mrb[0].mxu0
      %1969 = vmatprep.mubr.bf16.mxu0 0
      %1970 = vmatmul.mubr.bf16.gmra.mrb[0].mxu0 %v1717
      %v1971 = vpop.f32.mrb[0].mxu0
      %v1972 = vadd.f32 0.0, %v1971
      %v1973 = vpop.f32.mrb[0].mxu0
      %v1974 = vpop.f32.mrb[0].mxu0
      %v1975 = vadd.f32 0.0, %v1974
      %v1976 = vpop.f32.mrb[0].mxu0
      %1977 = vmatprep.mubr.bf16.mxu0 0
      %1978 = vmatmul.mubr.bf16.gmra.mrb[0].mxu0 %v1734
      %v1979 = vpop.f32.mrb[0].mxu0
      %v1980 = vadd.f32 0.0, %v1979
      %v1981 = vpop.f32.mrb[0].mxu0
      %v1982 = vpop.f32.mrb[0].mxu0
      %v1983 = vadd.f32 0.0, %v1982
      %v1984 = vpop.f32.mrb[0].mxu0
      %1985 = vmatprep.mubr.bf16.mxu0 0
      %1986 = vmatmul.mubr.bf16.gmra.mrb[0].mxu0 %v1751
      %v1987 = vpop.f32.mrb[0].mxu0
      %v1988 = vadd.f32 0.0, %v1987
      %v1989 = vpop.f32.mrb[0].mxu0
      %v1990 = vpop.f32.mrb[0].mxu0
      %v1991 = vadd.f32 0.0, %v1990
      %v1992 = vpop.f32.mrb[0].mxu0
      %1993 = vdwg.mxu0
      %v1994 = vadd.f32 %v1337, %v1868
      %v1995 = vadd.f32 %v1340, %v1871
      %v1996 = vadd.f32 %v1345, %v1876
      %v1997 = vadd.f32 %v1348, %v1879
      %v1998 = vadd.f32 %v1353, %v1884
      %v1999 = vadd.f32 %v1356, %v1887
      %v2000 = vadd.f32 %v1361, %v1892
      %v2001 = vadd.f32 %v1364, %v1895
      %v2002 = vadd.f32 %v1369, %v1900
      %v2003 = vadd.f32 %v1372, %v1903
      %v2004 = vadd.f32 %v1377, %v1908
      %v2005 = vadd.f32 %v1380, %v1911
      %v2006 = vadd.f32 %v1385, %v1916
      %v2007 = vadd.f32 %v1388, %v1919
      %v2008 = vadd.f32 %v1393, %v1924
      %v2009 = vadd.f32 %v1396, %v1927
      %v2010 = vadd.f32 %v1401, %v1932
      %v2011 = vadd.f32 %v1404, %v1935
      %v2012 = vadd.f32 %v1409, %v1940
      %v2013 = vadd.f32 %v1412, %v1943
      %v2014 = vadd.f32 %v1417, %v1948
      %v2015 = vadd.f32 %v1420, %v1951
      %v2016 = vadd.f32 %v1425, %v1956
      %v2017 = vadd.f32 %v1428, %v1959
      %v2018 = vadd.f32 %v1433, %v1964
      %v2019 = vadd.f32 %v1436, %v1967
      %v2020 = vadd.f32 %v1441, %v1972
      %v2021 = vadd.f32 %v1444, %v1975
      %v2022 = vadd.f32 %v1449, %v1980
      %v2023 = vadd.f32 %v1452, %v1983
      %v2024 = vadd.f32 %v1457, %v1988
      %v2025 = vadd.f32 %v1460, %v1991
      %v2026 = vld [vmem:[%s465] sm:$0xf8]
      %v2027 = vld [vmem:[%s465 + $0x8] sm:$0xf]
      %v2028 = vld [vmem:[%s465 + $0x10] sm:$0xf8]
      %v2029 = vld [vmem:[%s465 + $0x18] sm:$0xf]
      %v2030 = vld [vmem:[%s465 + $0x20] sm:$0xf8]
      %v2031 = vld [vmem:[%s465 + $0x28] sm:$0xf]
      %v2032 = vld [vmem:[%s465 + $0x30] sm:$0xf8]
      %v2033 = vld [vmem:[%s465 + $0x38] sm:$0xf]
      %v2034 = vld [vmem:[%s465 + $0x40] sm:$0xf8]
      %v2035 = vld [vmem:[%s465 + $0x48] sm:$0xf]
      %v2036 = vld [vmem:[%s465 + $0x50] sm:$0xf8]
      %v2037 = vld [vmem:[%s465 + $0x58] sm:$0xf]
      %v2038 = vld [vmem:[%s465 + $0x60] sm:$0xf8]
      %v2039 = vld [vmem:[%s465 + $0x68] sm:$0xf]
      %v2040 = vld [vmem:[%s465 + $0x70] sm:$0xf8]
      %v2041 = vld [vmem:[%s465 + $0x78] sm:$0xf]
      %v2042 = vld [vmem:[%s465 + $0x80] sm:$0xf8]
      %v2043 = vld [vmem:[%s465 + $0x88] sm:$0xf]
      %v2044 = vld [vmem:[%s465 + $0x90] sm:$0xf8]
      %v2045 = vld [vmem:[%s465 + $0x98] sm:$0xf]
      %v2046 = vld [vmem:[%s465 + $0xa0] sm:$0xf8]
      %v2047 = vld [vmem:[%s465 + $0xa8] sm:$0xf]
      %v2048 = vld [vmem:[%s465 + $0xb0] sm:$0xf8]
      %v2049 = vld [vmem:[%s465 + $0xb8] sm:$0xf]
      %v2050 = vld [vmem:[%s465 + $0xc0] sm:$0xf8]
      %v2051 = vld [vmem:[%s465 + $0xc8] sm:$0xf]
      %v2052 = vld [vmem:[%s465 + $0xd0] sm:$0xf8]
      %v2053 = vld [vmem:[%s465 + $0xd8] sm:$0xf]
      %v2054 = vld [vmem:[%s465 + $0xe0] sm:$0xf8]
      %v2055 = vld [vmem:[%s465 + $0xe8] sm:$0xf]
      %v2056 = vld [vmem:[%s465 + $0xf0] sm:$0xf8]
      %v2057 = vld [vmem:[%s465 + $0xf8] sm:$0xf]
      %v2059 = vshrl.u32 %v2026, 16
      %v2061 = vrot.slane %v2059, 3
      %v2062 = vshll.u32 %v2026, 16
      %v2064 = vrot.slane %v2062, 4
      %v2065 = vor.u32 %v2061, %v2064
      %v2067 = vshrl.u32 %v2027, 16
      %v2069 = vrot.slane %v2067, 3
      %v2070 = vshll.u32 %v2027, 16
      %v2072 = vrot.slane %v2070, 4
      %v2073 = vor.u32 %v2069, %v2072
      %v2074 = vsel %vm610, %v2065, %v2073
      %v2076 = vshrl.u32 %v2028, 16
      %v2078 = vrot.slane %v2076, 3
      %v2079 = vshll.u32 %v2028, 16
      %v2081 = vrot.slane %v2079, 4
      %v2082 = vor.u32 %v2078, %v2081
      %v2084 = vshrl.u32 %v2029, 16
      %v2086 = vrot.slane %v2084, 3
      %v2087 = vshll.u32 %v2029, 16
      %v2089 = vrot.slane %v2087, 4
      %v2090 = vor.u32 %v2086, %v2089
      %v2091 = vsel %vm610, %v2082, %v2090
      %v2093 = vshrl.u32 %v2030, 16
      %v2095 = vrot.slane %v2093, 3
      %v2096 = vshll.u32 %v2030, 16
      %v2098 = vrot.slane %v2096, 4
      %v2099 = vor.u32 %v2095, %v2098
      %v2101 = vshrl.u32 %v2031, 16
      %v2103 = vrot.slane %v2101, 3
      %v2104 = vshll.u32 %v2031, 16
      %v2106 = vrot.slane %v2104, 4
      %v2107 = vor.u32 %v2103, %v2106
      %v2108 = vsel %vm610, %v2099, %v2107
      %v2110 = vshrl.u32 %v2032, 16
      %v2112 = vrot.slane %v2110, 3
      %v2113 = vshll.u32 %v2032, 16
      %v2115 = vrot.slane %v2113, 4
      %v2116 = vor.u32 %v2112, %v2115
      %v2118 = vshrl.u32 %v2033, 16
      %v2120 = vrot.slane %v2118, 3
      %v2121 = vshll.u32 %v2033, 16
      %v2123 = vrot.slane %v2121, 4
      %v2124 = vor.u32 %v2120, %v2123
      %v2125 = vsel %vm610, %v2116, %v2124
      %v2127 = vshrl.u32 %v2034, 16
      %v2129 = vrot.slane %v2127, 3
      %v2130 = vshll.u32 %v2034, 16
      %v2132 = vrot.slane %v2130, 4
      %v2133 = vor.u32 %v2129, %v2132
      %v2135 = vshrl.u32 %v2035, 16
      %v2137 = vrot.slane %v2135, 3
      %v2138 = vshll.u32 %v2035, 16
      %v2140 = vrot.slane %v2138, 4
      %v2141 = vor.u32 %v2137, %v2140
      %v2142 = vsel %vm610, %v2133, %v2141
      %v2144 = vshrl.u32 %v2036, 16
      %v2146 = vrot.slane %v2144, 3
      %v2147 = vshll.u32 %v2036, 16
      %v2149 = vrot.slane %v2147, 4
      %v2150 = vor.u32 %v2146, %v2149
      %v2152 = vshrl.u32 %v2037, 16
      %v2154 = vrot.slane %v2152, 3
      %v2155 = vshll.u32 %v2037, 16
      %v2157 = vrot.slane %v2155, 4
      %v2158 = vor.u32 %v2154, %v2157
      %v2159 = vsel %vm610, %v2150, %v2158
      %v2161 = vshrl.u32 %v2038, 16
      %v2163 = vrot.slane %v2161, 3
      %v2164 = vshll.u32 %v2038, 16
      %v2166 = vrot.slane %v2164, 4
      %v2167 = vor.u32 %v2163, %v2166
      %v2169 = vshrl.u32 %v2039, 16
      %v2171 = vrot.slane %v2169, 3
      %v2172 = vshll.u32 %v2039, 16
      %v2174 = vrot.slane %v2172, 4
      %v2175 = vor.u32 %v2171, %v2174
      %v2176 = vsel %vm610, %v2167, %v2175
      %v2178 = vshrl.u32 %v2040, 16
      %v2180 = vrot.slane %v2178, 3
      %v2181 = vshll.u32 %v2040, 16
      %v2183 = vrot.slane %v2181, 4
      %v2184 = vor.u32 %v2180, %v2183
      %v2186 = vshrl.u32 %v2041, 16
      %v2188 = vrot.slane %v2186, 3
      %v2189 = vshll.u32 %v2041, 16
      %v2191 = vrot.slane %v2189, 4
      %v2192 = vor.u32 %v2188, %v2191
      %v2193 = vsel %vm610, %v2184, %v2192
      %v2195 = vshrl.u32 %v2042, 16
      %v2197 = vrot.slane %v2195, 3
      %v2198 = vshll.u32 %v2042, 16
      %v2200 = vrot.slane %v2198, 4
      %v2201 = vor.u32 %v2197, %v2200
      %v2203 = vshrl.u32 %v2043, 16
      %v2205 = vrot.slane %v2203, 3
      %v2206 = vshll.u32 %v2043, 16
      %v2208 = vrot.slane %v2206, 4
      %v2209 = vor.u32 %v2205, %v2208
      %v2210 = vsel %vm610, %v2201, %v2209
      %v2212 = vshrl.u32 %v2044, 16
      %v2214 = vrot.slane %v2212, 3
      %v2215 = vshll.u32 %v2044, 16
      %v2217 = vrot.slane %v2215, 4
      %v2218 = vor.u32 %v2214, %v2217
      %v2220 = vshrl.u32 %v2045, 16
      %v2222 = vrot.slane %v2220, 3
      %v2223 = vshll.u32 %v2045, 16
      %v2225 = vrot.slane %v2223, 4
      %v2226 = vor.u32 %v2222, %v2225
      %v2227 = vsel %vm610, %v2218, %v2226
      %v2229 = vshrl.u32 %v2046, 16
      %v2231 = vrot.slane %v2229, 3
      %v2232 = vshll.u32 %v2046, 16
      %v2234 = vrot.slane %v2232, 4
      %v2235 = vor.u32 %v2231, %v2234
      %v2237 = vshrl.u32 %v2047, 16
      %v2239 = vrot.slane %v2237, 3
      %v2240 = vshll.u32 %v2047, 16
      %v2242 = vrot.slane %v2240, 4
      %v2243 = vor.u32 %v2239, %v2242
      %v2244 = vsel %vm610, %v2235, %v2243
      %v2246 = vshrl.u32 %v2048, 16
      %v2248 = vrot.slane %v2246, 3
      %v2249 = vshll.u32 %v2048, 16
      %v2251 = vrot.slane %v2249, 4
      %v2252 = vor.u32 %v2248, %v2251
      %v2254 = vshrl.u32 %v2049, 16
      %v2256 = vrot.slane %v2254, 3
      %v2257 = vshll.u32 %v2049, 16
      %v2259 = vrot.slane %v2257, 4
      %v2260 = vor.u32 %v2256, %v2259
      %v2261 = vsel %vm610, %v2252, %v2260
      %v2263 = vshrl.u32 %v2050, 16
      %v2265 = vrot.slane %v2263, 3
      %v2266 = vshll.u32 %v2050, 16
      %v2268 = vrot.slane %v2266, 4
      %v2269 = vor.u32 %v2265, %v2268
      %v2271 = vshrl.u32 %v2051, 16
      %v2273 = vrot.slane %v2271, 3
      %v2274 = vshll.u32 %v2051, 16
      %v2276 = vrot.slane %v2274, 4
      %v2277 = vor.u32 %v2273, %v2276
      %v2278 = vsel %vm610, %v2269, %v2277
      %v2280 = vshrl.u32 %v2052, 16
      %v2282 = vrot.slane %v2280, 3
      %v2283 = vshll.u32 %v2052, 16
      %v2285 = vrot.slane %v2283, 4
      %v2286 = vor.u32 %v2282, %v2285
      %v2288 = vshrl.u32 %v2053, 16
      %v2290 = vrot.slane %v2288, 3
      %v2291 = vshll.u32 %v2053, 16
      %v2293 = vrot.slane %v2291, 4
      %v2294 = vor.u32 %v2290, %v2293
      %v2295 = vsel %vm610, %v2286, %v2294
      %v2297 = vshrl.u32 %v2054, 16
      %v2299 = vrot.slane %v2297, 3
      %v2300 = vshll.u32 %v2054, 16
      %v2302 = vrot.slane %v2300, 4
      %v2303 = vor.u32 %v2299, %v2302
      %v2305 = vshrl.u32 %v2055, 16
      %v2307 = vrot.slane %v2305, 3
      %v2308 = vshll.u32 %v2055, 16
      %v2310 = vrot.slane %v2308, 4
      %v2311 = vor.u32 %v2307, %v2310
      %v2312 = vsel %vm610, %v2303, %v2311
      %v2314 = vshrl.u32 %v2056, 16
      %v2316 = vrot.slane %v2314, 3
      %v2317 = vshll.u32 %v2056, 16
      %v2319 = vrot.slane %v2317, 4
      %v2320 = vor.u32 %v2316, %v2319
      %v2322 = vshrl.u32 %v2057, 16
      %v2324 = vrot.slane %v2322, 3
      %v2325 = vshll.u32 %v2057, 16
      %v2327 = vrot.slane %v2325, 4
      %v2328 = vor.u32 %v2324, %v2327
      %v2329 = vsel %vm610, %v2320, %v2328
      %s2346 = scalar_lea.vmem %s3, 192
      %v2347 = vld [vmem:[%s2346] sm:$0xf]
      %v2348 = vld [vmem:[%s2346 + $0x4] sm:$0xf]
      %v2349 = vld [vmem:[%s2346 + $0x8] sm:$0xf]
      %v2350 = vld [vmem:[%s2346 + $0xc] sm:$0xf]
      %v2351 = vld [vmem:[%s2346 + $0x10] sm:$0xf]
      %v2352 = vld [vmem:[%s2346 + $0x14] sm:$0xf]
      %v2353 = vld [vmem:[%s2346 + $0x18] sm:$0xf]
      %v2354 = vld [vmem:[%s2346 + $0x1c] sm:$0xf]
      %v2355 = vld [vmem:[%s2346 + $0x20] sm:$0xf]
      %v2356 = vld [vmem:[%s2346 + $0x24] sm:$0xf]
      %v2357 = vld [vmem:[%s2346 + $0x28] sm:$0xf]
      %v2358 = vld [vmem:[%s2346 + $0x2c] sm:$0xf]
      %v2359 = vld [vmem:[%s2346 + $0x30] sm:$0xf]
      %v2360 = vld [vmem:[%s2346 + $0x34] sm:$0xf]
      %v2361 = vld [vmem:[%s2346 + $0x38] sm:$0xf]
      %v2362 = vld [vmem:[%s2346 + $0x3c] sm:$0xf]
      %v2379 = vunpack.c.l.b16 %v2347
      %v2380 = vunpack.c.l.b16 %v2348
      %v2381 = vunpack.c.l.b16 %v2349
      %v2382 = vunpack.c.l.b16 %v2350
      %v2383 = vunpack.c.l.b16 %v2351
      %v2384 = vunpack.c.l.b16 %v2352
      %v2385 = vunpack.c.l.b16 %v2353
      %v2386 = vunpack.c.l.b16 %v2354
      %v2387 = vunpack.c.l.b16 %v2355
      %v2388 = vunpack.c.l.b16 %v2356
      %v2389 = vunpack.c.l.b16 %v2357
      %v2390 = vunpack.c.l.b16 %v2358
      %v2391 = vunpack.c.l.b16 %v2359
      %v2392 = vunpack.c.l.b16 %v2360
      %v2393 = vunpack.c.l.b16 %v2361
      %v2394 = vunpack.c.l.b16 %v2362
      %v2395 = vpack.c.b16 %v2380, %v2379
      %v2396 = vpack.c.b16 %v2382, %v2381
      %v2397 = vpack.c.b16 %v2384, %v2383
      %v2398 = vpack.c.b16 %v2386, %v2385
      %v2399 = vpack.c.b16 %v2388, %v2387
      %v2400 = vpack.c.b16 %v2390, %v2389
      %v2401 = vpack.c.b16 %v2392, %v2391
      %v2402 = vpack.c.b16 %v2394, %v2393
      %2411 = vmatprep.subr.bf16.mxu0 0
      %2412 = vmatpush1.bf16.msra.mxu0 %v2395
      %2413 = vmatprep.subr.bf16.mxu0 0
      %2414 = vmatpush1.bf16.msra.mxu0 %v2396
      %2415 = vmatprep.subr.bf16.mxu0 0
      %2416 = vmatpush1.bf16.msra.mxu0 %v2397
      %2417 = vmatprep.subr.bf16.mxu0 0
      %2418 = vmatpush1.bf16.msra.mxu0 %v2398
      %2419 = vmatprep.subr.bf16.mxu0 0
      %2420 = vmatpush1.bf16.msra.mxu0 %v2399
      %2421 = vmatprep.subr.bf16.mxu0 0
      %2422 = vmatpush1.bf16.msra.mxu0 %v2400
      %2423 = vmatprep.subr.bf16.mxu0 0
      %2424 = vmatpush1.bf16.msra.mxu0 %v2401
      %2425 = vmatprep.subr.bf16.mxu0 0
      %2426 = vmatpush1.bf16.msra.mxu0 %v2402
      %2427 = vmatprep.subr.bf16.mxu0 0
      %2428 = vmatpush1.bf16.msra.mxu0 0
      %2429 = vmatprep.subr.bf16.mxu0 0
      %2430 = vmatpush1.bf16.msra.mxu0 0
      %2431 = vmatprep.subr.bf16.mxu0 0
      %2432 = vmatpush1.bf16.msra.mxu0 0
      %2433 = vmatprep.subr.bf16.mxu0 0
      %2434 = vmatpush1.bf16.msra.mxu0 0
      %2435 = vmatprep.subr.bf16.mxu0 0
      %2436 = vmatpush1.bf16.msra.mxu0 0
      %2437 = vmatprep.subr.bf16.mxu0 0
      %2438 = vmatpush1.bf16.msra.mxu0 0
      %2439 = vmatprep.subr.bf16.mxu0 0
      %2440 = vmatpush1.bf16.msra.mxu0 0
      %2441 = vmatprep.subr.bf16.mxu0 0
      %2442 = vmatpush1.bf16.msra.mxu0 0
      %2443 = vmatprep.mubr.bf16.mxu0 0
      %2444 = vmatmul.mubr.bf16.gmra.mrb[0].mxu0 %v2074
      %v2445 = vpop.f32.mrb[0].mxu0
      %v2446 = vadd.f32 0.0, %v2445
      %v2447 = vpop.f32.mrb[0].mxu0
      %v2448 = vpop.f32.mrb[0].mxu0
      %v2449 = vadd.f32 0.0, %v2448
      %v2450 = vpop.f32.mrb[0].mxu0
      %2451 = vmatprep.mubr.bf16.mxu0 0
      %2452 = vmatmul.mubr.bf16.gmra.mrb[0].mxu0 %v2091
      %v2453 = vpop.f32.mrb[0].mxu0
      %v2454 = vadd.f32 0.0, %v2453
      %v2455 = vpop.f32.mrb[0].mxu0
      %v2456 = vpop.f32.mrb[0].mxu0
      %v2457 = vadd.f32 0.0, %v2456
      %v2458 = vpop.f32.mrb[0].mxu0
      %2459 = vmatprep.mubr.bf16.mxu0 0
      %2460 = vmatmul.mubr.bf16.gmra.mrb[0].mxu0 %v2108
      %v2461 = vpop.f32.mrb[0].mxu0
      %v2462 = vadd.f32 0.0, %v2461
      %v2463 = vpop.f32.mrb[0].mxu0
      %v2464 = vpop.f32.mrb[0].mxu0
      %v2465 = vadd.f32 0.0, %v2464
      %v2466 = vpop.f32.mrb[0].mxu0
      %2467 = vmatprep.mubr.bf16.mxu0 0
      %2468 = vmatmul.mubr.bf16.gmra.mrb[0].mxu0 %v2125
      %v2469 = vpop.f32.mrb[0].mxu0
      %v2470 = vadd.f32 0.0, %v2469
      %v2471 = vpop.f32.mrb[0].mxu0
      %v2472 = vpop.f32.mrb[0].mxu0
      %v2473 = vadd.f32 0.0, %v2472
      %v2474 = vpop.f32.mrb[0].mxu0
      %2475 = vmatprep.mubr.bf16.mxu0 0
      %2476 = vmatmul.mubr.bf16.gmra.mrb[0].mxu0 %v2142
      %v2477 = vpop.f32.mrb[0].mxu0
      %v2478 = vadd.f32 0.0, %v2477
      %v2479 = vpop.f32.mrb[0].mxu0
      %v2480 = vpop.f32.mrb[0].mxu0
      %v2481 = vadd.f32 0.0, %v2480
      %v2482 = vpop.f32.mrb[0].mxu0
      %2483 = vmatprep.mubr.bf16.mxu0 0
      %2484 = vmatmul.mubr.bf16.gmra.mrb[0].mxu0 %v2159
      %v2485 = vpop.f32.mrb[0].mxu0
      %v2486 = vadd.f32 0.0, %v2485
      %v2487 = vpop.f32.mrb[0].mxu0
      %v2488 = vpop.f32.mrb[0].mxu0
      %v2489 = vadd.f32 0.0, %v2488
      %v2490 = vpop.f32.mrb[0].mxu0
      %2491 = vmatprep.mubr.bf16.mxu0 0
      %2492 = vmatmul.mubr.bf16.gmra.mrb[0].mxu0 %v2176
      %v2493 = vpop.f32.mrb[0].mxu0
      %v2494 = vadd.f32 0.0, %v2493
      %v2495 = vpop.f32.mrb[0].mxu0
      %v2496 = vpop.f32.mrb[0].mxu0
      %v2497 = vadd.f32 0.0, %v2496
      %v2498 = vpop.f32.mrb[0].mxu0
      %2499 = vmatprep.mubr.bf16.mxu0 0
      %2500 = vmatmul.mubr.bf16.gmra.mrb[0].mxu0 %v2193
      %v2501 = vpop.f32.mrb[0].mxu0
      %v2502 = vadd.f32 0.0, %v2501
      %v2503 = vpop.f32.mrb[0].mxu0
      %v2504 = vpop.f32.mrb[0].mxu0
      %v2505 = vadd.f32 0.0, %v2504
      %v2506 = vpop.f32.mrb[0].mxu0
      %2507 = vmatprep.mubr.bf16.mxu0 0
      %2508 = vmatmul.mubr.bf16.gmra.mrb[0].mxu0 %v2210
      %v2509 = vpop.f32.mrb[0].mxu0
      %v2510 = vadd.f32 0.0, %v2509
      %v2511 = vpop.f32.mrb[0].mxu0
      %v2512 = vpop.f32.mrb[0].mxu0
      %v2513 = vadd.f32 0.0, %v2512
      %v2514 = vpop.f32.mrb[0].mxu0
      %2515 = vmatprep.mubr.bf16.mxu0 0
      %2516 = vmatmul.mubr.bf16.gmra.mrb[0].mxu0 %v2227
      %v2517 = vpop.f32.mrb[0].mxu0
      %v2518 = vadd.f32 0.0, %v2517
      %v2519 = vpop.f32.mrb[0].mxu0
      %v2520 = vpop.f32.mrb[0].mxu0
      %v2521 = vadd.f32 0.0, %v2520
      %v2522 = vpop.f32.mrb[0].mxu0
      %2523 = vmatprep.mubr.bf16.mxu0 0
      %2524 = vmatmul.mubr.bf16.gmra.mrb[0].mxu0 %v2244
      %v2525 = vpop.f32.mrb[0].mxu0
      %v2526 = vadd.f32 0.0, %v2525
      %v2527 = vpop.f32.mrb[0].mxu0
      %v2528 = vpop.f32.mrb[0].mxu0
      %v2529 = vadd.f32 0.0, %v2528
      %v2530 = vpop.f32.mrb[0].mxu0
      %2531 = vmatprep.mubr.bf16.mxu0 0
      %2532 = vmatmul.mubr.bf16.gmra.mrb[0].mxu0 %v2261
      %v2533 = vpop.f32.mrb[0].mxu0
      %v2534 = vadd.f32 0.0, %v2533
      %v2535 = vpop.f32.mrb[0].mxu0
      %v2536 = vpop.f32.mrb[0].mxu0
      %v2537 = vadd.f32 0.0, %v2536
      %v2538 = vpop.f32.mrb[0].mxu0
      %2539 = vmatprep.mubr.bf16.mxu0 0
      %2540 = vmatmul.mubr.bf16.gmra.mrb[0].mxu0 %v2278
      %v2541 = vpop.f32.mrb[0].mxu0
      %v2542 = vadd.f32 0.0, %v2541
      %v2543 = vpop.f32.mrb[0].mxu0
      %v2544 = vpop.f32.mrb[0].mxu0
      %v2545 = vadd.f32 0.0, %v2544
      %v2546 = vpop.f32.mrb[0].mxu0
      %2547 = vmatprep.mubr.bf16.mxu0 0
      %2548 = vmatmul.mubr.bf16.gmra.mrb[0].mxu0 %v2295
      %v2549 = vpop.f32.mrb[0].mxu0
      %v2550 = vadd.f32 0.0, %v2549
      %v2551 = vpop.f32.mrb[0].mxu0
      %v2552 = vpop.f32.mrb[0].mxu0
      %v2553 = vadd.f32 0.0, %v2552
      %v2554 = vpop.f32.mrb[0].mxu0
      %2555 = vmatprep.mubr.bf16.mxu0 0
      %2556 = vmatmul.mubr.bf16.gmra.mrb[0].mxu0 %v2312
      %v2557 = vpop.f32.mrb[0].mxu0
      %v2558 = vadd.f32 0.0, %v2557
      %v2559 = vpop.f32.mrb[0].mxu0
      %v2560 = vpop.f32.mrb[0].mxu0
      %v2561 = vadd.f32 0.0, %v2560
      %v2562 = vpop.f32.mrb[0].mxu0
      %2563 = vmatprep.mubr.bf16.mxu0 0
      %2564 = vmatmul.mubr.bf16.gmra.mrb[0].mxu0 %v2329
      %v2565 = vpop.f32.mrb[0].mxu0
      %v2566 = vadd.f32 0.0, %v2565
      %v2567 = vpop.f32.mrb[0].mxu0
      %v2568 = vpop.f32.mrb[0].mxu0
      %v2569 = vadd.f32 0.0, %v2568
      %v2570 = vpop.f32.mrb[0].mxu0
      %2571 = vdwg.mxu0
      %v2572 = vadd.f32 %v1994, %v2446
      %v2573 = vadd.f32 %v1995, %v2449
      %v2574 = vadd.f32 %v1996, %v2454
      %v2575 = vadd.f32 %v1997, %v2457
      %v2576 = vadd.f32 %v1998, %v2462
      %v2577 = vadd.f32 %v1999, %v2465
      %v2578 = vadd.f32 %v2000, %v2470
      %v2579 = vadd.f32 %v2001, %v2473
      %v2580 = vadd.f32 %v2002, %v2478
      %v2581 = vadd.f32 %v2003, %v2481
      %v2582 = vadd.f32 %v2004, %v2486
      %v2583 = vadd.f32 %v2005, %v2489
      %v2584 = vadd.f32 %v2006, %v2494
      %v2585 = vadd.f32 %v2007, %v2497
      %v2586 = vadd.f32 %v2008, %v2502
      %v2587 = vadd.f32 %v2009, %v2505
      %v2588 = vadd.f32 %v2010, %v2510
      %v2589 = vadd.f32 %v2011, %v2513
      %v2590 = vadd.f32 %v2012, %v2518
      %v2591 = vadd.f32 %v2013, %v2521
      %v2592 = vadd.f32 %v2014, %v2526
      %v2593 = vadd.f32 %v2015, %v2529
      %v2594 = vadd.f32 %v2016, %v2534
      %v2595 = vadd.f32 %v2017, %v2537
      %v2596 = vadd.f32 %v2018, %v2542
      %v2597 = vadd.f32 %v2019, %v2545
      %v2598 = vadd.f32 %v2020, %v2550
      %v2599 = vadd.f32 %v2021, %v2553
      %v2600 = vadd.f32 %v2022, %v2558
      %v2601 = vadd.f32 %v2023, %v2561
      %v2602 = vadd.f32 %v2024, %v2566
      %v2603 = vadd.f32 %v2025, %v2569
      %v2604 = vld [vmem:[%s465] sm:$0xf0]
      %v2605 = vld [vmem:[%s465 + $0x10] sm:$0xf0]
      %v2606 = vld [vmem:[%s465 + $0x20] sm:$0xf0]
      %v2607 = vld [vmem:[%s465 + $0x30] sm:$0xf0]
      %v2608 = vld [vmem:[%s465 + $0x40] sm:$0xf0]
      %v2609 = vld [vmem:[%s465 + $0x50] sm:$0xf0]
      %v2610 = vld [vmem:[%s465 + $0x60] sm:$0xf0]
      %v2611 = vld [vmem:[%s465 + $0x70] sm:$0xf0]
      %v2612 = vld [vmem:[%s465 + $0x80] sm:$0xf0]
      %v2613 = vld [vmem:[%s465 + $0x90] sm:$0xf0]
      %v2614 = vld [vmem:[%s465 + $0xa0] sm:$0xf0]
      %v2615 = vld [vmem:[%s465 + $0xb0] sm:$0xf0]
      %v2616 = vld [vmem:[%s465 + $0xc0] sm:$0xf0]
      %v2617 = vld [vmem:[%s465 + $0xd0] sm:$0xf0]
      %v2618 = vld [vmem:[%s465 + $0xe0] sm:$0xf0]
      %v2619 = vld [vmem:[%s465 + $0xf0] sm:$0xf0]
      %v2652 = vrot.slane %v2604, 4
      %v2653 = vrot.slane %v2027, 4
      %v2654 = vsel %vm963, %v2652, %v2653
      %v2655 = vrot.slane %v2605, 4
      %v2656 = vrot.slane %v2029, 4
      %v2657 = vsel %vm963, %v2655, %v2656
      %v2658 = vrot.slane %v2606, 4
      %v2659 = vrot.slane %v2031, 4
      %v2660 = vsel %vm963, %v2658, %v2659
      %v2661 = vrot.slane %v2607, 4
      %v2662 = vrot.slane %v2033, 4
      %v2663 = vsel %vm963, %v2661, %v2662
      %v2664 = vrot.slane %v2608, 4
      %v2665 = vrot.slane %v2035, 4
      %v2666 = vsel %vm963, %v2664, %v2665
      %v2667 = vrot.slane %v2609, 4
      %v2668 = vrot.slane %v2037, 4
      %v2669 = vsel %vm963, %v2667, %v2668
      %v2670 = vrot.slane %v2610, 4
      %v2671 = vrot.slane %v2039, 4
      %v2672 = vsel %vm963, %v2670, %v2671
      %v2673 = vrot.slane %v2611, 4
      %v2674 = vrot.slane %v2041, 4
      %v2675 = vsel %vm963, %v2673, %v2674
      %v2676 = vrot.slane %v2612, 4
      %v2677 = vrot.slane %v2043, 4
      %v2678 = vsel %vm963, %v2676, %v2677
      %v2679 = vrot.slane %v2613, 4
      %v2680 = vrot.slane %v2045, 4
      %v2681 = vsel %vm963, %v2679, %v2680
      %v2682 = vrot.slane %v2614, 4
      %v2683 = vrot.slane %v2047, 4
      %v2684 = vsel %vm963, %v2682, %v2683
      %v2685 = vrot.slane %v2615, 4
      %v2686 = vrot.slane %v2049, 4
      %v2687 = vsel %vm963, %v2685, %v2686
      %v2688 = vrot.slane %v2616, 4
      %v2689 = vrot.slane %v2051, 4
      %v2690 = vsel %vm963, %v2688, %v2689
      %v2691 = vrot.slane %v2617, 4
      %v2692 = vrot.slane %v2053, 4
      %v2693 = vsel %vm963, %v2691, %v2692
      %v2694 = vrot.slane %v2618, 4
      %v2695 = vrot.slane %v2055, 4
      %v2696 = vsel %vm963, %v2694, %v2695
      %v2697 = vrot.slane %v2619, 4
      %v2698 = vrot.slane %v2057, 4
      %v2699 = vsel %vm963, %v2697, %v2698
      %s2716 = scalar_lea.vmem %s3, 256
      %v2717 = vld [vmem:[%s2716] sm:$0xf]
      %v2718 = vld [vmem:[%s2716 + $0x4] sm:$0xf]
      %v2719 = vld [vmem:[%s2716 + $0x8] sm:$0xf]
      %v2720 = vld [vmem:[%s2716 + $0xc] sm:$0xf]
      %v2721 = vld [vmem:[%s2716 + $0x10] sm:$0xf]
      %v2722 = vld [vmem:[%s2716 + $0x14] sm:$0xf]
      %v2723 = vld [vmem:[%s2716 + $0x18] sm:$0xf]
      %v2724 = vld [vmem:[%s2716 + $0x1c] sm:$0xf]
      %v2725 = vld [vmem:[%s2716 + $0x20] sm:$0xf]
      %v2726 = vld [vmem:[%s2716 + $0x24] sm:$0xf]
      %v2727 = vld [vmem:[%s2716 + $0x28] sm:$0xf]
      %v2728 = vld [vmem:[%s2716 + $0x2c] sm:$0xf]
      %v2729 = vld [vmem:[%s2716 + $0x30] sm:$0xf]
      %v2730 = vld [vmem:[%s2716 + $0x34] sm:$0xf]
      %v2731 = vld [vmem:[%s2716 + $0x38] sm:$0xf]
      %v2732 = vld [vmem:[%s2716 + $0x3c] sm:$0xf]
      %v2749 = vunpack.c.l.b16 %v2717
      %v2750 = vunpack.c.l.b16 %v2718
      %v2751 = vunpack.c.l.b16 %v2719
      %v2752 = vunpack.c.l.b16 %v2720
      %v2753 = vunpack.c.l.b16 %v2721
      %v2754 = vunpack.c.l.b16 %v2722
      %v2755 = vunpack.c.l.b16 %v2723
      %v2756 = vunpack.c.l.b16 %v2724
      %v2757 = vunpack.c.l.b16 %v2725
      %v2758 = vunpack.c.l.b16 %v2726
      %v2759 = vunpack.c.l.b16 %v2727
      %v2760 = vunpack.c.l.b16 %v2728
      %v2761 = vunpack.c.l.b16 %v2729
      %v2762 = vunpack.c.l.b16 %v2730
      %v2763 = vunpack.c.l.b16 %v2731
      %v2764 = vunpack.c.l.b16 %v2732
      %v2765 = vpack.c.b16 %v2750, %v2749
      %v2766 = vpack.c.b16 %v2752, %v2751
      %v2767 = vpack.c.b16 %v2754, %v2753
      %v2768 = vpack.c.b16 %v2756, %v2755
      %v2769 = vpack.c.b16 %v2758, %v2757
      %v2770 = vpack.c.b16 %v2760, %v2759
      %v2771 = vpack.c.b16 %v2762, %v2761
      %v2772 = vpack.c.b16 %v2764, %v2763
      %2781 = vmatprep.subr.bf16.mxu0 0
      %2782 = vmatpush1.bf16.msra.mxu0 %v2765
      %2783 = vmatprep.subr.bf16.mxu0 0
      %2784 = vmatpush1.bf16.msra.mxu0 %v2766
      %2785 = vmatprep.subr.bf16.mxu0 0
      %2786 = vmatpush1.bf16.msra.mxu0 %v2767
      %2787 = vmatprep.subr.bf16.mxu0 0
      %2788 = vmatpush1.bf16.msra.mxu0 %v2768
      %2789 = vmatprep.subr.bf16.mxu0 0
      %2790 = vmatpush1.bf16.msra.mxu0 %v2769
      %2791 = vmatprep.subr.bf16.mxu0 0
      %2792 = vmatpush1.bf16.msra.mxu0 %v2770
      %2793 = vmatprep.subr.bf16.mxu0 0
      %2794 = vmatpush1.bf16.msra.mxu0 %v2771
      %2795 = vmatprep.subr.bf16.mxu0 0
      %2796 = vmatpush1.bf16.msra.mxu0 %v2772
      %2797 = vmatprep.subr.bf16.mxu0 0
      %2798 = vmatpush1.bf16.msra.mxu0 0
      %2799 = vmatprep.subr.bf16.mxu0 0
      %2800 = vmatpush1.bf16.msra.mxu0 0
      %2801 = vmatprep.subr.bf16.mxu0 0
      %2802 = vmatpush1.bf16.msra.mxu0 0
      %2803 = vmatprep.subr.bf16.mxu0 0
      %2804 = vmatpush1.bf16.msra.mxu0 0
      %2805 = vmatprep.subr.bf16.mxu0 0
      %2806 = vmatpush1.bf16.msra.mxu0 0
      %2807 = vmatprep.subr.bf16.mxu0 0
      %2808 = vmatpush1.bf16.msra.mxu0 0
      %2809 = vmatprep.subr.bf16.mxu0 0
      %2810 = vmatpush1.bf16.msra.mxu0 0
      %2811 = vmatprep.subr.bf16.mxu0 0
      %2812 = vmatpush1.bf16.msra.mxu0 0
      %2813 = vmatprep.mubr.bf16.mxu0 0
      %2814 = vmatmul.mubr.bf16.gmra.mrb[0].mxu0 %v2654
      %v2815 = vpop.f32.mrb[0].mxu0
      %v2816 = vadd.f32 0.0, %v2815
      %v2817 = vpop.f32.mrb[0].mxu0
      %v2818 = vpop.f32.mrb[0].mxu0
      %v2819 = vadd.f32 0.0, %v2818
      %v2820 = vpop.f32.mrb[0].mxu0
      %2821 = vmatprep.mubr.bf16.mxu0 0
      %2822 = vmatmul.mubr.bf16.gmra.mrb[0].mxu0 %v2657
      %v2823 = vpop.f32.mrb[0].mxu0
      %v2824 = vadd.f32 0.0, %v2823
      %v2825 = vpop.f32.mrb[0].mxu0
      %v2826 = vpop.f32.mrb[0].mxu0
      %v2827 = vadd.f32 0.0, %v2826
      %v2828 = vpop.f32.mrb[0].mxu0
      %2829 = vmatprep.mubr.bf16.mxu0 0
      %2830 = vmatmul.mubr.bf16.gmra.mrb[0].mxu0 %v2660
      %v2831 = vpop.f32.mrb[0].mxu0
      %v2832 = vadd.f32 0.0, %v2831
      %v2833 = vpop.f32.mrb[0].mxu0
      %v2834 = vpop.f32.mrb[0].mxu0
      %v2835 = vadd.f32 0.0, %v2834
      %v2836 = vpop.f32.mrb[0].mxu0
      %2837 = vmatprep.mubr.bf16.mxu0 0
      %2838 = vmatmul.mubr.bf16.gmra.mrb[0].mxu0 %v2663
      %v2839 = vpop.f32.mrb[0].mxu0
      %v2840 = vadd.f32 0.0, %v2839
      %v2841 = vpop.f32.mrb[0].mxu0
      %v2842 = vpop.f32.mrb[0].mxu0
      %v2843 = vadd.f32 0.0, %v2842
      %v2844 = vpop.f32.mrb[0].mxu0
      %2845 = vmatprep.mubr.bf16.mxu0 0
      %2846 = vmatmul.mubr.bf16.gmra.mrb[0].mxu0 %v2666
      %v2847 = vpop.f32.mrb[0].mxu0
      %v2848 = vadd.f32 0.0, %v2847
      %v2849 = vpop.f32.mrb[0].mxu0
      %v2850 = vpop.f32.mrb[0].mxu0
      %v2851 = vadd.f32 0.0, %v2850
      %v2852 = vpop.f32.mrb[0].mxu0
      %2853 = vmatprep.mubr.bf16.mxu0 0
      %2854 = vmatmul.mubr.bf16.gmra.mrb[0].mxu0 %v2669
      %v2855 = vpop.f32.mrb[0].mxu0
      %v2856 = vadd.f32 0.0, %v2855
      %v2857 = vpop.f32.mrb[0].mxu0
      %v2858 = vpop.f32.mrb[0].mxu0
      %v2859 = vadd.f32 0.0, %v2858
      %v2860 = vpop.f32.mrb[0].mxu0
      %2861 = vmatprep.mubr.bf16.mxu0 0
      %2862 = vmatmul.mubr.bf16.gmra.mrb[0].mxu0 %v2672
      %v2863 = vpop.f32.mrb[0].mxu0
      %v2864 = vadd.f32 0.0, %v2863
      %v2865 = vpop.f32.mrb[0].mxu0
      %v2866 = vpop.f32.mrb[0].mxu0
      %v2867 = vadd.f32 0.0, %v2866
      %v2868 = vpop.f32.mrb[0].mxu0
      %2869 = vmatprep.mubr.bf16.mxu0 0
      %2870 = vmatmul.mubr.bf16.gmra.mrb[0].mxu0 %v2675
      %v2871 = vpop.f32.mrb[0].mxu0
      %v2872 = vadd.f32 0.0, %v2871
      %v2873 = vpop.f32.mrb[0].mxu0
      %v2874 = vpop.f32.mrb[0].mxu0
      %v2875 = vadd.f32 0.0, %v2874
      %v2876 = vpop.f32.mrb[0].mxu0
      %2877 = vmatprep.mubr.bf16.mxu0 0
      %2878 = vmatmul.mubr.bf16.gmra.mrb[0].mxu0 %v2678
      %v2879 = vpop.f32.mrb[0].mxu0
      %v2880 = vadd.f32 0.0, %v2879
      %v2881 = vpop.f32.mrb[0].mxu0
      %v2882 = vpop.f32.mrb[0].mxu0
      %v2883 = vadd.f32 0.0, %v2882
      %v2884 = vpop.f32.mrb[0].mxu0
      %2885 = vmatprep.mubr.bf16.mxu0 0
      %2886 = vmatmul.mubr.bf16.gmra.mrb[0].mxu0 %v2681
      %v2887 = vpop.f32.mrb[0].mxu0
      %v2888 = vadd.f32 0.0, %v2887
      %v2889 = vpop.f32.mrb[0].mxu0
      %v2890 = vpop.f32.mrb[0].mxu0
      %v2891 = vadd.f32 0.0, %v2890
      %v2892 = vpop.f32.mrb[0].mxu0
      %2893 = vmatprep.mubr.bf16.mxu0 0
      %2894 = vmatmul.mubr.bf16.gmra.mrb[0].mxu0 %v2684
      %v2895 = vpop.f32.mrb[0].mxu0
      %v2896 = vadd.f32 0.0, %v2895
      %v2897 = vpop.f32.mrb[0].mxu0
      %v2898 = vpop.f32.mrb[0].mxu0
      %v2899 = vadd.f32 0.0, %v2898
      %v2900 = vpop.f32.mrb[0].mxu0
      %2901 = vmatprep.mubr.bf16.mxu0 0
      %2902 = vmatmul.mubr.bf16.gmra.mrb[0].mxu0 %v2687
      %v2903 = vpop.f32.mrb[0].mxu0
      %v2904 = vadd.f32 0.0, %v2903
      %v2905 = vpop.f32.mrb[0].mxu0
      %v2906 = vpop.f32.mrb[0].mxu0
      %v2907 = vadd.f32 0.0, %v2906
      %v2908 = vpop.f32.mrb[0].mxu0
      %2909 = vmatprep.mubr.bf16.mxu0 0
      %2910 = vmatmul.mubr.bf16.gmra.mrb[0].mxu0 %v2690
      %v2911 = vpop.f32.mrb[0].mxu0
      %v2912 = vadd.f32 0.0, %v2911
      %v2913 = vpop.f32.mrb[0].mxu0
      %v2914 = vpop.f32.mrb[0].mxu0
      %v2915 = vadd.f32 0.0, %v2914
      %v2916 = vpop.f32.mrb[0].mxu0
      %2917 = vmatprep.mubr.bf16.mxu0 0
      %2918 = vmatmul.mubr.bf16.gmra.mrb[0].mxu0 %v2693
      %v2919 = vpop.f32.mrb[0].mxu0
      %v2920 = vadd.f32 0.0, %v2919
      %v2921 = vpop.f32.mrb[0].mxu0
      %v2922 = vpop.f32.mrb[0].mxu0
      %v2923 = vadd.f32 0.0, %v2922
      %v2924 = vpop.f32.mrb[0].mxu0
      %2925 = vmatprep.mubr.bf16.mxu0 0
      %2926 = vmatmul.mubr.bf16.gmra.mrb[0].mxu0 %v2696
      %v2927 = vpop.f32.mrb[0].mxu0
      %v2928 = vadd.f32 0.0, %v2927
      %v2929 = vpop.f32.mrb[0].mxu0
      %v2930 = vpop.f32.mrb[0].mxu0
      %v2931 = vadd.f32 0.0, %v2930
      %v2932 = vpop.f32.mrb[0].mxu0
      %2933 = vmatprep.mubr.bf16.mxu0 0
      %2934 = vmatmul.mubr.bf16.gmra.mrb[0].mxu0 %v2699
      %v2935 = vpop.f32.mrb[0].mxu0
      %v2936 = vadd.f32 0.0, %v2935
      %v2937 = vpop.f32.mrb[0].mxu0
      %v2938 = vpop.f32.mrb[0].mxu0
      %v2939 = vadd.f32 0.0, %v2938
      %v2940 = vpop.f32.mrb[0].mxu0
      %2941 = vdwg.mxu0
      %v2942 = vadd.f32 %v2572, %v2816
      %v2943 = vadd.f32 %v2573, %v2819
      %v2944 = vadd.f32 %v2574, %v2824
      %v2945 = vadd.f32 %v2575, %v2827
      %v2946 = vadd.f32 %v2576, %v2832
      %v2947 = vadd.f32 %v2577, %v2835
      %v2948 = vadd.f32 %v2578, %v2840
      %v2949 = vadd.f32 %v2579, %v2843
      %v2950 = vadd.f32 %v2580, %v2848
      %v2951 = vadd.f32 %v2581, %v2851
      %v2952 = vadd.f32 %v2582, %v2856
      %v2953 = vadd.f32 %v2583, %v2859
      %v2954 = vadd.f32 %v2584, %v2864
      %v2955 = vadd.f32 %v2585, %v2867
      %v2956 = vadd.f32 %v2586, %v2872
      %v2957 = vadd.f32 %v2587, %v2875
      %v2958 = vadd.f32 %v2588, %v2880
      %v2959 = vadd.f32 %v2589, %v2883
      %v2960 = vadd.f32 %v2590, %v2888
      %v2961 = vadd.f32 %v2591, %v2891
      %v2962 = vadd.f32 %v2592, %v2896
      %v2963 = vadd.f32 %v2593, %v2899
      %v2964 = vadd.f32 %v2594, %v2904
      %v2965 = vadd.f32 %v2595, %v2907
      %v2966 = vadd.f32 %v2596, %v2912
      %v2967 = vadd.f32 %v2597, %v2915
      %v2968 = vadd.f32 %v2598, %v2920
      %v2969 = vadd.f32 %v2599, %v2923
      %v2970 = vadd.f32 %v2600, %v2928
      %v2971 = vadd.f32 %v2601, %v2931
      %v2972 = vadd.f32 %v2602, %v2936
      %v2973 = vadd.f32 %v2603, %v2939
      %v2974 = vld [vmem:[%s465 + $0x8] sm:$0x1f]
      %v2975 = vld [vmem:[%s465 + $0x18] sm:$0x1f]
      %v2976 = vld [vmem:[%s465 + $0x28] sm:$0x1f]
      %v2977 = vld [vmem:[%s465 + $0x38] sm:$0x1f]
      %v2978 = vld [vmem:[%s465 + $0x48] sm:$0x1f]
      %v2979 = vld [vmem:[%s465 + $0x58] sm:$0x1f]
      %v2980 = vld [vmem:[%s465 + $0x68] sm:$0x1f]
      %v2981 = vld [vmem:[%s465 + $0x78] sm:$0x1f]
      %v2982 = vld [vmem:[%s465 + $0x88] sm:$0x1f]
      %v2983 = vld [vmem:[%s465 + $0x98] sm:$0x1f]
      %v2984 = vld [vmem:[%s465 + $0xa8] sm:$0x1f]
      %v2985 = vld [vmem:[%s465 + $0xb8] sm:$0x1f]
      %v2986 = vld [vmem:[%s465 + $0xc8] sm:$0x1f]
      %v2987 = vld [vmem:[%s465 + $0xd8] sm:$0x1f]
      %v2988 = vld [vmem:[%s465 + $0xe8] sm:$0x1f]
      %v2989 = vld [vmem:[%s465 + $0xf8] sm:$0x1f]
      %v2991 = vshrl.u32 %v2604, 16
      %v2993 = vrot.slane %v2991, 4
      %v2994 = vshll.u32 %v2604, 16
      %v2996 = vrot.slane %v2994, 5
      %v2997 = vor.u32 %v2993, %v2996
      %v2999 = vshrl.u32 %v2974, 16
      %v3001 = vrot.slane %v2999, 4
      %v3002 = vshll.u32 %v2974, 16
      %v3004 = vrot.slane %v3002, 5
      %v3005 = vor.u32 %v3001, %v3004
      %v3006 = vsel %vm1479, %v2997, %v3005
      %v3008 = vshrl.u32 %v2605, 16
      %v3010 = vrot.slane %v3008, 4
      %v3011 = vshll.u32 %v2605, 16
      %v3013 = vrot.slane %v3011, 5
      %v3014 = vor.u32 %v3010, %v3013
      %v3016 = vshrl.u32 %v2975, 16
      %v3018 = vrot.slane %v3016, 4
      %v3019 = vshll.u32 %v2975, 16
      %v3021 = vrot.slane %v3019, 5
      %v3022 = vor.u32 %v3018, %v3021
      %v3023 = vsel %vm1479, %v3014, %v3022
      %v3025 = vshrl.u32 %v2606, 16
      %v3027 = vrot.slane %v3025, 4
      %v3028 = vshll.u32 %v2606, 16
      %v3030 = vrot.slane %v3028, 5
      %v3031 = vor.u32 %v3027, %v3030
      %v3033 = vshrl.u32 %v2976, 16
      %v3035 = vrot.slane %v3033, 4
      %v3036 = vshll.u32 %v2976, 16
      %v3038 = vrot.slane %v3036, 5
      %v3039 = vor.u32 %v3035, %v3038
      %v3040 = vsel %vm1479, %v3031, %v3039
      %v3042 = vshrl.u32 %v2607, 16
      %v3044 = vrot.slane %v3042, 4
      %v3045 = vshll.u32 %v2607, 16
      %v3047 = vrot.slane %v3045, 5
      %v3048 = vor.u32 %v3044, %v3047
      %v3050 = vshrl.u32 %v2977, 16
      %v3052 = vrot.slane %v3050, 4
      %v3053 = vshll.u32 %v2977, 16
      %v3055 = vrot.slane %v3053, 5
      %v3056 = vor.u32 %v3052, %v3055
      %v3057 = vsel %vm1479, %v3048, %v3056
      %v3059 = vshrl.u32 %v2608, 16
      %v3061 = vrot.slane %v3059, 4
      %v3062 = vshll.u32 %v2608, 16
      %v3064 = vrot.slane %v3062, 5
      %v3065 = vor.u32 %v3061, %v3064
      %v3067 = vshrl.u32 %v2978, 16
      %v3069 = vrot.slane %v3067, 4
      %v3070 = vshll.u32 %v2978, 16
      %v3072 = vrot.slane %v3070, 5
      %v3073 = vor.u32 %v3069, %v3072
      %v3074 = vsel %vm1479, %v3065, %v3073
      %v3076 = vshrl.u32 %v2609, 16
      %v3078 = vrot.slane %v3076, 4
      %v3079 = vshll.u32 %v2609, 16
      %v3081 = vrot.slane %v3079, 5
      %v3082 = vor.u32 %v3078, %v3081
      %v3084 = vshrl.u32 %v2979, 16
      %v3086 = vrot.slane %v3084, 4
      %v3087 = vshll.u32 %v2979, 16
      %v3089 = vrot.slane %v3087, 5
      %v3090 = vor.u32 %v3086, %v3089
      %v3091 = vsel %vm1479, %v3082, %v3090
      %v3093 = vshrl.u32 %v2610, 16
      %v3095 = vrot.slane %v3093, 4
      %v3096 = vshll.u32 %v2610, 16
      %v3098 = vrot.slane %v3096, 5
      %v3099 = vor.u32 %v3095, %v3098
      %v3101 = vshrl.u32 %v2980, 16
      %v3103 = vrot.slane %v3101, 4
      %v3104 = vshll.u32 %v2980, 16
      %v3106 = vrot.slane %v3104, 5
      %v3107 = vor.u32 %v3103, %v3106
      %v3108 = vsel %vm1479, %v3099, %v3107
      %v3110 = vshrl.u32 %v2611, 16
      %v3112 = vrot.slane %v3110, 4
      %v3113 = vshll.u32 %v2611, 16
      %v3115 = vrot.slane %v3113, 5
      %v3116 = vor.u32 %v3112, %v3115
      %v3118 = vshrl.u32 %v2981, 16
      %v3120 = vrot.slane %v3118, 4
      %v3121 = vshll.u32 %v2981, 16
      %v3123 = vrot.slane %v3121, 5
      %v3124 = vor.u32 %v3120, %v3123
      %v3125 = vsel %vm1479, %v3116, %v3124
      %v3127 = vshrl.u32 %v2612, 16
      %v3129 = vrot.slane %v3127, 4
      %v3130 = vshll.u32 %v2612, 16
      %v3132 = vrot.slane %v3130, 5
      %v3133 = vor.u32 %v3129, %v3132
      %v3135 = vshrl.u32 %v2982, 16
      %v3137 = vrot.slane %v3135, 4
      %v3138 = vshll.u32 %v2982, 16
      %v3140 = vrot.slane %v3138, 5
      %v3141 = vor.u32 %v3137, %v3140
      %v3142 = vsel %vm1479, %v3133, %v3141
      %v3144 = vshrl.u32 %v2613, 16
      %v3146 = vrot.slane %v3144, 4
      %v3147 = vshll.u32 %v2613, 16
      %v3149 = vrot.slane %v3147, 5
      %v3150 = vor.u32 %v3146, %v3149
      %v3152 = vshrl.u32 %v2983, 16
      %v3154 = vrot.slane %v3152, 4
      %v3155 = vshll.u32 %v2983, 16
      %v3157 = vrot.slane %v3155, 5
      %v3158 = vor.u32 %v3154, %v3157
      %v3159 = vsel %vm1479, %v3150, %v3158
      %v3161 = vshrl.u32 %v2614, 16
      %v3163 = vrot.slane %v3161, 4
      %v3164 = vshll.u32 %v2614, 16
      %v3166 = vrot.slane %v3164, 5
      %v3167 = vor.u32 %v3163, %v3166
      %v3169 = vshrl.u32 %v2984, 16
      %v3171 = vrot.slane %v3169, 4
      %v3172 = vshll.u32 %v2984, 16
      %v3174 = vrot.slane %v3172, 5
      %v3175 = vor.u32 %v3171, %v3174
      %v3176 = vsel %vm1479, %v3167, %v3175
      %v3178 = vshrl.u32 %v2615, 16
      %v3180 = vrot.slane %v3178, 4
      %v3181 = vshll.u32 %v2615, 16
      %v3183 = vrot.slane %v3181, 5
      %v3184 = vor.u32 %v3180, %v3183
      %v3186 = vshrl.u32 %v2985, 16
      %v3188 = vrot.slane %v3186, 4
      %v3189 = vshll.u32 %v2985, 16
      %v3191 = vrot.slane %v3189, 5
      %v3192 = vor.u32 %v3188, %v3191
      %v3193 = vsel %vm1479, %v3184, %v3192
      %v3195 = vshrl.u32 %v2616, 16
      %v3197 = vrot.slane %v3195, 4
      %v3198 = vshll.u32 %v2616, 16
      %v3200 = vrot.slane %v3198, 5
      %v3201 = vor.u32 %v3197, %v3200
      %v3203 = vshrl.u32 %v2986, 16
      %v3205 = vrot.slane %v3203, 4
      %v3206 = vshll.u32 %v2986, 16
      %v3208 = vrot.slane %v3206, 5
      %v3209 = vor.u32 %v3205, %v3208
      %v3210 = vsel %vm1479, %v3201, %v3209
      %v3212 = vshrl.u32 %v2617, 16
      %v3214 = vrot.slane %v3212, 4
      %v3215 = vshll.u32 %v2617, 16
      %v3217 = vrot.slane %v3215, 5
      %v3218 = vor.u32 %v3214, %v3217
      %v3220 = vshrl.u32 %v2987, 16
      %v3222 = vrot.slane %v3220, 4
      %v3223 = vshll.u32 %v2987, 16
      %v3225 = vrot.slane %v3223, 5
      %v3226 = vor.u32 %v3222, %v3225
      %v3227 = vsel %vm1479, %v3218, %v3226
      %v3229 = vshrl.u32 %v2618, 16
      %v3231 = vrot.slane %v3229, 4
      %v3232 = vshll.u32 %v2618, 16
      %v3234 = vrot.slane %v3232, 5
      %v3235 = vor.u32 %v3231, %v3234
      %v3237 = vshrl.u32 %v2988, 16
      %v3239 = vrot.slane %v3237, 4
      %v3240 = vshll.u32 %v2988, 16
      %v3242 = vrot.slane %v3240, 5
      %v3243 = vor.u32 %v3239, %v3242
      %v3244 = vsel %vm1479, %v3235, %v3243
      %v3246 = vshrl.u32 %v2619, 16
      %v3248 = vrot.slane %v3246, 4
      %v3249 = vshll.u32 %v2619, 16
      %v3251 = vrot.slane %v3249, 5
      %v3252 = vor.u32 %v3248, %v3251
      %v3254 = vshrl.u32 %v2989, 16
      %v3256 = vrot.slane %v3254, 4
      %v3257 = vshll.u32 %v2989, 16
      %v3259 = vrot.slane %v3257, 5
      %v3260 = vor.u32 %v3256, %v3259
      %v3261 = vsel %vm1479, %v3252, %v3260
      %s3278 = scalar_lea.vmem %s3, 320
      %v3279 = vld [vmem:[%s3278] sm:$0xf]
      %v3280 = vld [vmem:[%s3278 + $0x4] sm:$0xf]
      %v3281 = vld [vmem:[%s3278 + $0x8] sm:$0xf]
      %v3282 = vld [vmem:[%s3278 + $0xc] sm:$0xf]
      %v3283 = vld [vmem:[%s3278 + $0x10] sm:$0xf]
      %v3284 = vld [vmem:[%s3278 + $0x14] sm:$0xf]
      %v3285 = vld [vmem:[%s3278 + $0x18] sm:$0xf]
      %v3286 = vld [vmem:[%s3278 + $0x1c] sm:$0xf]
      %v3287 = vld [vmem:[%s3278 + $0x20] sm:$0xf]
      %v3288 = vld [vmem:[%s3278 + $0x24] sm:$0xf]
      %v3289 = vld [vmem:[%s3278 + $0x28] sm:$0xf]
      %v3290 = vld [vmem:[%s3278 + $0x2c] sm:$0xf]
      %v3291 = vld [vmem:[%s3278 + $0x30] sm:$0xf]
      %v3292 = vld [vmem:[%s3278 + $0x34] sm:$0xf]
      %v3293 = vld [vmem:[%s3278 + $0x38] sm:$0xf]
      %v3294 = vld [vmem:[%s3278 + $0x3c] sm:$0xf]
      %v3311 = vunpack.c.l.b16 %v3279
      %v3312 = vunpack.c.l.b16 %v3280
      %v3313 = vunpack.c.l.b16 %v3281
      %v3314 = vunpack.c.l.b16 %v3282
      %v3315 = vunpack.c.l.b16 %v3283
      %v3316 = vunpack.c.l.b16 %v3284
      %v3317 = vunpack.c.l.b16 %v3285
      %v3318 = vunpack.c.l.b16 %v3286
      %v3319 = vunpack.c.l.b16 %v3287
      %v3320 = vunpack.c.l.b16 %v3288
      %v3321 = vunpack.c.l.b16 %v3289
      %v3322 = vunpack.c.l.b16 %v3290
      %v3323 = vunpack.c.l.b16 %v3291
      %v3324 = vunpack.c.l.b16 %v3292
      %v3325 = vunpack.c.l.b16 %v3293
      %v3326 = vunpack.c.l.b16 %v3294
      %v3327 = vpack.c.b16 %v3312, %v3311
      %v3328 = vpack.c.b16 %v3314, %v3313
      %v3329 = vpack.c.b16 %v3316, %v3315
      %v3330 = vpack.c.b16 %v3318, %v3317
      %v3331 = vpack.c.b16 %v3320, %v3319
      %v3332 = vpack.c.b16 %v3322, %v3321
      %v3333 = vpack.c.b16 %v3324, %v3323
      %v3334 = vpack.c.b16 %v3326, %v3325
      %3343 = vmatprep.subr.bf16.mxu0 0
      %3344 = vmatpush1.bf16.msra.mxu0 %v3327
      %3345 = vmatprep.subr.bf16.mxu0 0
      %3346 = vmatpush1.bf16.msra.mxu0 %v3328
      %3347 = vmatprep.subr.bf16.mxu0 0
      %3348 = vmatpush1.bf16.msra.mxu0 %v3329
      %3349 = vmatprep.subr.bf16.mxu0 0
      %3350 = vmatpush1.bf16.msra.mxu0 %v3330
      %3351 = vmatprep.subr.bf16.mxu0 0
      %3352 = vmatpush1.bf16.msra.mxu0 %v3331
      %3353 = vmatprep.subr.bf16.mxu0 0
      %3354 = vmatpush1.bf16.msra.mxu0 %v3332
      %3355 = vmatprep.subr.bf16.mxu0 0
      %3356 = vmatpush1.bf16.msra.mxu0 %v3333
      %3357 = vmatprep.subr.bf16.mxu0 0
      %3358 = vmatpush1.bf16.msra.mxu0 %v3334
      %3359 = vmatprep.subr.bf16.mxu0 0
      %3360 = vmatpush1.bf16.msra.mxu0 0
      %3361 = vmatprep.subr.bf16.mxu0 0
      %3362 = vmatpush1.bf16.msra.mxu0 0
      %3363 = vmatprep.subr.bf16.mxu0 0
      %3364 = vmatpush1.bf16.msra.mxu0 0
      %3365 = vmatprep.subr.bf16.mxu0 0
      %3366 = vmatpush1.bf16.msra.mxu0 0
      %3367 = vmatprep.subr.bf16.mxu0 0
      %3368 = vmatpush1.bf16.msra.mxu0 0
      %3369 = vmatprep.subr.bf16.mxu0 0
      %3370 = vmatpush1.bf16.msra.mxu0 0
      %3371 = vmatprep.subr.bf16.mxu0 0
      %3372 = vmatpush1.bf16.msra.mxu0 0
      %3373 = vmatprep.subr.bf16.mxu0 0
      %3374 = vmatpush1.bf16.msra.mxu0 0
      %3375 = vmatprep.mubr.bf16.mxu0 0
      %3376 = vmatmul.mubr.bf16.gmra.mrb[0].mxu0 %v3006
      %v3377 = vpop.f32.mrb[0].mxu0
      %v3378 = vadd.f32 0.0, %v3377
      %v3379 = vpop.f32.mrb[0].mxu0
      %v3380 = vpop.f32.mrb[0].mxu0
      %v3381 = vadd.f32 0.0, %v3380
      %v3382 = vpop.f32.mrb[0].mxu0
      %3383 = vmatprep.mubr.bf16.mxu0 0
      %3384 = vmatmul.mubr.bf16.gmra.mrb[0].mxu0 %v3023
      %v3385 = vpop.f32.mrb[0].mxu0
      %v3386 = vadd.f32 0.0, %v3385
      %v3387 = vpop.f32.mrb[0].mxu0
      %v3388 = vpop.f32.mrb[0].mxu0
      %v3389 = vadd.f32 0.0, %v3388
      %v3390 = vpop.f32.mrb[0].mxu0
      %3391 = vmatprep.mubr.bf16.mxu0 0
      %3392 = vmatmul.mubr.bf16.gmra.mrb[0].mxu0 %v3040
      %v3393 = vpop.f32.mrb[0].mxu0
      %v3394 = vadd.f32 0.0, %v3393
      %v3395 = vpop.f32.mrb[0].mxu0
      %v3396 = vpop.f32.mrb[0].mxu0
      %v3397 = vadd.f32 0.0, %v3396
      %v3398 = vpop.f32.mrb[0].mxu0
      %3399 = vmatprep.mubr.bf16.mxu0 0
      %3400 = vmatmul.mubr.bf16.gmra.mrb[0].mxu0 %v3057
      %v3401 = vpop.f32.mrb[0].mxu0
      %v3402 = vadd.f32 0.0, %v3401
      %v3403 = vpop.f32.mrb[0].mxu0
      %v3404 = vpop.f32.mrb[0].mxu0
      %v3405 = vadd.f32 0.0, %v3404
      %v3406 = vpop.f32.mrb[0].mxu0
      %3407 = vmatprep.mubr.bf16.mxu0 0
      %3408 = vmatmul.mubr.bf16.gmra.mrb[0].mxu0 %v3074
      %v3409 = vpop.f32.mrb[0].mxu0
      %v3410 = vadd.f32 0.0, %v3409
      %v3411 = vpop.f32.mrb[0].mxu0
      %v3412 = vpop.f32.mrb[0].mxu0
      %v3413 = vadd.f32 0.0, %v3412
      %v3414 = vpop.f32.mrb[0].mxu0
      %3415 = vmatprep.mubr.bf16.mxu0 0
      %3416 = vmatmul.mubr.bf16.gmra.mrb[0].mxu0 %v3091
      %v3417 = vpop.f32.mrb[0].mxu0
      %v3418 = vadd.f32 0.0, %v3417
      %v3419 = vpop.f32.mrb[0].mxu0
      %v3420 = vpop.f32.mrb[0].mxu0
      %v3421 = vadd.f32 0.0, %v3420
      %v3422 = vpop.f32.mrb[0].mxu0
      %3423 = vmatprep.mubr.bf16.mxu0 0
      %3424 = vmatmul.mubr.bf16.gmra.mrb[0].mxu0 %v3108
      %v3425 = vpop.f32.mrb[0].mxu0
      %v3426 = vadd.f32 0.0, %v3425
      %v3427 = vpop.f32.mrb[0].mxu0
      %v3428 = vpop.f32.mrb[0].mxu0
      %v3429 = vadd.f32 0.0, %v3428
      %v3430 = vpop.f32.mrb[0].mxu0
      %3431 = vmatprep.mubr.bf16.mxu0 0
      %3432 = vmatmul.mubr.bf16.gmra.mrb[0].mxu0 %v3125
      %v3433 = vpop.f32.mrb[0].mxu0
      %v3434 = vadd.f32 0.0, %v3433
      %v3435 = vpop.f32.mrb[0].mxu0
      %v3436 = vpop.f32.mrb[0].mxu0
      %v3437 = vadd.f32 0.0, %v3436
      %v3438 = vpop.f32.mrb[0].mxu0
      %3439 = vmatprep.mubr.bf16.mxu0 0
      %3440 = vmatmul.mubr.bf16.gmra.mrb[0].mxu0 %v3142
      %v3441 = vpop.f32.mrb[0].mxu0
      %v3442 = vadd.f32 0.0, %v3441
      %v3443 = vpop.f32.mrb[0].mxu0
      %v3444 = vpop.f32.mrb[0].mxu0
      %v3445 = vadd.f32 0.0, %v3444
      %v3446 = vpop.f32.mrb[0].mxu0
      %3447 = vmatprep.mubr.bf16.mxu0 0
      %3448 = vmatmul.mubr.bf16.gmra.mrb[0].mxu0 %v3159
      %v3449 = vpop.f32.mrb[0].mxu0
      %v3450 = vadd.f32 0.0, %v3449
      %v3451 = vpop.f32.mrb[0].mxu0
      %v3452 = vpop.f32.mrb[0].mxu0
      %v3453 = vadd.f32 0.0, %v3452
      %v3454 = vpop.f32.mrb[0].mxu0
      %3455 = vmatprep.mubr.bf16.mxu0 0
      %3456 = vmatmul.mubr.bf16.gmra.mrb[0].mxu0 %v3176
      %v3457 = vpop.f32.mrb[0].mxu0
      %v3458 = vadd.f32 0.0, %v3457
      %v3459 = vpop.f32.mrb[0].mxu0
      %v3460 = vpop.f32.mrb[0].mxu0
      %v3461 = vadd.f32 0.0, %v3460
      %v3462 = vpop.f32.mrb[0].mxu0
      %3463 = vmatprep.mubr.bf16.mxu0 0
      %3464 = vmatmul.mubr.bf16.gmra.mrb[0].mxu0 %v3193
      %v3465 = vpop.f32.mrb[0].mxu0
      %v3466 = vadd.f32 0.0, %v3465
      %v3467 = vpop.f32.mrb[0].mxu0
      %v3468 = vpop.f32.mrb[0].mxu0
      %v3469 = vadd.f32 0.0, %v3468
      %v3470 = vpop.f32.mrb[0].mxu0
      %3471 = vmatprep.mubr.bf16.mxu0 0
      %3472 = vmatmul.mubr.bf16.gmra.mrb[0].mxu0 %v3210
      %v3473 = vpop.f32.mrb[0].mxu0
      %v3474 = vadd.f32 0.0, %v3473
      %v3475 = vpop.f32.mrb[0].mxu0
      %v3476 = vpop.f32.mrb[0].mxu0
      %v3477 = vadd.f32 0.0, %v3476
      %v3478 = vpop.f32.mrb[0].mxu0
      %3479 = vmatprep.mubr.bf16.mxu0 0
      %3480 = vmatmul.mubr.bf16.gmra.mrb[0].mxu0 %v3227
      %v3481 = vpop.f32.mrb[0].mxu0
      %v3482 = vadd.f32 0.0, %v3481
      %v3483 = vpop.f32.mrb[0].mxu0
      %v3484 = vpop.f32.mrb[0].mxu0
      %v3485 = vadd.f32 0.0, %v3484
      %v3486 = vpop.f32.mrb[0].mxu0
      %3487 = vmatprep.mubr.bf16.mxu0 0
      %3488 = vmatmul.mubr.bf16.gmra.mrb[0].mxu0 %v3244
      %v3489 = vpop.f32.mrb[0].mxu0
      %v3490 = vadd.f32 0.0, %v3489
      %v3491 = vpop.f32.mrb[0].mxu0
      %v3492 = vpop.f32.mrb[0].mxu0
      %v3493 = vadd.f32 0.0, %v3492
      %v3494 = vpop.f32.mrb[0].mxu0
      %3495 = vmatprep.mubr.bf16.mxu0 0
      %3496 = vmatmul.mubr.bf16.gmra.mrb[0].mxu0 %v3261
      %v3497 = vpop.f32.mrb[0].mxu0
      %v3498 = vadd.f32 0.0, %v3497
      %v3499 = vpop.f32.mrb[0].mxu0
      %v3500 = vpop.f32.mrb[0].mxu0
      %v3501 = vadd.f32 0.0, %v3500
      %v3502 = vpop.f32.mrb[0].mxu0
      %3503 = vdwg.mxu0
      %v3504 = vadd.f32 %v2942, %v3378
      %v3505 = vadd.f32 %v2943, %v3381
      %v3506 = vadd.f32 %v2944, %v3386
      %v3507 = vadd.f32 %v2945, %v3389
      %v3508 = vadd.f32 %v2946, %v3394
      %v3509 = vadd.f32 %v2947, %v3397
      %v3510 = vadd.f32 %v2948, %v3402
      %v3511 = vadd.f32 %v2949, %v3405
      %v3512 = vadd.f32 %v2950, %v3410
      %v3513 = vadd.f32 %v2951, %v3413
      %v3514 = vadd.f32 %v2952, %v3418
      %v3515 = vadd.f32 %v2953, %v3421
      %v3516 = vadd.f32 %v2954, %v3426
      %v3517 = vadd.f32 %v2955, %v3429
      %v3518 = vadd.f32 %v2956, %v3434
      %v3519 = vadd.f32 %v2957, %v3437
      %v3520 = vadd.f32 %v2958, %v3442
      %v3521 = vadd.f32 %v2959, %v3445
      %v3522 = vadd.f32 %v2960, %v3450
      %v3523 = vadd.f32 %v2961, %v3453
      %v3524 = vadd.f32 %v2962, %v3458
      %v3525 = vadd.f32 %v2963, %v3461
      %v3526 = vadd.f32 %v2964, %v3466
      %v3527 = vadd.f32 %v2965, %v3469
      %v3528 = vadd.f32 %v2966, %v3474
      %v3529 = vadd.f32 %v2967, %v3477
      %v3530 = vadd.f32 %v2968, %v3482
      %v3531 = vadd.f32 %v2969, %v3485
      %v3532 = vadd.f32 %v2970, %v3490
      %v3533 = vadd.f32 %v2971, %v3493
      %v3534 = vadd.f32 %v2972, %v3498
      %v3535 = vadd.f32 %v2973, %v3501
      %s3536 = scalar_lea.vmem [#allocation2], 32
      %v3537 = vld [vmem:[%s3536] sm:$0xf8]
      %v3538 = vld [vmem:[%s3536 + $0x8] sm:$0xf]
      %v3539 = vld [vmem:[%s3536 + $0x10] sm:$0xf8]
      %v3540 = vld [vmem:[%s3536 + $0x18] sm:$0xf]
      %v3541 = vld [vmem:[%s3536 + $0x20] sm:$0xf8]
      %v3542 = vld [vmem:[%s3536 + $0x28] sm:$0xf]
      %v3543 = vld [vmem:[%s3536 + $0x30] sm:$0xf8]
      %v3544 = vld [vmem:[%s3536 + $0x38] sm:$0xf]
      %v3545 = vld [vmem:[%s3536 + $0x40] sm:$0xf8]
      %v3546 = vld [vmem:[%s3536 + $0x48] sm:$0xf]
      %v3547 = vld [vmem:[%s3536 + $0x50] sm:$0xf8]
      %v3548 = vld [vmem:[%s3536 + $0x58] sm:$0xf]
      %v3549 = vld [vmem:[%s3536 + $0x60] sm:$0xf8]
      %v3550 = vld [vmem:[%s3536 + $0x68] sm:$0xf]
      %v3551 = vld [vmem:[%s3536 + $0x70] sm:$0xf8]
      %v3552 = vld [vmem:[%s3536 + $0x78] sm:$0xf]
      %v3553 = vld [vmem:[%s3536 + $0x80] sm:$0xf8]
      %v3554 = vld [vmem:[%s3536 + $0x88] sm:$0xf]
      %v3555 = vld [vmem:[%s3536 + $0x90] sm:$0xf8]
      %v3556 = vld [vmem:[%s3536 + $0x98] sm:$0xf]
      %v3557 = vld [vmem:[%s3536 + $0xa0] sm:$0xf8]
      %v3558 = vld [vmem:[%s3536 + $0xa8] sm:$0xf]
      %v3559 = vld [vmem:[%s3536 + $0xb0] sm:$0xf8]
      %v3560 = vld [vmem:[%s3536 + $0xb8] sm:$0xf]
      %v3561 = vld [vmem:[%s3536 + $0xc0] sm:$0xf8]
      %v3562 = vld [vmem:[%s3536 + $0xc8] sm:$0xf]
      %v3563 = vld [vmem:[%s3536 + $0xd0] sm:$0xf8]
      %v3564 = vld [vmem:[%s3536 + $0xd8] sm:$0xf]
      %v3565 = vld [vmem:[%s3536 + $0xe0] sm:$0xf8]
      %v3566 = vld [vmem:[%s3536 + $0xe8] sm:$0xf]
      %v3567 = vld [vmem:[%s3536 + $0xf0] sm:$0xf8]
      %v3568 = vld [vmem:[%s3536 + $0xf8] sm:$0xf]
      %v3570 = vshrl.u32 %v3537, 16
      %v3572 = vrot.slane %v3570, 3
      %v3573 = vshll.u32 %v3537, 16
      %v3575 = vrot.slane %v3573, 4
      %v3576 = vor.u32 %v3572, %v3575
      %v3578 = vshrl.u32 %v3538, 16
      %v3580 = vrot.slane %v3578, 3
      %v3581 = vshll.u32 %v3538, 16
      %v3583 = vrot.slane %v3581, 4
      %v3584 = vor.u32 %v3580, %v3583
      %v3585 = vsel %vm610, %v3576, %v3584
      %v3587 = vshrl.u32 %v3539, 16
      %v3589 = vrot.slane %v3587, 3
      %v3590 = vshll.u32 %v3539, 16
      %v3592 = vrot.slane %v3590, 4
      %v3593 = vor.u32 %v3589, %v3592
      %v3595 = vshrl.u32 %v3540, 16
      %v3597 = vrot.slane %v3595, 3
      %v3598 = vshll.u32 %v3540, 16
      %v3600 = vrot.slane %v3598, 4
      %v3601 = vor.u32 %v3597, %v3600
      %v3602 = vsel %vm610, %v3593, %v3601
      %v3604 = vshrl.u32 %v3541, 16
      %v3606 = vrot.slane %v3604, 3
      %v3607 = vshll.u32 %v3541, 16
      %v3609 = vrot.slane %v3607, 4
      %v3610 = vor.u32 %v3606, %v3609
      %v3612 = vshrl.u32 %v3542, 16
      %v3614 = vrot.slane %v3612, 3
      %v3615 = vshll.u32 %v3542, 16
      %v3617 = vrot.slane %v3615, 4
      %v3618 = vor.u32 %v3614, %v3617
      %v3619 = vsel %vm610, %v3610, %v3618
      %v3621 = vshrl.u32 %v3543, 16
      %v3623 = vrot.slane %v3621, 3
      %v3624 = vshll.u32 %v3543, 16
      %v3626 = vrot.slane %v3624, 4
      %v3627 = vor.u32 %v3623, %v3626
      %v3629 = vshrl.u32 %v3544, 16
      %v3631 = vrot.slane %v3629, 3
      %v3632 = vshll.u32 %v3544, 16
      %v3634 = vrot.slane %v3632, 4
      %v3635 = vor.u32 %v3631, %v3634
      %v3636 = vsel %vm610, %v3627, %v3635
      %v3638 = vshrl.u32 %v3545, 16
      %v3640 = vrot.slane %v3638, 3
      %v3641 = vshll.u32 %v3545, 16
      %v3643 = vrot.slane %v3641, 4
      %v3644 = vor.u32 %v3640, %v3643
      %v3646 = vshrl.u32 %v3546, 16
      %v3648 = vrot.slane %v3646, 3
      %v3649 = vshll.u32 %v3546, 16
      %v3651 = vrot.slane %v3649, 4
      %v3652 = vor.u32 %v3648, %v3651
      %v3653 = vsel %vm610, %v3644, %v3652
      %v3655 = vshrl.u32 %v3547, 16
      %v3657 = vrot.slane %v3655, 3
      %v3658 = vshll.u32 %v3547, 16
      %v3660 = vrot.slane %v3658, 4
      %v3661 = vor.u32 %v3657, %v3660
      %v3663 = vshrl.u32 %v3548, 16
      %v3665 = vrot.slane %v3663, 3
      %v3666 = vshll.u32 %v3548, 16
      %v3668 = vrot.slane %v3666, 4
      %v3669 = vor.u32 %v3665, %v3668
      %v3670 = vsel %vm610, %v3661, %v3669
      %v3672 = vshrl.u32 %v3549, 16
      %v3674 = vrot.slane %v3672, 3
      %v3675 = vshll.u32 %v3549, 16
      %v3677 = vrot.slane %v3675, 4
      %v3678 = vor.u32 %v3674, %v3677
      %v3680 = vshrl.u32 %v3550, 16
      %v3682 = vrot.slane %v3680, 3
      %v3683 = vshll.u32 %v3550, 16
      %v3685 = vrot.slane %v3683, 4
      %v3686 = vor.u32 %v3682, %v3685
      %v3687 = vsel %vm610, %v3678, %v3686
      %v3689 = vshrl.u32 %v3551, 16
      %v3691 = vrot.slane %v3689, 3
      %v3692 = vshll.u32 %v3551, 16
      %v3694 = vrot.slane %v3692, 4
      %v3695 = vor.u32 %v3691, %v3694
      %v3697 = vshrl.u32 %v3552, 16
      %v3699 = vrot.slane %v3697, 3
      %v3700 = vshll.u32 %v3552, 16
      %v3702 = vrot.slane %v3700, 4
      %v3703 = vor.u32 %v3699, %v3702
      %v3704 = vsel %vm610, %v3695, %v3703
      %v3706 = vshrl.u32 %v3553, 16
      %v3708 = vrot.slane %v3706, 3
      %v3709 = vshll.u32 %v3553, 16
      %v3711 = vrot.slane %v3709, 4
      %v3712 = vor.u32 %v3708, %v3711
      %v3714 = vshrl.u32 %v3554, 16
      %v3716 = vrot.slane %v3714, 3
      %v3717 = vshll.u32 %v3554, 16
      %v3719 = vrot.slane %v3717, 4
      %v3720 = vor.u32 %v3716, %v3719
      %v3721 = vsel %vm610, %v3712, %v3720
      %v3723 = vshrl.u32 %v3555, 16
      %v3725 = vrot.slane %v3723, 3
      %v3726 = vshll.u32 %v3555, 16
      %v3728 = vrot.slane %v3726, 4
      %v3729 = vor.u32 %v3725, %v3728
      %v3731 = vshrl.u32 %v3556, 16
      %v3733 = vrot.slane %v3731, 3
      %v3734 = vshll.u32 %v3556, 16
      %v3736 = vrot.slane %v3734, 4
      %v3737 = vor.u32 %v3733, %v3736
      %v3738 = vsel %vm610, %v3729, %v3737
      %v3740 = vshrl.u32 %v3557, 16
      %v3742 = vrot.slane %v3740, 3
      %v3743 = vshll.u32 %v3557, 16
      %v3745 = vrot.slane %v3743, 4
      %v3746 = vor.u32 %v3742, %v3745
      %v3748 = vshrl.u32 %v3558, 16
      %v3750 = vrot.slane %v3748, 3
      %v3751 = vshll.u32 %v3558, 16
      %v3753 = vrot.slane %v3751, 4
      %v3754 = vor.u32 %v3750, %v3753
      %v3755 = vsel %vm610, %v3746, %v3754
      %v3757 = vshrl.u32 %v3559, 16
      %v3759 = vrot.slane %v3757, 3
      %v3760 = vshll.u32 %v3559, 16
      %v3762 = vrot.slane %v3760, 4
      %v3763 = vor.u32 %v3759, %v3762
      %v3765 = vshrl.u32 %v3560, 16
      %v3767 = vrot.slane %v3765, 3
      %v3768 = vshll.u32 %v3560, 16
      %v3770 = vrot.slane %v3768, 4
      %v3771 = vor.u32 %v3767, %v3770
      %v3772 = vsel %vm610, %v3763, %v3771
      %v3774 = vshrl.u32 %v3561, 16
      %v3776 = vrot.slane %v3774, 3
      %v3777 = vshll.u32 %v3561, 16
      %v3779 = vrot.slane %v3777, 4
      %v3780 = vor.u32 %v3776, %v3779
      %v3782 = vshrl.u32 %v3562, 16
      %v3784 = vrot.slane %v3782, 3
      %v3785 = vshll.u32 %v3562, 16
      %v3787 = vrot.slane %v3785, 4
      %v3788 = vor.u32 %v3784, %v3787
      %v3789 = vsel %vm610, %v3780, %v3788
      %v3791 = vshrl.u32 %v3563, 16
      %v3793 = vrot.slane %v3791, 3
      %v3794 = vshll.u32 %v3563, 16
      %v3796 = vrot.slane %v3794, 4
      %v3797 = vor.u32 %v3793, %v3796
      %v3799 = vshrl.u32 %v3564, 16
      %v3801 = vrot.slane %v3799, 3
      %v3802 = vshll.u32 %v3564, 16
      %v3804 = vrot.slane %v3802, 4
      %v3805 = vor.u32 %v3801, %v3804
      %v3806 = vsel %vm610, %v3797, %v3805
      %v3808 = vshrl.u32 %v3565, 16
      %v3810 = vrot.slane %v3808, 3
      %v3811 = vshll.u32 %v3565, 16
      %v3813 = vrot.slane %v3811, 4
      %v3814 = vor.u32 %v3810, %v3813
      %v3816 = vshrl.u32 %v3566, 16
      %v3818 = vrot.slane %v3816, 3
      %v3819 = vshll.u32 %v3566, 16
      %v3821 = vrot.slane %v3819, 4
      %v3822 = vor.u32 %v3818, %v3821
      %v3823 = vsel %vm610, %v3814, %v3822
      %v3825 = vshrl.u32 %v3567, 16
      %v3827 = vrot.slane %v3825, 3
      %v3828 = vshll.u32 %v3567, 16
      %v3830 = vrot.slane %v3828, 4
      %v3831 = vor.u32 %v3827, %v3830
      %v3833 = vshrl.u32 %v3568, 16
      %v3835 = vrot.slane %v3833, 3
      %v3836 = vshll.u32 %v3568, 16
      %v3838 = vrot.slane %v3836, 4
      %v3839 = vor.u32 %v3835, %v3838
      %v3840 = vsel %vm610, %v3831, %v3839
      %s3857 = scalar_lea.vmem %s3, 384
      %v3858 = vld [vmem:[%s3857] sm:$0xf]
      %v3859 = vld [vmem:[%s3857 + $0x4] sm:$0xf]
      %v3860 = vld [vmem:[%s3857 + $0x8] sm:$0xf]
      %v3861 = vld [vmem:[%s3857 + $0xc] sm:$0xf]
      %v3862 = vld [vmem:[%s3857 + $0x10] sm:$0xf]
      %v3863 = vld [vmem:[%s3857 + $0x14] sm:$0xf]
      %v3864 = vld [vmem:[%s3857 + $0x18] sm:$0xf]
      %v3865 = vld [vmem:[%s3857 + $0x1c] sm:$0xf]
      %v3866 = vld [vmem:[%s3857 + $0x20] sm:$0xf]
      %v3867 = vld [vmem:[%s3857 + $0x24] sm:$0xf]
      %v3868 = vld [vmem:[%s3857 + $0x28] sm:$0xf]
      %v3869 = vld [vmem:[%s3857 + $0x2c] sm:$0xf]
      %v3870 = vld [vmem:[%s3857 + $0x30] sm:$0xf]
      %v3871 = vld [vmem:[%s3857 + $0x34] sm:$0xf]
      %v3872 = vld [vmem:[%s3857 + $0x38] sm:$0xf]
      %v3873 = vld [vmem:[%s3857 + $0x3c] sm:$0xf]
      %v3890 = vunpack.c.l.b16 %v3858
      %v3891 = vunpack.c.l.b16 %v3859
      %v3892 = vunpack.c.l.b16 %v3860
      %v3893 = vunpack.c.l.b16 %v3861
      %v3894 = vunpack.c.l.b16 %v3862
      %v3895 = vunpack.c.l.b16 %v3863
      %v3896 = vunpack.c.l.b16 %v3864
      %v3897 = vunpack.c.l.b16 %v3865
      %v3898 = vunpack.c.l.b16 %v3866
      %v3899 = vunpack.c.l.b16 %v3867
      %v3900 = vunpack.c.l.b16 %v3868
      %v3901 = vunpack.c.l.b16 %v3869
      %v3902 = vunpack.c.l.b16 %v3870
      %v3903 = vunpack.c.l.b16 %v3871
      %v3904 = vunpack.c.l.b16 %v3872
      %v3905 = vunpack.c.l.b16 %v3873
      %v3906 = vpack.c.b16 %v3891, %v3890
      %v3907 = vpack.c.b16 %v3893, %v3892
      %v3908 = vpack.c.b16 %v3895, %v3894
      %v3909 = vpack.c.b16 %v3897, %v3896
      %v3910 = vpack.c.b16 %v3899, %v3898
      %v3911 = vpack.c.b16 %v3901, %v3900
      %v3912 = vpack.c.b16 %v3903, %v3902
      %v3913 = vpack.c.b16 %v3905, %v3904
      %3922 = vmatprep.subr.bf16.mxu0 0
      %3923 = vmatpush1.bf16.msra.mxu0 %v3906
      %3924 = vmatprep.subr.bf16.mxu0 0
      %3925 = vmatpush1.bf16.msra.mxu0 %v3907
      %3926 = vmatprep.subr.bf16.mxu0 0
      %3927 = vmatpush1.bf16.msra.mxu0 %v3908
      %3928 = vmatprep.subr.bf16.mxu0 0
      %3929 = vmatpush1.bf16.msra.mxu0 %v3909
      %3930 = vmatprep.subr.bf16.mxu0 0
      %3931 = vmatpush1.bf16.msra.mxu0 %v3910
      %3932 = vmatprep.subr.bf16.mxu0 0
      %3933 = vmatpush1.bf16.msra.mxu0 %v3911
      %3934 = vmatprep.subr.bf16.mxu0 0
      %3935 = vmatpush1.bf16.msra.mxu0 %v3912
      %3936 = vmatprep.subr.bf16.mxu0 0
      %3937 = vmatpush1.bf16.msra.mxu0 %v3913
      %3938 = vmatprep.subr.bf16.mxu0 0
      %3939 = vmatpush1.bf16.msra.mxu0 0
      %3940 = vmatprep.subr.bf16.mxu0 0
      %3941 = vmatpush1.bf16.msra.mxu0 0
      %3942 = vmatprep.subr.bf16.mxu0 0
      %3943 = vmatpush1.bf16.msra.mxu0 0
      %3944 = vmatprep.subr.bf16.mxu0 0
      %3945 = vmatpush1.bf16.msra.mxu0 0
      %3946 = vmatprep.subr.bf16.mxu0 0
      %3947 = vmatpush1.bf16.msra.mxu0 0
      %3948 = vmatprep.subr.bf16.mxu0 0
      %3949 = vmatpush1.bf16.msra.mxu0 0
      %3950 = vmatprep.subr.bf16.mxu0 0
      %3951 = vmatpush1.bf16.msra.mxu0 0
      %3952 = vmatprep.subr.bf16.mxu0 0
      %3953 = vmatpush1.bf16.msra.mxu0 0
      %3954 = vmatprep.mubr.bf16.mxu0 0
      %3955 = vmatmul.mubr.bf16.gmra.mrb[0].mxu0 %v3585
      %v3956 = vpop.f32.mrb[0].mxu0
      %v3957 = vadd.f32 0.0, %v3956
      %v3958 = vpop.f32.mrb[0].mxu0
      %v3959 = vpop.f32.mrb[0].mxu0
      %v3960 = vadd.f32 0.0, %v3959
      %v3961 = vpop.f32.mrb[0].mxu0
      %3962 = vmatprep.mubr.bf16.mxu0 0
      %3963 = vmatmul.mubr.bf16.gmra.mrb[0].mxu0 %v3602
      %v3964 = vpop.f32.mrb[0].mxu0
      %v3965 = vadd.f32 0.0, %v3964
      %v3966 = vpop.f32.mrb[0].mxu0
      %v3967 = vpop.f32.mrb[0].mxu0
      %v3968 = vadd.f32 0.0, %v3967
      %v3969 = vpop.f32.mrb[0].mxu0
      %3970 = vmatprep.mubr.bf16.mxu0 0
      %3971 = vmatmul.mubr.bf16.gmra.mrb[0].mxu0 %v3619
      %v3972 = vpop.f32.mrb[0].mxu0
      %v3973 = vadd.f32 0.0, %v3972
      %v3974 = vpop.f32.mrb[0].mxu0
      %v3975 = vpop.f32.mrb[0].mxu0
      %v3976 = vadd.f32 0.0, %v3975
      %v3977 = vpop.f32.mrb[0].mxu0
      %3978 = vmatprep.mubr.bf16.mxu0 0
      %3979 = vmatmul.mubr.bf16.gmra.mrb[0].mxu0 %v3636
      %v3980 = vpop.f32.mrb[0].mxu0
      %v3981 = vadd.f32 0.0, %v3980
      %v3982 = vpop.f32.mrb[0].mxu0
      %v3983 = vpop.f32.mrb[0].mxu0
      %v3984 = vadd.f32 0.0, %v3983
      %v3985 = vpop.f32.mrb[0].mxu0
      %3986 = vmatprep.mubr.bf16.mxu0 0
      %3987 = vmatmul.mubr.bf16.gmra.mrb[0].mxu0 %v3653
      %v3988 = vpop.f32.mrb[0].mxu0
      %v3989 = vadd.f32 0.0, %v3988
      %v3990 = vpop.f32.mrb[0].mxu0
      %v3991 = vpop.f32.mrb[0].mxu0
      %v3992 = vadd.f32 0.0, %v3991
      %v3993 = vpop.f32.mrb[0].mxu0
      %3994 = vmatprep.mubr.bf16.mxu0 0
      %3995 = vmatmul.mubr.bf16.gmra.mrb[0].mxu0 %v3670
      %v3996 = vpop.f32.mrb[0].mxu0
      %v3997 = vadd.f32 0.0, %v3996
      %v3998 = vpop.f32.mrb[0].mxu0
      %v3999 = vpop.f32.mrb[0].mxu0
      %v4000 = vadd.f32 0.0, %v3999
      %v4001 = vpop.f32.mrb[0].mxu0
      %4002 = vmatprep.mubr.bf16.mxu0 0
      %4003 = vmatmul.mubr.bf16.gmra.mrb[0].mxu0 %v3687
      %v4004 = vpop.f32.mrb[0].mxu0
      %v4005 = vadd.f32 0.0, %v4004
      %v4006 = vpop.f32.mrb[0].mxu0
      %v4007 = vpop.f32.mrb[0].mxu0
      %v4008 = vadd.f32 0.0, %v4007
      %v4009 = vpop.f32.mrb[0].mxu0
      %4010 = vmatprep.mubr.bf16.mxu0 0
      %4011 = vmatmul.mubr.bf16.gmra.mrb[0].mxu0 %v3704
      %v4012 = vpop.f32.mrb[0].mxu0
      %v4013 = vadd.f32 0.0, %v4012
      %v4014 = vpop.f32.mrb[0].mxu0
      %v4015 = vpop.f32.mrb[0].mxu0
      %v4016 = vadd.f32 0.0, %v4015
      %v4017 = vpop.f32.mrb[0].mxu0
      %4018 = vmatprep.mubr.bf16.mxu0 0
      %4019 = vmatmul.mubr.bf16.gmra.mrb[0].mxu0 %v3721
      %v4020 = vpop.f32.mrb[0].mxu0
      %v4021 = vadd.f32 0.0, %v4020
      %v4022 = vpop.f32.mrb[0].mxu0
      %v4023 = vpop.f32.mrb[0].mxu0
      %v4024 = vadd.f32 0.0, %v4023
      %v4025 = vpop.f32.mrb[0].mxu0
      %4026 = vmatprep.mubr.bf16.mxu0 0
      %4027 = vmatmul.mubr.bf16.gmra.mrb[0].mxu0 %v3738
      %v4028 = vpop.f32.mrb[0].mxu0
      %v4029 = vadd.f32 0.0, %v4028
      %v4030 = vpop.f32.mrb[0].mxu0
      %v4031 = vpop.f32.mrb[0].mxu0
      %v4032 = vadd.f32 0.0, %v4031
      %v4033 = vpop.f32.mrb[0].mxu0
      %4034 = vmatprep.mubr.bf16.mxu0 0
      %4035 = vmatmul.mubr.bf16.gmra.mrb[0].mxu0 %v3755
      %v4036 = vpop.f32.mrb[0].mxu0
      %v4037 = vadd.f32 0.0, %v4036
      %v4038 = vpop.f32.mrb[0].mxu0
      %v4039 = vpop.f32.mrb[0].mxu0
      %v4040 = vadd.f32 0.0, %v4039
      %v4041 = vpop.f32.mrb[0].mxu0
      %4042 = vmatprep.mubr.bf16.mxu0 0
      %4043 = vmatmul.mubr.bf16.gmra.mrb[0].mxu0 %v3772
      %v4044 = vpop.f32.mrb[0].mxu0
      %v4045 = vadd.f32 0.0, %v4044
      %v4046 = vpop.f32.mrb[0].mxu0
      %v4047 = vpop.f32.mrb[0].mxu0
      %v4048 = vadd.f32 0.0, %v4047
      %v4049 = vpop.f32.mrb[0].mxu0
      %4050 = vmatprep.mubr.bf16.mxu0 0
      %4051 = vmatmul.mubr.bf16.gmra.mrb[0].mxu0 %v3789
      %v4052 = vpop.f32.mrb[0].mxu0
      %v4053 = vadd.f32 0.0, %v4052
      %v4054 = vpop.f32.mrb[0].mxu0
      %v4055 = vpop.f32.mrb[0].mxu0
      %v4056 = vadd.f32 0.0, %v4055
      %v4057 = vpop.f32.mrb[0].mxu0
      %4058 = vmatprep.mubr.bf16.mxu0 0
      %4059 = vmatmul.mubr.bf16.gmra.mrb[0].mxu0 %v3806
      %v4060 = vpop.f32.mrb[0].mxu0
      %v4061 = vadd.f32 0.0, %v4060
      %v4062 = vpop.f32.mrb[0].mxu0
      %v4063 = vpop.f32.mrb[0].mxu0
      %v4064 = vadd.f32 0.0, %v4063
      %v4065 = vpop.f32.mrb[0].mxu0
      %4066 = vmatprep.mubr.bf16.mxu0 0
      %4067 = vmatmul.mubr.bf16.gmra.mrb[0].mxu0 %v3823
      %v4068 = vpop.f32.mrb[0].mxu0
      %v4069 = vadd.f32 0.0, %v4068
      %v4070 = vpop.f32.mrb[0].mxu0
      %v4071 = vpop.f32.mrb[0].mxu0
      %v4072 = vadd.f32 0.0, %v4071
      %v4073 = vpop.f32.mrb[0].mxu0
      %4074 = vmatprep.mubr.bf16.mxu0 0
      %4075 = vmatmul.mubr.bf16.gmra.mrb[0].mxu0 %v3840
      %v4076 = vpop.f32.mrb[0].mxu0
      %v4077 = vadd.f32 0.0, %v4076
      %v4078 = vpop.f32.mrb[0].mxu0
      %v4079 = vpop.f32.mrb[0].mxu0
      %v4080 = vadd.f32 0.0, %v4079
      %v4081 = vpop.f32.mrb[0].mxu0
      %4082 = vdwg.mxu0
      %v4083 = vadd.f32 %v3504, %v3957
      %v4084 = vadd.f32 %v3505, %v3960
      %v4085 = vadd.f32 %v3506, %v3965
      %v4086 = vadd.f32 %v3507, %v3968
      %v4087 = vadd.f32 %v3508, %v3973
      %v4088 = vadd.f32 %v3509, %v3976
      %v4089 = vadd.f32 %v3510, %v3981
      %v4090 = vadd.f32 %v3511, %v3984
      %v4091 = vadd.f32 %v3512, %v3989
      %v4092 = vadd.f32 %v3513, %v3992
      %v4093 = vadd.f32 %v3514, %v3997
      %v4094 = vadd.f32 %v3515, %v4000
      %v4095 = vadd.f32 %v3516, %v4005
      %v4096 = vadd.f32 %v3517, %v4008
      %v4097 = vadd.f32 %v3518, %v4013
      %v4098 = vadd.f32 %v3519, %v4016
      %v4099 = vadd.f32 %v3520, %v4021
      %v4100 = vadd.f32 %v3521, %v4024
      %v4101 = vadd.f32 %v3522, %v4029
      %v4102 = vadd.f32 %v3523, %v4032
      %v4103 = vadd.f32 %v3524, %v4037
      %v4104 = vadd.f32 %v3525, %v4040
      %v4105 = vadd.f32 %v3526, %v4045
      %v4106 = vadd.f32 %v3527, %v4048
      %v4107 = vadd.f32 %v3528, %v4053
      %v4108 = vadd.f32 %v3529, %v4056
      %v4109 = vadd.f32 %v3530, %v4061
      %v4110 = vadd.f32 %v3531, %v4064
      %v4111 = vadd.f32 %v3532, %v4069
      %v4112 = vadd.f32 %v3533, %v4072
      %v4113 = vadd.f32 %v3534, %v4077
      %v4114 = vadd.f32 %v3535, %v4080
      %v4115 = vld [vmem:[%s3536] sm:$0xf0]
      %v4116 = vld [vmem:[%s3536 + $0x10] sm:$0xf0]
      %v4117 = vld [vmem:[%s3536 + $0x20] sm:$0xf0]
      %v4118 = vld [vmem:[%s3536 + $0x30] sm:$0xf0]
      %v4119 = vld [vmem:[%s3536 + $0x40] sm:$0xf0]
      %v4120 = vld [vmem:[%s3536 + $0x50] sm:$0xf0]
      %v4121 = vld [vmem:[%s3536 + $0x60] sm:$0xf0]
      %v4122 = vld [vmem:[%s3536 + $0x70] sm:$0xf0]
      %v4123 = vld [vmem:[%s3536 + $0x80] sm:$0xf0]
      %v4124 = vld [vmem:[%s3536 + $0x90] sm:$0xf0]
      %v4125 = vld [vmem:[%s3536 + $0xa0] sm:$0xf0]
      %v4126 = vld [vmem:[%s3536 + $0xb0] sm:$0xf0]
      %v4127 = vld [vmem:[%s3536 + $0xc0] sm:$0xf0]
      %v4128 = vld [vmem:[%s3536 + $0xd0] sm:$0xf0]
      %v4129 = vld [vmem:[%s3536 + $0xe0] sm:$0xf0]
      %v4130 = vld [vmem:[%s3536 + $0xf0] sm:$0xf0]
      %v4163 = vrot.slane %v4115, 4
      %v4164 = vrot.slane %v3538, 4
      %v4165 = vsel %vm963, %v4163, %v4164
      %v4166 = vrot.slane %v4116, 4
      %v4167 = vrot.slane %v3540, 4
      %v4168 = vsel %vm963, %v4166, %v4167
      %v4169 = vrot.slane %v4117, 4
      %v4170 = vrot.slane %v3542, 4
      %v4171 = vsel %vm963, %v4169, %v4170
      %v4172 = vrot.slane %v4118, 4
      %v4173 = vrot.slane %v3544, 4
      %v4174 = vsel %vm963, %v4172, %v4173
      %v4175 = vrot.slane %v4119, 4
      %v4176 = vrot.slane %v3546, 4
      %v4177 = vsel %vm963, %v4175, %v4176
      %v4178 = vrot.slane %v4120, 4
      %v4179 = vrot.slane %v3548, 4
      %v4180 = vsel %vm963, %v4178, %v4179
      %v4181 = vrot.slane %v4121, 4
      %v4182 = vrot.slane %v3550, 4
      %v4183 = vsel %vm963, %v4181, %v4182
      %v4184 = vrot.slane %v4122, 4
      %v4185 = vrot.slane %v3552, 4
      %v4186 = vsel %vm963, %v4184, %v4185
      %v4187 = vrot.slane %v4123, 4
      %v4188 = vrot.slane %v3554, 4
      %v4189 = vsel %vm963, %v4187, %v4188
      %v4190 = vrot.slane %v4124, 4
      %v4191 = vrot.slane %v3556, 4
      %v4192 = vsel %vm963, %v4190, %v4191
      %v4193 = vrot.slane %v4125, 4
      %v4194 = vrot.slane %v3558, 4
      %v4195 = vsel %vm963, %v4193, %v4194
      %v4196 = vrot.slane %v4126, 4
      %v4197 = vrot.slane %v3560, 4
      %v4198 = vsel %vm963, %v4196, %v4197
      %v4199 = vrot.slane %v4127, 4
      %v4200 = vrot.slane %v3562, 4
      %v4201 = vsel %vm963, %v4199, %v4200
      %v4202 = vrot.slane %v4128, 4
      %v4203 = vrot.slane %v3564, 4
      %v4204 = vsel %vm963, %v4202, %v4203
      %v4205 = vrot.slane %v4129, 4
      %v4206 = vrot.slane %v3566, 4
      %v4207 = vsel %vm963, %v4205, %v4206
      %v4208 = vrot.slane %v4130, 4
      %v4209 = vrot.slane %v3568, 4
      %v4210 = vsel %vm963, %v4208, %v4209
      %s4227 = scalar_lea.vmem %s3, 448
      %v4228 = vld [vmem:[%s4227] sm:$0xf]
      %v4229 = vld [vmem:[%s4227 + $0x4] sm:$0xf]
      %v4230 = vld [vmem:[%s4227 + $0x8] sm:$0xf]
      %v4231 = vld [vmem:[%s4227 + $0xc] sm:$0xf]
      %v4232 = vld [vmem:[%s4227 + $0x10] sm:$0xf]
      %v4233 = vld [vmem:[%s4227 + $0x14] sm:$0xf]
      %v4234 = vld [vmem:[%s4227 + $0x18] sm:$0xf]
      %v4235 = vld [vmem:[%s4227 + $0x1c] sm:$0xf]
      %v4236 = vld [vmem:[%s4227 + $0x20] sm:$0xf]
      %v4237 = vld [vmem:[%s4227 + $0x24] sm:$0xf]
      %v4238 = vld [vmem:[%s4227 + $0x28] sm:$0xf]
      %v4239 = vld [vmem:[%s4227 + $0x2c] sm:$0xf]
      %v4240 = vld [vmem:[%s4227 + $0x30] sm:$0xf]
      %v4241 = vld [vmem:[%s4227 + $0x34] sm:$0xf]
      %v4242 = vld [vmem:[%s4227 + $0x38] sm:$0xf]
      %v4243 = vld [vmem:[%s4227 + $0x3c] sm:$0xf]
      %v4260 = vunpack.c.l.b16 %v4228
      %v4261 = vunpack.c.l.b16 %v4229
      %v4262 = vunpack.c.l.b16 %v4230
      %v4263 = vunpack.c.l.b16 %v4231
      %v4264 = vunpack.c.l.b16 %v4232
      %v4265 = vunpack.c.l.b16 %v4233
      %v4266 = vunpack.c.l.b16 %v4234
      %v4267 = vunpack.c.l.b16 %v4235
      %v4268 = vunpack.c.l.b16 %v4236
      %v4269 = vunpack.c.l.b16 %v4237
      %v4270 = vunpack.c.l.b16 %v4238
      %v4271 = vunpack.c.l.b16 %v4239
      %v4272 = vunpack.c.l.b16 %v4240
      %v4273 = vunpack.c.l.b16 %v4241
      %v4274 = vunpack.c.l.b16 %v4242
      %v4275 = vunpack.c.l.b16 %v4243
      %v4276 = vpack.c.b16 %v4261, %v4260
      %v4277 = vpack.c.b16 %v4263, %v4262
      %v4278 = vpack.c.b16 %v4265, %v4264
      %v4279 = vpack.c.b16 %v4267, %v4266
      %v4280 = vpack.c.b16 %v4269, %v4268
      %v4281 = vpack.c.b16 %v4271, %v4270
      %v4282 = vpack.c.b16 %v4273, %v4272
      %v4283 = vpack.c.b16 %v4275, %v4274
      %4292 = vmatprep.subr.bf16.mxu0 0
      %4293 = vmatpush1.bf16.msra.mxu0 %v4276
      %4294 = vmatprep.subr.bf16.mxu0 0
      %4295 = vmatpush1.bf16.msra.mxu0 %v4277
      %4296 = vmatprep.subr.bf16.mxu0 0
      %4297 = vmatpush1.bf16.msra.mxu0 %v4278
      %4298 = vmatprep.subr.bf16.mxu0 0
      %4299 = vmatpush1.bf16.msra.mxu0 %v4279
      %4300 = vmatprep.subr.bf16.mxu0 0
      %4301 = vmatpush1.bf16.msra.mxu0 %v4280
      %4302 = vmatprep.subr.bf16.mxu0 0
      %4303 = vmatpush1.bf16.msra.mxu0 %v4281
      %4304 = vmatprep.subr.bf16.mxu0 0
      %4305 = vmatpush1.bf16.msra.mxu0 %v4282
      %4306 = vmatprep.subr.bf16.mxu0 0
      %4307 = vmatpush1.bf16.msra.mxu0 %v4283
      %4308 = vmatprep.subr.bf16.mxu0 0
      %4309 = vmatpush1.bf16.msra.mxu0 0
      %4310 = vmatprep.subr.bf16.mxu0 0
      %4311 = vmatpush1.bf16.msra.mxu0 0
      %4312 = vmatprep.subr.bf16.mxu0 0
      %4313 = vmatpush1.bf16.msra.mxu0 0
      %4314 = vmatprep.subr.bf16.mxu0 0
      %4315 = vmatpush1.bf16.msra.mxu0 0
      %4316 = vmatprep.subr.bf16.mxu0 0
      %4317 = vmatpush1.bf16.msra.mxu0 0
      %4318 = vmatprep.subr.bf16.mxu0 0
      %4319 = vmatpush1.bf16.msra.mxu0 0
      %4320 = vmatprep.subr.bf16.mxu0 0
      %4321 = vmatpush1.bf16.msra.mxu0 0
      %4322 = vmatprep.subr.bf16.mxu0 0
      %4323 = vmatpush1.bf16.msra.mxu0 0
      %4324 = vmatprep.mubr.bf16.mxu0 0
      %4325 = vmatmul.mubr.bf16.gmra.mrb[0].mxu0 %v4165
      %v4326 = vpop.f32.mrb[0].mxu0
      %v4327 = vadd.f32 0.0, %v4326
      %v4328 = vpop.f32.mrb[0].mxu0
      %v4329 = vpop.f32.mrb[0].mxu0
      %v4330 = vadd.f32 0.0, %v4329
      %v4331 = vpop.f32.mrb[0].mxu0
      %4332 = vmatprep.mubr.bf16.mxu0 0
      %4333 = vmatmul.mubr.bf16.gmra.mrb[0].mxu0 %v4168
      %v4334 = vpop.f32.mrb[0].mxu0
      %v4335 = vadd.f32 0.0, %v4334
      %v4336 = vpop.f32.mrb[0].mxu0
      %v4337 = vpop.f32.mrb[0].mxu0
      %v4338 = vadd.f32 0.0, %v4337
      %v4339 = vpop.f32.mrb[0].mxu0
      %4340 = vmatprep.mubr.bf16.mxu0 0
      %4341 = vmatmul.mubr.bf16.gmra.mrb[0].mxu0 %v4171
      %v4342 = vpop.f32.mrb[0].mxu0
      %v4343 = vadd.f32 0.0, %v4342
      %v4344 = vpop.f32.mrb[0].mxu0
      %v4345 = vpop.f32.mrb[0].mxu0
      %v4346 = vadd.f32 0.0, %v4345
      %v4347 = vpop.f32.mrb[0].mxu0
      %4348 = vmatprep.mubr.bf16.mxu0 0
      %4349 = vmatmul.mubr.bf16.gmra.mrb[0].mxu0 %v4174
      %v4350 = vpop.f32.mrb[0].mxu0
      %v4351 = vadd.f32 0.0, %v4350
      %v4352 = vpop.f32.mrb[0].mxu0
      %v4353 = vpop.f32.mrb[0].mxu0
      %v4354 = vadd.f32 0.0, %v4353
      %v4355 = vpop.f32.mrb[0].mxu0
      %4356 = vmatprep.mubr.bf16.mxu0 0
      %4357 = vmatmul.mubr.bf16.gmra.mrb[0].mxu0 %v4177
      %v4358 = vpop.f32.mrb[0].mxu0
      %v4359 = vadd.f32 0.0, %v4358
      %v4360 = vpop.f32.mrb[0].mxu0
      %v4361 = vpop.f32.mrb[0].mxu0
      %v4362 = vadd.f32 0.0, %v4361
      %v4363 = vpop.f32.mrb[0].mxu0
      %4364 = vmatprep.mubr.bf16.mxu0 0
      %4365 = vmatmul.mubr.bf16.gmra.mrb[0].mxu0 %v4180
      %v4366 = vpop.f32.mrb[0].mxu0
      %v4367 = vadd.f32 0.0, %v4366
      %v4368 = vpop.f32.mrb[0].mxu0
      %v4369 = vpop.f32.mrb[0].mxu0
      %v4370 = vadd.f32 0.0, %v4369
      %v4371 = vpop.f32.mrb[0].mxu0
      %4372 = vmatprep.mubr.bf16.mxu0 0
      %4373 = vmatmul.mubr.bf16.gmra.mrb[0].mxu0 %v4183
      %v4374 = vpop.f32.mrb[0].mxu0
      %v4375 = vadd.f32 0.0, %v4374
      %v4376 = vpop.f32.mrb[0].mxu0
      %v4377 = vpop.f32.mrb[0].mxu0
      %v4378 = vadd.f32 0.0, %v4377
      %v4379 = vpop.f32.mrb[0].mxu0
      %4380 = vmatprep.mubr.bf16.mxu0 0
      %4381 = vmatmul.mubr.bf16.gmra.mrb[0].mxu0 %v4186
      %v4382 = vpop.f32.mrb[0].mxu0
      %v4383 = vadd.f32 0.0, %v4382
      %v4384 = vpop.f32.mrb[0].mxu0
      %v4385 = vpop.f32.mrb[0].mxu0
      %v4386 = vadd.f32 0.0, %v4385
      %v4387 = vpop.f32.mrb[0].mxu0
      %4388 = vmatprep.mubr.bf16.mxu0 0
      %4389 = vmatmul.mubr.bf16.gmra.mrb[0].mxu0 %v4189
      %v4390 = vpop.f32.mrb[0].mxu0
      %v4391 = vadd.f32 0.0, %v4390
      %v4392 = vpop.f32.mrb[0].mxu0
      %v4393 = vpop.f32.mrb[0].mxu0
      %v4394 = vadd.f32 0.0, %v4393
      %v4395 = vpop.f32.mrb[0].mxu0
      %4396 = vmatprep.mubr.bf16.mxu0 0
      %4397 = vmatmul.mubr.bf16.gmra.mrb[0].mxu0 %v4192
      %v4398 = vpop.f32.mrb[0].mxu0
      %v4399 = vadd.f32 0.0, %v4398
      %v4400 = vpop.f32.mrb[0].mxu0
      %v4401 = vpop.f32.mrb[0].mxu0
      %v4402 = vadd.f32 0.0, %v4401
      %v4403 = vpop.f32.mrb[0].mxu0
      %4404 = vmatprep.mubr.bf16.mxu0 0
      %4405 = vmatmul.mubr.bf16.gmra.mrb[0].mxu0 %v4195
      %v4406 = vpop.f32.mrb[0].mxu0
      %v4407 = vadd.f32 0.0, %v4406
      %v4408 = vpop.f32.mrb[0].mxu0
      %v4409 = vpop.f32.mrb[0].mxu0
      %v4410 = vadd.f32 0.0, %v4409
      %v4411 = vpop.f32.mrb[0].mxu0
      %4412 = vmatprep.mubr.bf16.mxu0 0
      %4413 = vmatmul.mubr.bf16.gmra.mrb[0].mxu0 %v4198
      %v4414 = vpop.f32.mrb[0].mxu0
      %v4415 = vadd.f32 0.0, %v4414
      %v4416 = vpop.f32.mrb[0].mxu0
      %v4417 = vpop.f32.mrb[0].mxu0
      %v4418 = vadd.f32 0.0, %v4417
      %v4419 = vpop.f32.mrb[0].mxu0
      %4420 = vmatprep.mubr.bf16.mxu0 0
      %4421 = vmatmul.mubr.bf16.gmra.mrb[0].mxu0 %v4201
      %v4422 = vpop.f32.mrb[0].mxu0
      %v4423 = vadd.f32 0.0, %v4422
      %v4424 = vpop.f32.mrb[0].mxu0
      %v4425 = vpop.f32.mrb[0].mxu0
      %v4426 = vadd.f32 0.0, %v4425
      %v4427 = vpop.f32.mrb[0].mxu0
      %4428 = vmatprep.mubr.bf16.mxu0 0
      %4429 = vmatmul.mubr.bf16.gmra.mrb[0].mxu0 %v4204
      %v4430 = vpop.f32.mrb[0].mxu0
      %v4431 = vadd.f32 0.0, %v4430
      %v4432 = vpop.f32.mrb[0].mxu0
      %v4433 = vpop.f32.mrb[0].mxu0
      %v4434 = vadd.f32 0.0, %v4433
      %v4435 = vpop.f32.mrb[0].mxu0
      %4436 = vmatprep.mubr.bf16.mxu0 0
      %4437 = vmatmul.mubr.bf16.gmra.mrb[0].mxu0 %v4207
      %v4438 = vpop.f32.mrb[0].mxu0
      %v4439 = vadd.f32 0.0, %v4438
      %v4440 = vpop.f32.mrb[0].mxu0
      %v4441 = vpop.f32.mrb[0].mxu0
      %v4442 = vadd.f32 0.0, %v4441
      %v4443 = vpop.f32.mrb[0].mxu0
      %4444 = vmatprep.mubr.bf16.mxu0 0
      %4445 = vmatmul.mubr.bf16.gmra.mrb[0].mxu0 %v4210
      %v4446 = vpop.f32.mrb[0].mxu0
      %v4447 = vadd.f32 0.0, %v4446
      %v4448 = vpop.f32.mrb[0].mxu0
      %v4449 = vpop.f32.mrb[0].mxu0
      %v4450 = vadd.f32 0.0, %v4449
      %v4451 = vpop.f32.mrb[0].mxu0
      %4452 = vdwg.mxu0
      %v4453 = vadd.f32 %v4083, %v4327
      %v4454 = vadd.f32 %v4084, %v4330
      %v4455 = vadd.f32 %v4085, %v4335
      %v4456 = vadd.f32 %v4086, %v4338
      %v4457 = vadd.f32 %v4087, %v4343
      %v4458 = vadd.f32 %v4088, %v4346
      %v4459 = vadd.f32 %v4089, %v4351
      %v4460 = vadd.f32 %v4090, %v4354
      %v4461 = vadd.f32 %v4091, %v4359
      %v4462 = vadd.f32 %v4092, %v4362
      %v4463 = vadd.f32 %v4093, %v4367
      %v4464 = vadd.f32 %v4094, %v4370
      %v4465 = vadd.f32 %v4095, %v4375
      %v4466 = vadd.f32 %v4096, %v4378
      %v4467 = vadd.f32 %v4097, %v4383
      %v4468 = vadd.f32 %v4098, %v4386
      %v4469 = vadd.f32 %v4099, %v4391
      %v4470 = vadd.f32 %v4100, %v4394
      %v4471 = vadd.f32 %v4101, %v4399
      %v4472 = vadd.f32 %v4102, %v4402
      %v4473 = vadd.f32 %v4103, %v4407
      %v4474 = vadd.f32 %v4104, %v4410
      %v4475 = vadd.f32 %v4105, %v4415
      %v4476 = vadd.f32 %v4106, %v4418
      %v4477 = vadd.f32 %v4107, %v4423
      %v4478 = vadd.f32 %v4108, %v4426
      %v4479 = vadd.f32 %v4109, %v4431
      %v4480 = vadd.f32 %v4110, %v4434
      %v4481 = vadd.f32 %v4111, %v4439
      %v4482 = vadd.f32 %v4112, %v4442
      %v4483 = vadd.f32 %v4113, %v4447
      %v4484 = vadd.f32 %v4114, %v4450
      %v4485 = vld [vmem:[%s3536 + $0x8] sm:$0x1f]
      %v4486 = vld [vmem:[%s3536 + $0x18] sm:$0x1f]
      %v4487 = vld [vmem:[%s3536 + $0x28] sm:$0x1f]
      %v4488 = vld [vmem:[%s3536 + $0x38] sm:$0x1f]
      %v4489 = vld [vmem:[%s3536 + $0x48] sm:$0x1f]
      %v4490 = vld [vmem:[%s3536 + $0x58] sm:$0x1f]
      %v4491 = vld [vmem:[%s3536 + $0x68] sm:$0x1f]
      %v4492 = vld [vmem:[%s3536 + $0x78] sm:$0x1f]
      %v4493 = vld [vmem:[%s3536 + $0x88] sm:$0x1f]
      %v4494 = vld [vmem:[%s3536 + $0x98] sm:$0x1f]
      %v4495 = vld [vmem:[%s3536 + $0xa8] sm:$0x1f]
      %v4496 = vld [vmem:[%s3536 + $0xb8] sm:$0x1f]
      %v4497 = vld [vmem:[%s3536 + $0xc8] sm:$0x1f]
      %v4498 = vld [vmem:[%s3536 + $0xd8] sm:$0x1f]
      %v4499 = vld [vmem:[%s3536 + $0xe8] sm:$0x1f]
      %v4500 = vld [vmem:[%s3536 + $0xf8] sm:$0x1f]
      %v4502 = vshrl.u32 %v4115, 16
      %v4504 = vrot.slane %v4502, 4
      %v4505 = vshll.u32 %v4115, 16
      %v4507 = vrot.slane %v4505, 5
      %v4508 = vor.u32 %v4504, %v4507
      %v4510 = vshrl.u32 %v4485, 16
      %v4512 = vrot.slane %v4510, 4
      %v4513 = vshll.u32 %v4485, 16
      %v4515 = vrot.slane %v4513, 5
      %v4516 = vor.u32 %v4512, %v4515
      %v4517 = vsel %vm1479, %v4508, %v4516
      %v4519 = vshrl.u32 %v4116, 16
      %v4521 = vrot.slane %v4519, 4
      %v4522 = vshll.u32 %v4116, 16
      %v4524 = vrot.slane %v4522, 5
      %v4525 = vor.u32 %v4521, %v4524
      %v4527 = vshrl.u32 %v4486, 16
      %v4529 = vrot.slane %v4527, 4
      %v4530 = vshll.u32 %v4486, 16
      %v4532 = vrot.slane %v4530, 5
      %v4533 = vor.u32 %v4529, %v4532
      %v4534 = vsel %vm1479, %v4525, %v4533
      %v4536 = vshrl.u32 %v4117, 16
      %v4538 = vrot.slane %v4536, 4
      %v4539 = vshll.u32 %v4117, 16
      %v4541 = vrot.slane %v4539, 5
      %v4542 = vor.u32 %v4538, %v4541
      %v4544 = vshrl.u32 %v4487, 16
      %v4546 = vrot.slane %v4544, 4
      %v4547 = vshll.u32 %v4487, 16
      %v4549 = vrot.slane %v4547, 5
      %v4550 = vor.u32 %v4546, %v4549
      %v4551 = vsel %vm1479, %v4542, %v4550
      %v4553 = vshrl.u32 %v4118, 16
      %v4555 = vrot.slane %v4553, 4
      %v4556 = vshll.u32 %v4118, 16
      %v4558 = vrot.slane %v4556, 5
      %v4559 = vor.u32 %v4555, %v4558
      %v4561 = vshrl.u32 %v4488, 16
      %v4563 = vrot.slane %v4561, 4
      %v4564 = vshll.u32 %v4488, 16
      %v4566 = vrot.slane %v4564, 5
      %v4567 = vor.u32 %v4563, %v4566
      %v4568 = vsel %vm1479, %v4559, %v4567
      %v4570 = vshrl.u32 %v4119, 16
      %v4572 = vrot.slane %v4570, 4
      %v4573 = vshll.u32 %v4119, 16
      %v4575 = vrot.slane %v4573, 5
      %v4576 = vor.u32 %v4572, %v4575
      %v4578 = vshrl.u32 %v4489, 16
      %v4580 = vrot.slane %v4578, 4
      %v4581 = vshll.u32 %v4489, 16
      %v4583 = vrot.slane %v4581, 5
      %v4584 = vor.u32 %v4580, %v4583
      %v4585 = vsel %vm1479, %v4576, %v4584
      %v4587 = vshrl.u32 %v4120, 16
      %v4589 = vrot.slane %v4587, 4
      %v4590 = vshll.u32 %v4120, 16
      %v4592 = vrot.slane %v4590, 5
      %v4593 = vor.u32 %v4589, %v4592
      %v4595 = vshrl.u32 %v4490, 16
      %v4597 = vrot.slane %v4595, 4
      %v4598 = vshll.u32 %v4490, 16
      %v4600 = vrot.slane %v4598, 5
      %v4601 = vor.u32 %v4597, %v4600
      %v4602 = vsel %vm1479, %v4593, %v4601
      %v4604 = vshrl.u32 %v4121, 16
      %v4606 = vrot.slane %v4604, 4
      %v4607 = vshll.u32 %v4121, 16
      %v4609 = vrot.slane %v4607, 5
      %v4610 = vor.u32 %v4606, %v4609
      %v4612 = vshrl.u32 %v4491, 16
      %v4614 = vrot.slane %v4612, 4
      %v4615 = vshll.u32 %v4491, 16
      %v4617 = vrot.slane %v4615, 5
      %v4618 = vor.u32 %v4614, %v4617
      %v4619 = vsel %vm1479, %v4610, %v4618
      %v4621 = vshrl.u32 %v4122, 16
      %v4623 = vrot.slane %v4621, 4
      %v4624 = vshll.u32 %v4122, 16
      %v4626 = vrot.slane %v4624, 5
      %v4627 = vor.u32 %v4623, %v4626
      %v4629 = vshrl.u32 %v4492, 16
      %v4631 = vrot.slane %v4629, 4
      %v4632 = vshll.u32 %v4492, 16
      %v4634 = vrot.slane %v4632, 5
      %v4635 = vor.u32 %v4631, %v4634
      %v4636 = vsel %vm1479, %v4627, %v4635
      %v4638 = vshrl.u32 %v4123, 16
      %v4640 = vrot.slane %v4638, 4
      %v4641 = vshll.u32 %v4123, 16
      %v4643 = vrot.slane %v4641, 5
      %v4644 = vor.u32 %v4640, %v4643
      %v4646 = vshrl.u32 %v4493, 16
      %v4648 = vrot.slane %v4646, 4
      %v4649 = vshll.u32 %v4493, 16
      %v4651 = vrot.slane %v4649, 5
      %v4652 = vor.u32 %v4648, %v4651
      %v4653 = vsel %vm1479, %v4644, %v4652
      %v4655 = vshrl.u32 %v4124, 16
      %v4657 = vrot.slane %v4655, 4
      %v4658 = vshll.u32 %v4124, 16
      %v4660 = vrot.slane %v4658, 5
      %v4661 = vor.u32 %v4657, %v4660
      %v4663 = vshrl.u32 %v4494, 16
      %v4665 = vrot.slane %v4663, 4
      %v4666 = vshll.u32 %v4494, 16
      %v4668 = vrot.slane %v4666, 5
      %v4669 = vor.u32 %v4665, %v4668
      %v4670 = vsel %vm1479, %v4661, %v4669
      %v4672 = vshrl.u32 %v4125, 16
      %v4674 = vrot.slane %v4672, 4
      %v4675 = vshll.u32 %v4125, 16
      %v4677 = vrot.slane %v4675, 5
      %v4678 = vor.u32 %v4674, %v4677
      %v4680 = vshrl.u32 %v4495, 16
      %v4682 = vrot.slane %v4680, 4
      %v4683 = vshll.u32 %v4495, 16
      %v4685 = vrot.slane %v4683, 5
      %v4686 = vor.u32 %v4682, %v4685
      %v4687 = vsel %vm1479, %v4678, %v4686
      %v4689 = vshrl.u32 %v4126, 16
      %v4691 = vrot.slane %v4689, 4
      %v4692 = vshll.u32 %v4126, 16
      %v4694 = vrot.slane %v4692, 5
      %v4695 = vor.u32 %v4691, %v4694
      %v4697 = vshrl.u32 %v4496, 16
      %v4699 = vrot.slane %v4697, 4
      %v4700 = vshll.u32 %v4496, 16
      %v4702 = vrot.slane %v4700, 5
      %v4703 = vor.u32 %v4699, %v4702
      %v4704 = vsel %vm1479, %v4695, %v4703
      %v4706 = vshrl.u32 %v4127, 16
      %v4708 = vrot.slane %v4706, 4
      %v4709 = vshll.u32 %v4127, 16
      %v4711 = vrot.slane %v4709, 5
      %v4712 = vor.u32 %v4708, %v4711
      %v4714 = vshrl.u32 %v4497, 16
      %v4716 = vrot.slane %v4714, 4
      %v4717 = vshll.u32 %v4497, 16
      %v4719 = vrot.slane %v4717, 5
      %v4720 = vor.u32 %v4716, %v4719
      %v4721 = vsel %vm1479, %v4712, %v4720
      %v4723 = vshrl.u32 %v4128, 16
      %v4725 = vrot.slane %v4723, 4
      %v4726 = vshll.u32 %v4128, 16
      %v4728 = vrot.slane %v4726, 5
      %v4729 = vor.u32 %v4725, %v4728
      %v4731 = vshrl.u32 %v4498, 16
      %v4733 = vrot.slane %v4731, 4
      %v4734 = vshll.u32 %v4498, 16
      %v4736 = vrot.slane %v4734, 5
      %v4737 = vor.u32 %v4733, %v4736
      %v4738 = vsel %vm1479, %v4729, %v4737
      %v4740 = vshrl.u32 %v4129, 16
      %v4742 = vrot.slane %v4740, 4
      %v4743 = vshll.u32 %v4129, 16
      %v4745 = vrot.slane %v4743, 5
      %v4746 = vor.u32 %v4742, %v4745
      %v4748 = vshrl.u32 %v4499, 16
      %v4750 = vrot.slane %v4748, 4
      %v4751 = vshll.u32 %v4499, 16
      %v4753 = vrot.slane %v4751, 5
      %v4754 = vor.u32 %v4750, %v4753
      %v4755 = vsel %vm1479, %v4746, %v4754
      %v4757 = vshrl.u32 %v4130, 16
      %v4759 = vrot.slane %v4757, 4
      %v4760 = vshll.u32 %v4130, 16
      %v4762 = vrot.slane %v4760, 5
      %v4763 = vor.u32 %v4759, %v4762
      %v4765 = vshrl.u32 %v4500, 16
      %v4767 = vrot.slane %v4765, 4
      %v4768 = vshll.u32 %v4500, 16
      %v4770 = vrot.slane %v4768, 5
      %v4771 = vor.u32 %v4767, %v4770
      %v4772 = vsel %vm1479, %v4763, %v4771
      %s4789 = scalar_lea.vmem %s3, 512
      %v4790 = vld [vmem:[%s4789] sm:$0xf]
      %v4791 = vld [vmem:[%s4789 + $0x4] sm:$0xf]
      %v4792 = vld [vmem:[%s4789 + $0x8] sm:$0xf]
      %v4793 = vld [vmem:[%s4789 + $0xc] sm:$0xf]
      %v4794 = vld [vmem:[%s4789 + $0x10] sm:$0xf]
      %v4795 = vld [vmem:[%s4789 + $0x14] sm:$0xf]
      %v4796 = vld [vmem:[%s4789 + $0x18] sm:$0xf]
      %v4797 = vld [vmem:[%s4789 + $0x1c] sm:$0xf]
      %v4798 = vld [vmem:[%s4789 + $0x20] sm:$0xf]
      %v4799 = vld [vmem:[%s4789 + $0x24] sm:$0xf]
      %v4800 = vld [vmem:[%s4789 + $0x28] sm:$0xf]
      %v4801 = vld [vmem:[%s4789 + $0x2c] sm:$0xf]
      %v4802 = vld [vmem:[%s4789 + $0x30] sm:$0xf]
      %v4803 = vld [vmem:[%s4789 + $0x34] sm:$0xf]
      %v4804 = vld [vmem:[%s4789 + $0x38] sm:$0xf]
      %v4805 = vld [vmem:[%s4789 + $0x3c] sm:$0xf]
      %v4822 = vunpack.c.l.b16 %v4790
      %v4823 = vunpack.c.l.b16 %v4791
      %v4824 = vunpack.c.l.b16 %v4792
      %v4825 = vunpack.c.l.b16 %v4793
      %v4826 = vunpack.c.l.b16 %v4794
      %v4827 = vunpack.c.l.b16 %v4795
      %v4828 = vunpack.c.l.b16 %v4796
      %v4829 = vunpack.c.l.b16 %v4797
      %v4830 = vunpack.c.l.b16 %v4798
      %v4831 = vunpack.c.l.b16 %v4799
      %v4832 = vunpack.c.l.b16 %v4800
      %v4833 = vunpack.c.l.b16 %v4801
      %v4834 = vunpack.c.l.b16 %v4802
      %v4835 = vunpack.c.l.b16 %v4803
      %v4836 = vunpack.c.l.b16 %v4804
      %v4837 = vunpack.c.l.b16 %v4805
      %v4838 = vpack.c.b16 %v4823, %v4822
      %v4839 = vpack.c.b16 %v4825, %v4824
      %v4840 = vpack.c.b16 %v4827, %v4826
      %v4841 = vpack.c.b16 %v4829, %v4828
      %v4842 = vpack.c.b16 %v4831, %v4830
      %v4843 = vpack.c.b16 %v4833, %v4832
      %v4844 = vpack.c.b16 %v4835, %v4834
      %v4845 = vpack.c.b16 %v4837, %v4836
      %4854 = vmatprep.subr.bf16.mxu0 0
      %4855 = vmatpush1.bf16.msra.mxu0 %v4838
      %4856 = vmatprep.subr.bf16.mxu0 0
      %4857 = vmatpush1.bf16.msra.mxu0 %v4839
      %4858 = vmatprep.subr.bf16.mxu0 0
      %4859 = vmatpush1.bf16.msra.mxu0 %v4840
      %4860 = vmatprep.subr.bf16.mxu0 0
      %4861 = vmatpush1.bf16.msra.mxu0 %v4841
      %4862 = vmatprep.subr.bf16.mxu0 0
      %4863 = vmatpush1.bf16.msra.mxu0 %v4842
      %4864 = vmatprep.subr.bf16.mxu0 0
      %4865 = vmatpush1.bf16.msra.mxu0 %v4843
      %4866 = vmatprep.subr.bf16.mxu0 0
      %4867 = vmatpush1.bf16.msra.mxu0 %v4844
      %4868 = vmatprep.subr.bf16.mxu0 0
      %4869 = vmatpush1.bf16.msra.mxu0 %v4845
      %4870 = vmatprep.subr.bf16.mxu0 0
      %4871 = vmatpush1.bf16.msra.mxu0 0
      %4872 = vmatprep.subr.bf16.mxu0 0
      %4873 = vmatpush1.bf16.msra.mxu0 0
      %4874 = vmatprep.subr.bf16.mxu0 0
      %4875 = vmatpush1.bf16.msra.mxu0 0
      %4876 = vmatprep.subr.bf16.mxu0 0
      %4877 = vmatpush1.bf16.msra.mxu0 0
      %4878 = vmatprep.subr.bf16.mxu0 0
      %4879 = vmatpush1.bf16.msra.mxu0 0
      %4880 = vmatprep.subr.bf16.mxu0 0
      %4881 = vmatpush1.bf16.msra.mxu0 0
      %4882 = vmatprep.subr.bf16.mxu0 0
      %4883 = vmatpush1.bf16.msra.mxu0 0
      %4884 = vmatprep.subr.bf16.mxu0 0
      %4885 = vmatpush1.bf16.msra.mxu0 0
      %4886 = vmatprep.mubr.bf16.mxu0 0
      %4887 = vmatmul.mubr.bf16.gmra.mrb[0].mxu0 %v4517
      %v4888 = vpop.f32.mrb[0].mxu0
      %v4889 = vadd.f32 0.0, %v4888
      %v4890 = vpop.f32.mrb[0].mxu0
      %v4891 = vpop.f32.mrb[0].mxu0
      %v4892 = vadd.f32 0.0, %v4891
      %v4893 = vpop.f32.mrb[0].mxu0
      %4894 = vmatprep.mubr.bf16.mxu0 0
      %4895 = vmatmul.mubr.bf16.gmra.mrb[0].mxu0 %v4534
      %v4896 = vpop.f32.mrb[0].mxu0
      %v4897 = vadd.f32 0.0, %v4896
      %v4898 = vpop.f32.mrb[0].mxu0
      %v4899 = vpop.f32.mrb[0].mxu0
      %v4900 = vadd.f32 0.0, %v4899
      %v4901 = vpop.f32.mrb[0].mxu0
      %4902 = vmatprep.mubr.bf16.mxu0 0
      %4903 = vmatmul.mubr.bf16.gmra.mrb[0].mxu0 %v4551
      %v4904 = vpop.f32.mrb[0].mxu0
      %v4905 = vadd.f32 0.0, %v4904
      %v4906 = vpop.f32.mrb[0].mxu0
      %v4907 = vpop.f32.mrb[0].mxu0
      %v4908 = vadd.f32 0.0, %v4907
      %v4909 = vpop.f32.mrb[0].mxu0
      %4910 = vmatprep.mubr.bf16.mxu0 0
      %4911 = vmatmul.mubr.bf16.gmra.mrb[0].mxu0 %v4568
      %v4912 = vpop.f32.mrb[0].mxu0
      %v4913 = vadd.f32 0.0, %v4912
      %v4914 = vpop.f32.mrb[0].mxu0
      %v4915 = vpop.f32.mrb[0].mxu0
      %v4916 = vadd.f32 0.0, %v4915
      %v4917 = vpop.f32.mrb[0].mxu0
      %4918 = vmatprep.mubr.bf16.mxu0 0
      %4919 = vmatmul.mubr.bf16.gmra.mrb[0].mxu0 %v4585
      %v4920 = vpop.f32.mrb[0].mxu0
      %v4921 = vadd.f32 0.0, %v4920
      %v4922 = vpop.f32.mrb[0].mxu0
      %v4923 = vpop.f32.mrb[0].mxu0
      %v4924 = vadd.f32 0.0, %v4923
      %v4925 = vpop.f32.mrb[0].mxu0
      %4926 = vmatprep.mubr.bf16.mxu0 0
      %4927 = vmatmul.mubr.bf16.gmra.mrb[0].mxu0 %v4602
      %v4928 = vpop.f32.mrb[0].mxu0
      %v4929 = vadd.f32 0.0, %v4928
      %v4930 = vpop.f32.mrb[0].mxu0
      %v4931 = vpop.f32.mrb[0].mxu0
      %v4932 = vadd.f32 0.0, %v4931
      %v4933 = vpop.f32.mrb[0].mxu0
      %4934 = vmatprep.mubr.bf16.mxu0 0
      %4935 = vmatmul.mubr.bf16.gmra.mrb[0].mxu0 %v4619
      %v4936 = vpop.f32.mrb[0].mxu0
      %v4937 = vadd.f32 0.0, %v4936
      %v4938 = vpop.f32.mrb[0].mxu0
      %v4939 = vpop.f32.mrb[0].mxu0
      %v4940 = vadd.f32 0.0, %v4939
      %v4941 = vpop.f32.mrb[0].mxu0
      %4942 = vmatprep.mubr.bf16.mxu0 0
      %4943 = vmatmul.mubr.bf16.gmra.mrb[0].mxu0 %v4636
      %v4944 = vpop.f32.mrb[0].mxu0
      %v4945 = vadd.f32 0.0, %v4944
      %v4946 = vpop.f32.mrb[0].mxu0
      %v4947 = vpop.f32.mrb[0].mxu0
      %v4948 = vadd.f32 0.0, %v4947
      %v4949 = vpop.f32.mrb[0].mxu0
      %4950 = vmatprep.mubr.bf16.mxu0 0
      %4951 = vmatmul.mubr.bf16.gmra.mrb[0].mxu0 %v4653
      %v4952 = vpop.f32.mrb[0].mxu0
      %v4953 = vadd.f32 0.0, %v4952
      %v4954 = vpop.f32.mrb[0].mxu0
      %v4955 = vpop.f32.mrb[0].mxu0
      %v4956 = vadd.f32 0.0, %v4955
      %v4957 = vpop.f32.mrb[0].mxu0
      %4958 = vmatprep.mubr.bf16.mxu0 0
      %4959 = vmatmul.mubr.bf16.gmra.mrb[0].mxu0 %v4670
      %v4960 = vpop.f32.mrb[0].mxu0
      %v4961 = vadd.f32 0.0, %v4960
      %v4962 = vpop.f32.mrb[0].mxu0
      %v4963 = vpop.f32.mrb[0].mxu0
      %v4964 = vadd.f32 0.0, %v4963
      %v4965 = vpop.f32.mrb[0].mxu0
      %4966 = vmatprep.mubr.bf16.mxu0 0
      %4967 = vmatmul.mubr.bf16.gmra.mrb[0].mxu0 %v4687
      %v4968 = vpop.f32.mrb[0].mxu0
      %v4969 = vadd.f32 0.0, %v4968
      %v4970 = vpop.f32.mrb[0].mxu0
      %v4971 = vpop.f32.mrb[0].mxu0
      %v4972 = vadd.f32 0.0, %v4971
      %v4973 = vpop.f32.mrb[0].mxu0
      %4974 = vmatprep.mubr.bf16.mxu0 0
      %4975 = vmatmul.mubr.bf16.gmra.mrb[0].mxu0 %v4704
      %v4976 = vpop.f32.mrb[0].mxu0
      %v4977 = vadd.f32 0.0, %v4976
      %v4978 = vpop.f32.mrb[0].mxu0
      %v4979 = vpop.f32.mrb[0].mxu0
      %v4980 = vadd.f32 0.0, %v4979
      %v4981 = vpop.f32.mrb[0].mxu0
      %4982 = vmatprep.mubr.bf16.mxu0 0
      %4983 = vmatmul.mubr.bf16.gmra.mrb[0].mxu0 %v4721
      %v4984 = vpop.f32.mrb[0].mxu0
      %v4985 = vadd.f32 0.0, %v4984
      %v4986 = vpop.f32.mrb[0].mxu0
      %v4987 = vpop.f32.mrb[0].mxu0
      %v4988 = vadd.f32 0.0, %v4987
      %v4989 = vpop.f32.mrb[0].mxu0
      %4990 = vmatprep.mubr.bf16.mxu0 0
      %4991 = vmatmul.mubr.bf16.gmra.mrb[0].mxu0 %v4738
      %v4992 = vpop.f32.mrb[0].mxu0
      %v4993 = vadd.f32 0.0, %v4992
      %v4994 = vpop.f32.mrb[0].mxu0
      %v4995 = vpop.f32.mrb[0].mxu0
      %v4996 = vadd.f32 0.0, %v4995
      %v4997 = vpop.f32.mrb[0].mxu0
      %4998 = vmatprep.mubr.bf16.mxu0 0
      %4999 = vmatmul.mubr.bf16.gmra.mrb[0].mxu0 %v4755
      %v5000 = vpop.f32.mrb[0].mxu0
      %v5001 = vadd.f32 0.0, %v5000
      %v5002 = vpop.f32.mrb[0].mxu0
      %v5003 = vpop.f32.mrb[0].mxu0
      %v5004 = vadd.f32 0.0, %v5003
      %v5005 = vpop.f32.mrb[0].mxu0
      %5006 = vmatprep.mubr.bf16.mxu0 0
      %5007 = vmatmul.mubr.bf16.gmra.mrb[0].mxu0 %v4772
      %v5008 = vpop.f32.mrb[0].mxu0
      %v5009 = vadd.f32 0.0, %v5008
      %v5010 = vpop.f32.mrb[0].mxu0
      %v5011 = vpop.f32.mrb[0].mxu0
      %v5012 = vadd.f32 0.0, %v5011
      %v5013 = vpop.f32.mrb[0].mxu0
      %5014 = vdwg.mxu0
      %v5015 = vadd.f32 %v4453, %v4889
      %v5016 = vadd.f32 %v4454, %v4892
      %v5017 = vadd.f32 %v4455, %v4897
      %v5018 = vadd.f32 %v4456, %v4900
      %v5019 = vadd.f32 %v4457, %v4905
      %v5020 = vadd.f32 %v4458, %v4908
      %v5021 = vadd.f32 %v4459, %v4913
      %v5022 = vadd.f32 %v4460, %v4916
      %v5023 = vadd.f32 %v4461, %v4921
      %v5024 = vadd.f32 %v4462, %v4924
      %v5025 = vadd.f32 %v4463, %v4929
      %v5026 = vadd.f32 %v4464, %v4932
      %v5027 = vadd.f32 %v4465, %v4937
      %v5028 = vadd.f32 %v4466, %v4940
      %v5029 = vadd.f32 %v4467, %v4945
      %v5030 = vadd.f32 %v4468, %v4948
      %v5031 = vadd.f32 %v4469, %v4953
      %v5032 = vadd.f32 %v4470, %v4956
      %v5033 = vadd.f32 %v4471, %v4961
      %v5034 = vadd.f32 %v4472, %v4964
      %v5035 = vadd.f32 %v4473, %v4969
      %v5036 = vadd.f32 %v4474, %v4972
      %v5037 = vadd.f32 %v4475, %v4977
      %v5038 = vadd.f32 %v4476, %v4980
      %v5039 = vadd.f32 %v4477, %v4985
      %v5040 = vadd.f32 %v4478, %v4988
      %v5041 = vadd.f32 %v4479, %v4993
      %v5042 = vadd.f32 %v4480, %v4996
      %v5043 = vadd.f32 %v4481, %v5001
      %v5044 = vadd.f32 %v4482, %v5004
      %v5045 = vadd.f32 %v4483, %v5009
      %v5046 = vadd.f32 %v4484, %v5012
      %v5047 = vpack.c.bf16 %v5016, %v5015
      %v5048 = vpack.c.bf16 %v5018, %v5017
      %v5049 = vpack.c.bf16 %v5020, %v5019
      %v5050 = vpack.c.bf16 %v5022, %v5021
      %v5051 = vpack.c.bf16 %v5024, %v5023
      %v5052 = vpack.c.bf16 %v5026, %v5025
      %v5053 = vpack.c.bf16 %v5028, %v5027
      %v5054 = vpack.c.bf16 %v5030, %v5029
      %v5055 = vpack.c.bf16 %v5032, %v5031
      %v5056 = vpack.c.bf16 %v5034, %v5033
      %v5057 = vpack.c.bf16 %v5036, %v5035
      %v5058 = vpack.c.bf16 %v5038, %v5037
      %v5059 = vpack.c.bf16 %v5040, %v5039
      %v5060 = vpack.c.bf16 %v5042, %v5041
      %v5061 = vpack.c.bf16 %v5044, %v5043
      %v5062 = vpack.c.bf16 %v5046, %v5045
      %v5079 = vunpack.c.l.b16 %v5047
      %v5080 = vunpack.c.h.b16 %v5047
      %v5081 = vunpack.c.l.b16 %v5048
      %v5082 = vunpack.c.h.b16 %v5048
      %v5083 = vunpack.c.l.b16 %v5049
      %v5084 = vunpack.c.h.b16 %v5049
      %v5085 = vunpack.c.l.b16 %v5050
      %v5086 = vunpack.c.h.b16 %v5050
      %v5087 = vunpack.c.l.b16 %v5051
      %v5088 = vunpack.c.h.b16 %v5051
      %v5089 = vunpack.c.l.b16 %v5052
      %v5090 = vunpack.c.h.b16 %v5052
      %v5091 = vunpack.c.l.b16 %v5053
      %v5092 = vunpack.c.h.b16 %v5053
      %v5093 = vunpack.c.l.b16 %v5054
      %v5094 = vunpack.c.h.b16 %v5054
      %v5095 = vunpack.c.l.b16 %v5055
      %v5096 = vunpack.c.h.b16 %v5055
      %v5097 = vunpack.c.l.b16 %v5056
      %v5098 = vunpack.c.h.b16 %v5056
      %v5099 = vunpack.c.l.b16 %v5057
      %v5100 = vunpack.c.h.b16 %v5057
      %v5101 = vunpack.c.l.b16 %v5058
      %v5102 = vunpack.c.h.b16 %v5058
      %v5103 = vunpack.c.l.b16 %v5059
      %v5104 = vunpack.c.h.b16 %v5059
      %v5105 = vunpack.c.l.b16 %v5060
      %v5106 = vunpack.c.h.b16 %v5060
      %v5107 = vunpack.c.l.b16 %v5061
      %v5108 = vunpack.c.h.b16 %v5061
      %v5109 = vunpack.c.l.b16 %v5062
      %v5110 = vunpack.c.h.b16 %v5062
      %v5111 = vpack.c.b16 %v5079, %v5079
      %v5112 = vpack.c.b16 %v5080, %v5080
      %v5113 = vpack.c.b16 %v5081, %v5081
      %v5114 = vpack.c.b16 %v5082, %v5082
      %v5115 = vpack.c.b16 %v5083, %v5083
      %v5116 = vpack.c.b16 %v5084, %v5084
      %v5117 = vpack.c.b16 %v5085, %v5085
      %v5118 = vpack.c.b16 %v5086, %v5086
      %v5119 = vpack.c.b16 %v5087, %v5087
      %v5120 = vpack.c.b16 %v5088, %v5088
      %v5121 = vpack.c.b16 %v5089, %v5089
      %v5122 = vpack.c.b16 %v5090, %v5090
      %v5123 = vpack.c.b16 %v5091, %v5091
      %v5124 = vpack.c.b16 %v5092, %v5092
      %v5125 = vpack.c.b16 %v5093, %v5093
      %v5126 = vpack.c.b16 %v5094, %v5094
      %v5127 = vpack.c.b16 %v5095, %v5095
      %v5128 = vpack.c.b16 %v5096, %v5096
      %v5129 = vpack.c.b16 %v5097, %v5097
      %v5130 = vpack.c.b16 %v5098, %v5098
      %v5131 = vpack.c.b16 %v5099, %v5099
      %v5132 = vpack.c.b16 %v5100, %v5100
      %v5133 = vpack.c.b16 %v5101, %v5101
      %v5134 = vpack.c.b16 %v5102, %v5102
      %v5135 = vpack.c.b16 %v5103, %v5103
      %v5136 = vpack.c.b16 %v5104, %v5104
      %v5137 = vpack.c.b16 %v5105, %v5105
      %v5138 = vpack.c.b16 %v5106, %v5106
      %v5139 = vpack.c.b16 %v5107, %v5107
      %v5140 = vpack.c.b16 %v5108, %v5108
      %v5141 = vpack.c.b16 %v5109, %v5109
      %v5142 = vpack.c.b16 %v5110, %v5110
      %5175 = vst [vmem:[%s262] sm:$0xf] %v5111
      %5176 = vst [vmem:[%s262 + $0x4] sm:$0xf] %v5112
      %5177 = vst [vmem:[%s262 + $0x8] sm:$0xf] %v5113
      %5178 = vst [vmem:[%s262 + $0xc] sm:$0xf] %v5114
      %5179 = vst [vmem:[%s262 + $0x10] sm:$0xf] %v5115
      %5180 = vst [vmem:[%s262 + $0x14] sm:$0xf] %v5116
      %5181 = vst [vmem:[%s262 + $0x18] sm:$0xf] %v5117
      %5182 = vst [vmem:[%s262 + $0x1c] sm:$0xf] %v5118
      %5183 = vst [vmem:[%s262 + $0x20] sm:$0xf] %v5119
      %5184 = vst [vmem:[%s262 + $0x24] sm:$0xf] %v5120
      %5185 = vst [vmem:[%s262 + $0x28] sm:$0xf] %v5121
      %5186 = vst [vmem:[%s262 + $0x2c] sm:$0xf] %v5122
      %5187 = vst [vmem:[%s262 + $0x30] sm:$0xf] %v5123
      %5188 = vst [vmem:[%s262 + $0x34] sm:$0xf] %v5124
      %5189 = vst [vmem:[%s262 + $0x38] sm:$0xf] %v5125
      %5190 = vst [vmem:[%s262 + $0x3c] sm:$0xf] %v5126
      %5191 = vst [vmem:[%s262 + $0x40] sm:$0xf] %v5127
      %5192 = vst [vmem:[%s262 + $0x44] sm:$0xf] %v5128
      %5193 = vst [vmem:[%s262 + $0x48] sm:$0xf] %v5129
      %5194 = vst [vmem:[%s262 + $0x4c] sm:$0xf] %v5130
      %5195 = vst [vmem:[%s262 + $0x50] sm:$0xf] %v5131
      %5196 = vst [vmem:[%s262 + $0x54] sm:$0xf] %v5132
      %5197 = vst [vmem:[%s262 + $0x58] sm:$0xf] %v5133
      %5198 = vst [vmem:[%s262 + $0x5c] sm:$0xf] %v5134
      %5199 = vst [vmem:[%s262 + $0x60] sm:$0xf] %v5135
      %5200 = vst [vmem:[%s262 + $0x64] sm:$0xf] %v5136
      %5201 = vst [vmem:[%s262 + $0x68] sm:$0xf] %v5137
      %5202 = vst [vmem:[%s262 + $0x6c] sm:$0xf] %v5138
      %5203 = vst [vmem:[%s262 + $0x70] sm:$0xf] %v5139
      %5204 = vst [vmem:[%s262 + $0x74] sm:$0xf] %v5140
      %5205 = vst [vmem:[%s262 + $0x78] sm:$0xf] %v5141
      %5206 = vst [vmem:[%s262 + $0x7c] sm:$0xf] %v5142
      %v5207 = vadd.f32 %v5015, %v5016
      %v5208 = vadd.f32 %v5207, %v5017
      %v5209 = vadd.f32 %v5208, %v5018
      %v5210 = vadd.f32 %v5209, %v5019
      %v5211 = vadd.f32 %v5210, %v5020
      %v5212 = vadd.f32 %v5211, %v5021
      %v5213 = vadd.f32 %v5212, %v5022
      %v5214 = vadd.f32 %v5213, %v5023
      %v5215 = vadd.f32 %v5214, %v5024
      %v5216 = vadd.f32 %v5215, %v5025
      %v5217 = vadd.f32 %v5216, %v5026
      %v5218 = vadd.f32 %v5217, %v5027
      %v5219 = vadd.f32 %v5218, %v5028
      %v5220 = vadd.f32 %v5219, %v5029
      %v5221 = vadd.f32 %v5220, %v5030
      %v5222 = vadd.f32 %v5221, %v5031
      %v5223 = vadd.f32 %v5222, %v5032
      %v5224 = vadd.f32 %v5223, %v5033
      %v5225 = vadd.f32 %v5224, %v5034
      %v5226 = vadd.f32 %v5225, %v5035
      %v5227 = vadd.f32 %v5226, %v5036
      %v5228 = vadd.f32 %v5227, %v5037
      %v5229 = vadd.f32 %v5228, %v5038
      %v5230 = vadd.f32 %v5229, %v5039
      %v5231 = vadd.f32 %v5230, %v5040
      %v5232 = vadd.f32 %v5231, %v5041
      %v5233 = vadd.f32 %v5232, %v5042
      %v5234 = vadd.f32 %v5233, %v5043
      %v5235 = vadd.f32 %v5234, %v5044
      %v5236 = vadd.f32 %v5235, %v5045
      %v5237 = vadd.f32 %v5236, %v5046
      %v5238 = vrot.slane %v5237, 4
      %v5239 = vadd.f32 %v5237, %v5238
      %v5240 = vrot.slane %v5239, 2
      %v5241 = vadd.f32 %v5239, %v5240
      %v5242 = vrot.slane %v5241, 1
      %v5243 = vadd.f32 %v5241, %v5242
      %5244 = vst [vmem:[%s265] sm:$0x1] %v5243
      %v5245 = vmul.f32 %v5015, %v5015
      %v5246 = vmul.f32 %v5016, %v5016
      %v5247 = vmul.f32 %v5017, %v5017
      %v5248 = vmul.f32 %v5018, %v5018
      %v5249 = vmul.f32 %v5019, %v5019
      %v5250 = vmul.f32 %v5020, %v5020
      %v5251 = vmul.f32 %v5021, %v5021
      %v5252 = vmul.f32 %v5022, %v5022
      %v5253 = vmul.f32 %v5023, %v5023
      %v5254 = vmul.f32 %v5024, %v5024
      %v5255 = vmul.f32 %v5025, %v5025
      %v5256 = vmul.f32 %v5026, %v5026
      %v5257 = vmul.f32 %v5027, %v5027
      %v5258 = vmul.f32 %v5028, %v5028
      %v5259 = vmul.f32 %v5029, %v5029
      %v5260 = vmul.f32 %v5030, %v5030
      %v5261 = vmul.f32 %v5031, %v5031
      %v5262 = vmul.f32 %v5032, %v5032
      %v5263 = vmul.f32 %v5033, %v5033
      %v5264 = vmul.f32 %v5034, %v5034
      %v5265 = vmul.f32 %v5035, %v5035
      %v5266 = vmul.f32 %v5036, %v5036
      %v5267 = vmul.f32 %v5037, %v5037
      %v5268 = vmul.f32 %v5038, %v5038
      %v5269 = vmul.f32 %v5039, %v5039
      %v5270 = vmul.f32 %v5040, %v5040
      %v5271 = vmul.f32 %v5041, %v5041
      %v5272 = vmul.f32 %v5042, %v5042
      %v5273 = vmul.f32 %v5043, %v5043
      %v5274 = vmul.f32 %v5044, %v5044
      %v5275 = vmul.f32 %v5045, %v5045
      %v5276 = vmul.f32 %v5046, %v5046
      %v5277 = vadd.f32 %v5245, %v5246
      %v5278 = vadd.f32 %v5277, %v5247
      %v5279 = vadd.f32 %v5278, %v5248
      %v5280 = vadd.f32 %v5279, %v5249
      %v5281 = vadd.f32 %v5280, %v5250
      %v5282 = vadd.f32 %v5281, %v5251
      %v5283 = vadd.f32 %v5282, %v5252
      %v5284 = vadd.f32 %v5283, %v5253
      %v5285 = vadd.f32 %v5284, %v5254
      %v5286 = vadd.f32 %v5285, %v5255
      %v5287 = vadd.f32 %v5286, %v5256
      %v5288 = vadd.f32 %v5287, %v5257
      %v5289 = vadd.f32 %v5288, %v5258
      %v5290 = vadd.f32 %v5289, %v5259
      %v5291 = vadd.f32 %v5290, %v5260
      %v5292 = vadd.f32 %v5291, %v5261
      %v5293 = vadd.f32 %v5292, %v5262
      %v5294 = vadd.f32 %v5293, %v5263
      %v5295 = vadd.f32 %v5294, %v5264
      %v5296 = vadd.f32 %v5295, %v5265
      %v5297 = vadd.f32 %v5296, %v5266
      %v5298 = vadd.f32 %v5297, %v5267
      %v5299 = vadd.f32 %v5298, %v5268
      %v5300 = vadd.f32 %v5299, %v5269
      %v5301 = vadd.f32 %v5300, %v5270
      %v5302 = vadd.f32 %v5301, %v5271
      %v5303 = vadd.f32 %v5302, %v5272
      %v5304 = vadd.f32 %v5303, %v5273
      %v5305 = vadd.f32 %v5304, %v5274
      %v5306 = vadd.f32 %v5305, %v5275
      %v5307 = vadd.f32 %v5306, %v5276
      %v5308 = vrot.slane %v5307, 4
      %v5309 = vadd.f32 %v5307, %v5308
      %v5310 = vrot.slane %v5309, 2
      %v5311 = vadd.f32 %v5309, %v5310
      %v5312 = vrot.slane %v5311, 1
      %v5313 = vadd.f32 %v5311, %v5312
      %5314 = vst [vmem:[%s268] sm:$0x1] %v5313
      %p5315 = scmp.lt.s32.totalorder %s18, 1
      %s5316 = scalar_select %p5315, %s18, 1
      %s5317 = smul.addr %s5316, 32
      %s5318 = smul.addr %s5317, 4
      %s5319 = scalar_lea.vmem %s4, %s5318
      %p5320 = scmp.lt.s32.totalorder %s18, 1
      %s5321 = scalar_select %p5320, %s18, 1
      %s5322 = scalar_lea.vmem %s5, %s5321
      %p5323 = scmp.lt.s32.totalorder %s18, 1
      %s5324 = scalar_select %p5323, %s18, 1
      %s5325 = scalar_lea.vmem %s6, %s5324
      // Predicated region
      $region37: #{basic_block_forward.3} parent=35 // pred_check
        %p5326 = pneg %p125
      $region38: #{basic_block_forward.3} parent=35 // pred_check_branch
        %5328 = sbr.rel (%p5326) target = $region40
      $region39: #{basic_block_forward.3} parent=35 // pred_region
        _
      $region40: #{basic_block_forward.3} parent=35 // pred_fallthru
        _
      // Predicated region
      $region41: #{basic_block_forward.3} parent=35 // pred_check
        %p5329 = pneg %p151
      $region42: #{basic_block_forward.3} parent=35 // pred_check_branch
        %5331 = sbr.rel (%p5329) target = $region44
      $region43: #{basic_block_forward.3} parent=35 // pred_region
        _
      $region44: #{basic_block_forward.3} parent=35 // pred_fallthru
        _
      // Predicated region
      $region45: #{basic_block_forward.3} parent=35 // pred_check
        %p5332 = pneg %p177
      $region46: #{basic_block_forward.3} parent=35 // pred_check_branch
        %5334 = sbr.rel (%p5332) target = $region48
      $region47: #{basic_block_forward.3} parent=35 // pred_region
        _
      $region48: #{basic_block_forward.3} parent=35 // pred_fallthru
        _
    $region36: #{basic_block_forward.3} parent=5 // pred_fallthru
      _
    %p5335 = scmp.le.s32.totalorder 2, %s13
    // Predicated region
    $region49: #{basic_block_forward.3} parent=5 // pred_check
      %p5336 = pneg %p5335
    $region50: #{basic_block_forward.3} parent=5 // pred_check_branch
      %5338 = sbr.rel (%p5336) target = $region52
    $region51: #{basic_block_forward.3} parent=5 // pred_region
      %s5339 = ssub.s32 %s13, 2
      // Predicated region
      $region53: #{basic_block_forward.3} parent=51 // pred_check
        %p5340 = pneg %p131
      $region54: #{basic_block_forward.3} parent=51 // pred_check_branch
        %5342 = sbr.rel (%p5340) target = $region56
      $region55: #{basic_block_forward.3} parent=51 // pred_region
        %p5343 = scmp.lt.s32.totalorder %s19, 1
        %s5344 = scalar_select %p5343, %s19, 1
        %s5345 = smul.addr %s5344, 32
        %s5346 = smul.addr %s5345, 4
        %s5347 = scalar_lea.vmem %s4, %s5346
      $region56: #{basic_block_forward.3} parent=51 // pred_fallthru
        _
      // Predicated region
      $region57: #{basic_block_forward.3} parent=51 // pred_check
        %p5348 = pneg %p157
      $region58: #{basic_block_forward.3} parent=51 // pred_check_branch
        %5350 = sbr.rel (%p5348) target = $region60
      $region59: #{basic_block_forward.3} parent=51 // pred_region
        %p5351 = scmp.lt.s32.totalorder %s19, 1
        %s5352 = scalar_select %p5351, %s19, 1
        %s5353 = scalar_lea.vmem %s5, %s5352
      $region60: #{basic_block_forward.3} parent=51 // pred_fallthru
        _
      // Predicated region
      $region61: #{basic_block_forward.3} parent=51 // pred_check
        %p5354 = pneg %p183
      $region62: #{basic_block_forward.3} parent=51 // pred_check_branch
        %5356 = sbr.rel (%p5354) target = $region64
      $region63: #{basic_block_forward.3} parent=51 // pred_region
        %p5357 = scmp.lt.s32.totalorder %s19, 1
        %s5358 = scalar_select %p5357, %s19, 1
        %s5359 = scalar_lea.vmem %s6, %s5358
      $region64: #{basic_block_forward.3} parent=51 // pred_fallthru
        _
    $region52: #{basic_block_forward.3} parent=5 // pred_fallthru
      _
  $region6: #{basic_block_forward.3} parent=0 // loop_footer
    %s17 = sadd.s32 1, %s13
  $region7: #{basic_block_forward.3} parent=0 // loop_footer_branch
    %12 = sbr.rel target = $region3
  $region8: #{basic_block_forward.3} parent=0 // loop_exit
    _

</llo_original>
